<compile_context>
chip_gen: v6e
topology: v6e:2x2x1
jax: 0.10.0
libtpu: 0.0.40
codegen_flags: <defaults>
</compile_context>

<pallas_src>
import functools

import jax
import jax.numpy as jnp
from jax import lax
from jax.experimental import pallas as pl
from jax.experimental.pallas import tpu as pltpu


def _elbo_kernel(ftile_ref, fall_ref, proto_ref, labc_ref, labr_ref,
                 out_ref, acc_ref, *, tau, kappa, eta, b_real, tb):
    pid = pl.program_id(0)

    @pl.when(pid == 0)
    def _init():
        acc_ref[0] = 0.0
        acc_ref[1] = 0.0

    f_tile = ftile_ref[...]            # (TB, D)  native dtype (f32 / bf16)
    f_all = fall_ref[...]              # (Bp, D)
    proto = proto_ref[...]             # (D, C)

    # (C, TB): cluster logits of this tile's anchors; contract the feature dim
    # on both operands so no transpose is materialized.  (TB, Bp): contrast.
    adc_t = lax.dot_general(proto, f_tile, (((0,), (1,)), ((), ())),
                            preferred_element_type=jnp.float32)
    acon = lax.dot_general(f_tile, f_all, (((1,), (1,)), ((), ())),
                           preferred_element_type=jnp.float32)

    n_clu, tb_rows = adc_t.shape
    bp = acon.shape[1]
    padded = bp != b_real
    row_start = pid * tb

    # ---- masks rebuilt in-kernel (labels + iota), all 2-D ---------------------
    lab_c = labc_ref[...]                                        # (TB, 1) int32
    lab_r = labr_ref[...]                                        # (1, Bp) int32
    row_gid = row_start + lax.broadcasted_iota(jnp.int32, (tb_rows, bp), 0)
    col_gid = lax.broadcasted_iota(jnp.int32, (tb_rows, bp), 1)
    col_ok = col_gid < b_real
    logits_mask = jnp.where((row_gid != col_gid) & col_ok, 1.0, 0.0)  # (TB, Bp)
    mask = jnp.where(lab_c == lab_r, 1.0, 0.0) * logits_mask          # (TB, Bp)

    # ---- cluster softmax / entropy term (loss_0) ------------------------------
    pi_logit_t = adc_t * (1.0 / kappa) + 1e-18                        # (C, TB)
    m = jnp.max(pi_logit_t, axis=0, keepdims=True)
    sh = pi_logit_t - m
    log_pi_t = sh - jnp.log(jnp.sum(jnp.exp(sh), axis=0, keepdims=True))
    pi_t = jnp.exp(log_pi_t)                                          # (C, TB)
    ent = jnp.sum(pi_t * log_pi_t, axis=0, keepdims=True)             # (1, TB)
    if padded:
        rv = ((row_start + lax.broadcasted_iota(jnp.int32, (1, tb_rows), 1))
              < b_real).astype(jnp.float32)
        loss0_part = jnp.sum(ent * rv)
    else:
        loss0_part = jnp.sum(ent)

    # ---- (C, TB, Bp) weighted-contrast block ----------------------------------
    ac = adc_t[:, :, None]                  # (C, TB, 1)
    ak = acon[None, :, :]                   # (1, TB, Bp)
    diff = ac - ak                          # (C, TB, Bp)
    # softmax-of-two == sigmoid(diff); tanh form is stable and one EUP op.
    w1 = 0.5 * (jnp.tanh(0.5 * diff) + 1.0)
    ada = (ak + w1 * diff) * (1.0 / tau) + 1e-18

    if padded:
        colr = lax.broadcasted_iota(jnp.int32, (1, bp), 1)
        pen = jnp.where(colr < b_real, 0.0, -1e30)                    # (1, Bp)
        lmax = jnp.max(ada + pen[None, :, :], axis=2, keepdims=True)
    else:
        lmax = jnp.max(ada, axis=2, keepdims=True)                    # (C, TB, 1)

    logits = ada - lmax
    mask3 = mask[None, :, :]
    exp_logits = jnp.exp(logits) * logits_mask[None, :, :]            # (C, TB, Bp)
    row_sum = jnp.sum(exp_logits, axis=2, keepdims=True)              # (C, TB, 1)
    log_row = jnp.log(row_sum)
    inv_row = pl.reciprocal(row_sum, approx=True)   # cancels exactly in posterior

    log_logits_pos = (logits - log_row) * mask3
    norm_logits_pos = exp_logits * inv_row * mask3   # reuse exp_logits (no 2nd exp)

    pnlp = pi_t[:, :, None] * norm_logits_pos                         # (C, TB, Bp)
    denom = jnp.sum(pnlp, axis=0) + (1.0 - mask)                      # (TB, Bp)
    inv_denom = 1.0 / denom                         # exact divide, small tensor
    posterior = pnlp * inv_denom[None, :, :] * mask3

    inner = posterior * (log_pi_t[:, :, None] + log_logits_pos
                         - jnp.log(posterior + 1e-18))
    per_anchor = jnp.sum(jnp.sum(inner, axis=0), axis=1, keepdims=True)  # (TB, 1)
    mask_sum = jnp.sum(mask, axis=1, keepdims=True)                      # (TB, 1)
    safe = jnp.where(mask_sum > 0.0,
                     per_anchor / jnp.maximum(mask_sum, 1.0), 0.0)
    loss_part = jnp.sum(safe)

    acc_ref[0] = acc_ref[0] + loss_part
    acc_ref[1] = acc_ref[1] + loss0_part
    # Running combine; last grid step leaves the final value in the SMEM output.
    out_ref[0, 0] = (-acc_ref[0] + eta * acc_ref[1]) * (1.0 / b_real)


def _vmem_plan():
    try:
        cap = int(pltpu.get_tpu_info().vmem_capacity_bytes)
    except Exception:
        cap = 64 * 1024 * 1024                 # conservative: v7x per-core VMEM
    budget = min(cap // 4, 32 * 1024 * 1024)   # budget for heavy intermediates
    limit = min(cap // 2, 64 * 1024 * 1024)    # scoped-VMEM limit we request
    return budget, limit


def _pick_tile(bp, n_clusters, budget_bytes):
    # ~8 live f32 (C, TB, Bp) intermediates drive the per-step working set.
    bytes_per_anchor_row = 8 * n_clusters * bp * 4
    best = 8
    tb = 8
    while tb <= min(bp, 1024):
        if bp % tb == 0 and tb * bytes_per_anchor_row <= budget_bytes:
            best = tb
        tb += 8
    return best


def elbo_forward(emb, emb2, y, prototype, *, tau, kappa, eta):
    """Pallas-backed ELBO forward. emb/emb2: (N, D), y: (N,) int, prototype:
    (D, C). Returns scalar float32 loss."""
    n, d = emb.shape
    c = prototype.shape[1]
    b = 2 * n
    bp = ((b + 127) // 128) * 128            # lane-dense anchor/contrast axis

    features = jnp.concatenate([emb, emb2], axis=0)
    labels = jnp.concatenate([y, y], axis=0).astype(jnp.int32)
    if bp > b:
        features = jnp.pad(features, ((0, bp - b), (0, 0)))
        labels = jnp.pad(labels, (0, bp - b), constant_values=-1)
    lab_col = labels.reshape(bp, 1)
    lab_row = labels.reshape(1, bp)

    budget, vmem_limit = _vmem_plan()
    tb = _pick_tile(bp, c, budget)

    kernel = functools.partial(_elbo_kernel, tau=float(tau), kappa=float(kappa),
                               eta=float(eta), b_real=b, tb=tb)
    out = pl.pallas_call(
        kernel,
        out_shape=jax.ShapeDtypeStruct((1, 1), jnp.float32),
        grid=(bp // tb,),
        in_specs=[
            pl.BlockSpec((tb, d), lambda i: (i, 0)),    # anchor-row slab
            pl.BlockSpec((bp, d), lambda i: (0, 0)),    # full features (contrast)
            pl.BlockSpec((d, c), lambda i: (0, 0)),     # prototype
            pl.BlockSpec((tb, 1), lambda i: (i, 0)),    # anchor labels (column)
            pl.BlockSpec((1, bp), lambda i: (0, 0)),    # all labels (row)
        ],
        out_specs=pl.BlockSpec(memory_space=pltpu.MemorySpace.SMEM),
        scratch_shapes=[pltpu.SMEM((2,), jnp.float32)],
        compiler_params=pltpu.CompilerParams(
            dimension_semantics=("arbitrary",),
            vmem_limit_bytes=int(vmem_limit)),
    )(features, features, prototype, lab_col, lab_row)
    return out[0, 0]


def elbo_reference(emb, emb2, y, prototype, *, tau, kappa, eta):
    """Pure-JAX transcription of the PyTorch forward (for verification)."""
    features = jnp.concatenate([emb, emb2], axis=0).astype(jnp.float32)
    B = features.shape[0]
    C = prototype.shape[1]
    yv = y.reshape(-1, 1)
    mask = (yv == yv.T).astype(jnp.float32)
    mask = jnp.tile(mask, (2, 2))
    adc = features @ prototype.astype(jnp.float32)
    acon = features @ features.T
    log_pi = jax.nn.log_softmax(adc / kappa + 1e-18, axis=1)
    pi = jnp.exp(log_pi)
    loss_0 = jnp.mean(jnp.sum(pi * log_pi, axis=1))
    align_cluster = jnp.tile(adc.T.reshape(C, B, 1), (1, 1, B))
    align_contrast = jnp.tile(acon, (C, 1)).reshape(C, B, B)
    w1 = jnp.exp(align_cluster) / (jnp.exp(align_cluster) + jnp.exp(align_contrast))
    w2 = jnp.exp(align_contrast) / (jnp.exp(align_cluster) + jnp.exp(align_contrast))
    ada = (w1 * align_cluster + w2 * align_contrast) / tau + 1e-18
    logits = ada - jnp.max(ada, axis=2, keepdims=True)
    logits_mask = jnp.ones((B, B), jnp.float32) - jnp.eye(B, dtype=jnp.float32)
    mask = mask * logits_mask
    exp_logits = jnp.exp(logits) * logits_mask
    log_logits = logits - jnp.log(exp_logits.sum(2, keepdims=True))
    normalized_logits = jnp.exp(log_logits)
    log_logits_pos = log_logits * mask
    normalized_logits_pos = normalized_logits * mask
    pnlp = pi.T.reshape(C, B, 1) * normalized_logits_pos
    posterior = pnlp / (jnp.sum(pnlp, 0) + 1.0 - mask)
    posterior = posterior * mask
    loss = -jnp.mean(
        jnp.sum(jnp.sum(posterior * (log_pi.T.reshape(C, B, 1)
                                     + log_logits_pos
                                     - jnp.log(posterior + 1e-18)), 0), 1)
        / jnp.sum(mask, 1))
    return loss + eta * loss_0


if __name__ == "__main__":
    # Small deterministic config consistent with the module's forward.
    num_class, num_cluster, feat_dim = 4, 8, 32
    N = 8                      # per-view batch -> B = 2N = 16
    tau, kappa, eta = 0.5, 0.5, 1.0

    key = jax.random.PRNGKey(0)
    k1, k2, k3, k4 = jax.random.split(key, 4)
    emb = jax.random.normal(k1, (N, feat_dim), dtype=jnp.float32)
    emb2 = jax.random.normal(k2, (N, feat_dim), dtype=jnp.float32)
    # L2-normalize embeddings (typical contrastive-learning input; keeps exp stable)
    emb = emb / jnp.linalg.norm(emb, axis=1, keepdims=True)
    emb2 = emb2 / jnp.linalg.norm(emb2, axis=1, keepdims=True)
    y = jax.random.randint(k3, (N,), 0, num_class, dtype=jnp.int32)
    # nn.Parameter initialized with uniform(0, 1), shape (feat_dim, num_cluster)
    prototype = jax.random.uniform(k4, (feat_dim, num_cluster),
                                   dtype=jnp.float32, minval=0.0, maxval=1.0)

    loss_kernel = jax.block_until_ready(
        elbo_forward(emb, emb2, y, prototype, tau=tau, kappa=kappa, eta=eta))
    loss_ref = jax.block_until_ready(
        elbo_reference(emb, emb2, y, prototype, tau=tau, kappa=kappa, eta=eta))

    assert jnp.isfinite(loss_kernel), "kernel produced non-finite loss"
    assert jnp.allclose(loss_kernel, loss_ref, rtol=1e-3, atol=1e-3), (
        f"mismatch: kernel={loss_kernel}, ref={loss_ref}")
    print("KERNEL_OK")
</pallas_src>

<mosaic_0001>
module attributes {stable_mosaic.version = 11 : i64} {
  func.func @_elbo_kernel(%arg0: i32, %arg1: memref<128x32xf32, #tpu.memory_space<vmem>>, %arg2: memref<128x32xf32, #tpu.memory_space<vmem>>, %arg3: memref<32x8xf32, #tpu.memory_space<vmem>>, %arg4: memref<128x1xi32, #tpu.memory_space<vmem>>, %arg5: memref<1x128xi32, #tpu.memory_space<vmem>>, %arg6: memref<1x1xf32, #tpu.memory_space<smem>>, %arg7: memref<2xf32, #tpu.memory_space<smem>>) attributes {dimension_semantics = [#tpu.dimension_semantics<arbitrary>], iteration_bounds = array<i64: 1>, scalar_prefetch = 0 : i64, scratch_operands = 1 : i64, tpu.core_type = #tpu.core_type<tc>, window_params = [{transform_indices = @transform_0, window_bounds = array<i64: 128, 32>}, {pipeline_mode = #tpu.pipeline_mode<synchronous>, transform_indices = @transform_1, window_bounds = array<i64: 128, 32>}, {pipeline_mode = #tpu.pipeline_mode<synchronous>, transform_indices = @transform_2, window_bounds = array<i64: 32, 8>}, {transform_indices = @transform_3, window_bounds = array<i64: 128, 1>}, {pipeline_mode = #tpu.pipeline_mode<synchronous>, transform_indices = @transform_4, window_bounds = array<i64: 1, 128>}, {transform_indices = @transform_5, window_bounds = array<i64: 1, 1>}]} {
    %c0_i32 = arith.constant 0 : i32
    %0 = arith.cmpi eq, %arg0, %c0_i32 : i32
    %1 = arith.extui %0 : i1 to i32
    %c0_i32_0 = arith.constant 0 : i32
    %2 = arith.cmpi ne, %1, %c0_i32_0 : i32
    scf.if %2 {
      %cst_53 = arith.constant 0.000000e+00 : f32
      %c0_54 = arith.constant 0 : index
      %159 = memref.load %arg7[%c0_54] : memref<2xf32, #tpu.memory_space<smem>>
      memref.store %cst_53, %arg7[%c0_54] : memref<2xf32, #tpu.memory_space<smem>>
      %cst_55 = arith.constant 0.000000e+00 : f32
      %c1_56 = arith.constant 1 : index
      %160 = memref.load %arg7[%c1_56] : memref<2xf32, #tpu.memory_space<smem>>
      memref.store %cst_55, %arg7[%c1_56] : memref<2xf32, #tpu.memory_space<smem>>
    } else {
    }
    %c0 = arith.constant 0 : index
    %c0_1 = arith.constant 0 : index
    %3 = vector.load %arg1[%c0, %c0_1] : memref<128x32xf32, #tpu.memory_space<vmem>>, vector<128x32xf32>
    %c0_2 = arith.constant 0 : index
    %c0_3 = arith.constant 0 : index
    %4 = vector.load %arg2[%c0_2, %c0_3] : memref<128x32xf32, #tpu.memory_space<vmem>>, vector<128x32xf32>
    %c0_4 = arith.constant 0 : index
    %c0_5 = arith.constant 0 : index
    %5 = vector.load %arg3[%c0_4, %c0_5] : memref<32x8xf32, #tpu.memory_space<vmem>>, vector<32x8xf32>
    %cst = arith.constant dense<0.000000e+00> : vector<8x128xf32>
    %6 = tpu.matmul %5, %3, %cst {dimension_numbers = #tpu.dot_dimension_numbers<[0], [1], [1], [0], [0, 1, 1, 0], [], []>} : vector<32x8xf32>, vector<128x32xf32>, vector<8x128xf32> -> vector<8x128xf32>
    %cst_6 = arith.constant dense<0.000000e+00> : vector<128x128xf32>
    %7 = tpu.matmul %3, %4, %cst_6 {dimension_numbers = #tpu.dot_dimension_numbers<[1], [1], [0], [0], [0, 0, 1, 0], [], []>} : vector<128x32xf32>, vector<128x32xf32>, vector<128x128xf32> -> vector<128x128xf32>
    %c128_i32 = arith.constant 128 : i32
    %8 = arith.muli %arg0, %c128_i32 : i32
    %c0_7 = arith.constant 0 : index
    %c0_8 = arith.constant 0 : index
    %9 = vector.load %arg4[%c0_7, %c0_8] : memref<128x1xi32, #tpu.memory_space<vmem>>, vector<128x1xi32>
    %c0_9 = arith.constant 0 : index
    %c0_10 = arith.constant 0 : index
    %10 = vector.load %arg5[%c0_9, %c0_10] : memref<1x128xi32, #tpu.memory_space<vmem>>, vector<1x128xi32>
    %11 = tpu.iota {dimensions = array<i32: 0>} : vector<128x128xi32>
    %12 = vector.broadcast %8 : i32 to vector<128x128xi32>
    %13 = arith.addi %12, %11 : vector<128x128xi32>
    %14 = tpu.iota {dimensions = array<i32: 1>} : vector<128x128xi32>
    %c16_i32 = arith.constant 16 : i32
    %15 = vector.broadcast %c16_i32 : i32 to vector<128x128xi32>
    %16 = arith.cmpi slt, %14, %15 : vector<128x128xi32>
    %17 = arith.cmpi ne, %13, %14 : vector<128x128xi32>
    %18 = arith.andi %17, %16 : vector<128x128xi1>
    %cst_11 = arith.constant 1.000000e+00 : f32
    %cst_12 = arith.constant 0.000000e+00 : f32
    %19 = vector.broadcast %cst_11 : f32 to vector<128x128xf32>
    %20 = vector.broadcast %cst_12 : f32 to vector<128x128xf32>
    %21 = arith.select %18, %19, %20 : vector<128x128xi1>, vector<128x128xf32>
    %22 = vector.broadcast %9 : vector<128x1xi32> to vector<128x128xi32>
    %23 = vector.broadcast %10 : vector<1x128xi32> to vector<128x128xi32>
    %24 = arith.cmpi eq, %22, %23 : vector<128x128xi32>
    %cst_13 = arith.constant 1.000000e+00 : f32
    %cst_14 = arith.constant 0.000000e+00 : f32
    %25 = vector.broadcast %cst_13 : f32 to vector<128x128xf32>
    %26 = vector.broadcast %cst_14 : f32 to vector<128x128xf32>
    %27 = arith.select %24, %25, %26 : vector<128x128xi1>, vector<128x128xf32>
    %28 = arith.mulf %27, %21 : vector<128x128xf32>
    %cst_15 = arith.constant 2.000000e+00 : f32
    %29 = vector.broadcast %cst_15 : f32 to vector<8x128xf32>
    %30 = arith.mulf %6, %29 : vector<8x128xf32>
    %cst_16 = arith.constant 1.000000e-18 : f32
    %31 = vector.broadcast %cst_16 : f32 to vector<8x128xf32>
    %32 = arith.addf %30, %31 : vector<8x128xf32>
    %cst_17 = arith.constant dense<0xFF800000> : vector<128xf32>
    %33 = vector.multi_reduction <maximumf>, %32, %cst_17 [0] : vector<8x128xf32> to vector<128xf32>
    %34 = vector.shape_cast %33 : vector<128xf32> to vector<1x128xf32>
    %35 = vector.broadcast %34 : vector<1x128xf32> to vector<8x128xf32>
    %36 = arith.subf %32, %35 : vector<8x128xf32>
    %37 = math.exp %36 : vector<8x128xf32>
    %cst_18 = arith.constant dense<0.000000e+00> : vector<128xf32>
    %38 = vector.multi_reduction <add>, %37, %cst_18 [0] : vector<8x128xf32> to vector<128xf32>
    %39 = vector.shape_cast %38 : vector<128xf32> to vector<1x128xf32>
    %40 = math.log %39 : vector<1x128xf32>
    %41 = vector.broadcast %40 : vector<1x128xf32> to vector<8x128xf32>
    %42 = arith.subf %36, %41 : vector<8x128xf32>
    %43 = math.exp %42 : vector<8x128xf32>
    %44 = arith.mulf %43, %42 : vector<8x128xf32>
    %cst_19 = arith.constant dense<0.000000e+00> : vector<128xf32>
    %45 = vector.multi_reduction <add>, %44, %cst_19 [0] : vector<8x128xf32> to vector<128xf32>
    %46 = vector.shape_cast %45 : vector<128xf32> to vector<1x128xf32>
    %47 = tpu.iota {dimensions = array<i32: 1>} : vector<1x128xi32>
    %48 = vector.broadcast %8 : i32 to vector<1x128xi32>
    %49 = arith.addi %48, %47 : vector<1x128xi32>
    %c16_i32_20 = arith.constant 16 : i32
    %50 = vector.broadcast %c16_i32_20 : i32 to vector<1x128xi32>
    %51 = arith.cmpi slt, %49, %50 : vector<1x128xi32>
    %52 = arith.extui %51 : vector<1x128xi1> to vector<1x128xi32>
    %53 = arith.sitofp %52 : vector<1x128xi32> to vector<1x128xf32>
    %54 = arith.mulf %46, %53 : vector<1x128xf32>
    %55 = vector.shape_cast %54 : vector<1x128xf32> to vector<1x1x128xf32>
    %cst_21 = arith.constant dense<0.000000e+00> : vector<1xf32>
    %56 = vector.multi_reduction <add>, %55, %cst_21 [1, 2] : vector<1x1x128xf32> to vector<1xf32>
    %57 = vector.shape_cast %56 : vector<1xf32> to vector<1x1x1xf32>
    %58 = vector.extract %57[0, 0, 0] : f32 from vector<1x1x1xf32>
    %59 = vector.shape_cast %6 : vector<8x128xf32> to vector<8x128x1xf32>
    %60 = vector.shape_cast %7 : vector<128x128xf32> to vector<1x128x128xf32>
    %61 = vector.broadcast %59 : vector<8x128x1xf32> to vector<8x128x128xf32>
    %62 = vector.broadcast %60 : vector<1x128x128xf32> to vector<8x128x128xf32>
    %63 = arith.subf %61, %62 : vector<8x128x128xf32>
    %cst_22 = arith.constant 5.000000e-01 : f32
    %64 = vector.broadcast %cst_22 : f32 to vector<8x128x128xf32>
    %65 = arith.mulf %64, %63 : vector<8x128x128xf32>
    %66 = math.tanh %65 : vector<8x128x128xf32>
    %cst_23 = arith.constant 1.000000e+00 : f32
    %67 = vector.broadcast %cst_23 : f32 to vector<8x128x128xf32>
    %68 = arith.addf %66, %67 : vector<8x128x128xf32>
    %cst_24 = arith.constant 5.000000e-01 : f32
    %69 = vector.broadcast %cst_24 : f32 to vector<8x128x128xf32>
    %70 = arith.mulf %69, %68 : vector<8x128x128xf32>
    %71 = arith.mulf %70, %63 : vector<8x128x128xf32>
    %72 = vector.broadcast %60 : vector<1x128x128xf32> to vector<8x128x128xf32>
    %73 = arith.addf %72, %71 : vector<8x128x128xf32>
    %cst_25 = arith.constant 2.000000e+00 : f32
    %74 = vector.broadcast %cst_25 : f32 to vector<8x128x128xf32>
    %75 = arith.mulf %73, %74 : vector<8x128x128xf32>
    %cst_26 = arith.constant 1.000000e-18 : f32
    %76 = vector.broadcast %cst_26 : f32 to vector<8x128x128xf32>
    %77 = arith.addf %75, %76 : vector<8x128x128xf32>
    %78 = tpu.iota {dimensions = array<i32: 1>} : vector<1x128xi32>
    %c16_i32_27 = arith.constant 16 : i32
    %79 = vector.broadcast %c16_i32_27 : i32 to vector<1x128xi32>
    %80 = arith.cmpi slt, %78, %79 : vector<1x128xi32>
    %cst_28 = arith.constant 0.000000e+00 : f32
    %cst_29 = arith.constant -1.000000e+30 : f32
    %81 = vector.broadcast %cst_28 : f32 to vector<1x128xf32>
    %82 = vector.broadcast %cst_29 : f32 to vector<1x128xf32>
    %83 = arith.select %80, %81, %82 : vector<1x128xi1>, vector<1x128xf32>
    %84 = vector.shape_cast %83 : vector<1x128xf32> to vector<1x1x128xf32>
    %85 = vector.broadcast %84 : vector<1x1x128xf32> to vector<8x128x128xf32>
    %86 = arith.addf %77, %85 : vector<8x128x128xf32>
    %cst_30 = arith.constant dense<0xFF800000> : vector<8x128xf32>
    %87 = vector.multi_reduction <maximumf>, %86, %cst_30 [2] : vector<8x128x128xf32> to vector<8x128xf32>
    %88 = vector.shape_cast %87 : vector<8x128xf32> to vector<8x128x1xf32>
    %89 = vector.broadcast %88 : vector<8x128x1xf32> to vector<8x128x128xf32>
    %90 = arith.subf %77, %89 : vector<8x128x128xf32>
    %91 = vector.shape_cast %28 : vector<128x128xf32> to vector<1x128x128xf32>
    %92 = math.exp %90 : vector<8x128x128xf32>
    %93 = vector.shape_cast %21 : vector<128x128xf32> to vector<1x128x128xf32>
    %94 = vector.broadcast %93 : vector<1x128x128xf32> to vector<8x128x128xf32>
    %95 = arith.mulf %92, %94 : vector<8x128x128xf32>
    %cst_31 = arith.constant dense<0.000000e+00> : vector<8x128xf32>
    %96 = vector.multi_reduction <add>, %95, %cst_31 [2] : vector<8x128x128xf32> to vector<8x128xf32>
    %97 = vector.shape_cast %96 : vector<8x128xf32> to vector<8x128x1xf32>
    %98 = math.log %97 : vector<8x128x1xf32>
    %99 = tpu.reciprocal %97 {approx = true} : vector<8x128x1xf32> -> vector<8x128x1xf32>
    %100 = vector.broadcast %98 : vector<8x128x1xf32> to vector<8x128x128xf32>
    %101 = arith.subf %90, %100 : vector<8x128x128xf32>
    %102 = vector.broadcast %91 : vector<1x128x128xf32> to vector<8x128x128xf32>
    %103 = arith.mulf %101, %102 : vector<8x128x128xf32>
    %104 = vector.broadcast %99 : vector<8x128x1xf32> to vector<8x128x128xf32>
    %105 = arith.mulf %95, %104 : vector<8x128x128xf32>
    %106 = vector.broadcast %91 : vector<1x128x128xf32> to vector<8x128x128xf32>
    %107 = arith.mulf %105, %106 : vector<8x128x128xf32>
    %108 = vector.shape_cast %43 : vector<8x128xf32> to vector<8x128x1xf32>
    %109 = vector.broadcast %108 : vector<8x128x1xf32> to vector<8x128x128xf32>
    %110 = arith.mulf %109, %107 : vector<8x128x128xf32>
    %cst_32 = arith.constant dense<0.000000e+00> : vector<128x128xf32>
    %111 = vector.multi_reduction <add>, %110, %cst_32 [0] : vector<8x128x128xf32> to vector<128x128xf32>
    %cst_33 = arith.constant 1.000000e+00 : f32
    %112 = vector.broadcast %cst_33 : f32 to vector<128x128xf32>
    %113 = arith.subf %112, %28 : vector<128x128xf32>
    %114 = arith.addf %111, %113 : vector<128x128xf32>
    %cst_34 = arith.constant 1.000000e+00 : f32
    %115 = vector.broadcast %cst_34 : f32 to vector<128x128xf32>
    %116 = arith.divf %115, %114 : vector<128x128xf32>
    %117 = vector.shape_cast %116 : vector<128x128xf32> to vector<1x128x128xf32>
    %118 = vector.broadcast %117 : vector<1x128x128xf32> to vector<8x128x128xf32>
    %119 = arith.mulf %110, %118 : vector<8x128x128xf32>
    %120 = vector.broadcast %91 : vector<1x128x128xf32> to vector<8x128x128xf32>
    %121 = arith.mulf %119, %120 : vector<8x128x128xf32>
    %122 = vector.shape_cast %42 : vector<8x128xf32> to vector<8x128x1xf32>
    %123 = vector.broadcast %122 : vector<8x128x1xf32> to vector<8x128x128xf32>
    %124 = arith.addf %123, %103 : vector<8x128x128xf32>
    %cst_35 = arith.constant 1.000000e-18 : f32
    %125 = vector.broadcast %cst_35 : f32 to vector<8x128x128xf32>
    %126 = arith.addf %121, %125 : vector<8x128x128xf32>
    %127 = math.log %126 : vector<8x128x128xf32>
    %128 = arith.subf %124, %127 : vector<8x128x128xf32>
    %129 = arith.mulf %121, %128 : vector<8x128x128xf32>
    %cst_36 = arith.constant dense<0.000000e+00> : vector<128x128xf32>
    %130 = vector.multi_reduction <add>, %129, %cst_36 [0] : vector<8x128x128xf32> to vector<128x128xf32>
    %cst_37 = arith.constant dense<0.000000e+00> : vector<128xf32>
    %131 = vector.multi_reduction <add>, %130, %cst_37 [1] : vector<128x128xf32> to vector<128xf32>
    %132 = vector.shape_cast %131 : vector<128xf32> to vector<128x1xf32>
    %cst_38 = arith.constant dense<0.000000e+00> : vector<128xf32>
    %133 = vector.multi_reduction <add>, %28, %cst_38 [1] : vector<128x128xf32> to vector<128xf32>
    %134 = vector.shape_cast %133 : vector<128xf32> to vector<128x1xf32>
    %cst_39 = arith.constant 0.000000e+00 : f32
    %135 = vector.broadcast %cst_39 : f32 to vector<128x1xf32>
    %136 = arith.cmpf ogt, %134, %135 : vector<128x1xf32>
    %cst_40 = arith.constant 1.000000e+00 : f32
    %137 = vector.broadcast %cst_40 : f32 to vector<128x1xf32>
    %138 = arith.maximumf %134, %137 : vector<128x1xf32>
    %139 = arith.divf %132, %138 : vector<128x1xf32>
    %cst_41 = arith.constant 0.000000e+00 : f32
    %140 = vector.broadcast %cst_41 : f32 to vector<128x1xf32>
    %141 = arith.select %136, %139, %140 : vector<128x1xi1>, vector<128x1xf32>
    %142 = vector.shape_cast %141 : vector<128x1xf32> to vector<1x128x1xf32>
    %cst_42 = arith.constant dense<0.000000e+00> : vector<1xf32>
    %143 = vector.multi_reduction <add>, %142, %cst_42 [1, 2] : vector<1x128x1xf32> to vector<1xf32>
    %144 = vector.shape_cast %143 : vector<1xf32> to vector<1x1x1xf32>
    %145 = vector.extract %144[0, 0, 0] : f32 from vector<1x1x1xf32>
    %c0_43 = arith.constant 0 : index
    %146 = memref.load %arg7[%c0_43] : memref<2xf32, #tpu.memory_space<smem>>
    %147 = arith.addf %146, %145 : f32
    %c0_44 = arith.constant 0 : index
    %148 = memref.load %arg7[%c0_44] : memref<2xf32, #tpu.memory_space<smem>>
    memref.store %147, %arg7[%c0_44] : memref<2xf32, #tpu.memory_space<smem>>
    %c1 = arith.constant 1 : index
    %149 = memref.load %arg7[%c1] : memref<2xf32, #tpu.memory_space<smem>>
    %150 = arith.addf %149, %58 : f32
    %c1_45 = arith.constant 1 : index
    %151 = memref.load %arg7[%c1_45] : memref<2xf32, #tpu.memory_space<smem>>
    memref.store %150, %arg7[%c1_45] : memref<2xf32, #tpu.memory_space<smem>>
    %c0_46 = arith.constant 0 : index
    %152 = memref.load %arg7[%c0_46] : memref<2xf32, #tpu.memory_space<smem>>
    %cst_47 = arith.constant 0.000000e+00 : f32
    %153 = arith.subf %cst_47, %152 : f32
    %c1_48 = arith.constant 1 : index
    %154 = memref.load %arg7[%c1_48] : memref<2xf32, #tpu.memory_space<smem>>
    %cst_49 = arith.constant 1.000000e+00 : f32
    %155 = arith.mulf %cst_49, %154 : f32
    %156 = arith.addf %153, %155 : f32
    %cst_50 = arith.constant 6.250000e-02 : f32
    %157 = arith.mulf %156, %cst_50 : f32
    %c0_51 = arith.constant 0 : index
    %c0_52 = arith.constant 0 : index
    %158 = memref.load %arg6[%c0_51, %c0_52] : memref<1x1xf32, #tpu.memory_space<smem>>
    memref.store %157, %arg6[%c0_51, %c0_52] : memref<1x1xf32, #tpu.memory_space<smem>>
    return
  }
  func.func @transform_0(%arg0: i32) -> (i32, i32) {
    %c0_i32 = arith.constant 0 : i32
    %c0_i32_0 = arith.constant 0 : i32
    return %arg0, %c0_i32 : i32, i32
  }
  func.func @transform_1(%arg0: i32) -> (i32, i32) {
    %c0_i32 = arith.constant 0 : i32
    %c0_i32_0 = arith.constant 0 : i32
    %c0_i32_1 = arith.constant 0 : i32
    return %c0_i32, %c0_i32_0 : i32, i32
  }
  func.func @transform_2(%arg0: i32) -> (i32, i32) {
    %c0_i32 = arith.constant 0 : i32
    %c0_i32_0 = arith.constant 0 : i32
    %c0_i32_1 = arith.constant 0 : i32
    return %c0_i32, %c0_i32_0 : i32, i32
  }
  func.func @transform_3(%arg0: i32) -> (i32, i32) {
    %c0_i32 = arith.constant 0 : i32
    %c0_i32_0 = arith.constant 0 : i32
    return %arg0, %c0_i32 : i32, i32
  }
  func.func @transform_4(%arg0: i32) -> (i32, i32) {
    %c0_i32 = arith.constant 0 : i32
    %c0_i32_0 = arith.constant 0 : i32
    %c0_i32_1 = arith.constant 0 : i32
    return %c0_i32, %c0_i32_0 : i32, i32
  }
  func.func @transform_5(%arg0: i32) -> (i32, i32) {
    %c0_i32 = arith.constant 0 : i32
    %c0_i32_0 = arith.constant 0 : i32
    %c0_i32_1 = arith.constant 0 : i32
    return %c0_i32, %c0_i32_0 : i32, i32
  }
}

</mosaic_0001>

<llo_original>
// kernel: tpu_custom_call.1
$region0: #{tpu_custom_call.1}
  #allocation0 [shape = 'u32[]', space=smem, size = 0x4, offset = 0x4, fixed_abs, tag = 'smem constant byte address 0x4 - core index']
  #allocation1 [shape = 'u32[144,128]{1,0:T(1,128)}', space=vmem, size = 0x12000, scoped, tag = 'internal scratch']
  #allocation2 [shape = 'f32[2]{0:T(128)}', space=smem, size = 0x200, scoped, tag = 'scratch operand']
  %s0 = inlined_call_operand.vmem [shape: f32[128,32], index: 0, kind: input, shape index: {}]
  %s1 = inlined_call_operand.vmem [shape: f32[128,32], index: 1, kind: input, shape index: {}]
  %s2 = inlined_call_operand.vmem [shape: f32[32,8], index: 2, kind: input, shape index: {}]
  %s3 = inlined_call_operand.vmem [shape: s32[128,1], index: 3, kind: input, shape index: {}]
  %s4 = inlined_call_operand.vmem [shape: s32[1,128], index: 4, kind: input, shape index: {}]
  %s5 = inlined_call_operand.hbm [shape: f32[1,1], index: 5, kind: output, shape index: {}]
  %s6 = sld [smem:[#allocation0]]
  $region34: #{tpu_custom_call.1} parent=0
    _
  %s8 = ssub.s32 1, %s6
  %s9 = scalar_select 0, %s8, %s6
  $region1: #{tpu_custom_call.1} parent=0
    #allocation3 [shape = 'u8[512]{0}', space=smem, size = 0x200, scoped, tag = 'output window, operand 0, single buffered']
    #allocation4 [shape = 's32[1]{0}', space=sflag, size = 0x4, scoped, tag = 'scoped memory for tpu_custom_call.1']
    %10 = vsyncpa [#allocation4], 0
    // Predicated region
    $region2: #{tpu_custom_call.1} parent=1 // pred_check
      _
    $region3: #{tpu_custom_call.1} parent=1 // pred_check_branch
      %12 = sbr.rel (0) target = $region5
    $region4: #{tpu_custom_call.1} parent=1 // pred_region
      _
    $region5: #{tpu_custom_call.1} parent=1 // pred_fallthru
      _
    // Predicated region
    $region6: #{tpu_custom_call.1} parent=1 // pred_check
      _
    $region7: #{tpu_custom_call.1} parent=1 // pred_check_branch
      %14 = sbr.rel (0) target = $region9
    $region8: #{tpu_custom_call.1} parent=1 // pred_region
      _
    $region9: #{tpu_custom_call.1} parent=1 // pred_fallthru
      _
    // Predicated region
    $region10: #{tpu_custom_call.1} parent=1 // pred_check
      _
    $region11: #{tpu_custom_call.1} parent=1 // pred_check_branch
      %16 = sbr.rel (0) target = $region13
    $region12: #{tpu_custom_call.1} parent=1 // pred_region
      _
    $region13: #{tpu_custom_call.1} parent=1 // pred_fallthru
      _
    // Predicated region
    $region14: #{tpu_custom_call.1} parent=1 // pred_check
      _
    $region15: #{tpu_custom_call.1} parent=1 // pred_check_branch
      %18 = sbr.rel (0) target = $region17
    $region16: #{tpu_custom_call.1} parent=1 // pred_region
      _
    $region17: #{tpu_custom_call.1} parent=1 // pred_fallthru
      _
    // Predicated region
    $region18: #{tpu_custom_call.1} parent=1 // pred_check
      _
    $region19: #{tpu_custom_call.1} parent=1 // pred_check_branch
      %20 = sbr.rel (0) target = $region21
    $region20: #{tpu_custom_call.1} parent=1 // pred_region
      _
    $region21: #{tpu_custom_call.1} parent=1 // pred_fallthru
      _
    %p21 = scmp.eq.s32.totalorder 0, 0
    // Predicated region
    $region22: #{tpu_custom_call.1} parent=1 // pred_check
      %p22 = pneg %p21
    $region23: #{tpu_custom_call.1} parent=1 // pred_check_branch
      %24 = sbr.rel (%p22) target = $region25
    $region24: #{tpu_custom_call.1} parent=1 // pred_region
      %s25 = scalar_lea.smem [#allocation2], 0
      %26 = sst [smem:[%s25]] 0.0
      %s27 = scalar_lea.smem [#allocation2], 1
      %28 = sst [smem:[%s27]] 0.0
    $region25: #{tpu_custom_call.1} parent=1 // pred_fallthru
      _
    %v29 = vld [vmem:[%s0] sm:$0xff]
    %v30 = vld [vmem:[%s0 + $0x8] sm:$0xff]
    %v31 = vld [vmem:[%s0 + $0x10] sm:$0xff]
    %v32 = vld [vmem:[%s0 + $0x18] sm:$0xff]
    %v33 = vld [vmem:[%s0 + $0x20] sm:$0xff]
    %v34 = vld [vmem:[%s0 + $0x28] sm:$0xff]
    %v35 = vld [vmem:[%s0 + $0x30] sm:$0xff]
    %v36 = vld [vmem:[%s0 + $0x38] sm:$0xff]
    %v37 = vld [vmem:[%s0 + $0x40] sm:$0xff]
    %v38 = vld [vmem:[%s0 + $0x48] sm:$0xff]
    %v39 = vld [vmem:[%s0 + $0x50] sm:$0xff]
    %v40 = vld [vmem:[%s0 + $0x58] sm:$0xff]
    %v41 = vld [vmem:[%s0 + $0x60] sm:$0xff]
    %v42 = vld [vmem:[%s0 + $0x68] sm:$0xff]
    %v43 = vld [vmem:[%s0 + $0x70] sm:$0xff]
    %v44 = vld [vmem:[%s0 + $0x78] sm:$0xff]
    %v45 = vld [vmem:[%s1] sm:$0xff]
    %v46 = vld [vmem:[%s1 + $0x8] sm:$0xff]
    %v47 = vld [vmem:[%s1 + $0x10] sm:$0xff]
    %v48 = vld [vmem:[%s1 + $0x18] sm:$0xff]
    %v49 = vld [vmem:[%s1 + $0x20] sm:$0xff]
    %v50 = vld [vmem:[%s1 + $0x28] sm:$0xff]
    %v51 = vld [vmem:[%s1 + $0x30] sm:$0xff]
    %v52 = vld [vmem:[%s1 + $0x38] sm:$0xff]
    %v53 = vld [vmem:[%s1 + $0x40] sm:$0xff]
    %v54 = vld [vmem:[%s1 + $0x48] sm:$0xff]
    %v55 = vld [vmem:[%s1 + $0x50] sm:$0xff]
    %v56 = vld [vmem:[%s1 + $0x58] sm:$0xff]
    %v57 = vld [vmem:[%s1 + $0x60] sm:$0xff]
    %v58 = vld [vmem:[%s1 + $0x68] sm:$0xff]
    %v59 = vld [vmem:[%s1 + $0x70] sm:$0xff]
    %v60 = vld [vmem:[%s1 + $0x78] sm:$0xff]
    %v61 = vld [vmem:[%s2] sm:$0xff]
    %v62 = vld [vmem:[%s2 + $0x8] sm:$0xff]
    %v63 = vld [vmem:[%s2 + $0x10] sm:$0xff]
    %v64 = vld [vmem:[%s2 + $0x18] sm:$0xff]
    %65 = vxpose.xlu0.b32.start [1/16] %v61, 128
    %66 = vxpose.xlu0.b32.cont [2/16] %v62, 128
    %67 = vxpose.xlu0.b32.cont [3/16] %v63, 128
    %68 = vxpose.xlu0.b32.cont [4/16] %v64, 128
    %69 = vxpose.xlu0.b32.cont [5/16] 0.0, 128
    %70 = vxpose.xlu0.b32.cont [6/16] 0.0, 128
    %71 = vxpose.xlu0.b32.cont [7/16] 0.0, 128
    %72 = vxpose.xlu0.b32.cont [8/16] 0.0, 128
    %73 = vxpose.xlu0.b32.cont [9/16] 0.0, 128
    %74 = vxpose.xlu0.b32.cont [10/16] 0.0, 128
    %75 = vxpose.xlu0.b32.cont [11/16] 0.0, 128
    %76 = vxpose.xlu0.b32.cont [12/16] 0.0, 128
    %77 = vxpose.xlu0.b32.cont [13/16] 0.0, 128
    %78 = vxpose.xlu0.b32.cont [14/16] 0.0, 128
    %79 = vxpose.xlu0.b32.cont [15/16] 0.0, 128
    %80 = vxpose.xlu0.b32.end [16/16] 0.0, 128
    %v81 = vpop.trf.xlu0
    %v82 = vpop.trf.xlu0
    %v83 = vpop.trf.xlu0
    %v84 = vpop.trf.xlu0
    %v85 = vpop.trf.xlu0
    %v86 = vpop.trf.xlu0
    %v87 = vpop.trf.xlu0
    %v88 = vpop.trf.xlu0
    %v89 = vpop.trf.xlu0
    %v90 = vpop.trf.xlu0
    %v91 = vpop.trf.xlu0
    %v92 = vpop.trf.xlu0
    %v93 = vpop.trf.xlu0
    %v94 = vpop.trf.xlu0
    %v95 = vpop.trf.xlu0
    %v96 = vpop.trf.xlu0
    %vm97 = vcmask 261120
    %v99 = vsel %vm97, %v81, 0
    %v102 = vsel %vm97, %v29, 0
    %v105 = vsel %vm97, %v30, 0
    %v108 = vsel %vm97, %v31, 0
    %v111 = vsel %vm97, %v32, 0
    %v114 = vsel %vm97, %v33, 0
    %v117 = vsel %vm97, %v34, 0
    %v120 = vsel %vm97, %v35, 0
    %v123 = vsel %vm97, %v36, 0
    %v126 = vsel %vm97, %v37, 0
    %v129 = vsel %vm97, %v38, 0
    %v132 = vsel %vm97, %v39, 0
    %v135 = vsel %vm97, %v40, 0
    %v138 = vsel %vm97, %v41, 0
    %v141 = vsel %vm97, %v42, 0
    %v144 = vsel %vm97, %v43, 0
    %v147 = vsel %vm97, %v44, 0
    %149 = vmatprep.subr.mxu0 0.0
    %150 = vmatpush1.xpose.msra.mxu0 %v147
    %151 = vmatprep.subr.mxu0 0.0
    %152 = vmatpush1.xpose.msra.mxu0 %v144
    %153 = vmatprep.subr.mxu0 0.0
    %154 = vmatpush1.xpose.msra.mxu0 %v141
    %155 = vmatprep.subr.mxu0 0.0
    %156 = vmatpush1.xpose.msra.mxu0 %v138
    %157 = vmatprep.subr.mxu0 0.0
    %158 = vmatpush1.xpose.msra.mxu0 %v135
    %159 = vmatprep.subr.mxu0 0.0
    %160 = vmatpush1.xpose.msra.mxu0 %v132
    %161 = vmatprep.subr.mxu0 0.0
    %162 = vmatpush1.xpose.msra.mxu0 %v129
    %163 = vmatprep.subr.mxu0 0.0
    %164 = vmatpush1.xpose.msra.mxu0 %v126
    %165 = vmatprep.subr.mxu0 0.0
    %166 = vmatpush1.xpose.msra.mxu0 %v123
    %167 = vmatprep.subr.mxu0 0.0
    %168 = vmatpush1.xpose.msra.mxu0 %v120
    %169 = vmatprep.subr.mxu0 0.0
    %170 = vmatpush1.xpose.msra.mxu0 %v117
    %171 = vmatprep.subr.mxu0 0.0
    %172 = vmatpush1.xpose.msra.mxu0 %v114
    %173 = vmatprep.subr.mxu0 0.0
    %174 = vmatpush1.xpose.msra.mxu0 %v111
    %175 = vmatprep.subr.mxu0 0.0
    %176 = vmatpush1.xpose.msra.mxu0 %v108
    %177 = vmatprep.subr.mxu0 0.0
    %178 = vmatpush1.xpose.msra.mxu0 %v105
    %179 = vmatprep.subr.mxu0 0.0
    %180 = vmatpush1.xpose.msra.mxu0 %v102
    %181 = vmatprep.subr.mxu0 0.0
    %182 = vmatpush2.xpose.msra.mxu0 0.0
    %183 = vmatprep.subr.mxu0 0.0
    %184 = vmatpush2.xpose.msra.mxu0 0.0
    %185 = vmatprep.subr.mxu0 0.0
    %186 = vmatpush2.xpose.msra.mxu0 0.0
    %187 = vmatprep.subr.mxu0 0.0
    %188 = vmatpush2.xpose.msra.mxu0 0.0
    %189 = vmatprep.subr.mxu0 0.0
    %190 = vmatpush2.xpose.msra.mxu0 0.0
    %191 = vmatprep.subr.mxu0 0.0
    %192 = vmatpush2.xpose.msra.mxu0 0.0
    %193 = vmatprep.subr.mxu0 0.0
    %194 = vmatpush2.xpose.msra.mxu0 0.0
    %195 = vmatprep.subr.mxu0 0.0
    %196 = vmatpush2.xpose.msra.mxu0 0.0
    %197 = vmatprep.subr.mxu0 0.0
    %198 = vmatpush2.xpose.msra.mxu0 0.0
    %199 = vmatprep.subr.mxu0 0.0
    %200 = vmatpush2.xpose.msra.mxu0 0.0
    %201 = vmatprep.subr.mxu0 0.0
    %202 = vmatpush2.xpose.msra.mxu0 0.0
    %203 = vmatprep.subr.mxu0 0.0
    %204 = vmatpush2.xpose.msra.mxu0 0.0
    %205 = vmatprep.subr.mxu0 0.0
    %206 = vmatpush2.xpose.msra.mxu0 0.0
    %207 = vmatprep.subr.mxu0 0.0
    %208 = vmatpush2.xpose.msra.mxu0 0.0
    %209 = vmatprep.subr.mxu0 0.0
    %210 = vmatpush2.xpose.msra.mxu0 0.0
    %211 = vmatprep.subr.mxu0 0.0
    %212 = vmatpush2.xpose.msra.mxu0 0.0
    %213 = vmatprep.mubr.f32.mxu0 0.0
    %214 = vmatmul.mubr.f32.gmra.mxu0 %v99
    %v215 = vpop.f32.mrf.mxu0
    %v216 = vadd.f32 0.0, %v215
    %v217 = vpop.f32.mrf.mxu0
    %218 = vdwg.mxu0
    %v220 = vsel %vm97, %v45, 0
    %v223 = vsel %vm97, %v46, 0
    %v226 = vsel %vm97, %v47, 0
    %v229 = vsel %vm97, %v48, 0
    %v232 = vsel %vm97, %v49, 0
    %v235 = vsel %vm97, %v50, 0
    %v238 = vsel %vm97, %v51, 0
    %v241 = vsel %vm97, %v52, 0
    %v244 = vsel %vm97, %v53, 0
    %v247 = vsel %vm97, %v54, 0
    %v250 = vsel %vm97, %v55, 0
    %v253 = vsel %vm97, %v56, 0
    %v256 = vsel %vm97, %v57, 0
    %v259 = vsel %vm97, %v58, 0
    %v262 = vsel %vm97, %v59, 0
    %v265 = vsel %vm97, %v60, 0
    %267 = vmatprep.subr.mxu0 0.0
    %268 = vmatpush1.xpose.msra.mxu0 %v265
    %269 = vmatprep.subr.mxu0 0.0
    %270 = vmatpush1.xpose.msra.mxu0 %v262
    %271 = vmatprep.subr.mxu0 0.0
    %272 = vmatpush1.xpose.msra.mxu0 %v259
    %273 = vmatprep.subr.mxu0 0.0
    %274 = vmatpush1.xpose.msra.mxu0 %v256
    %275 = vmatprep.subr.mxu0 0.0
    %276 = vmatpush1.xpose.msra.mxu0 %v253
    %277 = vmatprep.subr.mxu0 0.0
    %278 = vmatpush1.xpose.msra.mxu0 %v250
    %279 = vmatprep.subr.mxu0 0.0
    %280 = vmatpush1.xpose.msra.mxu0 %v247
    %281 = vmatprep.subr.mxu0 0.0
    %282 = vmatpush1.xpose.msra.mxu0 %v244
    %283 = vmatprep.subr.mxu0 0.0
    %284 = vmatpush1.xpose.msra.mxu0 %v241
    %285 = vmatprep.subr.mxu0 0.0
    %286 = vmatpush1.xpose.msra.mxu0 %v238
    %287 = vmatprep.subr.mxu0 0.0
    %288 = vmatpush1.xpose.msra.mxu0 %v235
    %289 = vmatprep.subr.mxu0 0.0
    %290 = vmatpush1.xpose.msra.mxu0 %v232
    %291 = vmatprep.subr.mxu0 0.0
    %292 = vmatpush1.xpose.msra.mxu0 %v229
    %293 = vmatprep.subr.mxu0 0.0
    %294 = vmatpush1.xpose.msra.mxu0 %v226
    %295 = vmatprep.subr.mxu0 0.0
    %296 = vmatpush1.xpose.msra.mxu0 %v223
    %297 = vmatprep.subr.mxu0 0.0
    %298 = vmatpush1.xpose.msra.mxu0 %v220
    %299 = vmatprep.subr.mxu0 0.0
    %300 = vmatpush2.xpose.msra.mxu0 0.0
    %301 = vmatprep.subr.mxu0 0.0
    %302 = vmatpush2.xpose.msra.mxu0 0.0
    %303 = vmatprep.subr.mxu0 0.0
    %304 = vmatpush2.xpose.msra.mxu0 0.0
    %305 = vmatprep.subr.mxu0 0.0
    %306 = vmatpush2.xpose.msra.mxu0 0.0
    %307 = vmatprep.subr.mxu0 0.0
    %308 = vmatpush2.xpose.msra.mxu0 0.0
    %309 = vmatprep.subr.mxu0 0.0
    %310 = vmatpush2.xpose.msra.mxu0 0.0
    %311 = vmatprep.subr.mxu0 0.0
    %312 = vmatpush2.xpose.msra.mxu0 0.0
    %313 = vmatprep.subr.mxu0 0.0
    %314 = vmatpush2.xpose.msra.mxu0 0.0
    %315 = vmatprep.subr.mxu0 0.0
    %316 = vmatpush2.xpose.msra.mxu0 0.0
    %317 = vmatprep.subr.mxu0 0.0
    %318 = vmatpush2.xpose.msra.mxu0 0.0
    %319 = vmatprep.subr.mxu0 0.0
    %320 = vmatpush2.xpose.msra.mxu0 0.0
    %321 = vmatprep.subr.mxu0 0.0
    %322 = vmatpush2.xpose.msra.mxu0 0.0
    %323 = vmatprep.subr.mxu0 0.0
    %324 = vmatpush2.xpose.msra.mxu0 0.0
    %325 = vmatprep.subr.mxu0 0.0
    %326 = vmatpush2.xpose.msra.mxu0 0.0
    %327 = vmatprep.subr.mxu0 0.0
    %328 = vmatpush2.xpose.msra.mxu0 0.0
    %329 = vmatprep.subr.mxu0 0.0
    %330 = vmatpush2.xpose.msra.mxu0 0.0
    %331 = vmatprep.mubr.f32.mxu0 0.0
    %332 = vmatmul.mubr.f32.gmra.mxu0 %v102
    %v333 = vpop.f32.mrf.mxu0
    %v334 = vadd.f32 0.0, %v333
    %v335 = vpop.f32.mrf.mxu0
    %336 = vmatprep.mubr.f32.mxu0 0.0
    %337 = vmatmul.mubr.f32.gmra.mxu0 %v105
    %v338 = vpop.f32.mrf.mxu0
    %v339 = vadd.f32 0.0, %v338
    %v340 = vpop.f32.mrf.mxu0
    %341 = vmatprep.mubr.f32.mxu0 0.0
    %342 = vmatmul.mubr.f32.gmra.mxu0 %v108
    %v343 = vpop.f32.mrf.mxu0
    %v344 = vadd.f32 0.0, %v343
    %v345 = vpop.f32.mrf.mxu0
    %346 = vmatprep.mubr.f32.mxu0 0.0
    %347 = vmatmul.mubr.f32.gmra.mxu0 %v111
    %v348 = vpop.f32.mrf.mxu0
    %v349 = vadd.f32 0.0, %v348
    %v350 = vpop.f32.mrf.mxu0
    %351 = vmatprep.mubr.f32.mxu0 0.0
    %352 = vmatmul.mubr.f32.gmra.mxu0 %v114
    %v353 = vpop.f32.mrf.mxu0
    %v354 = vadd.f32 0.0, %v353
    %v355 = vpop.f32.mrf.mxu0
    %356 = vmatprep.mubr.f32.mxu0 0.0
    %357 = vmatmul.mubr.f32.gmra.mxu0 %v117
    %v358 = vpop.f32.mrf.mxu0
    %v359 = vadd.f32 0.0, %v358
    %v360 = vpop.f32.mrf.mxu0
    %361 = vmatprep.mubr.f32.mxu0 0.0
    %362 = vmatmul.mubr.f32.gmra.mxu0 %v120
    %v363 = vpop.f32.mrf.mxu0
    %v364 = vadd.f32 0.0, %v363
    %v365 = vpop.f32.mrf.mxu0
    %366 = vmatprep.mubr.f32.mxu0 0.0
    %367 = vmatmul.mubr.f32.gmra.mxu0 %v123
    %v368 = vpop.f32.mrf.mxu0
    %v369 = vadd.f32 0.0, %v368
    %v370 = vpop.f32.mrf.mxu0
    %371 = vmatprep.mubr.f32.mxu0 0.0
    %372 = vmatmul.mubr.f32.gmra.mxu0 %v126
    %v373 = vpop.f32.mrf.mxu0
    %v374 = vadd.f32 0.0, %v373
    %v375 = vpop.f32.mrf.mxu0
    %376 = vmatprep.mubr.f32.mxu0 0.0
    %377 = vmatmul.mubr.f32.gmra.mxu0 %v129
    %v378 = vpop.f32.mrf.mxu0
    %v379 = vadd.f32 0.0, %v378
    %v380 = vpop.f32.mrf.mxu0
    %381 = vmatprep.mubr.f32.mxu0 0.0
    %382 = vmatmul.mubr.f32.gmra.mxu0 %v132
    %v383 = vpop.f32.mrf.mxu0
    %v384 = vadd.f32 0.0, %v383
    %v385 = vpop.f32.mrf.mxu0
    %386 = vmatprep.mubr.f32.mxu0 0.0
    %387 = vmatmul.mubr.f32.gmra.mxu0 %v135
    %v388 = vpop.f32.mrf.mxu0
    %v389 = vadd.f32 0.0, %v388
    %v390 = vpop.f32.mrf.mxu0
    %391 = vmatprep.mubr.f32.mxu0 0.0
    %392 = vmatmul.mubr.f32.gmra.mxu0 %v138
    %v393 = vpop.f32.mrf.mxu0
    %v394 = vadd.f32 0.0, %v393
    %v395 = vpop.f32.mrf.mxu0
    %396 = vmatprep.mubr.f32.mxu0 0.0
    %397 = vmatmul.mubr.f32.gmra.mxu0 %v141
    %v398 = vpop.f32.mrf.mxu0
    %v399 = vadd.f32 0.0, %v398
    %v400 = vpop.f32.mrf.mxu0
    %401 = vmatprep.mubr.f32.mxu0 0.0
    %402 = vmatmul.mubr.f32.gmra.mxu0 %v144
    %v403 = vpop.f32.mrf.mxu0
    %v404 = vadd.f32 0.0, %v403
    %v405 = vpop.f32.mrf.mxu0
    %406 = vmatprep.mubr.f32.mxu0 0.0
    %407 = vmatmul.mubr.f32.gmra.mxu0 %v147
    %v408 = vpop.f32.mrf.mxu0
    %v409 = vadd.f32 0.0, %v408
    %v410 = vpop.f32.mrf.mxu0
    %411 = vdwg.mxu0
    %s412 = smul.u32 0, 128
    %v413 = vld [vmem:[%s3] sm:$0xff]
    %v414 = vld [vmem:[%s3 + $0x8] sm:$0xff]
    %v415 = vld [vmem:[%s3 + $0x10] sm:$0xff]
    %v416 = vld [vmem:[%s3 + $0x18] sm:$0xff]
    %v417 = vld [vmem:[%s3 + $0x20] sm:$0xff]
    %v418 = vld [vmem:[%s3 + $0x28] sm:$0xff]
    %v419 = vld [vmem:[%s3 + $0x30] sm:$0xff]
    %v420 = vld [vmem:[%s3 + $0x38] sm:$0xff]
    %v421 = vld [vmem:[%s3 + $0x40] sm:$0xff]
    %v422 = vld [vmem:[%s3 + $0x48] sm:$0xff]
    %v423 = vld [vmem:[%s3 + $0x50] sm:$0xff]
    %v424 = vld [vmem:[%s3 + $0x58] sm:$0xff]
    %v425 = vld [vmem:[%s3 + $0x60] sm:$0xff]
    %v426 = vld [vmem:[%s3 + $0x68] sm:$0xff]
    %v427 = vld [vmem:[%s3 + $0x70] sm:$0xff]
    %v428 = vld [vmem:[%s3 + $0x78] sm:$0xff]
    %v429 = vld [vmem:[%s4] sm:$0x1]
    %v430 = vlaneseq
    %v431 = vshrl.u32 %v430, 7
    %v432 = vadd.s32 %v431, 8
    %v433 = vadd.s32 %v431, 16
    %v434 = vadd.s32 %v431, 24
    %v435 = vadd.s32 %v431, 32
    %v436 = vadd.s32 %v431, 40
    %v437 = vadd.s32 %v431, 48
    %v438 = vadd.s32 %v431, 56
    %v439 = vadd.s32 %v431, 64
    %v440 = vadd.s32 %v431, 72
    %v441 = vadd.s32 %v431, 80
    %v442 = vadd.s32 %v431, 88
    %v443 = vadd.s32 %v431, 96
    %v444 = vadd.s32 %v431, 104
    %v445 = vadd.s32 %v431, 112
    %v446 = vadd.s32 %v431, 120
    %v447 = vstv %s412
    %v448 = vadd.s32 %v447, %v431
    %v449 = vadd.s32 %v447, %v432
    %v450 = vadd.s32 %v447, %v433
    %v451 = vadd.s32 %v447, %v434
    %v452 = vadd.s32 %v447, %v435
    %v453 = vadd.s32 %v447, %v436
    %v454 = vadd.s32 %v447, %v437
    %v455 = vadd.s32 %v447, %v438
    %v456 = vadd.s32 %v447, %v439
    %v457 = vadd.s32 %v447, %v440
    %v458 = vadd.s32 %v447, %v441
    %v459 = vadd.s32 %v447, %v442
    %v460 = vadd.s32 %v447, %v443
    %v461 = vadd.s32 %v447, %v444
    %v462 = vadd.s32 %v447, %v445
    %v463 = vadd.s32 %v447, %v446
    %v464 = vlaneseq
    %v465 = vand.u32 %v464, 127
    %vm466 = vcmp.lt.s32.totalorder %v465, 16
    %vm467 = vcmp.ne.s32.totalorder %v448, %v465
    %vm468 = vcmp.ne.s32.totalorder %v449, %v465
    %vm469 = vcmp.ne.s32.totalorder %v450, %v465
    %vm470 = vcmp.ne.s32.totalorder %v451, %v465
    %vm471 = vcmp.ne.s32.totalorder %v452, %v465
    %vm472 = vcmp.ne.s32.totalorder %v453, %v465
    %vm473 = vcmp.ne.s32.totalorder %v454, %v465
    %vm474 = vcmp.ne.s32.totalorder %v455, %v465
    %vm475 = vcmp.ne.s32.totalorder %v456, %v465
    %vm476 = vcmp.ne.s32.totalorder %v457, %v465
    %vm477 = vcmp.ne.s32.totalorder %v458, %v465
    %vm478 = vcmp.ne.s32.totalorder %v459, %v465
    %vm479 = vcmp.ne.s32.totalorder %v460, %v465
    %vm480 = vcmp.ne.s32.totalorder %v461, %v465
    %vm481 = vcmp.ne.s32.totalorder %v462, %v465
    %vm482 = vcmp.ne.s32.totalorder %v463, %v465
    %vm483 = vmand %vm467, %vm466
    %vm484 = vmand %vm468, %vm466
    %vm485 = vmand %vm469, %vm466
    %vm486 = vmand %vm470, %vm466
    %vm487 = vmand %vm471, %vm466
    %vm488 = vmand %vm472, %vm466
    %vm489 = vmand %vm473, %vm466
    %vm490 = vmand %vm474, %vm466
    %vm491 = vmand %vm475, %vm466
    %vm492 = vmand %vm476, %vm466
    %vm493 = vmand %vm477, %vm466
    %vm494 = vmand %vm478, %vm466
    %vm495 = vmand %vm479, %vm466
    %vm496 = vmand %vm480, %vm466
    %vm497 = vmand %vm481, %vm466
    %vm498 = vmand %vm482, %vm466
    %v499 = vsel %vm483, 1.0, 0.0
    %v500 = vsel %vm484, 1.0, 0.0
    %v501 = vsel %vm485, 1.0, 0.0
    %v502 = vsel %vm486, 1.0, 0.0
    %v503 = vsel %vm487, 1.0, 0.0
    %v504 = vsel %vm488, 1.0, 0.0
    %v505 = vsel %vm489, 1.0, 0.0
    %v506 = vsel %vm490, 1.0, 0.0
    %v507 = vsel %vm491, 1.0, 0.0
    %v508 = vsel %vm492, 1.0, 0.0
    %v509 = vsel %vm493, 1.0, 0.0
    %v510 = vsel %vm494, 1.0, 0.0
    %v511 = vsel %vm495, 1.0, 0.0
    %v512 = vsel %vm496, 1.0, 0.0
    %v513 = vsel %vm497, 1.0, 0.0
    %v514 = vsel %vm498, 1.0, 0.0
    %515 = vset.pattern.permute.xlu0 0
    %516 = vperm.xlu0 %515, %v413
    %v517 = vpop.permute.xlu0 %516
    %518 = vset.pattern.permute.xlu0 0
    %519 = vperm.xlu0 %518, %v414
    %v520 = vpop.permute.xlu0 %519
    %521 = vset.pattern.permute.xlu0 0
    %522 = vperm.xlu0 %521, %v415
    %v523 = vpop.permute.xlu0 %522
    %524 = vset.pattern.permute.xlu0 0
    %525 = vperm.xlu0 %524, %v416
    %v526 = vpop.permute.xlu0 %525
    %527 = vset.pattern.permute.xlu0 0
    %528 = vperm.xlu0 %527, %v417
    %v529 = vpop.permute.xlu0 %528
    %530 = vset.pattern.permute.xlu0 0
    %531 = vperm.xlu0 %530, %v418
    %v532 = vpop.permute.xlu0 %531
    %533 = vset.pattern.permute.xlu0 0
    %534 = vperm.xlu0 %533, %v419
    %v535 = vpop.permute.xlu0 %534
    %536 = vset.pattern.permute.xlu0 0
    %537 = vperm.xlu0 %536, %v420
    %v538 = vpop.permute.xlu0 %537
    %539 = vset.pattern.permute.xlu0 0
    %540 = vperm.xlu0 %539, %v421
    %v541 = vpop.permute.xlu0 %540
    %542 = vset.pattern.permute.xlu0 0
    %543 = vperm.xlu0 %542, %v422
    %v544 = vpop.permute.xlu0 %543
    %545 = vset.pattern.permute.xlu0 0
    %546 = vperm.xlu0 %545, %v423
    %v547 = vpop.permute.xlu0 %546
    %548 = vset.pattern.permute.xlu0 0
    %549 = vperm.xlu0 %548, %v424
    %v550 = vpop.permute.xlu0 %549
    %551 = vset.pattern.permute.xlu0 0
    %552 = vperm.xlu0 %551, %v425
    %v553 = vpop.permute.xlu0 %552
    %554 = vset.pattern.permute.xlu0 0
    %555 = vperm.xlu0 %554, %v426
    %v556 = vpop.permute.xlu0 %555
    %557 = vset.pattern.permute.xlu0 0
    %558 = vperm.xlu0 %557, %v427
    %v559 = vpop.permute.xlu0 %558
    %560 = vset.pattern.permute.xlu0 0
    %561 = vperm.xlu0 %560, %v428
    %v562 = vpop.permute.xlu0 %561
    %v563 = vlaneseq
    %v564 = vshrl.u32 %v563, 7
    %v565 = vsub.s32 0, %v564
    %v566 = vrot.slane %v429, %v565
    %vm567 = vcmp.eq.s32.totalorder %v517, %v566
    %vm568 = vcmp.eq.s32.totalorder %v520, %v566
    %vm569 = vcmp.eq.s32.totalorder %v523, %v566
    %vm570 = vcmp.eq.s32.totalorder %v526, %v566
    %vm571 = vcmp.eq.s32.totalorder %v529, %v566
    %vm572 = vcmp.eq.s32.totalorder %v532, %v566
    %vm573 = vcmp.eq.s32.totalorder %v535, %v566
    %vm574 = vcmp.eq.s32.totalorder %v538, %v566
    %vm575 = vcmp.eq.s32.totalorder %v541, %v566
    %vm576 = vcmp.eq.s32.totalorder %v544, %v566
    %vm577 = vcmp.eq.s32.totalorder %v547, %v566
    %vm578 = vcmp.eq.s32.totalorder %v550, %v566
    %vm579 = vcmp.eq.s32.totalorder %v553, %v566
    %vm580 = vcmp.eq.s32.totalorder %v556, %v566
    %vm581 = vcmp.eq.s32.totalorder %v559, %v566
    %vm582 = vcmp.eq.s32.totalorder %v562, %v566
    %v583 = vsel %vm567, 1.0, 0.0
    %v584 = vsel %vm568, 1.0, 0.0
    %v585 = vsel %vm569, 1.0, 0.0
    %v586 = vsel %vm570, 1.0, 0.0
    %v587 = vsel %vm571, 1.0, 0.0
    %v588 = vsel %vm572, 1.0, 0.0
    %v589 = vsel %vm573, 1.0, 0.0
    %v590 = vsel %vm574, 1.0, 0.0
    %v591 = vsel %vm575, 1.0, 0.0
    %v592 = vsel %vm576, 1.0, 0.0
    %v593 = vsel %vm577, 1.0, 0.0
    %v594 = vsel %vm578, 1.0, 0.0
    %v595 = vsel %vm579, 1.0, 0.0
    %v596 = vsel %vm580, 1.0, 0.0
    %v597 = vsel %vm581, 1.0, 0.0
    %v598 = vsel %vm582, 1.0, 0.0
    %v599 = vmul.f32 %v583, %v499
    %v600 = vmul.f32 %v584, %v500
    %v601 = vmul.f32 %v585, %v501
    %v602 = vmul.f32 %v586, %v502
    %v603 = vmul.f32 %v587, %v503
    %v604 = vmul.f32 %v588, %v504
    %v605 = vmul.f32 %v589, %v505
    %v606 = vmul.f32 %v590, %v506
    %v607 = vmul.f32 %v591, %v507
    %v608 = vmul.f32 %v592, %v508
    %v609 = vmul.f32 %v593, %v509
    %v610 = vmul.f32 %v594, %v510
    %v611 = vmul.f32 %v595, %v511
    %v612 = vmul.f32 %v596, %v512
    %v613 = vmul.f32 %v597, %v513
    %v614 = vmul.f32 %v598, %v514
    %v615 = vmul.f32 %v216, 2.0
    %v616 = vadd.f32 %v615, 1e-18
    %v617 = vrot.slane %v616, 4
    %v618 = vmax.f32 %v616, %v617
    %v619 = vrot.slane %v618, 2
    %v620 = vmax.f32 %v618, %v619
    %v621 = vrot.slane %v620, 1
    %v622 = vmax.f32 %v620, %v621
    %v623 = vsub.f32 %v616, %v622
    %v624 = vmul.f32 %v623, 1.442695
    %v625 = vpow.pop %v624
    %v626 = vrot.slane %v625, 4
    %v627 = vadd.f32 %v625, %v626
    %v628 = vrot.slane %v627, 2
    %v629 = vadd.f32 %v627, %v628
    %v630 = vrot.slane %v629, 1
    %v631 = vadd.f32 %v629, %v630
    %v632 = vlog2.pop %v631
    %v633 = vmul.f32 %v632, 0.6931472
    %v634 = vsub.f32 %v623, %v633
    %v635 = vmul.f32 %v634, 1.442695
    %v636 = vpow.pop %v635
    %v637 = vmul.f32 %v636, %v634
    %v638 = vrot.slane %v637, 4
    %v639 = vadd.f32 %v637, %v638
    %v640 = vrot.slane %v639, 2
    %v641 = vadd.f32 %v639, %v640
    %v642 = vrot.slane %v641, 1
    %v643 = vadd.f32 %v641, %v642
    %v644 = vadd.s32 %v447, %v465
    %vm645 = vcmp.lt.s32.totalorder %v644, 16
    %v646 = vsel %vm645, 1, 0
    %v647 = vcvt.s32.f32 %v646
    %v648 = vmul.f32 %v643, %v647
    %vm649 = vcmask 1040384
    %v650 = vsel %vm649, %v648, 0.0
    %651 = vadd.xlane.f32.xlu0 %v650
    %v652 = vpop.xlane.xlu0 %651
    %v653 = vrot.slane %v652, 4
    %v654 = vadd.f32 %v652, %v653
    %v655 = vrot.slane %v654, 2
    %v656 = vadd.f32 %v654, %v655
    %v657 = vrot.slane %v656, 1
    %v658 = vadd.f32 %v656, %v657
    %s659 = vtos %v658
    %v660 = vlaneseq
    %v661 = vshrl.u32 %v660, 7
    %v662 = vsub.s32 0, %v661
    %v663 = vrot.slane %v216, %v662
    %665 = vbcast.lane.b32.xlu0 %v663, 256
    %v666 = vpop.permute.xlu0 %665
    %s668 = sor.u32 256, 8
    %669 = vbcast.lane.b32.xlu0 %v663, %s668
    %v670 = vpop.permute.xlu0 %669
    %s672 = sor.u32 256, 16
    %673 = vbcast.lane.b32.xlu0 %v663, %s672
    %v674 = vpop.permute.xlu0 %673
    %s676 = sor.u32 256, 24
    %677 = vbcast.lane.b32.xlu0 %v663, %s676
    %v678 = vpop.permute.xlu0 %677
    %s680 = sor.u32 256, 32
    %681 = vbcast.lane.b32.xlu0 %v663, %s680
    %v682 = vpop.permute.xlu0 %681
    %s684 = sor.u32 256, 40
    %685 = vbcast.lane.b32.xlu0 %v663, %s684
    %v686 = vpop.permute.xlu0 %685
    %s688 = sor.u32 256, 48
    %689 = vbcast.lane.b32.xlu0 %v663, %s688
    %v690 = vpop.permute.xlu0 %689
    %s692 = sor.u32 256, 56
    %693 = vbcast.lane.b32.xlu0 %v663, %s692
    %v694 = vpop.permute.xlu0 %693
    %s696 = sor.u32 256, 64
    %697 = vbcast.lane.b32.xlu0 %v663, %s696
    %v698 = vpop.permute.xlu0 %697
    %s700 = sor.u32 256, 72
    %701 = vbcast.lane.b32.xlu0 %v663, %s700
    %v702 = vpop.permute.xlu0 %701
    %s704 = sor.u32 256, 80
    %705 = vbcast.lane.b32.xlu0 %v663, %s704
    %v706 = vpop.permute.xlu0 %705
    %s708 = sor.u32 256, 88
    %709 = vbcast.lane.b32.xlu0 %v663, %s708
    %v710 = vpop.permute.xlu0 %709
    %s712 = sor.u32 256, 96
    %713 = vbcast.lane.b32.xlu0 %v663, %s712
    %v714 = vpop.permute.xlu0 %713
    %s716 = sor.u32 256, 104
    %717 = vbcast.lane.b32.xlu0 %v663, %s716
    %v718 = vpop.permute.xlu0 %717
    %s720 = sor.u32 256, 112
    %721 = vbcast.lane.b32.xlu0 %v663, %s720
    %v722 = vpop.permute.xlu0 %721
    %s724 = sor.u32 256, 120
    %725 = vbcast.lane.b32.xlu0 %v663, %s724
    %v726 = vpop.permute.xlu0 %725
    %v727 = vlaneseq
    %v728 = vshrl.u32 %v727, 7
    %v729 = vsub.s32 1, %v728
    %v730 = vrot.slane %v216, %v729
    %732 = vbcast.lane.b32.xlu0 %v730, 256
    %v733 = vpop.permute.xlu0 %732
    %s735 = sor.u32 256, 8
    %736 = vbcast.lane.b32.xlu0 %v730, %s735
    %v737 = vpop.permute.xlu0 %736
    %s739 = sor.u32 256, 16
    %740 = vbcast.lane.b32.xlu0 %v730, %s739
    %v741 = vpop.permute.xlu0 %740
    %s743 = sor.u32 256, 24
    %744 = vbcast.lane.b32.xlu0 %v730, %s743
    %v745 = vpop.permute.xlu0 %744
    %s747 = sor.u32 256, 32
    %748 = vbcast.lane.b32.xlu0 %v730, %s747
    %v749 = vpop.permute.xlu0 %748
    %s751 = sor.u32 256, 40
    %752 = vbcast.lane.b32.xlu0 %v730, %s751
    %v753 = vpop.permute.xlu0 %752
    %s755 = sor.u32 256, 48
    %756 = vbcast.lane.b32.xlu0 %v730, %s755
    %v757 = vpop.permute.xlu0 %756
    %s759 = sor.u32 256, 56
    %760 = vbcast.lane.b32.xlu0 %v730, %s759
    %v761 = vpop.permute.xlu0 %760
    %s763 = sor.u32 256, 64
    %764 = vbcast.lane.b32.xlu0 %v730, %s763
    %v765 = vpop.permute.xlu0 %764
    %s767 = sor.u32 256, 72
    %768 = vbcast.lane.b32.xlu0 %v730, %s767
    %v769 = vpop.permute.xlu0 %768
    %s771 = sor.u32 256, 80
    %772 = vbcast.lane.b32.xlu0 %v730, %s771
    %v773 = vpop.permute.xlu0 %772
    %s775 = sor.u32 256, 88
    %776 = vbcast.lane.b32.xlu0 %v730, %s775
    %v777 = vpop.permute.xlu0 %776
    %s779 = sor.u32 256, 96
    %780 = vbcast.lane.b32.xlu0 %v730, %s779
    %v781 = vpop.permute.xlu0 %780
    %s783 = sor.u32 256, 104
    %784 = vbcast.lane.b32.xlu0 %v730, %s783
    %v785 = vpop.permute.xlu0 %784
    %s787 = sor.u32 256, 112
    %788 = vbcast.lane.b32.xlu0 %v730, %s787
    %v789 = vpop.permute.xlu0 %788
    %s791 = sor.u32 256, 120
    %792 = vbcast.lane.b32.xlu0 %v730, %s791
    %v793 = vpop.permute.xlu0 %792
    %v794 = vlaneseq
    %v795 = vshrl.u32 %v794, 7
    %v796 = vsub.s32 2, %v795
    %v797 = vrot.slane %v216, %v796
    %799 = vbcast.lane.b32.xlu0 %v797, 256
    %v800 = vpop.permute.xlu0 %799
    %s802 = sor.u32 256, 8
    %803 = vbcast.lane.b32.xlu0 %v797, %s802
    %v804 = vpop.permute.xlu0 %803
    %s806 = sor.u32 256, 16
    %807 = vbcast.lane.b32.xlu0 %v797, %s806
    %v808 = vpop.permute.xlu0 %807
    %s810 = sor.u32 256, 24
    %811 = vbcast.lane.b32.xlu0 %v797, %s810
    %v812 = vpop.permute.xlu0 %811
    %s814 = sor.u32 256, 32
    %815 = vbcast.lane.b32.xlu0 %v797, %s814
    %v816 = vpop.permute.xlu0 %815
    %s818 = sor.u32 256, 40
    %819 = vbcast.lane.b32.xlu0 %v797, %s818
    %v820 = vpop.permute.xlu0 %819
    %s822 = sor.u32 256, 48
    %823 = vbcast.lane.b32.xlu0 %v797, %s822
    %v824 = vpop.permute.xlu0 %823
    %s826 = sor.u32 256, 56
    %827 = vbcast.lane.b32.xlu0 %v797, %s826
    %v828 = vpop.permute.xlu0 %827
    %s830 = sor.u32 256, 64
    %831 = vbcast.lane.b32.xlu0 %v797, %s830
    %v832 = vpop.permute.xlu0 %831
    %s834 = sor.u32 256, 72
    %835 = vbcast.lane.b32.xlu0 %v797, %s834
    %v836 = vpop.permute.xlu0 %835
    %s838 = sor.u32 256, 80
    %839 = vbcast.lane.b32.xlu0 %v797, %s838
    %v840 = vpop.permute.xlu0 %839
    %s842 = sor.u32 256, 88
    %843 = vbcast.lane.b32.xlu0 %v797, %s842
    %v844 = vpop.permute.xlu0 %843
    %s846 = sor.u32 256, 96
    %847 = vbcast.lane.b32.xlu0 %v797, %s846
    %v848 = vpop.permute.xlu0 %847
    %s850 = sor.u32 256, 104
    %851 = vbcast.lane.b32.xlu0 %v797, %s850
    %v852 = vpop.permute.xlu0 %851
    %s854 = sor.u32 256, 112
    %855 = vbcast.lane.b32.xlu0 %v797, %s854
    %v856 = vpop.permute.xlu0 %855
    %s858 = sor.u32 256, 120
    %859 = vbcast.lane.b32.xlu0 %v797, %s858
    %v860 = vpop.permute.xlu0 %859
    %v861 = vlaneseq
    %v862 = vshrl.u32 %v861, 7
    %v863 = vsub.s32 3, %v862
    %v864 = vrot.slane %v216, %v863
    %866 = vbcast.lane.b32.xlu0 %v864, 256
    %v867 = vpop.permute.xlu0 %866
    %s869 = sor.u32 256, 8
    %870 = vbcast.lane.b32.xlu0 %v864, %s869
    %v871 = vpop.permute.xlu0 %870
    %s873 = sor.u32 256, 16
    %874 = vbcast.lane.b32.xlu0 %v864, %s873
    %v875 = vpop.permute.xlu0 %874
    %s877 = sor.u32 256, 24
    %878 = vbcast.lane.b32.xlu0 %v864, %s877
    %v879 = vpop.permute.xlu0 %878
    %s881 = sor.u32 256, 32
    %882 = vbcast.lane.b32.xlu0 %v864, %s881
    %v883 = vpop.permute.xlu0 %882
    %s885 = sor.u32 256, 40
    %886 = vbcast.lane.b32.xlu0 %v864, %s885
    %v887 = vpop.permute.xlu0 %886
    %s889 = sor.u32 256, 48
    %890 = vbcast.lane.b32.xlu0 %v864, %s889
    %v891 = vpop.permute.xlu0 %890
    %s893 = sor.u32 256, 56
    %894 = vbcast.lane.b32.xlu0 %v864, %s893
    %v895 = vpop.permute.xlu0 %894
    %s897 = sor.u32 256, 64
    %898 = vbcast.lane.b32.xlu0 %v864, %s897
    %v899 = vpop.permute.xlu0 %898
    %s901 = sor.u32 256, 72
    %902 = vbcast.lane.b32.xlu0 %v864, %s901
    %v903 = vpop.permute.xlu0 %902
    %s905 = sor.u32 256, 80
    %906 = vbcast.lane.b32.xlu0 %v864, %s905
    %v907 = vpop.permute.xlu0 %906
    %s909 = sor.u32 256, 88
    %910 = vbcast.lane.b32.xlu0 %v864, %s909
    %v911 = vpop.permute.xlu0 %910
    %s913 = sor.u32 256, 96
    %914 = vbcast.lane.b32.xlu0 %v864, %s913
    %v915 = vpop.permute.xlu0 %914
    %s917 = sor.u32 256, 104
    %918 = vbcast.lane.b32.xlu0 %v864, %s917
    %v919 = vpop.permute.xlu0 %918
    %s921 = sor.u32 256, 112
    %922 = vbcast.lane.b32.xlu0 %v864, %s921
    %v923 = vpop.permute.xlu0 %922
    %s925 = sor.u32 256, 120
    %926 = vbcast.lane.b32.xlu0 %v864, %s925
    %v927 = vpop.permute.xlu0 %926
    %v928 = vlaneseq
    %v929 = vshrl.u32 %v928, 7
    %v930 = vsub.s32 4, %v929
    %v931 = vrot.slane %v216, %v930
    %933 = vbcast.lane.b32.xlu0 %v931, 256
    %v934 = vpop.permute.xlu0 %933
    %s936 = sor.u32 256, 8
    %937 = vbcast.lane.b32.xlu0 %v931, %s936
    %v938 = vpop.permute.xlu0 %937
    %s940 = sor.u32 256, 16
    %941 = vbcast.lane.b32.xlu0 %v931, %s940
    %v942 = vpop.permute.xlu0 %941
    %s944 = sor.u32 256, 24
    %945 = vbcast.lane.b32.xlu0 %v931, %s944
    %v946 = vpop.permute.xlu0 %945
    %s948 = sor.u32 256, 32
    %949 = vbcast.lane.b32.xlu0 %v931, %s948
    %v950 = vpop.permute.xlu0 %949
    %s952 = sor.u32 256, 40
    %953 = vbcast.lane.b32.xlu0 %v931, %s952
    %v954 = vpop.permute.xlu0 %953
    %s956 = sor.u32 256, 48
    %957 = vbcast.lane.b32.xlu0 %v931, %s956
    %v958 = vpop.permute.xlu0 %957
    %s960 = sor.u32 256, 56
    %961 = vbcast.lane.b32.xlu0 %v931, %s960
    %v962 = vpop.permute.xlu0 %961
    %s964 = sor.u32 256, 64
    %965 = vbcast.lane.b32.xlu0 %v931, %s964
    %v966 = vpop.permute.xlu0 %965
    %s968 = sor.u32 256, 72
    %969 = vbcast.lane.b32.xlu0 %v931, %s968
    %v970 = vpop.permute.xlu0 %969
    %s972 = sor.u32 256, 80
    %973 = vbcast.lane.b32.xlu0 %v931, %s972
    %v974 = vpop.permute.xlu0 %973
    %s976 = sor.u32 256, 88
    %977 = vbcast.lane.b32.xlu0 %v931, %s976
    %v978 = vpop.permute.xlu0 %977
    %s980 = sor.u32 256, 96
    %981 = vbcast.lane.b32.xlu0 %v931, %s980
    %v982 = vpop.permute.xlu0 %981
    %s984 = sor.u32 256, 104
    %985 = vbcast.lane.b32.xlu0 %v931, %s984
    %v986 = vpop.permute.xlu0 %985
    %s988 = sor.u32 256, 112
    %989 = vbcast.lane.b32.xlu0 %v931, %s988
    %v990 = vpop.permute.xlu0 %989
    %s992 = sor.u32 256, 120
    %993 = vbcast.lane.b32.xlu0 %v931, %s992
    %v994 = vpop.permute.xlu0 %993
    %v995 = vlaneseq
    %v996 = vshrl.u32 %v995, 7
    %v997 = vsub.s32 5, %v996
    %v998 = vrot.slane %v216, %v997
    %1000 = vbcast.lane.b32.xlu0 %v998, 256
    %v1001 = vpop.permute.xlu0 %1000
    %s1003 = sor.u32 256, 8
    %1004 = vbcast.lane.b32.xlu0 %v998, %s1003
    %v1005 = vpop.permute.xlu0 %1004
    %s1007 = sor.u32 256, 16
    %1008 = vbcast.lane.b32.xlu0 %v998, %s1007
    %v1009 = vpop.permute.xlu0 %1008
    %s1011 = sor.u32 256, 24
    %1012 = vbcast.lane.b32.xlu0 %v998, %s1011
    %v1013 = vpop.permute.xlu0 %1012
    %s1015 = sor.u32 256, 32
    %1016 = vbcast.lane.b32.xlu0 %v998, %s1015
    %v1017 = vpop.permute.xlu0 %1016
    %s1019 = sor.u32 256, 40
    %1020 = vbcast.lane.b32.xlu0 %v998, %s1019
    %v1021 = vpop.permute.xlu0 %1020
    %s1023 = sor.u32 256, 48
    %1024 = vbcast.lane.b32.xlu0 %v998, %s1023
    %v1025 = vpop.permute.xlu0 %1024
    %s1027 = sor.u32 256, 56
    %1028 = vbcast.lane.b32.xlu0 %v998, %s1027
    %v1029 = vpop.permute.xlu0 %1028
    %s1031 = sor.u32 256, 64
    %1032 = vbcast.lane.b32.xlu0 %v998, %s1031
    %v1033 = vpop.permute.xlu0 %1032
    %s1035 = sor.u32 256, 72
    %1036 = vbcast.lane.b32.xlu0 %v998, %s1035
    %v1037 = vpop.permute.xlu0 %1036
    %s1039 = sor.u32 256, 80
    %1040 = vbcast.lane.b32.xlu0 %v998, %s1039
    %v1041 = vpop.permute.xlu0 %1040
    %s1043 = sor.u32 256, 88
    %1044 = vbcast.lane.b32.xlu0 %v998, %s1043
    %v1045 = vpop.permute.xlu0 %1044
    %s1047 = sor.u32 256, 96
    %1048 = vbcast.lane.b32.xlu0 %v998, %s1047
    %v1049 = vpop.permute.xlu0 %1048
    %s1051 = sor.u32 256, 104
    %1052 = vbcast.lane.b32.xlu0 %v998, %s1051
    %v1053 = vpop.permute.xlu0 %1052
    %s1055 = sor.u32 256, 112
    %1056 = vbcast.lane.b32.xlu0 %v998, %s1055
    %v1057 = vpop.permute.xlu0 %1056
    %s1059 = sor.u32 256, 120
    %1060 = vbcast.lane.b32.xlu0 %v998, %s1059
    %v1061 = vpop.permute.xlu0 %1060
    %v1062 = vlaneseq
    %v1063 = vshrl.u32 %v1062, 7
    %v1064 = vsub.s32 6, %v1063
    %v1065 = vrot.slane %v216, %v1064
    %1067 = vbcast.lane.b32.xlu0 %v1065, 256
    %v1068 = vpop.permute.xlu0 %1067
    %s1070 = sor.u32 256, 8
    %1071 = vbcast.lane.b32.xlu0 %v1065, %s1070
    %v1072 = vpop.permute.xlu0 %1071
    %s1074 = sor.u32 256, 16
    %1075 = vbcast.lane.b32.xlu0 %v1065, %s1074
    %v1076 = vpop.permute.xlu0 %1075
    %s1078 = sor.u32 256, 24
    %1079 = vbcast.lane.b32.xlu0 %v1065, %s1078
    %v1080 = vpop.permute.xlu0 %1079
    %s1082 = sor.u32 256, 32
    %1083 = vbcast.lane.b32.xlu0 %v1065, %s1082
    %v1084 = vpop.permute.xlu0 %1083
    %s1086 = sor.u32 256, 40
    %1087 = vbcast.lane.b32.xlu0 %v1065, %s1086
    %v1088 = vpop.permute.xlu0 %1087
    %s1090 = sor.u32 256, 48
    %1091 = vbcast.lane.b32.xlu0 %v1065, %s1090
    %v1092 = vpop.permute.xlu0 %1091
    %s1094 = sor.u32 256, 56
    %1095 = vbcast.lane.b32.xlu0 %v1065, %s1094
    %v1096 = vpop.permute.xlu0 %1095
    %s1098 = sor.u32 256, 64
    %1099 = vbcast.lane.b32.xlu0 %v1065, %s1098
    %v1100 = vpop.permute.xlu0 %1099
    %s1102 = sor.u32 256, 72
    %1103 = vbcast.lane.b32.xlu0 %v1065, %s1102
    %v1104 = vpop.permute.xlu0 %1103
    %s1106 = sor.u32 256, 80
    %1107 = vbcast.lane.b32.xlu0 %v1065, %s1106
    %v1108 = vpop.permute.xlu0 %1107
    %s1110 = sor.u32 256, 88
    %1111 = vbcast.lane.b32.xlu0 %v1065, %s1110
    %v1112 = vpop.permute.xlu0 %1111
    %s1114 = sor.u32 256, 96
    %1115 = vbcast.lane.b32.xlu0 %v1065, %s1114
    %v1116 = vpop.permute.xlu0 %1115
    %s1118 = sor.u32 256, 104
    %1119 = vbcast.lane.b32.xlu0 %v1065, %s1118
    %v1120 = vpop.permute.xlu0 %1119
    %s1122 = sor.u32 256, 112
    %1123 = vbcast.lane.b32.xlu0 %v1065, %s1122
    %v1124 = vpop.permute.xlu0 %1123
    %s1126 = sor.u32 256, 120
    %1127 = vbcast.lane.b32.xlu0 %v1065, %s1126
    %v1128 = vpop.permute.xlu0 %1127
    %v1129 = vlaneseq
    %v1130 = vshrl.u32 %v1129, 7
    %v1131 = vsub.s32 7, %v1130
    %v1132 = vrot.slane %v216, %v1131
    %1134 = vbcast.lane.b32.xlu0 %v1132, 256
    %v1135 = vpop.permute.xlu0 %1134
    %s1137 = sor.u32 256, 8
    %1138 = vbcast.lane.b32.xlu0 %v1132, %s1137
    %v1139 = vpop.permute.xlu0 %1138
    %s1141 = sor.u32 256, 16
    %1142 = vbcast.lane.b32.xlu0 %v1132, %s1141
    %v1143 = vpop.permute.xlu0 %1142
    %s1145 = sor.u32 256, 24
    %1146 = vbcast.lane.b32.xlu0 %v1132, %s1145
    %v1147 = vpop.permute.xlu0 %1146
    %s1149 = sor.u32 256, 32
    %1150 = vbcast.lane.b32.xlu0 %v1132, %s1149
    %v1151 = vpop.permute.xlu0 %1150
    %s1153 = sor.u32 256, 40
    %1154 = vbcast.lane.b32.xlu0 %v1132, %s1153
    %v1155 = vpop.permute.xlu0 %1154
    %s1157 = sor.u32 256, 48
    %1158 = vbcast.lane.b32.xlu0 %v1132, %s1157
    %v1159 = vpop.permute.xlu0 %1158
    %s1161 = sor.u32 256, 56
    %1162 = vbcast.lane.b32.xlu0 %v1132, %s1161
    %v1163 = vpop.permute.xlu0 %1162
    %s1165 = sor.u32 256, 64
    %1166 = vbcast.lane.b32.xlu0 %v1132, %s1165
    %v1167 = vpop.permute.xlu0 %1166
    %s1169 = sor.u32 256, 72
    %1170 = vbcast.lane.b32.xlu0 %v1132, %s1169
    %v1171 = vpop.permute.xlu0 %1170
    %s1173 = sor.u32 256, 80
    %1174 = vbcast.lane.b32.xlu0 %v1132, %s1173
    %v1175 = vpop.permute.xlu0 %1174
    %s1177 = sor.u32 256, 88
    %1178 = vbcast.lane.b32.xlu0 %v1132, %s1177
    %v1179 = vpop.permute.xlu0 %1178
    %s1181 = sor.u32 256, 96
    %1182 = vbcast.lane.b32.xlu0 %v1132, %s1181
    %v1183 = vpop.permute.xlu0 %1182
    %s1185 = sor.u32 256, 104
    %1186 = vbcast.lane.b32.xlu0 %v1132, %s1185
    %v1187 = vpop.permute.xlu0 %1186
    %s1189 = sor.u32 256, 112
    %1190 = vbcast.lane.b32.xlu0 %v1132, %s1189
    %v1191 = vpop.permute.xlu0 %1190
    %s1193 = sor.u32 256, 120
    %1194 = vbcast.lane.b32.xlu0 %v1132, %s1193
    %v1195 = vpop.permute.xlu0 %1194
    %v1196 = vsub.f32 %v666, %v334
    %v1197 = vsub.f32 %v670, %v339
    %v1198 = vsub.f32 %v674, %v344
    %v1199 = vsub.f32 %v678, %v349
    %v1200 = vsub.f32 %v682, %v354
    %v1201 = vsub.f32 %v686, %v359
    %v1202 = vsub.f32 %v690, %v364
    %v1203 = vsub.f32 %v694, %v369
    %v1204 = vsub.f32 %v698, %v374
    %v1205 = vsub.f32 %v702, %v379
    %v1206 = vsub.f32 %v706, %v384
    %v1207 = vsub.f32 %v710, %v389
    %v1208 = vsub.f32 %v714, %v394
    %v1209 = vsub.f32 %v718, %v399
    %v1210 = vsub.f32 %v722, %v404
    %v1211 = vsub.f32 %v726, %v409
    %v1212 = vsub.f32 %v733, %v334
    %v1213 = vsub.f32 %v737, %v339
    %v1214 = vsub.f32 %v741, %v344
    %v1215 = vsub.f32 %v745, %v349
    %v1216 = vsub.f32 %v749, %v354
    %v1217 = vsub.f32 %v753, %v359
    %v1218 = vsub.f32 %v757, %v364
    %v1219 = vsub.f32 %v761, %v369
    %v1220 = vsub.f32 %v765, %v374
    %v1221 = vsub.f32 %v769, %v379
    %v1222 = vsub.f32 %v773, %v384
    %v1223 = vsub.f32 %v777, %v389
    %v1224 = vsub.f32 %v781, %v394
    %v1225 = vsub.f32 %v785, %v399
    %v1226 = vsub.f32 %v789, %v404
    %v1227 = vsub.f32 %v793, %v409
    %v1228 = vsub.f32 %v800, %v334
    %v1229 = vsub.f32 %v804, %v339
    %v1230 = vsub.f32 %v808, %v344
    %v1231 = vsub.f32 %v812, %v349
    %v1232 = vsub.f32 %v816, %v354
    %v1233 = vsub.f32 %v820, %v359
    %v1234 = vsub.f32 %v824, %v364
    %v1235 = vsub.f32 %v828, %v369
    %v1236 = vsub.f32 %v832, %v374
    %v1237 = vsub.f32 %v836, %v379
    %v1238 = vsub.f32 %v840, %v384
    %v1239 = vsub.f32 %v844, %v389
    %v1240 = vsub.f32 %v848, %v394
    %v1241 = vsub.f32 %v852, %v399
    %v1242 = vsub.f32 %v856, %v404
    %v1243 = vsub.f32 %v860, %v409
    %v1244 = vsub.f32 %v867, %v334
    %v1245 = vsub.f32 %v871, %v339
    %v1246 = vsub.f32 %v875, %v344
    %v1247 = vsub.f32 %v879, %v349
    %v1248 = vsub.f32 %v883, %v354
    %v1249 = vsub.f32 %v887, %v359
    %v1250 = vsub.f32 %v891, %v364
    %v1251 = vsub.f32 %v895, %v369
    %v1252 = vsub.f32 %v899, %v374
    %v1253 = vsub.f32 %v903, %v379
    %v1254 = vsub.f32 %v907, %v384
    %v1255 = vsub.f32 %v911, %v389
    %v1256 = vsub.f32 %v915, %v394
    %v1257 = vsub.f32 %v919, %v399
    %v1258 = vsub.f32 %v923, %v404
    %v1259 = vsub.f32 %v927, %v409
    %v1260 = vsub.f32 %v934, %v334
    %v1261 = vsub.f32 %v938, %v339
    %v1262 = vsub.f32 %v942, %v344
    %v1263 = vsub.f32 %v946, %v349
    %v1264 = vsub.f32 %v950, %v354
    %v1265 = vsub.f32 %v954, %v359
    %v1266 = vsub.f32 %v958, %v364
    %v1267 = vsub.f32 %v962, %v369
    %v1268 = vsub.f32 %v966, %v374
    %v1269 = vsub.f32 %v970, %v379
    %v1270 = vsub.f32 %v974, %v384
    %v1271 = vsub.f32 %v978, %v389
    %v1272 = vsub.f32 %v982, %v394
    %v1273 = vsub.f32 %v986, %v399
    %v1274 = vsub.f32 %v990, %v404
    %v1275 = vsub.f32 %v994, %v409
    %v1276 = vsub.f32 %v1001, %v334
    %v1277 = vsub.f32 %v1005, %v339
    %v1278 = vsub.f32 %v1009, %v344
    %v1279 = vsub.f32 %v1013, %v349
    %v1280 = vsub.f32 %v1017, %v354
    %v1281 = vsub.f32 %v1021, %v359
    %v1282 = vsub.f32 %v1025, %v364
    %v1283 = vsub.f32 %v1029, %v369
    %v1284 = vsub.f32 %v1033, %v374
    %v1285 = vsub.f32 %v1037, %v379
    %v1286 = vsub.f32 %v1041, %v384
    %v1287 = vsub.f32 %v1045, %v389
    %v1288 = vsub.f32 %v1049, %v394
    %v1289 = vsub.f32 %v1053, %v399
    %v1290 = vsub.f32 %v1057, %v404
    %v1291 = vsub.f32 %v1061, %v409
    %v1292 = vsub.f32 %v1068, %v334
    %v1293 = vsub.f32 %v1072, %v339
    %v1294 = vsub.f32 %v1076, %v344
    %v1295 = vsub.f32 %v1080, %v349
    %v1296 = vsub.f32 %v1084, %v354
    %v1297 = vsub.f32 %v1088, %v359
    %v1298 = vsub.f32 %v1092, %v364
    %v1299 = vsub.f32 %v1096, %v369
    %v1300 = vsub.f32 %v1100, %v374
    %v1301 = vsub.f32 %v1104, %v379
    %v1302 = vsub.f32 %v1108, %v384
    %v1303 = vsub.f32 %v1112, %v389
    %v1304 = vsub.f32 %v1116, %v394
    %v1305 = vsub.f32 %v1120, %v399
    %v1306 = vsub.f32 %v1124, %v404
    %v1307 = vsub.f32 %v1128, %v409
    %v1308 = vsub.f32 %v1135, %v334
    %v1309 = vsub.f32 %v1139, %v339
    %v1310 = vsub.f32 %v1143, %v344
    %v1311 = vsub.f32 %v1147, %v349
    %v1312 = vsub.f32 %v1151, %v354
    %v1313 = vsub.f32 %v1155, %v359
    %v1314 = vsub.f32 %v1159, %v364
    %v1315 = vsub.f32 %v1163, %v369
    %v1316 = vsub.f32 %v1167, %v374
    %v1317 = vsub.f32 %v1171, %v379
    %v1318 = vsub.f32 %v1175, %v384
    %v1319 = vsub.f32 %v1179, %v389
    %v1320 = vsub.f32 %v1183, %v394
    %v1321 = vsub.f32 %v1187, %v399
    %v1322 = vsub.f32 %v1191, %v404
    %v1323 = vsub.f32 %v1195, %v409
    %v1324 = vmul.f32 %v1196, 0.5
    %v1325 = vmul.f32 %v1197, 0.5
    %v1326 = vmul.f32 %v1198, 0.5
    %v1327 = vmul.f32 %v1199, 0.5
    %v1328 = vmul.f32 %v1200, 0.5
    %v1329 = vmul.f32 %v1201, 0.5
    %v1330 = vmul.f32 %v1202, 0.5
    %v1331 = vmul.f32 %v1203, 0.5
    %v1332 = vmul.f32 %v1204, 0.5
    %v1333 = vmul.f32 %v1205, 0.5
    %v1334 = vmul.f32 %v1206, 0.5
    %v1335 = vmul.f32 %v1207, 0.5
    %v1336 = vmul.f32 %v1208, 0.5
    %v1337 = vmul.f32 %v1209, 0.5
    %v1338 = vmul.f32 %v1210, 0.5
    %v1339 = vmul.f32 %v1211, 0.5
    %v1340 = vmul.f32 %v1212, 0.5
    %v1341 = vmul.f32 %v1213, 0.5
    %v1342 = vmul.f32 %v1214, 0.5
    %v1343 = vmul.f32 %v1215, 0.5
    %v1344 = vmul.f32 %v1216, 0.5
    %v1345 = vmul.f32 %v1217, 0.5
    %v1346 = vmul.f32 %v1218, 0.5
    %v1347 = vmul.f32 %v1219, 0.5
    %v1348 = vmul.f32 %v1220, 0.5
    %v1349 = vmul.f32 %v1221, 0.5
    %v1350 = vmul.f32 %v1222, 0.5
    %v1351 = vmul.f32 %v1223, 0.5
    %v1352 = vmul.f32 %v1224, 0.5
    %v1353 = vmul.f32 %v1225, 0.5
    %v1354 = vmul.f32 %v1226, 0.5
    %v1355 = vmul.f32 %v1227, 0.5
    %v1356 = vmul.f32 %v1228, 0.5
    %v1357 = vmul.f32 %v1229, 0.5
    %v1358 = vmul.f32 %v1230, 0.5
    %v1359 = vmul.f32 %v1231, 0.5
    %v1360 = vmul.f32 %v1232, 0.5
    %v1361 = vmul.f32 %v1233, 0.5
    %v1362 = vmul.f32 %v1234, 0.5
    %v1363 = vmul.f32 %v1235, 0.5
    %v1364 = vmul.f32 %v1236, 0.5
    %v1365 = vmul.f32 %v1237, 0.5
    %v1366 = vmul.f32 %v1238, 0.5
    %v1367 = vmul.f32 %v1239, 0.5
    %v1368 = vmul.f32 %v1240, 0.5
    %v1369 = vmul.f32 %v1241, 0.5
    %v1370 = vmul.f32 %v1242, 0.5
    %v1371 = vmul.f32 %v1243, 0.5
    %v1372 = vmul.f32 %v1244, 0.5
    %v1373 = vmul.f32 %v1245, 0.5
    %v1374 = vmul.f32 %v1246, 0.5
    %v1375 = vmul.f32 %v1247, 0.5
    %v1376 = vmul.f32 %v1248, 0.5
    %v1377 = vmul.f32 %v1249, 0.5
    %v1378 = vmul.f32 %v1250, 0.5
    %v1379 = vmul.f32 %v1251, 0.5
    %v1380 = vmul.f32 %v1252, 0.5
    %v1381 = vmul.f32 %v1253, 0.5
    %v1382 = vmul.f32 %v1254, 0.5
    %v1383 = vmul.f32 %v1255, 0.5
    %v1384 = vmul.f32 %v1256, 0.5
    %v1385 = vmul.f32 %v1257, 0.5
    %v1386 = vmul.f32 %v1258, 0.5
    %v1387 = vmul.f32 %v1259, 0.5
    %v1388 = vmul.f32 %v1260, 0.5
    %v1389 = vmul.f32 %v1261, 0.5
    %v1390 = vmul.f32 %v1262, 0.5
    %v1391 = vmul.f32 %v1263, 0.5
    %v1392 = vmul.f32 %v1264, 0.5
    %v1393 = vmul.f32 %v1265, 0.5
    %v1394 = vmul.f32 %v1266, 0.5
    %v1395 = vmul.f32 %v1267, 0.5
    %v1396 = vmul.f32 %v1268, 0.5
    %v1397 = vmul.f32 %v1269, 0.5
    %v1398 = vmul.f32 %v1270, 0.5
    %v1399 = vmul.f32 %v1271, 0.5
    %v1400 = vmul.f32 %v1272, 0.5
    %v1401 = vmul.f32 %v1273, 0.5
    %v1402 = vmul.f32 %v1274, 0.5
    %v1403 = vmul.f32 %v1275, 0.5
    %v1404 = vmul.f32 %v1276, 0.5
    %v1405 = vmul.f32 %v1277, 0.5
    %v1406 = vmul.f32 %v1278, 0.5
    %v1407 = vmul.f32 %v1279, 0.5
    %v1408 = vmul.f32 %v1280, 0.5
    %v1409 = vmul.f32 %v1281, 0.5
    %v1410 = vmul.f32 %v1282, 0.5
    %v1411 = vmul.f32 %v1283, 0.5
    %v1412 = vmul.f32 %v1284, 0.5
    %v1413 = vmul.f32 %v1285, 0.5
    %v1414 = vmul.f32 %v1286, 0.5
    %v1415 = vmul.f32 %v1287, 0.5
    %v1416 = vmul.f32 %v1288, 0.5
    %v1417 = vmul.f32 %v1289, 0.5
    %v1418 = vmul.f32 %v1290, 0.5
    %v1419 = vmul.f32 %v1291, 0.5
    %v1420 = vmul.f32 %v1292, 0.5
    %v1421 = vmul.f32 %v1293, 0.5
    %v1422 = vmul.f32 %v1294, 0.5
    %v1423 = vmul.f32 %v1295, 0.5
    %v1424 = vmul.f32 %v1296, 0.5
    %v1425 = vmul.f32 %v1297, 0.5
    %v1426 = vmul.f32 %v1298, 0.5
    %v1427 = vmul.f32 %v1299, 0.5
    %v1428 = vmul.f32 %v1300, 0.5
    %v1429 = vmul.f32 %v1301, 0.5
    %v1430 = vmul.f32 %v1302, 0.5
    %v1431 = vmul.f32 %v1303, 0.5
    %v1432 = vmul.f32 %v1304, 0.5
    %v1433 = vmul.f32 %v1305, 0.5
    %v1434 = vmul.f32 %v1306, 0.5
    %v1435 = vmul.f32 %v1307, 0.5
    %v1436 = vmul.f32 %v1308, 0.5
    %v1437 = vmul.f32 %v1309, 0.5
    %v1438 = vmul.f32 %v1310, 0.5
    %v1439 = vmul.f32 %v1311, 0.5
    %v1440 = vmul.f32 %v1312, 0.5
    %v1441 = vmul.f32 %v1313, 0.5
    %v1442 = vmul.f32 %v1314, 0.5
    %v1443 = vmul.f32 %v1315, 0.5
    %v1444 = vmul.f32 %v1316, 0.5
    %v1445 = vmul.f32 %v1317, 0.5
    %v1446 = vmul.f32 %v1318, 0.5
    %v1447 = vmul.f32 %v1319, 0.5
    %v1448 = vmul.f32 %v1320, 0.5
    %v1449 = vmul.f32 %v1321, 0.5
    %v1450 = vmul.f32 %v1322, 0.5
    %v1451 = vmul.f32 %v1323, 0.5
    %v1452 = vtanh.pop %v1324
    %v1453 = vtanh.pop %v1325
    %v1454 = vtanh.pop %v1326
    %v1455 = vtanh.pop %v1327
    %v1456 = vtanh.pop %v1328
    %v1457 = vtanh.pop %v1329
    %v1458 = vtanh.pop %v1330
    %v1459 = vtanh.pop %v1331
    %v1460 = vtanh.pop %v1332
    %v1461 = vtanh.pop %v1333
    %v1462 = vtanh.pop %v1334
    %v1463 = vtanh.pop %v1335
    %v1464 = vtanh.pop %v1336
    %v1465 = vtanh.pop %v1337
    %v1466 = vtanh.pop %v1338
    %v1467 = vtanh.pop %v1339
    %v1468 = vtanh.pop %v1340
    %v1469 = vtanh.pop %v1341
    %v1470 = vtanh.pop %v1342
    %v1471 = vtanh.pop %v1343
    %v1472 = vtanh.pop %v1344
    %v1473 = vtanh.pop %v1345
    %v1474 = vtanh.pop %v1346
    %v1475 = vtanh.pop %v1347
    %v1476 = vtanh.pop %v1348
    %v1477 = vtanh.pop %v1349
    %v1478 = vtanh.pop %v1350
    %v1479 = vtanh.pop %v1351
    %v1480 = vtanh.pop %v1352
    %v1481 = vtanh.pop %v1353
    %v1482 = vtanh.pop %v1354
    %v1483 = vtanh.pop %v1355
    %v1484 = vtanh.pop %v1356
    %v1485 = vtanh.pop %v1357
    %v1486 = vtanh.pop %v1358
    %v1487 = vtanh.pop %v1359
    %v1488 = vtanh.pop %v1360
    %v1489 = vtanh.pop %v1361
    %v1490 = vtanh.pop %v1362
    %v1491 = vtanh.pop %v1363
    %v1492 = vtanh.pop %v1364
    %v1493 = vtanh.pop %v1365
    %v1494 = vtanh.pop %v1366
    %v1495 = vtanh.pop %v1367
    %v1496 = vtanh.pop %v1368
    %v1497 = vtanh.pop %v1369
    %v1498 = vtanh.pop %v1370
    %v1499 = vtanh.pop %v1371
    %v1500 = vtanh.pop %v1372
    %v1501 = vtanh.pop %v1373
    %v1502 = vtanh.pop %v1374
    %v1503 = vtanh.pop %v1375
    %v1504 = vtanh.pop %v1376
    %v1505 = vtanh.pop %v1377
    %v1506 = vtanh.pop %v1378
    %v1507 = vtanh.pop %v1379
    %v1508 = vtanh.pop %v1380
    %v1509 = vtanh.pop %v1381
    %v1510 = vtanh.pop %v1382
    %v1511 = vtanh.pop %v1383
    %v1512 = vtanh.pop %v1384
    %v1513 = vtanh.pop %v1385
    %v1514 = vtanh.pop %v1386
    %v1515 = vtanh.pop %v1387
    %v1516 = vtanh.pop %v1388
    %v1517 = vtanh.pop %v1389
    %v1518 = vtanh.pop %v1390
    %v1519 = vtanh.pop %v1391
    %v1520 = vtanh.pop %v1392
    %v1521 = vtanh.pop %v1393
    %v1522 = vtanh.pop %v1394
    %v1523 = vtanh.pop %v1395
    %v1524 = vtanh.pop %v1396
    %v1525 = vtanh.pop %v1397
    %v1526 = vtanh.pop %v1398
    %v1527 = vtanh.pop %v1399
    %v1528 = vtanh.pop %v1400
    %v1529 = vtanh.pop %v1401
    %v1530 = vtanh.pop %v1402
    %v1531 = vtanh.pop %v1403
    %v1532 = vtanh.pop %v1404
    %v1533 = vtanh.pop %v1405
    %v1534 = vtanh.pop %v1406
    %v1535 = vtanh.pop %v1407
    %v1536 = vtanh.pop %v1408
    %v1537 = vtanh.pop %v1409
    %v1538 = vtanh.pop %v1410
    %v1539 = vtanh.pop %v1411
    %v1540 = vtanh.pop %v1412
    %v1541 = vtanh.pop %v1413
    %v1542 = vtanh.pop %v1414
    %v1543 = vtanh.pop %v1415
    %v1544 = vtanh.pop %v1416
    %v1545 = vtanh.pop %v1417
    %v1546 = vtanh.pop %v1418
    %v1547 = vtanh.pop %v1419
    %v1548 = vtanh.pop %v1420
    %v1549 = vtanh.pop %v1421
    %v1550 = vtanh.pop %v1422
    %v1551 = vtanh.pop %v1423
    %v1552 = vtanh.pop %v1424
    %v1553 = vtanh.pop %v1425
    %v1554 = vtanh.pop %v1426
    %v1555 = vtanh.pop %v1427
    %v1556 = vtanh.pop %v1428
    %v1557 = vtanh.pop %v1429
    %v1558 = vtanh.pop %v1430
    %v1559 = vtanh.pop %v1431
    %v1560 = vtanh.pop %v1432
    %v1561 = vtanh.pop %v1433
    %v1562 = vtanh.pop %v1434
    %v1563 = vtanh.pop %v1435
    %v1564 = vtanh.pop %v1436
    %v1565 = vtanh.pop %v1437
    %v1566 = vtanh.pop %v1438
    %v1567 = vtanh.pop %v1439
    %v1568 = vtanh.pop %v1440
    %v1569 = vtanh.pop %v1441
    %v1570 = vtanh.pop %v1442
    %v1571 = vtanh.pop %v1443
    %v1572 = vtanh.pop %v1444
    %v1573 = vtanh.pop %v1445
    %v1574 = vtanh.pop %v1446
    %v1575 = vtanh.pop %v1447
    %v1576 = vtanh.pop %v1448
    %v1577 = vtanh.pop %v1449
    %v1578 = vtanh.pop %v1450
    %v1579 = vtanh.pop %v1451
    %v1580 = vadd.f32 %v1452, 1.0
    %v1581 = vadd.f32 %v1453, 1.0
    %v1582 = vadd.f32 %v1454, 1.0
    %v1583 = vadd.f32 %v1455, 1.0
    %v1584 = vadd.f32 %v1456, 1.0
    %v1585 = vadd.f32 %v1457, 1.0
    %v1586 = vadd.f32 %v1458, 1.0
    %v1587 = vadd.f32 %v1459, 1.0
    %v1588 = vadd.f32 %v1460, 1.0
    %v1589 = vadd.f32 %v1461, 1.0
    %v1590 = vadd.f32 %v1462, 1.0
    %v1591 = vadd.f32 %v1463, 1.0
    %v1592 = vadd.f32 %v1464, 1.0
    %v1593 = vadd.f32 %v1465, 1.0
    %v1594 = vadd.f32 %v1466, 1.0
    %v1595 = vadd.f32 %v1467, 1.0
    %v1596 = vadd.f32 %v1468, 1.0
    %v1597 = vadd.f32 %v1469, 1.0
    %v1598 = vadd.f32 %v1470, 1.0
    %v1599 = vadd.f32 %v1471, 1.0
    %v1600 = vadd.f32 %v1472, 1.0
    %v1601 = vadd.f32 %v1473, 1.0
    %v1602 = vadd.f32 %v1474, 1.0
    %v1603 = vadd.f32 %v1475, 1.0
    %v1604 = vadd.f32 %v1476, 1.0
    %v1605 = vadd.f32 %v1477, 1.0
    %v1606 = vadd.f32 %v1478, 1.0
    %v1607 = vadd.f32 %v1479, 1.0
    %v1608 = vadd.f32 %v1480, 1.0
    %v1609 = vadd.f32 %v1481, 1.0
    %v1610 = vadd.f32 %v1482, 1.0
    %v1611 = vadd.f32 %v1483, 1.0
    %v1612 = vadd.f32 %v1484, 1.0
    %v1613 = vadd.f32 %v1485, 1.0
    %v1614 = vadd.f32 %v1486, 1.0
    %v1615 = vadd.f32 %v1487, 1.0
    %v1616 = vadd.f32 %v1488, 1.0
    %v1617 = vadd.f32 %v1489, 1.0
    %v1618 = vadd.f32 %v1490, 1.0
    %v1619 = vadd.f32 %v1491, 1.0
    %v1620 = vadd.f32 %v1492, 1.0
    %v1621 = vadd.f32 %v1493, 1.0
    %v1622 = vadd.f32 %v1494, 1.0
    %v1623 = vadd.f32 %v1495, 1.0
    %v1624 = vadd.f32 %v1496, 1.0
    %v1625 = vadd.f32 %v1497, 1.0
    %v1626 = vadd.f32 %v1498, 1.0
    %v1627 = vadd.f32 %v1499, 1.0
    %v1628 = vadd.f32 %v1500, 1.0
    %v1629 = vadd.f32 %v1501, 1.0
    %v1630 = vadd.f32 %v1502, 1.0
    %v1631 = vadd.f32 %v1503, 1.0
    %v1632 = vadd.f32 %v1504, 1.0
    %v1633 = vadd.f32 %v1505, 1.0
    %v1634 = vadd.f32 %v1506, 1.0
    %v1635 = vadd.f32 %v1507, 1.0
    %v1636 = vadd.f32 %v1508, 1.0
    %v1637 = vadd.f32 %v1509, 1.0
    %v1638 = vadd.f32 %v1510, 1.0
    %v1639 = vadd.f32 %v1511, 1.0
    %v1640 = vadd.f32 %v1512, 1.0
    %v1641 = vadd.f32 %v1513, 1.0
    %v1642 = vadd.f32 %v1514, 1.0
    %v1643 = vadd.f32 %v1515, 1.0
    %v1644 = vadd.f32 %v1516, 1.0
    %v1645 = vadd.f32 %v1517, 1.0
    %v1646 = vadd.f32 %v1518, 1.0
    %v1647 = vadd.f32 %v1519, 1.0
    %v1648 = vadd.f32 %v1520, 1.0
    %v1649 = vadd.f32 %v1521, 1.0
    %v1650 = vadd.f32 %v1522, 1.0
    %v1651 = vadd.f32 %v1523, 1.0
    %v1652 = vadd.f32 %v1524, 1.0
    %v1653 = vadd.f32 %v1525, 1.0
    %v1654 = vadd.f32 %v1526, 1.0
    %v1655 = vadd.f32 %v1527, 1.0
    %v1656 = vadd.f32 %v1528, 1.0
    %v1657 = vadd.f32 %v1529, 1.0
    %v1658 = vadd.f32 %v1530, 1.0
    %v1659 = vadd.f32 %v1531, 1.0
    %v1660 = vadd.f32 %v1532, 1.0
    %v1661 = vadd.f32 %v1533, 1.0
    %v1662 = vadd.f32 %v1534, 1.0
    %v1663 = vadd.f32 %v1535, 1.0
    %v1664 = vadd.f32 %v1536, 1.0
    %v1665 = vadd.f32 %v1537, 1.0
    %v1666 = vadd.f32 %v1538, 1.0
    %v1667 = vadd.f32 %v1539, 1.0
    %v1668 = vadd.f32 %v1540, 1.0
    %v1669 = vadd.f32 %v1541, 1.0
    %v1670 = vadd.f32 %v1542, 1.0
    %v1671 = vadd.f32 %v1543, 1.0
    %v1672 = vadd.f32 %v1544, 1.0
    %v1673 = vadd.f32 %v1545, 1.0
    %v1674 = vadd.f32 %v1546, 1.0
    %v1675 = vadd.f32 %v1547, 1.0
    %v1676 = vadd.f32 %v1548, 1.0
    %v1677 = vadd.f32 %v1549, 1.0
    %v1678 = vadd.f32 %v1550, 1.0
    %v1679 = vadd.f32 %v1551, 1.0
    %v1680 = vadd.f32 %v1552, 1.0
    %v1681 = vadd.f32 %v1553, 1.0
    %v1682 = vadd.f32 %v1554, 1.0
    %v1683 = vadd.f32 %v1555, 1.0
    %v1684 = vadd.f32 %v1556, 1.0
    %v1685 = vadd.f32 %v1557, 1.0
    %v1686 = vadd.f32 %v1558, 1.0
    %v1687 = vadd.f32 %v1559, 1.0
    %v1688 = vadd.f32 %v1560, 1.0
    %v1689 = vadd.f32 %v1561, 1.0
    %v1690 = vadd.f32 %v1562, 1.0
    %v1691 = vadd.f32 %v1563, 1.0
    %v1692 = vadd.f32 %v1564, 1.0
    %v1693 = vadd.f32 %v1565, 1.0
    %v1694 = vadd.f32 %v1566, 1.0
    %v1695 = vadd.f32 %v1567, 1.0
    %v1696 = vadd.f32 %v1568, 1.0
    %v1697 = vadd.f32 %v1569, 1.0
    %v1698 = vadd.f32 %v1570, 1.0
    %v1699 = vadd.f32 %v1571, 1.0
    %v1700 = vadd.f32 %v1572, 1.0
    %v1701 = vadd.f32 %v1573, 1.0
    %v1702 = vadd.f32 %v1574, 1.0
    %v1703 = vadd.f32 %v1575, 1.0
    %v1704 = vadd.f32 %v1576, 1.0
    %v1705 = vadd.f32 %v1577, 1.0
    %v1706 = vadd.f32 %v1578, 1.0
    %v1707 = vadd.f32 %v1579, 1.0
    %v1708 = vmul.f32 %v1580, 0.5
    %v1709 = vmul.f32 %v1581, 0.5
    %v1710 = vmul.f32 %v1582, 0.5
    %v1711 = vmul.f32 %v1583, 0.5
    %v1712 = vmul.f32 %v1584, 0.5
    %v1713 = vmul.f32 %v1585, 0.5
    %v1714 = vmul.f32 %v1586, 0.5
    %v1715 = vmul.f32 %v1587, 0.5
    %v1716 = vmul.f32 %v1588, 0.5
    %v1717 = vmul.f32 %v1589, 0.5
    %v1718 = vmul.f32 %v1590, 0.5
    %v1719 = vmul.f32 %v1591, 0.5
    %v1720 = vmul.f32 %v1592, 0.5
    %v1721 = vmul.f32 %v1593, 0.5
    %v1722 = vmul.f32 %v1594, 0.5
    %v1723 = vmul.f32 %v1595, 0.5
    %v1724 = vmul.f32 %v1596, 0.5
    %v1725 = vmul.f32 %v1597, 0.5
    %v1726 = vmul.f32 %v1598, 0.5
    %v1727 = vmul.f32 %v1599, 0.5
    %v1728 = vmul.f32 %v1600, 0.5
    %v1729 = vmul.f32 %v1601, 0.5
    %v1730 = vmul.f32 %v1602, 0.5
    %v1731 = vmul.f32 %v1603, 0.5
    %v1732 = vmul.f32 %v1604, 0.5
    %v1733 = vmul.f32 %v1605, 0.5
    %v1734 = vmul.f32 %v1606, 0.5
    %v1735 = vmul.f32 %v1607, 0.5
    %v1736 = vmul.f32 %v1608, 0.5
    %v1737 = vmul.f32 %v1609, 0.5
    %v1738 = vmul.f32 %v1610, 0.5
    %v1739 = vmul.f32 %v1611, 0.5
    %v1740 = vmul.f32 %v1612, 0.5
    %v1741 = vmul.f32 %v1613, 0.5
    %v1742 = vmul.f32 %v1614, 0.5
    %v1743 = vmul.f32 %v1615, 0.5
    %v1744 = vmul.f32 %v1616, 0.5
    %v1745 = vmul.f32 %v1617, 0.5
    %v1746 = vmul.f32 %v1618, 0.5
    %v1747 = vmul.f32 %v1619, 0.5
    %v1748 = vmul.f32 %v1620, 0.5
    %v1749 = vmul.f32 %v1621, 0.5
    %v1750 = vmul.f32 %v1622, 0.5
    %v1751 = vmul.f32 %v1623, 0.5
    %v1752 = vmul.f32 %v1624, 0.5
    %v1753 = vmul.f32 %v1625, 0.5
    %v1754 = vmul.f32 %v1626, 0.5
    %v1755 = vmul.f32 %v1627, 0.5
    %v1756 = vmul.f32 %v1628, 0.5
    %v1757 = vmul.f32 %v1629, 0.5
    %v1758 = vmul.f32 %v1630, 0.5
    %v1759 = vmul.f32 %v1631, 0.5
    %v1760 = vmul.f32 %v1632, 0.5
    %v1761 = vmul.f32 %v1633, 0.5
    %v1762 = vmul.f32 %v1634, 0.5
    %v1763 = vmul.f32 %v1635, 0.5
    %v1764 = vmul.f32 %v1636, 0.5
    %v1765 = vmul.f32 %v1637, 0.5
    %v1766 = vmul.f32 %v1638, 0.5
    %v1767 = vmul.f32 %v1639, 0.5
    %v1768 = vmul.f32 %v1640, 0.5
    %v1769 = vmul.f32 %v1641, 0.5
    %v1770 = vmul.f32 %v1642, 0.5
    %v1771 = vmul.f32 %v1643, 0.5
    %v1772 = vmul.f32 %v1644, 0.5
    %v1773 = vmul.f32 %v1645, 0.5
    %v1774 = vmul.f32 %v1646, 0.5
    %v1775 = vmul.f32 %v1647, 0.5
    %v1776 = vmul.f32 %v1648, 0.5
    %v1777 = vmul.f32 %v1649, 0.5
    %v1778 = vmul.f32 %v1650, 0.5
    %v1779 = vmul.f32 %v1651, 0.5
    %v1780 = vmul.f32 %v1652, 0.5
    %v1781 = vmul.f32 %v1653, 0.5
    %v1782 = vmul.f32 %v1654, 0.5
    %v1783 = vmul.f32 %v1655, 0.5
    %v1784 = vmul.f32 %v1656, 0.5
    %v1785 = vmul.f32 %v1657, 0.5
    %v1786 = vmul.f32 %v1658, 0.5
    %v1787 = vmul.f32 %v1659, 0.5
    %v1788 = vmul.f32 %v1660, 0.5
    %v1789 = vmul.f32 %v1661, 0.5
    %v1790 = vmul.f32 %v1662, 0.5
    %v1791 = vmul.f32 %v1663, 0.5
    %v1792 = vmul.f32 %v1664, 0.5
    %v1793 = vmul.f32 %v1665, 0.5
    %v1794 = vmul.f32 %v1666, 0.5
    %v1795 = vmul.f32 %v1667, 0.5
    %v1796 = vmul.f32 %v1668, 0.5
    %v1797 = vmul.f32 %v1669, 0.5
    %v1798 = vmul.f32 %v1670, 0.5
    %v1799 = vmul.f32 %v1671, 0.5
    %v1800 = vmul.f32 %v1672, 0.5
    %v1801 = vmul.f32 %v1673, 0.5
    %v1802 = vmul.f32 %v1674, 0.5
    %v1803 = vmul.f32 %v1675, 0.5
    %v1804 = vmul.f32 %v1676, 0.5
    %v1805 = vmul.f32 %v1677, 0.5
    %v1806 = vmul.f32 %v1678, 0.5
    %v1807 = vmul.f32 %v1679, 0.5
    %v1808 = vmul.f32 %v1680, 0.5
    %v1809 = vmul.f32 %v1681, 0.5
    %v1810 = vmul.f32 %v1682, 0.5
    %v1811 = vmul.f32 %v1683, 0.5
    %v1812 = vmul.f32 %v1684, 0.5
    %v1813 = vmul.f32 %v1685, 0.5
    %v1814 = vmul.f32 %v1686, 0.5
    %v1815 = vmul.f32 %v1687, 0.5
    %v1816 = vmul.f32 %v1688, 0.5
    %v1817 = vmul.f32 %v1689, 0.5
    %v1818 = vmul.f32 %v1690, 0.5
    %v1819 = vmul.f32 %v1691, 0.5
    %v1820 = vmul.f32 %v1692, 0.5
    %v1821 = vmul.f32 %v1693, 0.5
    %v1822 = vmul.f32 %v1694, 0.5
    %v1823 = vmul.f32 %v1695, 0.5
    %v1824 = vmul.f32 %v1696, 0.5
    %v1825 = vmul.f32 %v1697, 0.5
    %v1826 = vmul.f32 %v1698, 0.5
    %v1827 = vmul.f32 %v1699, 0.5
    %v1828 = vmul.f32 %v1700, 0.5
    %v1829 = vmul.f32 %v1701, 0.5
    %v1830 = vmul.f32 %v1702, 0.5
    %v1831 = vmul.f32 %v1703, 0.5
    %v1832 = vmul.f32 %v1704, 0.5
    %v1833 = vmul.f32 %v1705, 0.5
    %v1834 = vmul.f32 %v1706, 0.5
    %v1835 = vmul.f32 %v1707, 0.5
    %v1836 = vmul.f32 %v1708, %v1196
    %v1837 = vmul.f32 %v1709, %v1197
    %v1838 = vmul.f32 %v1710, %v1198
    %v1839 = vmul.f32 %v1711, %v1199
    %v1840 = vmul.f32 %v1712, %v1200
    %v1841 = vmul.f32 %v1713, %v1201
    %v1842 = vmul.f32 %v1714, %v1202
    %v1843 = vmul.f32 %v1715, %v1203
    %v1844 = vmul.f32 %v1716, %v1204
    %v1845 = vmul.f32 %v1717, %v1205
    %v1846 = vmul.f32 %v1718, %v1206
    %v1847 = vmul.f32 %v1719, %v1207
    %v1848 = vmul.f32 %v1720, %v1208
    %v1849 = vmul.f32 %v1721, %v1209
    %v1850 = vmul.f32 %v1722, %v1210
    %v1851 = vmul.f32 %v1723, %v1211
    %v1852 = vmul.f32 %v1724, %v1212
    %v1853 = vmul.f32 %v1725, %v1213
    %v1854 = vmul.f32 %v1726, %v1214
    %v1855 = vmul.f32 %v1727, %v1215
    %v1856 = vmul.f32 %v1728, %v1216
    %v1857 = vmul.f32 %v1729, %v1217
    %v1858 = vmul.f32 %v1730, %v1218
    %v1859 = vmul.f32 %v1731, %v1219
    %v1860 = vmul.f32 %v1732, %v1220
    %v1861 = vmul.f32 %v1733, %v1221
    %v1862 = vmul.f32 %v1734, %v1222
    %v1863 = vmul.f32 %v1735, %v1223
    %v1864 = vmul.f32 %v1736, %v1224
    %v1865 = vmul.f32 %v1737, %v1225
    %v1866 = vmul.f32 %v1738, %v1226
    %v1867 = vmul.f32 %v1739, %v1227
    %v1868 = vmul.f32 %v1740, %v1228
    %v1869 = vmul.f32 %v1741, %v1229
    %v1870 = vmul.f32 %v1742, %v1230
    %v1871 = vmul.f32 %v1743, %v1231
    %v1872 = vmul.f32 %v1744, %v1232
    %v1873 = vmul.f32 %v1745, %v1233
    %v1874 = vmul.f32 %v1746, %v1234
    %v1875 = vmul.f32 %v1747, %v1235
    %v1876 = vmul.f32 %v1748, %v1236
    %v1877 = vmul.f32 %v1749, %v1237
    %v1878 = vmul.f32 %v1750, %v1238
    %v1879 = vmul.f32 %v1751, %v1239
    %v1880 = vmul.f32 %v1752, %v1240
    %v1881 = vmul.f32 %v1753, %v1241
    %v1882 = vmul.f32 %v1754, %v1242
    %v1883 = vmul.f32 %v1755, %v1243
    %v1884 = vmul.f32 %v1756, %v1244
    %v1885 = vmul.f32 %v1757, %v1245
    %v1886 = vmul.f32 %v1758, %v1246
    %v1887 = vmul.f32 %v1759, %v1247
    %v1888 = vmul.f32 %v1760, %v1248
    %v1889 = vmul.f32 %v1761, %v1249
    %v1890 = vmul.f32 %v1762, %v1250
    %v1891 = vmul.f32 %v1763, %v1251
    %v1892 = vmul.f32 %v1764, %v1252
    %v1893 = vmul.f32 %v1765, %v1253
    %v1894 = vmul.f32 %v1766, %v1254
    %v1895 = vmul.f32 %v1767, %v1255
    %v1896 = vmul.f32 %v1768, %v1256
    %v1897 = vmul.f32 %v1769, %v1257
    %v1898 = vmul.f32 %v1770, %v1258
    %v1899 = vmul.f32 %v1771, %v1259
    %v1900 = vmul.f32 %v1772, %v1260
    %v1901 = vmul.f32 %v1773, %v1261
    %v1902 = vmul.f32 %v1774, %v1262
    %v1903 = vmul.f32 %v1775, %v1263
    %v1904 = vmul.f32 %v1776, %v1264
    %v1905 = vmul.f32 %v1777, %v1265
    %v1906 = vmul.f32 %v1778, %v1266
    %v1907 = vmul.f32 %v1779, %v1267
    %v1908 = vmul.f32 %v1780, %v1268
    %v1909 = vmul.f32 %v1781, %v1269
    %v1910 = vmul.f32 %v1782, %v1270
    %v1911 = vmul.f32 %v1783, %v1271
    %v1912 = vmul.f32 %v1784, %v1272
    %v1913 = vmul.f32 %v1785, %v1273
    %v1914 = vmul.f32 %v1786, %v1274
    %v1915 = vmul.f32 %v1787, %v1275
    %v1916 = vmul.f32 %v1788, %v1276
    %v1917 = vmul.f32 %v1789, %v1277
    %v1918 = vmul.f32 %v1790, %v1278
    %v1919 = vmul.f32 %v1791, %v1279
    %v1920 = vmul.f32 %v1792, %v1280
    %v1921 = vmul.f32 %v1793, %v1281
    %v1922 = vmul.f32 %v1794, %v1282
    %v1923 = vmul.f32 %v1795, %v1283
    %v1924 = vmul.f32 %v1796, %v1284
    %v1925 = vmul.f32 %v1797, %v1285
    %v1926 = vmul.f32 %v1798, %v1286
    %v1927 = vmul.f32 %v1799, %v1287
    %v1928 = vmul.f32 %v1800, %v1288
    %v1929 = vmul.f32 %v1801, %v1289
    %v1930 = vmul.f32 %v1802, %v1290
    %v1931 = vmul.f32 %v1803, %v1291
    %v1932 = vmul.f32 %v1804, %v1292
    %v1933 = vmul.f32 %v1805, %v1293
    %v1934 = vmul.f32 %v1806, %v1294
    %v1935 = vmul.f32 %v1807, %v1295
    %v1936 = vmul.f32 %v1808, %v1296
    %v1937 = vmul.f32 %v1809, %v1297
    %v1938 = vmul.f32 %v1810, %v1298
    %v1939 = vmul.f32 %v1811, %v1299
    %v1940 = vmul.f32 %v1812, %v1300
    %v1941 = vmul.f32 %v1813, %v1301
    %v1942 = vmul.f32 %v1814, %v1302
    %v1943 = vmul.f32 %v1815, %v1303
    %v1944 = vmul.f32 %v1816, %v1304
    %v1945 = vmul.f32 %v1817, %v1305
    %v1946 = vmul.f32 %v1818, %v1306
    %v1947 = vmul.f32 %v1819, %v1307
    %v1948 = vmul.f32 %v1820, %v1308
    %v1949 = vmul.f32 %v1821, %v1309
    %v1950 = vmul.f32 %v1822, %v1310
    %v1951 = vmul.f32 %v1823, %v1311
    %v1952 = vmul.f32 %v1824, %v1312
    %v1953 = vmul.f32 %v1825, %v1313
    %v1954 = vmul.f32 %v1826, %v1314
    %v1955 = vmul.f32 %v1827, %v1315
    %v1956 = vmul.f32 %v1828, %v1316
    %v1957 = vmul.f32 %v1829, %v1317
    %v1958 = vmul.f32 %v1830, %v1318
    %v1959 = vmul.f32 %v1831, %v1319
    %v1960 = vmul.f32 %v1832, %v1320
    %v1961 = vmul.f32 %v1833, %v1321
    %v1962 = vmul.f32 %v1834, %v1322
    %v1963 = vmul.f32 %v1835, %v1323
    %v1964 = vadd.f32 %v334, %v1836
    %v1965 = vadd.f32 %v339, %v1837
    %v1966 = vadd.f32 %v344, %v1838
    %v1967 = vadd.f32 %v349, %v1839
    %v1968 = vadd.f32 %v354, %v1840
    %v1969 = vadd.f32 %v359, %v1841
    %v1970 = vadd.f32 %v364, %v1842
    %v1971 = vadd.f32 %v369, %v1843
    %v1972 = vadd.f32 %v374, %v1844
    %v1973 = vadd.f32 %v379, %v1845
    %v1974 = vadd.f32 %v384, %v1846
    %v1975 = vadd.f32 %v389, %v1847
    %v1976 = vadd.f32 %v394, %v1848
    %v1977 = vadd.f32 %v399, %v1849
    %v1978 = vadd.f32 %v404, %v1850
    %v1979 = vadd.f32 %v409, %v1851
    %v1980 = vadd.f32 %v334, %v1852
    %v1981 = vadd.f32 %v339, %v1853
    %v1982 = vadd.f32 %v344, %v1854
    %v1983 = vadd.f32 %v349, %v1855
    %v1984 = vadd.f32 %v354, %v1856
    %v1985 = vadd.f32 %v359, %v1857
    %v1986 = vadd.f32 %v364, %v1858
    %v1987 = vadd.f32 %v369, %v1859
    %v1988 = vadd.f32 %v374, %v1860
    %v1989 = vadd.f32 %v379, %v1861
    %v1990 = vadd.f32 %v384, %v1862
    %v1991 = vadd.f32 %v389, %v1863
    %v1992 = vadd.f32 %v394, %v1864
    %v1993 = vadd.f32 %v399, %v1865
    %v1994 = vadd.f32 %v404, %v1866
    %v1995 = vadd.f32 %v409, %v1867
    %v1996 = vadd.f32 %v334, %v1868
    %v1997 = vadd.f32 %v339, %v1869
    %v1998 = vadd.f32 %v344, %v1870
    %v1999 = vadd.f32 %v349, %v1871
    %v2000 = vadd.f32 %v354, %v1872
    %v2001 = vadd.f32 %v359, %v1873
    %v2002 = vadd.f32 %v364, %v1874
    %v2003 = vadd.f32 %v369, %v1875
    %v2004 = vadd.f32 %v374, %v1876
    %v2005 = vadd.f32 %v379, %v1877
    %v2006 = vadd.f32 %v384, %v1878
    %v2007 = vadd.f32 %v389, %v1879
    %v2008 = vadd.f32 %v394, %v1880
    %v2009 = vadd.f32 %v399, %v1881
    %v2010 = vadd.f32 %v404, %v1882
    %v2011 = vadd.f32 %v409, %v1883
    %v2012 = vadd.f32 %v334, %v1884
    %v2013 = vadd.f32 %v339, %v1885
    %v2014 = vadd.f32 %v344, %v1886
    %v2015 = vadd.f32 %v349, %v1887
    %v2016 = vadd.f32 %v354, %v1888
    %v2017 = vadd.f32 %v359, %v1889
    %v2018 = vadd.f32 %v364, %v1890
    %v2019 = vadd.f32 %v369, %v1891
    %v2020 = vadd.f32 %v374, %v1892
    %v2021 = vadd.f32 %v379, %v1893
    %v2022 = vadd.f32 %v384, %v1894
    %v2023 = vadd.f32 %v389, %v1895
    %v2024 = vadd.f32 %v394, %v1896
    %v2025 = vadd.f32 %v399, %v1897
    %v2026 = vadd.f32 %v404, %v1898
    %v2027 = vadd.f32 %v409, %v1899
    %v2028 = vadd.f32 %v334, %v1900
    %v2029 = vadd.f32 %v339, %v1901
    %v2030 = vadd.f32 %v344, %v1902
    %v2031 = vadd.f32 %v349, %v1903
    %v2032 = vadd.f32 %v354, %v1904
    %v2033 = vadd.f32 %v359, %v1905
    %v2034 = vadd.f32 %v364, %v1906
    %v2035 = vadd.f32 %v369, %v1907
    %v2036 = vadd.f32 %v374, %v1908
    %v2037 = vadd.f32 %v379, %v1909
    %v2038 = vadd.f32 %v384, %v1910
    %v2039 = vadd.f32 %v389, %v1911
    %v2040 = vadd.f32 %v394, %v1912
    %v2041 = vadd.f32 %v399, %v1913
    %v2042 = vadd.f32 %v404, %v1914
    %v2043 = vadd.f32 %v409, %v1915
    %v2044 = vadd.f32 %v334, %v1916
    %v2045 = vadd.f32 %v339, %v1917
    %v2046 = vadd.f32 %v344, %v1918
    %v2047 = vadd.f32 %v349, %v1919
    %v2048 = vadd.f32 %v354, %v1920
    %v2049 = vadd.f32 %v359, %v1921
    %v2050 = vadd.f32 %v364, %v1922
    %v2051 = vadd.f32 %v369, %v1923
    %v2052 = vadd.f32 %v374, %v1924
    %v2053 = vadd.f32 %v379, %v1925
    %v2054 = vadd.f32 %v384, %v1926
    %v2055 = vadd.f32 %v389, %v1927
    %v2056 = vadd.f32 %v394, %v1928
    %v2057 = vadd.f32 %v399, %v1929
    %v2058 = vadd.f32 %v404, %v1930
    %v2059 = vadd.f32 %v409, %v1931
    %v2060 = vadd.f32 %v334, %v1932
    %v2061 = vadd.f32 %v339, %v1933
    %v2062 = vadd.f32 %v344, %v1934
    %v2063 = vadd.f32 %v349, %v1935
    %v2064 = vadd.f32 %v354, %v1936
    %v2065 = vadd.f32 %v359, %v1937
    %v2066 = vadd.f32 %v364, %v1938
    %v2067 = vadd.f32 %v369, %v1939
    %v2068 = vadd.f32 %v374, %v1940
    %v2069 = vadd.f32 %v379, %v1941
    %v2070 = vadd.f32 %v384, %v1942
    %v2071 = vadd.f32 %v389, %v1943
    %v2072 = vadd.f32 %v394, %v1944
    %v2073 = vadd.f32 %v399, %v1945
    %v2074 = vadd.f32 %v404, %v1946
    %v2075 = vadd.f32 %v409, %v1947
    %v2076 = vadd.f32 %v334, %v1948
    %v2077 = vadd.f32 %v339, %v1949
    %v2078 = vadd.f32 %v344, %v1950
    %v2079 = vadd.f32 %v349, %v1951
    %v2080 = vadd.f32 %v354, %v1952
    %v2081 = vadd.f32 %v359, %v1953
    %v2082 = vadd.f32 %v364, %v1954
    %v2083 = vadd.f32 %v369, %v1955
    %v2084 = vadd.f32 %v374, %v1956
    %v2085 = vadd.f32 %v379, %v1957
    %v2086 = vadd.f32 %v384, %v1958
    %v2087 = vadd.f32 %v389, %v1959
    %v2088 = vadd.f32 %v394, %v1960
    %v2089 = vadd.f32 %v399, %v1961
    %v2090 = vadd.f32 %v404, %v1962
    %v2091 = vadd.f32 %v409, %v1963
    %v2092 = vmul.f32 %v1964, 2.0
    %v2093 = vmul.f32 %v1965, 2.0
    %v2094 = vmul.f32 %v1966, 2.0
    %v2095 = vmul.f32 %v1967, 2.0
    %v2096 = vmul.f32 %v1968, 2.0
    %v2097 = vmul.f32 %v1969, 2.0
    %v2098 = vmul.f32 %v1970, 2.0
    %v2099 = vmul.f32 %v1971, 2.0
    %v2100 = vmul.f32 %v1972, 2.0
    %v2101 = vmul.f32 %v1973, 2.0
    %v2102 = vmul.f32 %v1974, 2.0
    %v2103 = vmul.f32 %v1975, 2.0
    %v2104 = vmul.f32 %v1976, 2.0
    %v2105 = vmul.f32 %v1977, 2.0
    %v2106 = vmul.f32 %v1978, 2.0
    %v2107 = vmul.f32 %v1979, 2.0
    %v2108 = vmul.f32 %v1980, 2.0
    %v2109 = vmul.f32 %v1981, 2.0
    %v2110 = vmul.f32 %v1982, 2.0
    %v2111 = vmul.f32 %v1983, 2.0
    %v2112 = vmul.f32 %v1984, 2.0
    %v2113 = vmul.f32 %v1985, 2.0
    %v2114 = vmul.f32 %v1986, 2.0
    %v2115 = vmul.f32 %v1987, 2.0
    %v2116 = vmul.f32 %v1988, 2.0
    %v2117 = vmul.f32 %v1989, 2.0
    %v2118 = vmul.f32 %v1990, 2.0
    %v2119 = vmul.f32 %v1991, 2.0
    %v2120 = vmul.f32 %v1992, 2.0
    %v2121 = vmul.f32 %v1993, 2.0
    %v2122 = vmul.f32 %v1994, 2.0
    %v2123 = vmul.f32 %v1995, 2.0
    %v2124 = vmul.f32 %v1996, 2.0
    %v2125 = vmul.f32 %v1997, 2.0
    %v2126 = vmul.f32 %v1998, 2.0
    %v2127 = vmul.f32 %v1999, 2.0
    %v2128 = vmul.f32 %v2000, 2.0
    %v2129 = vmul.f32 %v2001, 2.0
    %v2130 = vmul.f32 %v2002, 2.0
    %v2131 = vmul.f32 %v2003, 2.0
    %v2132 = vmul.f32 %v2004, 2.0
    %v2133 = vmul.f32 %v2005, 2.0
    %v2134 = vmul.f32 %v2006, 2.0
    %v2135 = vmul.f32 %v2007, 2.0
    %v2136 = vmul.f32 %v2008, 2.0
    %v2137 = vmul.f32 %v2009, 2.0
    %v2138 = vmul.f32 %v2010, 2.0
    %v2139 = vmul.f32 %v2011, 2.0
    %v2140 = vmul.f32 %v2012, 2.0
    %v2141 = vmul.f32 %v2013, 2.0
    %v2142 = vmul.f32 %v2014, 2.0
    %v2143 = vmul.f32 %v2015, 2.0
    %v2144 = vmul.f32 %v2016, 2.0
    %v2145 = vmul.f32 %v2017, 2.0
    %v2146 = vmul.f32 %v2018, 2.0
    %v2147 = vmul.f32 %v2019, 2.0
    %v2148 = vmul.f32 %v2020, 2.0
    %v2149 = vmul.f32 %v2021, 2.0
    %v2150 = vmul.f32 %v2022, 2.0
    %v2151 = vmul.f32 %v2023, 2.0
    %v2152 = vmul.f32 %v2024, 2.0
    %v2153 = vmul.f32 %v2025, 2.0
    %v2154 = vmul.f32 %v2026, 2.0
    %v2155 = vmul.f32 %v2027, 2.0
    %v2156 = vmul.f32 %v2028, 2.0
    %v2157 = vmul.f32 %v2029, 2.0
    %v2158 = vmul.f32 %v2030, 2.0
    %v2159 = vmul.f32 %v2031, 2.0
    %v2160 = vmul.f32 %v2032, 2.0
    %v2161 = vmul.f32 %v2033, 2.0
    %v2162 = vmul.f32 %v2034, 2.0
    %v2163 = vmul.f32 %v2035, 2.0
    %v2164 = vmul.f32 %v2036, 2.0
    %v2165 = vmul.f32 %v2037, 2.0
    %v2166 = vmul.f32 %v2038, 2.0
    %v2167 = vmul.f32 %v2039, 2.0
    %v2168 = vmul.f32 %v2040, 2.0
    %v2169 = vmul.f32 %v2041, 2.0
    %v2170 = vmul.f32 %v2042, 2.0
    %v2171 = vmul.f32 %v2043, 2.0
    %v2172 = vmul.f32 %v2044, 2.0
    %v2173 = vmul.f32 %v2045, 2.0
    %v2174 = vmul.f32 %v2046, 2.0
    %v2175 = vmul.f32 %v2047, 2.0
    %v2176 = vmul.f32 %v2048, 2.0
    %v2177 = vmul.f32 %v2049, 2.0
    %v2178 = vmul.f32 %v2050, 2.0
    %v2179 = vmul.f32 %v2051, 2.0
    %v2180 = vmul.f32 %v2052, 2.0
    %v2181 = vmul.f32 %v2053, 2.0
    %v2182 = vmul.f32 %v2054, 2.0
    %v2183 = vmul.f32 %v2055, 2.0
    %v2184 = vmul.f32 %v2056, 2.0
    %v2185 = vmul.f32 %v2057, 2.0
    %v2186 = vmul.f32 %v2058, 2.0
    %v2187 = vmul.f32 %v2059, 2.0
    %v2188 = vmul.f32 %v2060, 2.0
    %v2189 = vmul.f32 %v2061, 2.0
    %v2190 = vmul.f32 %v2062, 2.0
    %v2191 = vmul.f32 %v2063, 2.0
    %v2192 = vmul.f32 %v2064, 2.0
    %v2193 = vmul.f32 %v2065, 2.0
    %v2194 = vmul.f32 %v2066, 2.0
    %v2195 = vmul.f32 %v2067, 2.0
    %v2196 = vmul.f32 %v2068, 2.0
    %v2197 = vmul.f32 %v2069, 2.0
    %v2198 = vmul.f32 %v2070, 2.0
    %v2199 = vmul.f32 %v2071, 2.0
    %v2200 = vmul.f32 %v2072, 2.0
    %v2201 = vmul.f32 %v2073, 2.0
    %v2202 = vmul.f32 %v2074, 2.0
    %v2203 = vmul.f32 %v2075, 2.0
    %v2204 = vmul.f32 %v2076, 2.0
    %v2205 = vmul.f32 %v2077, 2.0
    %v2206 = vmul.f32 %v2078, 2.0
    %v2207 = vmul.f32 %v2079, 2.0
    %v2208 = vmul.f32 %v2080, 2.0
    %v2209 = vmul.f32 %v2081, 2.0
    %v2210 = vmul.f32 %v2082, 2.0
    %v2211 = vmul.f32 %v2083, 2.0
    %v2212 = vmul.f32 %v2084, 2.0
    %v2213 = vmul.f32 %v2085, 2.0
    %v2214 = vmul.f32 %v2086, 2.0
    %v2215 = vmul.f32 %v2087, 2.0
    %v2216 = vmul.f32 %v2088, 2.0
    %v2217 = vmul.f32 %v2089, 2.0
    %v2218 = vmul.f32 %v2090, 2.0
    %v2219 = vmul.f32 %v2091, 2.0
    %v2220 = vadd.f32 %v2092, 1e-18
    %v2221 = vadd.f32 %v2093, 1e-18
    %v2222 = vadd.f32 %v2094, 1e-18
    %v2223 = vadd.f32 %v2095, 1e-18
    %v2224 = vadd.f32 %v2096, 1e-18
    %v2225 = vadd.f32 %v2097, 1e-18
    %v2226 = vadd.f32 %v2098, 1e-18
    %v2227 = vadd.f32 %v2099, 1e-18
    %v2228 = vadd.f32 %v2100, 1e-18
    %v2229 = vadd.f32 %v2101, 1e-18
    %v2230 = vadd.f32 %v2102, 1e-18
    %v2231 = vadd.f32 %v2103, 1e-18
    %v2232 = vadd.f32 %v2104, 1e-18
    %v2233 = vadd.f32 %v2105, 1e-18
    %v2234 = vadd.f32 %v2106, 1e-18
    %v2235 = vadd.f32 %v2107, 1e-18
    %v2236 = vadd.f32 %v2108, 1e-18
    %v2237 = vadd.f32 %v2109, 1e-18
    %v2238 = vadd.f32 %v2110, 1e-18
    %v2239 = vadd.f32 %v2111, 1e-18
    %v2240 = vadd.f32 %v2112, 1e-18
    %v2241 = vadd.f32 %v2113, 1e-18
    %v2242 = vadd.f32 %v2114, 1e-18
    %v2243 = vadd.f32 %v2115, 1e-18
    %v2244 = vadd.f32 %v2116, 1e-18
    %v2245 = vadd.f32 %v2117, 1e-18
    %v2246 = vadd.f32 %v2118, 1e-18
    %v2247 = vadd.f32 %v2119, 1e-18
    %v2248 = vadd.f32 %v2120, 1e-18
    %v2249 = vadd.f32 %v2121, 1e-18
    %v2250 = vadd.f32 %v2122, 1e-18
    %v2251 = vadd.f32 %v2123, 1e-18
    %v2252 = vadd.f32 %v2124, 1e-18
    %v2253 = vadd.f32 %v2125, 1e-18
    %v2254 = vadd.f32 %v2126, 1e-18
    %v2255 = vadd.f32 %v2127, 1e-18
    %v2256 = vadd.f32 %v2128, 1e-18
    %v2257 = vadd.f32 %v2129, 1e-18
    %v2258 = vadd.f32 %v2130, 1e-18
    %v2259 = vadd.f32 %v2131, 1e-18
    %v2260 = vadd.f32 %v2132, 1e-18
    %v2261 = vadd.f32 %v2133, 1e-18
    %v2262 = vadd.f32 %v2134, 1e-18
    %v2263 = vadd.f32 %v2135, 1e-18
    %v2264 = vadd.f32 %v2136, 1e-18
    %v2265 = vadd.f32 %v2137, 1e-18
    %v2266 = vadd.f32 %v2138, 1e-18
    %v2267 = vadd.f32 %v2139, 1e-18
    %v2268 = vadd.f32 %v2140, 1e-18
    %v2269 = vadd.f32 %v2141, 1e-18
    %v2270 = vadd.f32 %v2142, 1e-18
    %v2271 = vadd.f32 %v2143, 1e-18
    %v2272 = vadd.f32 %v2144, 1e-18
    %v2273 = vadd.f32 %v2145, 1e-18
    %v2274 = vadd.f32 %v2146, 1e-18
    %v2275 = vadd.f32 %v2147, 1e-18
    %v2276 = vadd.f32 %v2148, 1e-18
    %v2277 = vadd.f32 %v2149, 1e-18
    %v2278 = vadd.f32 %v2150, 1e-18
    %v2279 = vadd.f32 %v2151, 1e-18
    %v2280 = vadd.f32 %v2152, 1e-18
    %v2281 = vadd.f32 %v2153, 1e-18
    %v2282 = vadd.f32 %v2154, 1e-18
    %v2283 = vadd.f32 %v2155, 1e-18
    %v2284 = vadd.f32 %v2156, 1e-18
    %v2285 = vadd.f32 %v2157, 1e-18
    %v2286 = vadd.f32 %v2158, 1e-18
    %v2287 = vadd.f32 %v2159, 1e-18
    %v2288 = vadd.f32 %v2160, 1e-18
    %v2289 = vadd.f32 %v2161, 1e-18
    %v2290 = vadd.f32 %v2162, 1e-18
    %v2291 = vadd.f32 %v2163, 1e-18
    %v2292 = vadd.f32 %v2164, 1e-18
    %v2293 = vadd.f32 %v2165, 1e-18
    %v2294 = vadd.f32 %v2166, 1e-18
    %v2295 = vadd.f32 %v2167, 1e-18
    %v2296 = vadd.f32 %v2168, 1e-18
    %v2297 = vadd.f32 %v2169, 1e-18
    %v2298 = vadd.f32 %v2170, 1e-18
    %v2299 = vadd.f32 %v2171, 1e-18
    %v2300 = vadd.f32 %v2172, 1e-18
    %v2301 = vadd.f32 %v2173, 1e-18
    %v2302 = vadd.f32 %v2174, 1e-18
    %v2303 = vadd.f32 %v2175, 1e-18
    %v2304 = vadd.f32 %v2176, 1e-18
    %v2305 = vadd.f32 %v2177, 1e-18
    %v2306 = vadd.f32 %v2178, 1e-18
    %v2307 = vadd.f32 %v2179, 1e-18
    %v2308 = vadd.f32 %v2180, 1e-18
    %v2309 = vadd.f32 %v2181, 1e-18
    %v2310 = vadd.f32 %v2182, 1e-18
    %v2311 = vadd.f32 %v2183, 1e-18
    %v2312 = vadd.f32 %v2184, 1e-18
    %v2313 = vadd.f32 %v2185, 1e-18
    %v2314 = vadd.f32 %v2186, 1e-18
    %v2315 = vadd.f32 %v2187, 1e-18
    %v2316 = vadd.f32 %v2188, 1e-18
    %v2317 = vadd.f32 %v2189, 1e-18
    %v2318 = vadd.f32 %v2190, 1e-18
    %v2319 = vadd.f32 %v2191, 1e-18
    %v2320 = vadd.f32 %v2192, 1e-18
    %v2321 = vadd.f32 %v2193, 1e-18
    %v2322 = vadd.f32 %v2194, 1e-18
    %v2323 = vadd.f32 %v2195, 1e-18
    %v2324 = vadd.f32 %v2196, 1e-18
    %v2325 = vadd.f32 %v2197, 1e-18
    %v2326 = vadd.f32 %v2198, 1e-18
    %v2327 = vadd.f32 %v2199, 1e-18
    %v2328 = vadd.f32 %v2200, 1e-18
    %v2329 = vadd.f32 %v2201, 1e-18
    %v2330 = vadd.f32 %v2202, 1e-18
    %v2331 = vadd.f32 %v2203, 1e-18
    %v2332 = vadd.f32 %v2204, 1e-18
    %v2333 = vadd.f32 %v2205, 1e-18
    %v2334 = vadd.f32 %v2206, 1e-18
    %v2335 = vadd.f32 %v2207, 1e-18
    %v2336 = vadd.f32 %v2208, 1e-18
    %v2337 = vadd.f32 %v2209, 1e-18
    %v2338 = vadd.f32 %v2210, 1e-18
    %v2339 = vadd.f32 %v2211, 1e-18
    %v2340 = vadd.f32 %v2212, 1e-18
    %v2341 = vadd.f32 %v2213, 1e-18
    %v2342 = vadd.f32 %v2214, 1e-18
    %v2343 = vadd.f32 %v2215, 1e-18
    %v2344 = vadd.f32 %v2216, 1e-18
    %v2345 = vadd.f32 %v2217, 1e-18
    %v2346 = vadd.f32 %v2218, 1e-18
    %v2347 = vadd.f32 %v2219, 1e-18
    %v2348 = vsel %vm466, 0.0, -1e+30
    %v2349 = vadd.f32 %v2220, %v2348
    %v2350 = vadd.f32 %v2221, %v2348
    %v2351 = vadd.f32 %v2222, %v2348
    %v2352 = vadd.f32 %v2223, %v2348
    %v2353 = vadd.f32 %v2224, %v2348
    %v2354 = vadd.f32 %v2225, %v2348
    %v2355 = vadd.f32 %v2226, %v2348
    %v2356 = vadd.f32 %v2227, %v2348
    %v2357 = vadd.f32 %v2228, %v2348
    %v2358 = vadd.f32 %v2229, %v2348
    %v2359 = vadd.f32 %v2230, %v2348
    %v2360 = vadd.f32 %v2231, %v2348
    %v2361 = vadd.f32 %v2232, %v2348
    %v2362 = vadd.f32 %v2233, %v2348
    %v2363 = vadd.f32 %v2234, %v2348
    %v2364 = vadd.f32 %v2235, %v2348
    %v2365 = vadd.f32 %v2236, %v2348
    %v2366 = vadd.f32 %v2237, %v2348
    %v2367 = vadd.f32 %v2238, %v2348
    %v2368 = vadd.f32 %v2239, %v2348
    %v2369 = vadd.f32 %v2240, %v2348
    %v2370 = vadd.f32 %v2241, %v2348
    %v2371 = vadd.f32 %v2242, %v2348
    %v2372 = vadd.f32 %v2243, %v2348
    %v2373 = vadd.f32 %v2244, %v2348
    %v2374 = vadd.f32 %v2245, %v2348
    %v2375 = vadd.f32 %v2246, %v2348
    %v2376 = vadd.f32 %v2247, %v2348
    %v2377 = vadd.f32 %v2248, %v2348
    %v2378 = vadd.f32 %v2249, %v2348
    %v2379 = vadd.f32 %v2250, %v2348
    %v2380 = vadd.f32 %v2251, %v2348
    %v2381 = vadd.f32 %v2252, %v2348
    %v2382 = vadd.f32 %v2253, %v2348
    %v2383 = vadd.f32 %v2254, %v2348
    %v2384 = vadd.f32 %v2255, %v2348
    %v2385 = vadd.f32 %v2256, %v2348
    %v2386 = vadd.f32 %v2257, %v2348
    %v2387 = vadd.f32 %v2258, %v2348
    %v2388 = vadd.f32 %v2259, %v2348
    %v2389 = vadd.f32 %v2260, %v2348
    %v2390 = vadd.f32 %v2261, %v2348
    %v2391 = vadd.f32 %v2262, %v2348
    %v2392 = vadd.f32 %v2263, %v2348
    %v2393 = vadd.f32 %v2264, %v2348
    %v2394 = vadd.f32 %v2265, %v2348
    %v2395 = vadd.f32 %v2266, %v2348
    %v2396 = vadd.f32 %v2267, %v2348
    %v2397 = vadd.f32 %v2268, %v2348
    %v2398 = vadd.f32 %v2269, %v2348
    %v2399 = vadd.f32 %v2270, %v2348
    %v2400 = vadd.f32 %v2271, %v2348
    %v2401 = vadd.f32 %v2272, %v2348
    %v2402 = vadd.f32 %v2273, %v2348
    %v2403 = vadd.f32 %v2274, %v2348
    %v2404 = vadd.f32 %v2275, %v2348
    %v2405 = vadd.f32 %v2276, %v2348
    %v2406 = vadd.f32 %v2277, %v2348
    %v2407 = vadd.f32 %v2278, %v2348
    %v2408 = vadd.f32 %v2279, %v2348
    %v2409 = vadd.f32 %v2280, %v2348
    %v2410 = vadd.f32 %v2281, %v2348
    %v2411 = vadd.f32 %v2282, %v2348
    %v2412 = vadd.f32 %v2283, %v2348
    %v2413 = vadd.f32 %v2284, %v2348
    %v2414 = vadd.f32 %v2285, %v2348
    %v2415 = vadd.f32 %v2286, %v2348
    %v2416 = vadd.f32 %v2287, %v2348
    %v2417 = vadd.f32 %v2288, %v2348
    %v2418 = vadd.f32 %v2289, %v2348
    %v2419 = vadd.f32 %v2290, %v2348
    %v2420 = vadd.f32 %v2291, %v2348
    %v2421 = vadd.f32 %v2292, %v2348
    %v2422 = vadd.f32 %v2293, %v2348
    %v2423 = vadd.f32 %v2294, %v2348
    %v2424 = vadd.f32 %v2295, %v2348
    %v2425 = vadd.f32 %v2296, %v2348
    %v2426 = vadd.f32 %v2297, %v2348
    %v2427 = vadd.f32 %v2298, %v2348
    %v2428 = vadd.f32 %v2299, %v2348
    %v2429 = vadd.f32 %v2300, %v2348
    %v2430 = vadd.f32 %v2301, %v2348
    %v2431 = vadd.f32 %v2302, %v2348
    %v2432 = vadd.f32 %v2303, %v2348
    %v2433 = vadd.f32 %v2304, %v2348
    %v2434 = vadd.f32 %v2305, %v2348
    %v2435 = vadd.f32 %v2306, %v2348
    %v2436 = vadd.f32 %v2307, %v2348
    %v2437 = vadd.f32 %v2308, %v2348
    %v2438 = vadd.f32 %v2309, %v2348
    %v2439 = vadd.f32 %v2310, %v2348
    %v2440 = vadd.f32 %v2311, %v2348
    %v2441 = vadd.f32 %v2312, %v2348
    %v2442 = vadd.f32 %v2313, %v2348
    %v2443 = vadd.f32 %v2314, %v2348
    %v2444 = vadd.f32 %v2315, %v2348
    %v2445 = vadd.f32 %v2316, %v2348
    %v2446 = vadd.f32 %v2317, %v2348
    %v2447 = vadd.f32 %v2318, %v2348
    %v2448 = vadd.f32 %v2319, %v2348
    %v2449 = vadd.f32 %v2320, %v2348
    %v2450 = vadd.f32 %v2321, %v2348
    %v2451 = vadd.f32 %v2322, %v2348
    %v2452 = vadd.f32 %v2323, %v2348
    %v2453 = vadd.f32 %v2324, %v2348
    %v2454 = vadd.f32 %v2325, %v2348
    %v2455 = vadd.f32 %v2326, %v2348
    %v2456 = vadd.f32 %v2327, %v2348
    %v2457 = vadd.f32 %v2328, %v2348
    %v2458 = vadd.f32 %v2329, %v2348
    %v2459 = vadd.f32 %v2330, %v2348
    %v2460 = vadd.f32 %v2331, %v2348
    %v2461 = vadd.f32 %v2332, %v2348
    %v2462 = vadd.f32 %v2333, %v2348
    %v2463 = vadd.f32 %v2334, %v2348
    %v2464 = vadd.f32 %v2335, %v2348
    %v2465 = vadd.f32 %v2336, %v2348
    %v2466 = vadd.f32 %v2337, %v2348
    %v2467 = vadd.f32 %v2338, %v2348
    %v2468 = vadd.f32 %v2339, %v2348
    %v2469 = vadd.f32 %v2340, %v2348
    %v2470 = vadd.f32 %v2341, %v2348
    %v2471 = vadd.f32 %v2342, %v2348
    %v2472 = vadd.f32 %v2343, %v2348
    %v2473 = vadd.f32 %v2344, %v2348
    %v2474 = vadd.f32 %v2345, %v2348
    %v2475 = vadd.f32 %v2346, %v2348
    %v2476 = vadd.f32 %v2347, %v2348
    %2477 = vmax.xlane.f32.xlu0 %v2349
    %v2478 = vpop.xlane.xlu0 %2477
    %2479 = vmax.xlane.f32.xlu0 %v2350
    %v2480 = vpop.xlane.xlu0 %2479
    %2481 = vmax.xlane.f32.xlu0 %v2351
    %v2482 = vpop.xlane.xlu0 %2481
    %2483 = vmax.xlane.f32.xlu0 %v2352
    %v2484 = vpop.xlane.xlu0 %2483
    %2485 = vmax.xlane.f32.xlu0 %v2353
    %v2486 = vpop.xlane.xlu0 %2485
    %2487 = vmax.xlane.f32.xlu0 %v2354
    %v2488 = vpop.xlane.xlu0 %2487
    %2489 = vmax.xlane.f32.xlu0 %v2355
    %v2490 = vpop.xlane.xlu0 %2489
    %2491 = vmax.xlane.f32.xlu0 %v2356
    %v2492 = vpop.xlane.xlu0 %2491
    %2493 = vmax.xlane.f32.xlu0 %v2357
    %v2494 = vpop.xlane.xlu0 %2493
    %2495 = vmax.xlane.f32.xlu0 %v2358
    %v2496 = vpop.xlane.xlu0 %2495
    %2497 = vmax.xlane.f32.xlu0 %v2359
    %v2498 = vpop.xlane.xlu0 %2497
    %2499 = vmax.xlane.f32.xlu0 %v2360
    %v2500 = vpop.xlane.xlu0 %2499
    %2501 = vmax.xlane.f32.xlu0 %v2361
    %v2502 = vpop.xlane.xlu0 %2501
    %2503 = vmax.xlane.f32.xlu0 %v2362
    %v2504 = vpop.xlane.xlu0 %2503
    %2505 = vmax.xlane.f32.xlu0 %v2363
    %v2506 = vpop.xlane.xlu0 %2505
    %2507 = vmax.xlane.f32.xlu0 %v2364
    %v2508 = vpop.xlane.xlu0 %2507
    %2509 = vmax.xlane.f32.xlu0 %v2365
    %v2510 = vpop.xlane.xlu0 %2509
    %2511 = vmax.xlane.f32.xlu0 %v2366
    %v2512 = vpop.xlane.xlu0 %2511
    %2513 = vmax.xlane.f32.xlu0 %v2367
    %v2514 = vpop.xlane.xlu0 %2513
    %2515 = vmax.xlane.f32.xlu0 %v2368
    %v2516 = vpop.xlane.xlu0 %2515
    %2517 = vmax.xlane.f32.xlu0 %v2369
    %v2518 = vpop.xlane.xlu0 %2517
    %2519 = vmax.xlane.f32.xlu0 %v2370
    %v2520 = vpop.xlane.xlu0 %2519
    %2521 = vmax.xlane.f32.xlu0 %v2371
    %v2522 = vpop.xlane.xlu0 %2521
    %2523 = vmax.xlane.f32.xlu0 %v2372
    %v2524 = vpop.xlane.xlu0 %2523
    %2525 = vmax.xlane.f32.xlu0 %v2373
    %v2526 = vpop.xlane.xlu0 %2525
    %2527 = vmax.xlane.f32.xlu0 %v2374
    %v2528 = vpop.xlane.xlu0 %2527
    %2529 = vmax.xlane.f32.xlu0 %v2375
    %v2530 = vpop.xlane.xlu0 %2529
    %2531 = vmax.xlane.f32.xlu0 %v2376
    %v2532 = vpop.xlane.xlu0 %2531
    %2533 = vmax.xlane.f32.xlu0 %v2377
    %v2534 = vpop.xlane.xlu0 %2533
    %2535 = vmax.xlane.f32.xlu0 %v2378
    %v2536 = vpop.xlane.xlu0 %2535
    %2537 = vmax.xlane.f32.xlu0 %v2379
    %v2538 = vpop.xlane.xlu0 %2537
    %2539 = vmax.xlane.f32.xlu0 %v2380
    %v2540 = vpop.xlane.xlu0 %2539
    %2541 = vmax.xlane.f32.xlu0 %v2381
    %v2542 = vpop.xlane.xlu0 %2541
    %2543 = vmax.xlane.f32.xlu0 %v2382
    %v2544 = vpop.xlane.xlu0 %2543
    %2545 = vmax.xlane.f32.xlu0 %v2383
    %v2546 = vpop.xlane.xlu0 %2545
    %2547 = vmax.xlane.f32.xlu0 %v2384
    %v2548 = vpop.xlane.xlu0 %2547
    %2549 = vmax.xlane.f32.xlu0 %v2385
    %v2550 = vpop.xlane.xlu0 %2549
    %2551 = vmax.xlane.f32.xlu0 %v2386
    %v2552 = vpop.xlane.xlu0 %2551
    %2553 = vmax.xlane.f32.xlu0 %v2387
    %v2554 = vpop.xlane.xlu0 %2553
    %2555 = vmax.xlane.f32.xlu0 %v2388
    %v2556 = vpop.xlane.xlu0 %2555
    %2557 = vmax.xlane.f32.xlu0 %v2389
    %v2558 = vpop.xlane.xlu0 %2557
    %2559 = vmax.xlane.f32.xlu0 %v2390
    %v2560 = vpop.xlane.xlu0 %2559
    %2561 = vmax.xlane.f32.xlu0 %v2391
    %v2562 = vpop.xlane.xlu0 %2561
    %2563 = vmax.xlane.f32.xlu0 %v2392
    %v2564 = vpop.xlane.xlu0 %2563
    %2565 = vmax.xlane.f32.xlu0 %v2393
    %v2566 = vpop.xlane.xlu0 %2565
    %2567 = vmax.xlane.f32.xlu0 %v2394
    %v2568 = vpop.xlane.xlu0 %2567
    %2569 = vmax.xlane.f32.xlu0 %v2395
    %v2570 = vpop.xlane.xlu0 %2569
    %2571 = vmax.xlane.f32.xlu0 %v2396
    %v2572 = vpop.xlane.xlu0 %2571
    %2573 = vmax.xlane.f32.xlu0 %v2397
    %v2574 = vpop.xlane.xlu0 %2573
    %2575 = vmax.xlane.f32.xlu0 %v2398
    %v2576 = vpop.xlane.xlu0 %2575
    %2577 = vmax.xlane.f32.xlu0 %v2399
    %v2578 = vpop.xlane.xlu0 %2577
    %2579 = vmax.xlane.f32.xlu0 %v2400
    %v2580 = vpop.xlane.xlu0 %2579
    %2581 = vmax.xlane.f32.xlu0 %v2401
    %v2582 = vpop.xlane.xlu0 %2581
    %2583 = vmax.xlane.f32.xlu0 %v2402
    %v2584 = vpop.xlane.xlu0 %2583
    %2585 = vmax.xlane.f32.xlu0 %v2403
    %v2586 = vpop.xlane.xlu0 %2585
    %2587 = vmax.xlane.f32.xlu0 %v2404
    %v2588 = vpop.xlane.xlu0 %2587
    %2589 = vmax.xlane.f32.xlu0 %v2405
    %v2590 = vpop.xlane.xlu0 %2589
    %2591 = vmax.xlane.f32.xlu0 %v2406
    %v2592 = vpop.xlane.xlu0 %2591
    %2593 = vmax.xlane.f32.xlu0 %v2407
    %v2594 = vpop.xlane.xlu0 %2593
    %2595 = vmax.xlane.f32.xlu0 %v2408
    %v2596 = vpop.xlane.xlu0 %2595
    %2597 = vmax.xlane.f32.xlu0 %v2409
    %v2598 = vpop.xlane.xlu0 %2597
    %2599 = vmax.xlane.f32.xlu0 %v2410
    %v2600 = vpop.xlane.xlu0 %2599
    %2601 = vmax.xlane.f32.xlu0 %v2411
    %v2602 = vpop.xlane.xlu0 %2601
    %2603 = vmax.xlane.f32.xlu0 %v2412
    %v2604 = vpop.xlane.xlu0 %2603
    %2605 = vmax.xlane.f32.xlu0 %v2413
    %v2606 = vpop.xlane.xlu0 %2605
    %2607 = vmax.xlane.f32.xlu0 %v2414
    %v2608 = vpop.xlane.xlu0 %2607
    %2609 = vmax.xlane.f32.xlu0 %v2415
    %v2610 = vpop.xlane.xlu0 %2609
    %2611 = vmax.xlane.f32.xlu0 %v2416
    %v2612 = vpop.xlane.xlu0 %2611
    %2613 = vmax.xlane.f32.xlu0 %v2417
    %v2614 = vpop.xlane.xlu0 %2613
    %2615 = vmax.xlane.f32.xlu0 %v2418
    %v2616 = vpop.xlane.xlu0 %2615
    %2617 = vmax.xlane.f32.xlu0 %v2419
    %v2618 = vpop.xlane.xlu0 %2617
    %2619 = vmax.xlane.f32.xlu0 %v2420
    %v2620 = vpop.xlane.xlu0 %2619
    %2621 = vmax.xlane.f32.xlu0 %v2421
    %v2622 = vpop.xlane.xlu0 %2621
    %2623 = vmax.xlane.f32.xlu0 %v2422
    %v2624 = vpop.xlane.xlu0 %2623
    %2625 = vmax.xlane.f32.xlu0 %v2423
    %v2626 = vpop.xlane.xlu0 %2625
    %2627 = vmax.xlane.f32.xlu0 %v2424
    %v2628 = vpop.xlane.xlu0 %2627
    %2629 = vmax.xlane.f32.xlu0 %v2425
    %v2630 = vpop.xlane.xlu0 %2629
    %2631 = vmax.xlane.f32.xlu0 %v2426
    %v2632 = vpop.xlane.xlu0 %2631
    %2633 = vmax.xlane.f32.xlu0 %v2427
    %v2634 = vpop.xlane.xlu0 %2633
    %2635 = vmax.xlane.f32.xlu0 %v2428
    %v2636 = vpop.xlane.xlu0 %2635
    %2637 = vmax.xlane.f32.xlu0 %v2429
    %v2638 = vpop.xlane.xlu0 %2637
    %2639 = vmax.xlane.f32.xlu0 %v2430
    %v2640 = vpop.xlane.xlu0 %2639
    %2641 = vmax.xlane.f32.xlu0 %v2431
    %v2642 = vpop.xlane.xlu0 %2641
    %2643 = vmax.xlane.f32.xlu0 %v2432
    %v2644 = vpop.xlane.xlu0 %2643
    %2645 = vmax.xlane.f32.xlu0 %v2433
    %v2646 = vpop.xlane.xlu0 %2645
    %2647 = vmax.xlane.f32.xlu0 %v2434
    %v2648 = vpop.xlane.xlu0 %2647
    %2649 = vmax.xlane.f32.xlu0 %v2435
    %v2650 = vpop.xlane.xlu0 %2649
    %2651 = vmax.xlane.f32.xlu0 %v2436
    %v2652 = vpop.xlane.xlu0 %2651
    %2653 = vmax.xlane.f32.xlu0 %v2437
    %v2654 = vpop.xlane.xlu0 %2653
    %2655 = vmax.xlane.f32.xlu0 %v2438
    %v2656 = vpop.xlane.xlu0 %2655
    %2657 = vmax.xlane.f32.xlu0 %v2439
    %v2658 = vpop.xlane.xlu0 %2657
    %2659 = vmax.xlane.f32.xlu0 %v2440
    %v2660 = vpop.xlane.xlu0 %2659
    %2661 = vmax.xlane.f32.xlu0 %v2441
    %v2662 = vpop.xlane.xlu0 %2661
    %2663 = vmax.xlane.f32.xlu0 %v2442
    %v2664 = vpop.xlane.xlu0 %2663
    %2665 = vmax.xlane.f32.xlu0 %v2443
    %v2666 = vpop.xlane.xlu0 %2665
    %2667 = vmax.xlane.f32.xlu0 %v2444
    %v2668 = vpop.xlane.xlu0 %2667
    %2669 = vmax.xlane.f32.xlu0 %v2445
    %v2670 = vpop.xlane.xlu0 %2669
    %2671 = vmax.xlane.f32.xlu0 %v2446
    %v2672 = vpop.xlane.xlu0 %2671
    %2673 = vmax.xlane.f32.xlu0 %v2447
    %v2674 = vpop.xlane.xlu0 %2673
    %2675 = vmax.xlane.f32.xlu0 %v2448
    %v2676 = vpop.xlane.xlu0 %2675
    %2677 = vmax.xlane.f32.xlu0 %v2449
    %v2678 = vpop.xlane.xlu0 %2677
    %2679 = vmax.xlane.f32.xlu0 %v2450
    %v2680 = vpop.xlane.xlu0 %2679
    %2681 = vmax.xlane.f32.xlu0 %v2451
    %v2682 = vpop.xlane.xlu0 %2681
    %2683 = vmax.xlane.f32.xlu0 %v2452
    %v2684 = vpop.xlane.xlu0 %2683
    %2685 = vmax.xlane.f32.xlu0 %v2453
    %v2686 = vpop.xlane.xlu0 %2685
    %2687 = vmax.xlane.f32.xlu0 %v2454
    %v2688 = vpop.xlane.xlu0 %2687
    %2689 = vmax.xlane.f32.xlu0 %v2455
    %v2690 = vpop.xlane.xlu0 %2689
    %2691 = vmax.xlane.f32.xlu0 %v2456
    %v2692 = vpop.xlane.xlu0 %2691
    %2693 = vmax.xlane.f32.xlu0 %v2457
    %v2694 = vpop.xlane.xlu0 %2693
    %2695 = vmax.xlane.f32.xlu0 %v2458
    %v2696 = vpop.xlane.xlu0 %2695
    %2697 = vmax.xlane.f32.xlu0 %v2459
    %v2698 = vpop.xlane.xlu0 %2697
    %2699 = vmax.xlane.f32.xlu0 %v2460
    %v2700 = vpop.xlane.xlu0 %2699
    %2701 = vmax.xlane.f32.xlu0 %v2461
    %v2702 = vpop.xlane.xlu0 %2701
    %2703 = vmax.xlane.f32.xlu0 %v2462
    %v2704 = vpop.xlane.xlu0 %2703
    %2705 = vmax.xlane.f32.xlu0 %v2463
    %v2706 = vpop.xlane.xlu0 %2705
    %2707 = vmax.xlane.f32.xlu0 %v2464
    %v2708 = vpop.xlane.xlu0 %2707
    %2709 = vmax.xlane.f32.xlu0 %v2465
    %v2710 = vpop.xlane.xlu0 %2709
    %2711 = vmax.xlane.f32.xlu0 %v2466
    %v2712 = vpop.xlane.xlu0 %2711
    %2713 = vmax.xlane.f32.xlu0 %v2467
    %v2714 = vpop.xlane.xlu0 %2713
    %2715 = vmax.xlane.f32.xlu0 %v2468
    %v2716 = vpop.xlane.xlu0 %2715
    %2717 = vmax.xlane.f32.xlu0 %v2469
    %v2718 = vpop.xlane.xlu0 %2717
    %2719 = vmax.xlane.f32.xlu0 %v2470
    %v2720 = vpop.xlane.xlu0 %2719
    %2721 = vmax.xlane.f32.xlu0 %v2471
    %v2722 = vpop.xlane.xlu0 %2721
    %2723 = vmax.xlane.f32.xlu0 %v2472
    %v2724 = vpop.xlane.xlu0 %2723
    %2725 = vmax.xlane.f32.xlu0 %v2473
    %v2726 = vpop.xlane.xlu0 %2725
    %2727 = vmax.xlane.f32.xlu0 %v2474
    %v2728 = vpop.xlane.xlu0 %2727
    %2729 = vmax.xlane.f32.xlu0 %v2475
    %v2730 = vpop.xlane.xlu0 %2729
    %2731 = vmax.xlane.f32.xlu0 %v2476
    %v2732 = vpop.xlane.xlu0 %2731
    %v2733 = vsub.f32 %v2220, %v2478
    %v2734 = vsub.f32 %v2221, %v2480
    %v2735 = vsub.f32 %v2222, %v2482
    %v2736 = vsub.f32 %v2223, %v2484
    %v2737 = vsub.f32 %v2224, %v2486
    %v2738 = vsub.f32 %v2225, %v2488
    %v2739 = vsub.f32 %v2226, %v2490
    %v2740 = vsub.f32 %v2227, %v2492
    %v2741 = vsub.f32 %v2228, %v2494
    %v2742 = vsub.f32 %v2229, %v2496
    %v2743 = vsub.f32 %v2230, %v2498
    %v2744 = vsub.f32 %v2231, %v2500
    %v2745 = vsub.f32 %v2232, %v2502
    %v2746 = vsub.f32 %v2233, %v2504
    %v2747 = vsub.f32 %v2234, %v2506
    %v2748 = vsub.f32 %v2235, %v2508
    %v2749 = vsub.f32 %v2236, %v2510
    %v2750 = vsub.f32 %v2237, %v2512
    %v2751 = vsub.f32 %v2238, %v2514
    %v2752 = vsub.f32 %v2239, %v2516
    %v2753 = vsub.f32 %v2240, %v2518
    %v2754 = vsub.f32 %v2241, %v2520
    %v2755 = vsub.f32 %v2242, %v2522
    %v2756 = vsub.f32 %v2243, %v2524
    %v2757 = vsub.f32 %v2244, %v2526
    %v2758 = vsub.f32 %v2245, %v2528
    %v2759 = vsub.f32 %v2246, %v2530
    %v2760 = vsub.f32 %v2247, %v2532
    %v2761 = vsub.f32 %v2248, %v2534
    %v2762 = vsub.f32 %v2249, %v2536
    %v2763 = vsub.f32 %v2250, %v2538
    %v2764 = vsub.f32 %v2251, %v2540
    %v2765 = vsub.f32 %v2252, %v2542
    %v2766 = vsub.f32 %v2253, %v2544
    %v2767 = vsub.f32 %v2254, %v2546
    %v2768 = vsub.f32 %v2255, %v2548
    %v2769 = vsub.f32 %v2256, %v2550
    %v2770 = vsub.f32 %v2257, %v2552
    %v2771 = vsub.f32 %v2258, %v2554
    %v2772 = vsub.f32 %v2259, %v2556
    %v2773 = vsub.f32 %v2260, %v2558
    %v2774 = vsub.f32 %v2261, %v2560
    %v2775 = vsub.f32 %v2262, %v2562
    %v2776 = vsub.f32 %v2263, %v2564
    %v2777 = vsub.f32 %v2264, %v2566
    %v2778 = vsub.f32 %v2265, %v2568
    %v2779 = vsub.f32 %v2266, %v2570
    %v2780 = vsub.f32 %v2267, %v2572
    %v2781 = vsub.f32 %v2268, %v2574
    %v2782 = vsub.f32 %v2269, %v2576
    %v2783 = vsub.f32 %v2270, %v2578
    %v2784 = vsub.f32 %v2271, %v2580
    %v2785 = vsub.f32 %v2272, %v2582
    %v2786 = vsub.f32 %v2273, %v2584
    %v2787 = vsub.f32 %v2274, %v2586
    %v2788 = vsub.f32 %v2275, %v2588
    %v2789 = vsub.f32 %v2276, %v2590
    %v2790 = vsub.f32 %v2277, %v2592
    %v2791 = vsub.f32 %v2278, %v2594
    %v2792 = vsub.f32 %v2279, %v2596
    %v2793 = vsub.f32 %v2280, %v2598
    %v2794 = vsub.f32 %v2281, %v2600
    %v2795 = vsub.f32 %v2282, %v2602
    %v2796 = vsub.f32 %v2283, %v2604
    %v2797 = vsub.f32 %v2284, %v2606
    %v2798 = vsub.f32 %v2285, %v2608
    %v2799 = vsub.f32 %v2286, %v2610
    %v2800 = vsub.f32 %v2287, %v2612
    %v2801 = vsub.f32 %v2288, %v2614
    %v2802 = vsub.f32 %v2289, %v2616
    %v2803 = vsub.f32 %v2290, %v2618
    %v2804 = vsub.f32 %v2291, %v2620
    %v2805 = vsub.f32 %v2292, %v2622
    %v2806 = vsub.f32 %v2293, %v2624
    %v2807 = vsub.f32 %v2294, %v2626
    %v2808 = vsub.f32 %v2295, %v2628
    %v2809 = vsub.f32 %v2296, %v2630
    %v2810 = vsub.f32 %v2297, %v2632
    %v2811 = vsub.f32 %v2298, %v2634
    %v2812 = vsub.f32 %v2299, %v2636
    %v2813 = vsub.f32 %v2300, %v2638
    %v2814 = vsub.f32 %v2301, %v2640
    %v2815 = vsub.f32 %v2302, %v2642
    %v2816 = vsub.f32 %v2303, %v2644
    %v2817 = vsub.f32 %v2304, %v2646
    %v2818 = vsub.f32 %v2305, %v2648
    %v2819 = vsub.f32 %v2306, %v2650
    %v2820 = vsub.f32 %v2307, %v2652
    %v2821 = vsub.f32 %v2308, %v2654
    %v2822 = vsub.f32 %v2309, %v2656
    %v2823 = vsub.f32 %v2310, %v2658
    %v2824 = vsub.f32 %v2311, %v2660
    %v2825 = vsub.f32 %v2312, %v2662
    %v2826 = vsub.f32 %v2313, %v2664
    %v2827 = vsub.f32 %v2314, %v2666
    %v2828 = vsub.f32 %v2315, %v2668
    %v2829 = vsub.f32 %v2316, %v2670
    %v2830 = vsub.f32 %v2317, %v2672
    %v2831 = vsub.f32 %v2318, %v2674
    %v2832 = vsub.f32 %v2319, %v2676
    %v2833 = vsub.f32 %v2320, %v2678
    %v2834 = vsub.f32 %v2321, %v2680
    %v2835 = vsub.f32 %v2322, %v2682
    %v2836 = vsub.f32 %v2323, %v2684
    %v2837 = vsub.f32 %v2324, %v2686
    %v2838 = vsub.f32 %v2325, %v2688
    %v2839 = vsub.f32 %v2326, %v2690
    %v2840 = vsub.f32 %v2327, %v2692
    %v2841 = vsub.f32 %v2328, %v2694
    %v2842 = vsub.f32 %v2329, %v2696
    %v2843 = vsub.f32 %v2330, %v2698
    %v2844 = vsub.f32 %v2331, %v2700
    %v2845 = vsub.f32 %v2332, %v2702
    %v2846 = vsub.f32 %v2333, %v2704
    %v2847 = vsub.f32 %v2334, %v2706
    %v2848 = vsub.f32 %v2335, %v2708
    %v2849 = vsub.f32 %v2336, %v2710
    %v2850 = vsub.f32 %v2337, %v2712
    %v2851 = vsub.f32 %v2338, %v2714
    %v2852 = vsub.f32 %v2339, %v2716
    %v2853 = vsub.f32 %v2340, %v2718
    %v2854 = vsub.f32 %v2341, %v2720
    %v2855 = vsub.f32 %v2342, %v2722
    %v2856 = vsub.f32 %v2343, %v2724
    %v2857 = vsub.f32 %v2344, %v2726
    %v2858 = vsub.f32 %v2345, %v2728
    %v2859 = vsub.f32 %v2346, %v2730
    %v2860 = vsub.f32 %v2347, %v2732
    %v2861 = vmul.f32 %v2733, 1.442695
    %v2862 = vpow.pop %v2861
    %v2863 = vmul.f32 %v2734, 1.442695
    %v2864 = vpow.pop %v2863
    %v2865 = vmul.f32 %v2735, 1.442695
    %v2866 = vpow.pop %v2865
    %v2867 = vmul.f32 %v2736, 1.442695
    %v2868 = vpow.pop %v2867
    %v2869 = vmul.f32 %v2737, 1.442695
    %v2870 = vpow.pop %v2869
    %v2871 = vmul.f32 %v2738, 1.442695
    %v2872 = vpow.pop %v2871
    %v2873 = vmul.f32 %v2739, 1.442695
    %v2874 = vpow.pop %v2873
    %v2875 = vmul.f32 %v2740, 1.442695
    %v2876 = vpow.pop %v2875
    %v2877 = vmul.f32 %v2741, 1.442695
    %v2878 = vpow.pop %v2877
    %v2879 = vmul.f32 %v2742, 1.442695
    %v2880 = vpow.pop %v2879
    %v2881 = vmul.f32 %v2743, 1.442695
    %v2882 = vpow.pop %v2881
    %v2883 = vmul.f32 %v2744, 1.442695
    %v2884 = vpow.pop %v2883
    %v2885 = vmul.f32 %v2745, 1.442695
    %v2886 = vpow.pop %v2885
    %v2887 = vmul.f32 %v2746, 1.442695
    %v2888 = vpow.pop %v2887
    %v2889 = vmul.f32 %v2747, 1.442695
    %v2890 = vpow.pop %v2889
    %v2891 = vmul.f32 %v2748, 1.442695
    %v2892 = vpow.pop %v2891
    %v2893 = vmul.f32 %v2749, 1.442695
    %v2894 = vpow.pop %v2893
    %v2895 = vmul.f32 %v2750, 1.442695
    %v2896 = vpow.pop %v2895
    %v2897 = vmul.f32 %v2751, 1.442695
    %v2898 = vpow.pop %v2897
    %v2899 = vmul.f32 %v2752, 1.442695
    %v2900 = vpow.pop %v2899
    %v2901 = vmul.f32 %v2753, 1.442695
    %v2902 = vpow.pop %v2901
    %v2903 = vmul.f32 %v2754, 1.442695
    %v2904 = vpow.pop %v2903
    %v2905 = vmul.f32 %v2755, 1.442695
    %v2906 = vpow.pop %v2905
    %v2907 = vmul.f32 %v2756, 1.442695
    %v2908 = vpow.pop %v2907
    %v2909 = vmul.f32 %v2757, 1.442695
    %v2910 = vpow.pop %v2909
    %v2911 = vmul.f32 %v2758, 1.442695
    %v2912 = vpow.pop %v2911
    %v2913 = vmul.f32 %v2759, 1.442695
    %v2914 = vpow.pop %v2913
    %v2915 = vmul.f32 %v2760, 1.442695
    %v2916 = vpow.pop %v2915
    %v2917 = vmul.f32 %v2761, 1.442695
    %v2918 = vpow.pop %v2917
    %v2919 = vmul.f32 %v2762, 1.442695
    %v2920 = vpow.pop %v2919
    %v2921 = vmul.f32 %v2763, 1.442695
    %v2922 = vpow.pop %v2921
    %v2923 = vmul.f32 %v2764, 1.442695
    %v2924 = vpow.pop %v2923
    %v2925 = vmul.f32 %v2765, 1.442695
    %v2926 = vpow.pop %v2925
    %v2927 = vmul.f32 %v2766, 1.442695
    %v2928 = vpow.pop %v2927
    %v2929 = vmul.f32 %v2767, 1.442695
    %v2930 = vpow.pop %v2929
    %v2931 = vmul.f32 %v2768, 1.442695
    %v2932 = vpow.pop %v2931
    %v2933 = vmul.f32 %v2769, 1.442695
    %v2934 = vpow.pop %v2933
    %v2935 = vmul.f32 %v2770, 1.442695
    %v2936 = vpow.pop %v2935
    %v2937 = vmul.f32 %v2771, 1.442695
    %v2938 = vpow.pop %v2937
    %v2939 = vmul.f32 %v2772, 1.442695
    %v2940 = vpow.pop %v2939
    %v2941 = vmul.f32 %v2773, 1.442695
    %v2942 = vpow.pop %v2941
    %v2943 = vmul.f32 %v2774, 1.442695
    %v2944 = vpow.pop %v2943
    %v2945 = vmul.f32 %v2775, 1.442695
    %v2946 = vpow.pop %v2945
    %v2947 = vmul.f32 %v2776, 1.442695
    %v2948 = vpow.pop %v2947
    %v2949 = vmul.f32 %v2777, 1.442695
    %v2950 = vpow.pop %v2949
    %v2951 = vmul.f32 %v2778, 1.442695
    %v2952 = vpow.pop %v2951
    %v2953 = vmul.f32 %v2779, 1.442695
    %v2954 = vpow.pop %v2953
    %v2955 = vmul.f32 %v2780, 1.442695
    %v2956 = vpow.pop %v2955
    %v2957 = vmul.f32 %v2781, 1.442695
    %v2958 = vpow.pop %v2957
    %v2959 = vmul.f32 %v2782, 1.442695
    %v2960 = vpow.pop %v2959
    %v2961 = vmul.f32 %v2783, 1.442695
    %v2962 = vpow.pop %v2961
    %v2963 = vmul.f32 %v2784, 1.442695
    %v2964 = vpow.pop %v2963
    %v2965 = vmul.f32 %v2785, 1.442695
    %v2966 = vpow.pop %v2965
    %v2967 = vmul.f32 %v2786, 1.442695
    %v2968 = vpow.pop %v2967
    %v2969 = vmul.f32 %v2787, 1.442695
    %v2970 = vpow.pop %v2969
    %v2971 = vmul.f32 %v2788, 1.442695
    %v2972 = vpow.pop %v2971
    %v2973 = vmul.f32 %v2789, 1.442695
    %v2974 = vpow.pop %v2973
    %v2975 = vmul.f32 %v2790, 1.442695
    %v2976 = vpow.pop %v2975
    %v2977 = vmul.f32 %v2791, 1.442695
    %v2978 = vpow.pop %v2977
    %v2979 = vmul.f32 %v2792, 1.442695
    %v2980 = vpow.pop %v2979
    %v2981 = vmul.f32 %v2793, 1.442695
    %v2982 = vpow.pop %v2981
    %v2983 = vmul.f32 %v2794, 1.442695
    %v2984 = vpow.pop %v2983
    %v2985 = vmul.f32 %v2795, 1.442695
    %v2986 = vpow.pop %v2985
    %v2987 = vmul.f32 %v2796, 1.442695
    %v2988 = vpow.pop %v2987
    %v2989 = vmul.f32 %v2797, 1.442695
    %v2990 = vpow.pop %v2989
    %v2991 = vmul.f32 %v2798, 1.442695
    %v2992 = vpow.pop %v2991
    %v2993 = vmul.f32 %v2799, 1.442695
    %v2994 = vpow.pop %v2993
    %v2995 = vmul.f32 %v2800, 1.442695
    %v2996 = vpow.pop %v2995
    %v2997 = vmul.f32 %v2801, 1.442695
    %v2998 = vpow.pop %v2997
    %v2999 = vmul.f32 %v2802, 1.442695
    %v3000 = vpow.pop %v2999
    %v3001 = vmul.f32 %v2803, 1.442695
    %v3002 = vpow.pop %v3001
    %v3003 = vmul.f32 %v2804, 1.442695
    %v3004 = vpow.pop %v3003
    %v3005 = vmul.f32 %v2805, 1.442695
    %v3006 = vpow.pop %v3005
    %v3007 = vmul.f32 %v2806, 1.442695
    %v3008 = vpow.pop %v3007
    %v3009 = vmul.f32 %v2807, 1.442695
    %v3010 = vpow.pop %v3009
    %v3011 = vmul.f32 %v2808, 1.442695
    %v3012 = vpow.pop %v3011
    %v3013 = vmul.f32 %v2809, 1.442695
    %v3014 = vpow.pop %v3013
    %v3015 = vmul.f32 %v2810, 1.442695
    %v3016 = vpow.pop %v3015
    %v3017 = vmul.f32 %v2811, 1.442695
    %v3018 = vpow.pop %v3017
    %v3019 = vmul.f32 %v2812, 1.442695
    %v3020 = vpow.pop %v3019
    %v3021 = vmul.f32 %v2813, 1.442695
    %v3022 = vpow.pop %v3021
    %v3023 = vmul.f32 %v2814, 1.442695
    %v3024 = vpow.pop %v3023
    %v3025 = vmul.f32 %v2815, 1.442695
    %v3026 = vpow.pop %v3025
    %v3027 = vmul.f32 %v2816, 1.442695
    %v3028 = vpow.pop %v3027
    %v3029 = vmul.f32 %v2817, 1.442695
    %v3030 = vpow.pop %v3029
    %v3031 = vmul.f32 %v2818, 1.442695
    %v3032 = vpow.pop %v3031
    %v3033 = vmul.f32 %v2819, 1.442695
    %v3034 = vpow.pop %v3033
    %v3035 = vmul.f32 %v2820, 1.442695
    %v3036 = vpow.pop %v3035
    %v3037 = vmul.f32 %v2821, 1.442695
    %v3038 = vpow.pop %v3037
    %v3039 = vmul.f32 %v2822, 1.442695
    %v3040 = vpow.pop %v3039
    %v3041 = vmul.f32 %v2823, 1.442695
    %v3042 = vpow.pop %v3041
    %v3043 = vmul.f32 %v2824, 1.442695
    %v3044 = vpow.pop %v3043
    %v3045 = vmul.f32 %v2825, 1.442695
    %v3046 = vpow.pop %v3045
    %v3047 = vmul.f32 %v2826, 1.442695
    %v3048 = vpow.pop %v3047
    %v3049 = vmul.f32 %v2827, 1.442695
    %v3050 = vpow.pop %v3049
    %v3051 = vmul.f32 %v2828, 1.442695
    %v3052 = vpow.pop %v3051
    %v3053 = vmul.f32 %v2829, 1.442695
    %v3054 = vpow.pop %v3053
    %v3055 = vmul.f32 %v2830, 1.442695
    %v3056 = vpow.pop %v3055
    %v3057 = vmul.f32 %v2831, 1.442695
    %v3058 = vpow.pop %v3057
    %v3059 = vmul.f32 %v2832, 1.442695
    %v3060 = vpow.pop %v3059
    %v3061 = vmul.f32 %v2833, 1.442695
    %v3062 = vpow.pop %v3061
    %v3063 = vmul.f32 %v2834, 1.442695
    %v3064 = vpow.pop %v3063
    %v3065 = vmul.f32 %v2835, 1.442695
    %v3066 = vpow.pop %v3065
    %v3067 = vmul.f32 %v2836, 1.442695
    %v3068 = vpow.pop %v3067
    %v3069 = vmul.f32 %v2837, 1.442695
    %v3070 = vpow.pop %v3069
    %v3071 = vmul.f32 %v2838, 1.442695
    %v3072 = vpow.pop %v3071
    %v3073 = vmul.f32 %v2839, 1.442695
    %v3074 = vpow.pop %v3073
    %v3075 = vmul.f32 %v2840, 1.442695
    %v3076 = vpow.pop %v3075
    %v3077 = vmul.f32 %v2841, 1.442695
    %v3078 = vpow.pop %v3077
    %v3079 = vmul.f32 %v2842, 1.442695
    %v3080 = vpow.pop %v3079
    %v3081 = vmul.f32 %v2843, 1.442695
    %v3082 = vpow.pop %v3081
    %v3083 = vmul.f32 %v2844, 1.442695
    %v3084 = vpow.pop %v3083
    %v3085 = vmul.f32 %v2845, 1.442695
    %v3086 = vpow.pop %v3085
    %v3087 = vmul.f32 %v2846, 1.442695
    %v3088 = vpow.pop %v3087
    %v3089 = vmul.f32 %v2847, 1.442695
    %v3090 = vpow.pop %v3089
    %v3091 = vmul.f32 %v2848, 1.442695
    %v3092 = vpow.pop %v3091
    %v3093 = vmul.f32 %v2849, 1.442695
    %v3094 = vpow.pop %v3093
    %v3095 = vmul.f32 %v2850, 1.442695
    %v3096 = vpow.pop %v3095
    %v3097 = vmul.f32 %v2851, 1.442695
    %v3098 = vpow.pop %v3097
    %v3099 = vmul.f32 %v2852, 1.442695
    %v3100 = vpow.pop %v3099
    %v3101 = vmul.f32 %v2853, 1.442695
    %v3102 = vpow.pop %v3101
    %v3103 = vmul.f32 %v2854, 1.442695
    %v3104 = vpow.pop %v3103
    %v3105 = vmul.f32 %v2855, 1.442695
    %v3106 = vpow.pop %v3105
    %v3107 = vmul.f32 %v2856, 1.442695
    %v3108 = vpow.pop %v3107
    %v3109 = vmul.f32 %v2857, 1.442695
    %v3110 = vpow.pop %v3109
    %v3111 = vmul.f32 %v2858, 1.442695
    %v3112 = vpow.pop %v3111
    %v3113 = vmul.f32 %v2859, 1.442695
    %v3114 = vpow.pop %v3113
    %v3115 = vmul.f32 %v2860, 1.442695
    %v3116 = vpow.pop %v3115
    %v3117 = vmul.f32 %v2862, %v499
    %v3118 = vmul.f32 %v2864, %v500
    %v3119 = vmul.f32 %v2866, %v501
    %v3120 = vmul.f32 %v2868, %v502
    %v3121 = vmul.f32 %v2870, %v503
    %v3122 = vmul.f32 %v2872, %v504
    %v3123 = vmul.f32 %v2874, %v505
    %v3124 = vmul.f32 %v2876, %v506
    %v3125 = vmul.f32 %v2878, %v507
    %v3126 = vmul.f32 %v2880, %v508
    %v3127 = vmul.f32 %v2882, %v509
    %v3128 = vmul.f32 %v2884, %v510
    %v3129 = vmul.f32 %v2886, %v511
    %v3130 = vmul.f32 %v2888, %v512
    %v3131 = vmul.f32 %v2890, %v513
    %v3132 = vmul.f32 %v2892, %v514
    %v3133 = vmul.f32 %v2894, %v499
    %v3134 = vmul.f32 %v2896, %v500
    %v3135 = vmul.f32 %v2898, %v501
    %v3136 = vmul.f32 %v2900, %v502
    %v3137 = vmul.f32 %v2902, %v503
    %v3138 = vmul.f32 %v2904, %v504
    %v3139 = vmul.f32 %v2906, %v505
    %v3140 = vmul.f32 %v2908, %v506
    %v3141 = vmul.f32 %v2910, %v507
    %v3142 = vmul.f32 %v2912, %v508
    %v3143 = vmul.f32 %v2914, %v509
    %v3144 = vmul.f32 %v2916, %v510
    %v3145 = vmul.f32 %v2918, %v511
    %v3146 = vmul.f32 %v2920, %v512
    %v3147 = vmul.f32 %v2922, %v513
    %v3148 = vmul.f32 %v2924, %v514
    %v3149 = vmul.f32 %v2926, %v499
    %v3150 = vmul.f32 %v2928, %v500
    %v3151 = vmul.f32 %v2930, %v501
    %v3152 = vmul.f32 %v2932, %v502
    %v3153 = vmul.f32 %v2934, %v503
    %v3154 = vmul.f32 %v2936, %v504
    %v3155 = vmul.f32 %v2938, %v505
    %v3156 = vmul.f32 %v2940, %v506
    %v3157 = vmul.f32 %v2942, %v507
    %v3158 = vmul.f32 %v2944, %v508
    %v3159 = vmul.f32 %v2946, %v509
    %v3160 = vmul.f32 %v2948, %v510
    %v3161 = vmul.f32 %v2950, %v511
    %v3162 = vmul.f32 %v2952, %v512
    %v3163 = vmul.f32 %v2954, %v513
    %v3164 = vmul.f32 %v2956, %v514
    %v3165 = vmul.f32 %v2958, %v499
    %v3166 = vmul.f32 %v2960, %v500
    %v3167 = vmul.f32 %v2962, %v501
    %v3168 = vmul.f32 %v2964, %v502
    %v3169 = vmul.f32 %v2966, %v503
    %v3170 = vmul.f32 %v2968, %v504
    %v3171 = vmul.f32 %v2970, %v505
    %v3172 = vmul.f32 %v2972, %v506
    %v3173 = vmul.f32 %v2974, %v507
    %v3174 = vmul.f32 %v2976, %v508
    %v3175 = vmul.f32 %v2978, %v509
    %v3176 = vmul.f32 %v2980, %v510
    %v3177 = vmul.f32 %v2982, %v511
    %v3178 = vmul.f32 %v2984, %v512
    %v3179 = vmul.f32 %v2986, %v513
    %v3180 = vmul.f32 %v2988, %v514
    %v3181 = vmul.f32 %v2990, %v499
    %v3182 = vmul.f32 %v2992, %v500
    %v3183 = vmul.f32 %v2994, %v501
    %v3184 = vmul.f32 %v2996, %v502
    %v3185 = vmul.f32 %v2998, %v503
    %v3186 = vmul.f32 %v3000, %v504
    %v3187 = vmul.f32 %v3002, %v505
    %v3188 = vmul.f32 %v3004, %v506
    %v3189 = vmul.f32 %v3006, %v507
    %v3190 = vmul.f32 %v3008, %v508
    %v3191 = vmul.f32 %v3010, %v509
    %v3192 = vmul.f32 %v3012, %v510
    %v3193 = vmul.f32 %v3014, %v511
    %v3194 = vmul.f32 %v3016, %v512
    %v3195 = vmul.f32 %v3018, %v513
    %v3196 = vmul.f32 %v3020, %v514
    %v3197 = vmul.f32 %v3022, %v499
    %v3198 = vmul.f32 %v3024, %v500
    %v3199 = vmul.f32 %v3026, %v501
    %v3200 = vmul.f32 %v3028, %v502
    %v3201 = vmul.f32 %v3030, %v503
    %v3202 = vmul.f32 %v3032, %v504
    %v3203 = vmul.f32 %v3034, %v505
    %v3204 = vmul.f32 %v3036, %v506
    %v3205 = vmul.f32 %v3038, %v507
    %v3206 = vmul.f32 %v3040, %v508
    %v3207 = vmul.f32 %v3042, %v509
    %v3208 = vmul.f32 %v3044, %v510
    %v3209 = vmul.f32 %v3046, %v511
    %v3210 = vmul.f32 %v3048, %v512
    %v3211 = vmul.f32 %v3050, %v513
    %v3212 = vmul.f32 %v3052, %v514
    %v3213 = vmul.f32 %v3054, %v499
    %v3214 = vmul.f32 %v3056, %v500
    %v3215 = vmul.f32 %v3058, %v501
    %v3216 = vmul.f32 %v3060, %v502
    %v3217 = vmul.f32 %v3062, %v503
    %v3218 = vmul.f32 %v3064, %v504
    %v3219 = vmul.f32 %v3066, %v505
    %v3220 = vmul.f32 %v3068, %v506
    %v3221 = vmul.f32 %v3070, %v507
    %v3222 = vmul.f32 %v3072, %v508
    %v3223 = vmul.f32 %v3074, %v509
    %v3224 = vmul.f32 %v3076, %v510
    %v3225 = vmul.f32 %v3078, %v511
    %v3226 = vmul.f32 %v3080, %v512
    %v3227 = vmul.f32 %v3082, %v513
    %v3228 = vmul.f32 %v3084, %v514
    %v3229 = vmul.f32 %v3086, %v499
    %v3230 = vmul.f32 %v3088, %v500
    %v3231 = vmul.f32 %v3090, %v501
    %v3232 = vmul.f32 %v3092, %v502
    %v3233 = vmul.f32 %v3094, %v503
    %v3234 = vmul.f32 %v3096, %v504
    %v3235 = vmul.f32 %v3098, %v505
    %v3236 = vmul.f32 %v3100, %v506
    %v3237 = vmul.f32 %v3102, %v507
    %v3238 = vmul.f32 %v3104, %v508
    %v3239 = vmul.f32 %v3106, %v509
    %v3240 = vmul.f32 %v3108, %v510
    %v3241 = vmul.f32 %v3110, %v511
    %v3242 = vmul.f32 %v3112, %v512
    %v3243 = vmul.f32 %v3114, %v513
    %v3244 = vmul.f32 %v3116, %v514
    %3245 = vadd.xlane.f32.xlu0 %v3117
    %v3246 = vpop.xlane.xlu0 %3245
    %3247 = vadd.xlane.f32.xlu0 %v3118
    %v3248 = vpop.xlane.xlu0 %3247
    %3249 = vadd.xlane.f32.xlu0 %v3119
    %v3250 = vpop.xlane.xlu0 %3249
    %3251 = vadd.xlane.f32.xlu0 %v3120
    %v3252 = vpop.xlane.xlu0 %3251
    %3253 = vadd.xlane.f32.xlu0 %v3121
    %v3254 = vpop.xlane.xlu0 %3253
    %3255 = vadd.xlane.f32.xlu0 %v3122
    %v3256 = vpop.xlane.xlu0 %3255
    %3257 = vadd.xlane.f32.xlu0 %v3123
    %v3258 = vpop.xlane.xlu0 %3257
    %3259 = vadd.xlane.f32.xlu0 %v3124
    %v3260 = vpop.xlane.xlu0 %3259
    %3261 = vadd.xlane.f32.xlu0 %v3125
    %v3262 = vpop.xlane.xlu0 %3261
    %3263 = vadd.xlane.f32.xlu0 %v3126
    %v3264 = vpop.xlane.xlu0 %3263
    %3265 = vadd.xlane.f32.xlu0 %v3127
    %v3266 = vpop.xlane.xlu0 %3265
    %3267 = vadd.xlane.f32.xlu0 %v3128
    %v3268 = vpop.xlane.xlu0 %3267
    %3269 = vadd.xlane.f32.xlu0 %v3129
    %v3270 = vpop.xlane.xlu0 %3269
    %3271 = vadd.xlane.f32.xlu0 %v3130
    %v3272 = vpop.xlane.xlu0 %3271
    %3273 = vadd.xlane.f32.xlu0 %v3131
    %v3274 = vpop.xlane.xlu0 %3273
    %3275 = vadd.xlane.f32.xlu0 %v3132
    %v3276 = vpop.xlane.xlu0 %3275
    %3277 = vadd.xlane.f32.xlu0 %v3133
    %v3278 = vpop.xlane.xlu0 %3277
    %3279 = vadd.xlane.f32.xlu0 %v3134
    %v3280 = vpop.xlane.xlu0 %3279
    %3281 = vadd.xlane.f32.xlu0 %v3135
    %v3282 = vpop.xlane.xlu0 %3281
    %3283 = vadd.xlane.f32.xlu0 %v3136
    %v3284 = vpop.xlane.xlu0 %3283
    %3285 = vadd.xlane.f32.xlu0 %v3137
    %v3286 = vpop.xlane.xlu0 %3285
    %3287 = vadd.xlane.f32.xlu0 %v3138
    %v3288 = vpop.xlane.xlu0 %3287
    %3289 = vadd.xlane.f32.xlu0 %v3139
    %v3290 = vpop.xlane.xlu0 %3289
    %3291 = vadd.xlane.f32.xlu0 %v3140
    %v3292 = vpop.xlane.xlu0 %3291
    %3293 = vadd.xlane.f32.xlu0 %v3141
    %v3294 = vpop.xlane.xlu0 %3293
    %3295 = vadd.xlane.f32.xlu0 %v3142
    %v3296 = vpop.xlane.xlu0 %3295
    %3297 = vadd.xlane.f32.xlu0 %v3143
    %v3298 = vpop.xlane.xlu0 %3297
    %3299 = vadd.xlane.f32.xlu0 %v3144
    %v3300 = vpop.xlane.xlu0 %3299
    %3301 = vadd.xlane.f32.xlu0 %v3145
    %v3302 = vpop.xlane.xlu0 %3301
    %3303 = vadd.xlane.f32.xlu0 %v3146
    %v3304 = vpop.xlane.xlu0 %3303
    %3305 = vadd.xlane.f32.xlu0 %v3147
    %v3306 = vpop.xlane.xlu0 %3305
    %3307 = vadd.xlane.f32.xlu0 %v3148
    %v3308 = vpop.xlane.xlu0 %3307
    %3309 = vadd.xlane.f32.xlu0 %v3149
    %v3310 = vpop.xlane.xlu0 %3309
    %3311 = vadd.xlane.f32.xlu0 %v3150
    %v3312 = vpop.xlane.xlu0 %3311
    %3313 = vadd.xlane.f32.xlu0 %v3151
    %v3314 = vpop.xlane.xlu0 %3313
    %3315 = vadd.xlane.f32.xlu0 %v3152
    %v3316 = vpop.xlane.xlu0 %3315
    %3317 = vadd.xlane.f32.xlu0 %v3153
    %v3318 = vpop.xlane.xlu0 %3317
    %3319 = vadd.xlane.f32.xlu0 %v3154
    %v3320 = vpop.xlane.xlu0 %3319
    %3321 = vadd.xlane.f32.xlu0 %v3155
    %v3322 = vpop.xlane.xlu0 %3321
    %3323 = vadd.xlane.f32.xlu0 %v3156
    %v3324 = vpop.xlane.xlu0 %3323
    %3325 = vadd.xlane.f32.xlu0 %v3157
    %v3326 = vpop.xlane.xlu0 %3325
    %3327 = vadd.xlane.f32.xlu0 %v3158
    %v3328 = vpop.xlane.xlu0 %3327
    %3329 = vadd.xlane.f32.xlu0 %v3159
    %v3330 = vpop.xlane.xlu0 %3329
    %3331 = vadd.xlane.f32.xlu0 %v3160
    %v3332 = vpop.xlane.xlu0 %3331
    %3333 = vadd.xlane.f32.xlu0 %v3161
    %v3334 = vpop.xlane.xlu0 %3333
    %3335 = vadd.xlane.f32.xlu0 %v3162
    %v3336 = vpop.xlane.xlu0 %3335
    %3337 = vadd.xlane.f32.xlu0 %v3163
    %v3338 = vpop.xlane.xlu0 %3337
    %3339 = vadd.xlane.f32.xlu0 %v3164
    %v3340 = vpop.xlane.xlu0 %3339
    %3341 = vadd.xlane.f32.xlu0 %v3165
    %v3342 = vpop.xlane.xlu0 %3341
    %3343 = vadd.xlane.f32.xlu0 %v3166
    %v3344 = vpop.xlane.xlu0 %3343
    %3345 = vadd.xlane.f32.xlu0 %v3167
    %v3346 = vpop.xlane.xlu0 %3345
    %3347 = vadd.xlane.f32.xlu0 %v3168
    %v3348 = vpop.xlane.xlu0 %3347
    %3349 = vadd.xlane.f32.xlu0 %v3169
    %v3350 = vpop.xlane.xlu0 %3349
    %3351 = vadd.xlane.f32.xlu0 %v3170
    %v3352 = vpop.xlane.xlu0 %3351
    %3353 = vadd.xlane.f32.xlu0 %v3171
    %v3354 = vpop.xlane.xlu0 %3353
    %3355 = vadd.xlane.f32.xlu0 %v3172
    %v3356 = vpop.xlane.xlu0 %3355
    %3357 = vadd.xlane.f32.xlu0 %v3173
    %v3358 = vpop.xlane.xlu0 %3357
    %3359 = vadd.xlane.f32.xlu0 %v3174
    %v3360 = vpop.xlane.xlu0 %3359
    %3361 = vadd.xlane.f32.xlu0 %v3175
    %v3362 = vpop.xlane.xlu0 %3361
    %3363 = vadd.xlane.f32.xlu0 %v3176
    %v3364 = vpop.xlane.xlu0 %3363
    %3365 = vadd.xlane.f32.xlu0 %v3177
    %v3366 = vpop.xlane.xlu0 %3365
    %3367 = vadd.xlane.f32.xlu0 %v3178
    %v3368 = vpop.xlane.xlu0 %3367
    %3369 = vadd.xlane.f32.xlu0 %v3179
    %v3370 = vpop.xlane.xlu0 %3369
    %3371 = vadd.xlane.f32.xlu0 %v3180
    %v3372 = vpop.xlane.xlu0 %3371
    %3373 = vadd.xlane.f32.xlu0 %v3181
    %v3374 = vpop.xlane.xlu0 %3373
    %3375 = vadd.xlane.f32.xlu0 %v3182
    %v3376 = vpop.xlane.xlu0 %3375
    %3377 = vadd.xlane.f32.xlu0 %v3183
    %v3378 = vpop.xlane.xlu0 %3377
    %3379 = vadd.xlane.f32.xlu0 %v3184
    %v3380 = vpop.xlane.xlu0 %3379
    %3381 = vadd.xlane.f32.xlu0 %v3185
    %v3382 = vpop.xlane.xlu0 %3381
    %3383 = vadd.xlane.f32.xlu0 %v3186
    %v3384 = vpop.xlane.xlu0 %3383
    %3385 = vadd.xlane.f32.xlu0 %v3187
    %v3386 = vpop.xlane.xlu0 %3385
    %3387 = vadd.xlane.f32.xlu0 %v3188
    %v3388 = vpop.xlane.xlu0 %3387
    %3389 = vadd.xlane.f32.xlu0 %v3189
    %v3390 = vpop.xlane.xlu0 %3389
    %3391 = vadd.xlane.f32.xlu0 %v3190
    %v3392 = vpop.xlane.xlu0 %3391
    %3393 = vadd.xlane.f32.xlu0 %v3191
    %v3394 = vpop.xlane.xlu0 %3393
    %3395 = vadd.xlane.f32.xlu0 %v3192
    %v3396 = vpop.xlane.xlu0 %3395
    %3397 = vadd.xlane.f32.xlu0 %v3193
    %v3398 = vpop.xlane.xlu0 %3397
    %3399 = vadd.xlane.f32.xlu0 %v3194
    %v3400 = vpop.xlane.xlu0 %3399
    %3401 = vadd.xlane.f32.xlu0 %v3195
    %v3402 = vpop.xlane.xlu0 %3401
    %3403 = vadd.xlane.f32.xlu0 %v3196
    %v3404 = vpop.xlane.xlu0 %3403
    %3405 = vadd.xlane.f32.xlu0 %v3197
    %v3406 = vpop.xlane.xlu0 %3405
    %3407 = vadd.xlane.f32.xlu0 %v3198
    %v3408 = vpop.xlane.xlu0 %3407
    %3409 = vadd.xlane.f32.xlu0 %v3199
    %v3410 = vpop.xlane.xlu0 %3409
    %3411 = vadd.xlane.f32.xlu0 %v3200
    %v3412 = vpop.xlane.xlu0 %3411
    %3413 = vadd.xlane.f32.xlu0 %v3201
    %v3414 = vpop.xlane.xlu0 %3413
    %3415 = vadd.xlane.f32.xlu0 %v3202
    %v3416 = vpop.xlane.xlu0 %3415
    %3417 = vadd.xlane.f32.xlu0 %v3203
    %v3418 = vpop.xlane.xlu0 %3417
    %3419 = vadd.xlane.f32.xlu0 %v3204
    %v3420 = vpop.xlane.xlu0 %3419
    %3421 = vadd.xlane.f32.xlu0 %v3205
    %v3422 = vpop.xlane.xlu0 %3421
    %3423 = vadd.xlane.f32.xlu0 %v3206
    %v3424 = vpop.xlane.xlu0 %3423
    %3425 = vadd.xlane.f32.xlu0 %v3207
    %v3426 = vpop.xlane.xlu0 %3425
    %3427 = vadd.xlane.f32.xlu0 %v3208
    %v3428 = vpop.xlane.xlu0 %3427
    %3429 = vadd.xlane.f32.xlu0 %v3209
    %v3430 = vpop.xlane.xlu0 %3429
    %3431 = vadd.xlane.f32.xlu0 %v3210
    %v3432 = vpop.xlane.xlu0 %3431
    %3433 = vadd.xlane.f32.xlu0 %v3211
    %v3434 = vpop.xlane.xlu0 %3433
    %3435 = vadd.xlane.f32.xlu0 %v3212
    %v3436 = vpop.xlane.xlu0 %3435
    %3437 = vadd.xlane.f32.xlu0 %v3213
    %v3438 = vpop.xlane.xlu0 %3437
    %3439 = vadd.xlane.f32.xlu0 %v3214
    %v3440 = vpop.xlane.xlu0 %3439
    %3441 = vadd.xlane.f32.xlu0 %v3215
    %v3442 = vpop.xlane.xlu0 %3441
    %3443 = vadd.xlane.f32.xlu0 %v3216
    %v3444 = vpop.xlane.xlu0 %3443
    %3445 = vadd.xlane.f32.xlu0 %v3217
    %v3446 = vpop.xlane.xlu0 %3445
    %3447 = vadd.xlane.f32.xlu0 %v3218
    %v3448 = vpop.xlane.xlu0 %3447
    %3449 = vadd.xlane.f32.xlu0 %v3219
    %v3450 = vpop.xlane.xlu0 %3449
    %3451 = vadd.xlane.f32.xlu0 %v3220
    %v3452 = vpop.xlane.xlu0 %3451
    %3453 = vadd.xlane.f32.xlu0 %v3221
    %v3454 = vpop.xlane.xlu0 %3453
    %3455 = vadd.xlane.f32.xlu0 %v3222
    %v3456 = vpop.xlane.xlu0 %3455
    %3457 = vadd.xlane.f32.xlu0 %v3223
    %v3458 = vpop.xlane.xlu0 %3457
    %3459 = vadd.xlane.f32.xlu0 %v3224
    %v3460 = vpop.xlane.xlu0 %3459
    %3461 = vadd.xlane.f32.xlu0 %v3225
    %v3462 = vpop.xlane.xlu0 %3461
    %3463 = vadd.xlane.f32.xlu0 %v3226
    %v3464 = vpop.xlane.xlu0 %3463
    %3465 = vadd.xlane.f32.xlu0 %v3227
    %v3466 = vpop.xlane.xlu0 %3465
    %3467 = vadd.xlane.f32.xlu0 %v3228
    %v3468 = vpop.xlane.xlu0 %3467
    %3469 = vadd.xlane.f32.xlu0 %v3229
    %v3470 = vpop.xlane.xlu0 %3469
    %3471 = vadd.xlane.f32.xlu0 %v3230
    %v3472 = vpop.xlane.xlu0 %3471
    %3473 = vadd.xlane.f32.xlu0 %v3231
    %v3474 = vpop.xlane.xlu0 %3473
    %3475 = vadd.xlane.f32.xlu0 %v3232
    %v3476 = vpop.xlane.xlu0 %3475
    %3477 = vadd.xlane.f32.xlu0 %v3233
    %v3478 = vpop.xlane.xlu0 %3477
    %3479 = vadd.xlane.f32.xlu0 %v3234
    %v3480 = vpop.xlane.xlu0 %3479
    %3481 = vadd.xlane.f32.xlu0 %v3235
    %v3482 = vpop.xlane.xlu0 %3481
    %3483 = vadd.xlane.f32.xlu0 %v3236
    %v3484 = vpop.xlane.xlu0 %3483
    %3485 = vadd.xlane.f32.xlu0 %v3237
    %v3486 = vpop.xlane.xlu0 %3485
    %3487 = vadd.xlane.f32.xlu0 %v3238
    %v3488 = vpop.xlane.xlu0 %3487
    %3489 = vadd.xlane.f32.xlu0 %v3239
    %v3490 = vpop.xlane.xlu0 %3489
    %3491 = vadd.xlane.f32.xlu0 %v3240
    %v3492 = vpop.xlane.xlu0 %3491
    %3493 = vadd.xlane.f32.xlu0 %v3241
    %v3494 = vpop.xlane.xlu0 %3493
    %3495 = vadd.xlane.f32.xlu0 %v3242
    %v3496 = vpop.xlane.xlu0 %3495
    %3497 = vadd.xlane.f32.xlu0 %v3243
    %v3498 = vpop.xlane.xlu0 %3497
    %3499 = vadd.xlane.f32.xlu0 %v3244
    %v3500 = vpop.xlane.xlu0 %3499
    %v3501 = vlog2.pop %v3246
    %v3502 = vmul.f32 %v3501, 0.6931472
    %v3503 = vlog2.pop %v3248
    %v3504 = vmul.f32 %v3503, 0.6931472
    %v3505 = vlog2.pop %v3250
    %v3506 = vmul.f32 %v3505, 0.6931472
    %v3507 = vlog2.pop %v3252
    %v3508 = vmul.f32 %v3507, 0.6931472
    %v3509 = vlog2.pop %v3254
    %v3510 = vmul.f32 %v3509, 0.6931472
    %v3511 = vlog2.pop %v3256
    %v3512 = vmul.f32 %v3511, 0.6931472
    %v3513 = vlog2.pop %v3258
    %v3514 = vmul.f32 %v3513, 0.6931472
    %v3515 = vlog2.pop %v3260
    %v3516 = vmul.f32 %v3515, 0.6931472
    %v3517 = vlog2.pop %v3262
    %v3518 = vmul.f32 %v3517, 0.6931472
    %v3519 = vlog2.pop %v3264
    %v3520 = vmul.f32 %v3519, 0.6931472
    %v3521 = vlog2.pop %v3266
    %v3522 = vmul.f32 %v3521, 0.6931472
    %v3523 = vlog2.pop %v3268
    %v3524 = vmul.f32 %v3523, 0.6931472
    %v3525 = vlog2.pop %v3270
    %v3526 = vmul.f32 %v3525, 0.6931472
    %v3527 = vlog2.pop %v3272
    %v3528 = vmul.f32 %v3527, 0.6931472
    %v3529 = vlog2.pop %v3274
    %v3530 = vmul.f32 %v3529, 0.6931472
    %v3531 = vlog2.pop %v3276
    %v3532 = vmul.f32 %v3531, 0.6931472
    %v3533 = vlog2.pop %v3278
    %v3534 = vmul.f32 %v3533, 0.6931472
    %v3535 = vlog2.pop %v3280
    %v3536 = vmul.f32 %v3535, 0.6931472
    %v3537 = vlog2.pop %v3282
    %v3538 = vmul.f32 %v3537, 0.6931472
    %v3539 = vlog2.pop %v3284
    %v3540 = vmul.f32 %v3539, 0.6931472
    %v3541 = vlog2.pop %v3286
    %v3542 = vmul.f32 %v3541, 0.6931472
    %v3543 = vlog2.pop %v3288
    %v3544 = vmul.f32 %v3543, 0.6931472
    %v3545 = vlog2.pop %v3290
    %v3546 = vmul.f32 %v3545, 0.6931472
    %v3547 = vlog2.pop %v3292
    %v3548 = vmul.f32 %v3547, 0.6931472
    %v3549 = vlog2.pop %v3294
    %v3550 = vmul.f32 %v3549, 0.6931472
    %v3551 = vlog2.pop %v3296
    %v3552 = vmul.f32 %v3551, 0.6931472
    %v3553 = vlog2.pop %v3298
    %v3554 = vmul.f32 %v3553, 0.6931472
    %v3555 = vlog2.pop %v3300
    %v3556 = vmul.f32 %v3555, 0.6931472
    %v3557 = vlog2.pop %v3302
    %v3558 = vmul.f32 %v3557, 0.6931472
    %v3559 = vlog2.pop %v3304
    %v3560 = vmul.f32 %v3559, 0.6931472
    %v3561 = vlog2.pop %v3306
    %v3562 = vmul.f32 %v3561, 0.6931472
    %v3563 = vlog2.pop %v3308
    %v3564 = vmul.f32 %v3563, 0.6931472
    %v3565 = vlog2.pop %v3310
    %v3566 = vmul.f32 %v3565, 0.6931472
    %v3567 = vlog2.pop %v3312
    %v3568 = vmul.f32 %v3567, 0.6931472
    %v3569 = vlog2.pop %v3314
    %v3570 = vmul.f32 %v3569, 0.6931472
    %v3571 = vlog2.pop %v3316
    %v3572 = vmul.f32 %v3571, 0.6931472
    %v3573 = vlog2.pop %v3318
    %v3574 = vmul.f32 %v3573, 0.6931472
    %v3575 = vlog2.pop %v3320
    %v3576 = vmul.f32 %v3575, 0.6931472
    %v3577 = vlog2.pop %v3322
    %v3578 = vmul.f32 %v3577, 0.6931472
    %v3579 = vlog2.pop %v3324
    %v3580 = vmul.f32 %v3579, 0.6931472
    %v3581 = vlog2.pop %v3326
    %v3582 = vmul.f32 %v3581, 0.6931472
    %v3583 = vlog2.pop %v3328
    %v3584 = vmul.f32 %v3583, 0.6931472
    %v3585 = vlog2.pop %v3330
    %v3586 = vmul.f32 %v3585, 0.6931472
    %v3587 = vlog2.pop %v3332
    %v3588 = vmul.f32 %v3587, 0.6931472
    %v3589 = vlog2.pop %v3334
    %v3590 = vmul.f32 %v3589, 0.6931472
    %v3591 = vlog2.pop %v3336
    %v3592 = vmul.f32 %v3591, 0.6931472
    %v3593 = vlog2.pop %v3338
    %v3594 = vmul.f32 %v3593, 0.6931472
    %v3595 = vlog2.pop %v3340
    %v3596 = vmul.f32 %v3595, 0.6931472
    %v3597 = vlog2.pop %v3342
    %v3598 = vmul.f32 %v3597, 0.6931472
    %v3599 = vlog2.pop %v3344
    %v3600 = vmul.f32 %v3599, 0.6931472
    %v3601 = vlog2.pop %v3346
    %v3602 = vmul.f32 %v3601, 0.6931472
    %v3603 = vlog2.pop %v3348
    %v3604 = vmul.f32 %v3603, 0.6931472
    %v3605 = vlog2.pop %v3350
    %v3606 = vmul.f32 %v3605, 0.6931472
    %v3607 = vlog2.pop %v3352
    %v3608 = vmul.f32 %v3607, 0.6931472
    %v3609 = vlog2.pop %v3354
    %v3610 = vmul.f32 %v3609, 0.6931472
    %v3611 = vlog2.pop %v3356
    %v3612 = vmul.f32 %v3611, 0.6931472
    %v3613 = vlog2.pop %v3358
    %v3614 = vmul.f32 %v3613, 0.6931472
    %v3615 = vlog2.pop %v3360
    %v3616 = vmul.f32 %v3615, 0.6931472
    %v3617 = vlog2.pop %v3362
    %v3618 = vmul.f32 %v3617, 0.6931472
    %v3619 = vlog2.pop %v3364
    %v3620 = vmul.f32 %v3619, 0.6931472
    %v3621 = vlog2.pop %v3366
    %v3622 = vmul.f32 %v3621, 0.6931472
    %v3623 = vlog2.pop %v3368
    %v3624 = vmul.f32 %v3623, 0.6931472
    %v3625 = vlog2.pop %v3370
    %v3626 = vmul.f32 %v3625, 0.6931472
    %v3627 = vlog2.pop %v3372
    %v3628 = vmul.f32 %v3627, 0.6931472
    %v3629 = vlog2.pop %v3374
    %v3630 = vmul.f32 %v3629, 0.6931472
    %v3631 = vlog2.pop %v3376
    %v3632 = vmul.f32 %v3631, 0.6931472
    %v3633 = vlog2.pop %v3378
    %v3634 = vmul.f32 %v3633, 0.6931472
    %v3635 = vlog2.pop %v3380
    %v3636 = vmul.f32 %v3635, 0.6931472
    %v3637 = vlog2.pop %v3382
    %v3638 = vmul.f32 %v3637, 0.6931472
    %v3639 = vlog2.pop %v3384
    %v3640 = vmul.f32 %v3639, 0.6931472
    %v3641 = vlog2.pop %v3386
    %v3642 = vmul.f32 %v3641, 0.6931472
    %v3643 = vlog2.pop %v3388
    %v3644 = vmul.f32 %v3643, 0.6931472
    %v3645 = vlog2.pop %v3390
    %v3646 = vmul.f32 %v3645, 0.6931472
    %v3647 = vlog2.pop %v3392
    %v3648 = vmul.f32 %v3647, 0.6931472
    %v3649 = vlog2.pop %v3394
    %v3650 = vmul.f32 %v3649, 0.6931472
    %v3651 = vlog2.pop %v3396
    %v3652 = vmul.f32 %v3651, 0.6931472
    %v3653 = vlog2.pop %v3398
    %v3654 = vmul.f32 %v3653, 0.6931472
    %v3655 = vlog2.pop %v3400
    %v3656 = vmul.f32 %v3655, 0.6931472
    %v3657 = vlog2.pop %v3402
    %v3658 = vmul.f32 %v3657, 0.6931472
    %v3659 = vlog2.pop %v3404
    %v3660 = vmul.f32 %v3659, 0.6931472
    %v3661 = vlog2.pop %v3406
    %v3662 = vmul.f32 %v3661, 0.6931472
    %v3663 = vlog2.pop %v3408
    %v3664 = vmul.f32 %v3663, 0.6931472
    %v3665 = vlog2.pop %v3410
    %v3666 = vmul.f32 %v3665, 0.6931472
    %v3667 = vlog2.pop %v3412
    %v3668 = vmul.f32 %v3667, 0.6931472
    %v3669 = vlog2.pop %v3414
    %v3670 = vmul.f32 %v3669, 0.6931472
    %v3671 = vlog2.pop %v3416
    %v3672 = vmul.f32 %v3671, 0.6931472
    %v3673 = vlog2.pop %v3418
    %v3674 = vmul.f32 %v3673, 0.6931472
    %v3675 = vlog2.pop %v3420
    %v3676 = vmul.f32 %v3675, 0.6931472
    %v3677 = vlog2.pop %v3422
    %v3678 = vmul.f32 %v3677, 0.6931472
    %v3679 = vlog2.pop %v3424
    %v3680 = vmul.f32 %v3679, 0.6931472
    %v3681 = vlog2.pop %v3426
    %v3682 = vmul.f32 %v3681, 0.6931472
    %v3683 = vlog2.pop %v3428
    %v3684 = vmul.f32 %v3683, 0.6931472
    %v3685 = vlog2.pop %v3430
    %v3686 = vmul.f32 %v3685, 0.6931472
    %v3687 = vlog2.pop %v3432
    %v3688 = vmul.f32 %v3687, 0.6931472
    %v3689 = vlog2.pop %v3434
    %v3690 = vmul.f32 %v3689, 0.6931472
    %v3691 = vlog2.pop %v3436
    %v3692 = vmul.f32 %v3691, 0.6931472
    %v3693 = vlog2.pop %v3438
    %v3694 = vmul.f32 %v3693, 0.6931472
    %v3695 = vlog2.pop %v3440
    %v3696 = vmul.f32 %v3695, 0.6931472
    %v3697 = vlog2.pop %v3442
    %v3698 = vmul.f32 %v3697, 0.6931472
    %v3699 = vlog2.pop %v3444
    %v3700 = vmul.f32 %v3699, 0.6931472
    %v3701 = vlog2.pop %v3446
    %v3702 = vmul.f32 %v3701, 0.6931472
    %v3703 = vlog2.pop %v3448
    %v3704 = vmul.f32 %v3703, 0.6931472
    %v3705 = vlog2.pop %v3450
    %v3706 = vmul.f32 %v3705, 0.6931472
    %v3707 = vlog2.pop %v3452
    %v3708 = vmul.f32 %v3707, 0.6931472
    %v3709 = vlog2.pop %v3454
    %v3710 = vmul.f32 %v3709, 0.6931472
    %v3711 = vlog2.pop %v3456
    %v3712 = vmul.f32 %v3711, 0.6931472
    %v3713 = vlog2.pop %v3458
    %v3714 = vmul.f32 %v3713, 0.6931472
    %v3715 = vlog2.pop %v3460
    %v3716 = vmul.f32 %v3715, 0.6931472
    %v3717 = vlog2.pop %v3462
    %v3718 = vmul.f32 %v3717, 0.6931472
    %v3719 = vlog2.pop %v3464
    %v3720 = vmul.f32 %v3719, 0.6931472
    %v3721 = vlog2.pop %v3466
    %v3722 = vmul.f32 %v3721, 0.6931472
    %v3723 = vlog2.pop %v3468
    %v3724 = vmul.f32 %v3723, 0.6931472
    %v3725 = vlog2.pop %v3470
    %v3726 = vmul.f32 %v3725, 0.6931472
    %v3727 = vlog2.pop %v3472
    %v3728 = vmul.f32 %v3727, 0.6931472
    %v3729 = vlog2.pop %v3474
    %v3730 = vmul.f32 %v3729, 0.6931472
    %v3731 = vlog2.pop %v3476
    %v3732 = vmul.f32 %v3731, 0.6931472
    %v3733 = vlog2.pop %v3478
    %v3734 = vmul.f32 %v3733, 0.6931472
    %v3735 = vlog2.pop %v3480
    %v3736 = vmul.f32 %v3735, 0.6931472
    %v3737 = vlog2.pop %v3482
    %v3738 = vmul.f32 %v3737, 0.6931472
    %v3739 = vlog2.pop %v3484
    %v3740 = vmul.f32 %v3739, 0.6931472
    %v3741 = vlog2.pop %v3486
    %v3742 = vmul.f32 %v3741, 0.6931472
    %v3743 = vlog2.pop %v3488
    %v3744 = vmul.f32 %v3743, 0.6931472
    %v3745 = vlog2.pop %v3490
    %v3746 = vmul.f32 %v3745, 0.6931472
    %v3747 = vlog2.pop %v3492
    %v3748 = vmul.f32 %v3747, 0.6931472
    %v3749 = vlog2.pop %v3494
    %v3750 = vmul.f32 %v3749, 0.6931472
    %v3751 = vlog2.pop %v3496
    %v3752 = vmul.f32 %v3751, 0.6931472
    %v3753 = vlog2.pop %v3498
    %v3754 = vmul.f32 %v3753, 0.6931472
    %v3755 = vlog2.pop %v3500
    %v3756 = vmul.f32 %v3755, 0.6931472
    %v3757 = vrcp.pop %v3246
    %v3758 = vrcp.pop %v3248
    %v3759 = vrcp.pop %v3250
    %v3760 = vrcp.pop %v3252
    %v3761 = vrcp.pop %v3254
    %v3762 = vrcp.pop %v3256
    %v3763 = vrcp.pop %v3258
    %v3764 = vrcp.pop %v3260
    %v3765 = vrcp.pop %v3262
    %v3766 = vrcp.pop %v3264
    %v3767 = vrcp.pop %v3266
    %v3768 = vrcp.pop %v3268
    %v3769 = vrcp.pop %v3270
    %v3770 = vrcp.pop %v3272
    %v3771 = vrcp.pop %v3274
    %v3772 = vrcp.pop %v3276
    %v3773 = vrcp.pop %v3278
    %v3774 = vrcp.pop %v3280
    %v3775 = vrcp.pop %v3282
    %v3776 = vrcp.pop %v3284
    %v3777 = vrcp.pop %v3286
    %v3778 = vrcp.pop %v3288
    %v3779 = vrcp.pop %v3290
    %v3780 = vrcp.pop %v3292
    %v3781 = vrcp.pop %v3294
    %v3782 = vrcp.pop %v3296
    %v3783 = vrcp.pop %v3298
    %v3784 = vrcp.pop %v3300
    %v3785 = vrcp.pop %v3302
    %v3786 = vrcp.pop %v3304
    %v3787 = vrcp.pop %v3306
    %v3788 = vrcp.pop %v3308
    %v3789 = vrcp.pop %v3310
    %v3790 = vrcp.pop %v3312
    %v3791 = vrcp.pop %v3314
    %v3792 = vrcp.pop %v3316
    %v3793 = vrcp.pop %v3318
    %v3794 = vrcp.pop %v3320
    %v3795 = vrcp.pop %v3322
    %v3796 = vrcp.pop %v3324
    %v3797 = vrcp.pop %v3326
    %v3798 = vrcp.pop %v3328
    %v3799 = vrcp.pop %v3330
    %v3800 = vrcp.pop %v3332
    %v3801 = vrcp.pop %v3334
    %v3802 = vrcp.pop %v3336
    %v3803 = vrcp.pop %v3338
    %v3804 = vrcp.pop %v3340
    %v3805 = vrcp.pop %v3342
    %v3806 = vrcp.pop %v3344
    %v3807 = vrcp.pop %v3346
    %v3808 = vrcp.pop %v3348
    %v3809 = vrcp.pop %v3350
    %v3810 = vrcp.pop %v3352
    %v3811 = vrcp.pop %v3354
    %v3812 = vrcp.pop %v3356
    %v3813 = vrcp.pop %v3358
    %v3814 = vrcp.pop %v3360
    %v3815 = vrcp.pop %v3362
    %v3816 = vrcp.pop %v3364
    %v3817 = vrcp.pop %v3366
    %v3818 = vrcp.pop %v3368
    %v3819 = vrcp.pop %v3370
    %v3820 = vrcp.pop %v3372
    %v3821 = vrcp.pop %v3374
    %v3822 = vrcp.pop %v3376
    %v3823 = vrcp.pop %v3378
    %v3824 = vrcp.pop %v3380
    %v3825 = vrcp.pop %v3382
    %v3826 = vrcp.pop %v3384
    %v3827 = vrcp.pop %v3386
    %v3828 = vrcp.pop %v3388
    %v3829 = vrcp.pop %v3390
    %v3830 = vrcp.pop %v3392
    %v3831 = vrcp.pop %v3394
    %v3832 = vrcp.pop %v3396
    %v3833 = vrcp.pop %v3398
    %v3834 = vrcp.pop %v3400
    %v3835 = vrcp.pop %v3402
    %v3836 = vrcp.pop %v3404
    %v3837 = vrcp.pop %v3406
    %v3838 = vrcp.pop %v3408
    %v3839 = vrcp.pop %v3410
    %v3840 = vrcp.pop %v3412
    %v3841 = vrcp.pop %v3414
    %v3842 = vrcp.pop %v3416
    %v3843 = vrcp.pop %v3418
    %v3844 = vrcp.pop %v3420
    %v3845 = vrcp.pop %v3422
    %v3846 = vrcp.pop %v3424
    %v3847 = vrcp.pop %v3426
    %v3848 = vrcp.pop %v3428
    %v3849 = vrcp.pop %v3430
    %v3850 = vrcp.pop %v3432
    %v3851 = vrcp.pop %v3434
    %v3852 = vrcp.pop %v3436
    %v3853 = vrcp.pop %v3438
    %v3854 = vrcp.pop %v3440
    %v3855 = vrcp.pop %v3442
    %v3856 = vrcp.pop %v3444
    %v3857 = vrcp.pop %v3446
    %v3858 = vrcp.pop %v3448
    %v3859 = vrcp.pop %v3450
    %v3860 = vrcp.pop %v3452
    %v3861 = vrcp.pop %v3454
    %v3862 = vrcp.pop %v3456
    %v3863 = vrcp.pop %v3458
    %v3864 = vrcp.pop %v3460
    %v3865 = vrcp.pop %v3462
    %v3866 = vrcp.pop %v3464
    %v3867 = vrcp.pop %v3466
    %v3868 = vrcp.pop %v3468
    %v3869 = vrcp.pop %v3470
    %v3870 = vrcp.pop %v3472
    %v3871 = vrcp.pop %v3474
    %v3872 = vrcp.pop %v3476
    %v3873 = vrcp.pop %v3478
    %v3874 = vrcp.pop %v3480
    %v3875 = vrcp.pop %v3482
    %v3876 = vrcp.pop %v3484
    %v3877 = vrcp.pop %v3486
    %v3878 = vrcp.pop %v3488
    %v3879 = vrcp.pop %v3490
    %v3880 = vrcp.pop %v3492
    %v3881 = vrcp.pop %v3494
    %v3882 = vrcp.pop %v3496
    %v3883 = vrcp.pop %v3498
    %v3884 = vrcp.pop %v3500
    %v3885 = vsub.f32 %v2733, %v3502
    %v3886 = vsub.f32 %v2734, %v3504
    %v3887 = vsub.f32 %v2735, %v3506
    %v3888 = vsub.f32 %v2736, %v3508
    %v3889 = vsub.f32 %v2737, %v3510
    %v3890 = vsub.f32 %v2738, %v3512
    %v3891 = vsub.f32 %v2739, %v3514
    %v3892 = vsub.f32 %v2740, %v3516
    %v3893 = vsub.f32 %v2741, %v3518
    %v3894 = vsub.f32 %v2742, %v3520
    %v3895 = vsub.f32 %v2743, %v3522
    %v3896 = vsub.f32 %v2744, %v3524
    %v3897 = vsub.f32 %v2745, %v3526
    %v3898 = vsub.f32 %v2746, %v3528
    %v3899 = vsub.f32 %v2747, %v3530
    %v3900 = vsub.f32 %v2748, %v3532
    %v3901 = vsub.f32 %v2749, %v3534
    %v3902 = vsub.f32 %v2750, %v3536
    %v3903 = vsub.f32 %v2751, %v3538
    %v3904 = vsub.f32 %v2752, %v3540
    %v3905 = vsub.f32 %v2753, %v3542
    %v3906 = vsub.f32 %v2754, %v3544
    %v3907 = vsub.f32 %v2755, %v3546
    %v3908 = vsub.f32 %v2756, %v3548
    %v3909 = vsub.f32 %v2757, %v3550
    %v3910 = vsub.f32 %v2758, %v3552
    %v3911 = vsub.f32 %v2759, %v3554
    %v3912 = vsub.f32 %v2760, %v3556
    %v3913 = vsub.f32 %v2761, %v3558
    %v3914 = vsub.f32 %v2762, %v3560
    %v3915 = vsub.f32 %v2763, %v3562
    %v3916 = vsub.f32 %v2764, %v3564
    %v3917 = vsub.f32 %v2765, %v3566
    %v3918 = vsub.f32 %v2766, %v3568
    %v3919 = vsub.f32 %v2767, %v3570
    %v3920 = vsub.f32 %v2768, %v3572
    %v3921 = vsub.f32 %v2769, %v3574
    %v3922 = vsub.f32 %v2770, %v3576
    %v3923 = vsub.f32 %v2771, %v3578
    %v3924 = vsub.f32 %v2772, %v3580
    %v3925 = vsub.f32 %v2773, %v3582
    %v3926 = vsub.f32 %v2774, %v3584
    %v3927 = vsub.f32 %v2775, %v3586
    %v3928 = vsub.f32 %v2776, %v3588
    %v3929 = vsub.f32 %v2777, %v3590
    %v3930 = vsub.f32 %v2778, %v3592
    %v3931 = vsub.f32 %v2779, %v3594
    %v3932 = vsub.f32 %v2780, %v3596
    %v3933 = vsub.f32 %v2781, %v3598
    %v3934 = vsub.f32 %v2782, %v3600
    %v3935 = vsub.f32 %v2783, %v3602
    %v3936 = vsub.f32 %v2784, %v3604
    %v3937 = vsub.f32 %v2785, %v3606
    %v3938 = vsub.f32 %v2786, %v3608
    %v3939 = vsub.f32 %v2787, %v3610
    %v3940 = vsub.f32 %v2788, %v3612
    %v3941 = vsub.f32 %v2789, %v3614
    %v3942 = vsub.f32 %v2790, %v3616
    %v3943 = vsub.f32 %v2791, %v3618
    %v3944 = vsub.f32 %v2792, %v3620
    %v3945 = vsub.f32 %v2793, %v3622
    %v3946 = vsub.f32 %v2794, %v3624
    %v3947 = vsub.f32 %v2795, %v3626
    %v3948 = vsub.f32 %v2796, %v3628
    %v3949 = vsub.f32 %v2797, %v3630
    %v3950 = vsub.f32 %v2798, %v3632
    %v3951 = vsub.f32 %v2799, %v3634
    %v3952 = vsub.f32 %v2800, %v3636
    %v3953 = vsub.f32 %v2801, %v3638
    %v3954 = vsub.f32 %v2802, %v3640
    %v3955 = vsub.f32 %v2803, %v3642
    %v3956 = vsub.f32 %v2804, %v3644
    %v3957 = vsub.f32 %v2805, %v3646
    %v3958 = vsub.f32 %v2806, %v3648
    %v3959 = vsub.f32 %v2807, %v3650
    %v3960 = vsub.f32 %v2808, %v3652
    %v3961 = vsub.f32 %v2809, %v3654
    %v3962 = vsub.f32 %v2810, %v3656
    %v3963 = vsub.f32 %v2811, %v3658
    %v3964 = vsub.f32 %v2812, %v3660
    %v3965 = vsub.f32 %v2813, %v3662
    %v3966 = vsub.f32 %v2814, %v3664
    %v3967 = vsub.f32 %v2815, %v3666
    %v3968 = vsub.f32 %v2816, %v3668
    %v3969 = vsub.f32 %v2817, %v3670
    %v3970 = vsub.f32 %v2818, %v3672
    %v3971 = vsub.f32 %v2819, %v3674
    %v3972 = vsub.f32 %v2820, %v3676
    %v3973 = vsub.f32 %v2821, %v3678
    %v3974 = vsub.f32 %v2822, %v3680
    %v3975 = vsub.f32 %v2823, %v3682
    %v3976 = vsub.f32 %v2824, %v3684
    %v3977 = vsub.f32 %v2825, %v3686
    %v3978 = vsub.f32 %v2826, %v3688
    %v3979 = vsub.f32 %v2827, %v3690
    %v3980 = vsub.f32 %v2828, %v3692
    %v3981 = vsub.f32 %v2829, %v3694
    %v3982 = vsub.f32 %v2830, %v3696
    %v3983 = vsub.f32 %v2831, %v3698
    %v3984 = vsub.f32 %v2832, %v3700
    %v3985 = vsub.f32 %v2833, %v3702
    %v3986 = vsub.f32 %v2834, %v3704
    %v3987 = vsub.f32 %v2835, %v3706
    %v3988 = vsub.f32 %v2836, %v3708
    %v3989 = vsub.f32 %v2837, %v3710
    %v3990 = vsub.f32 %v2838, %v3712
    %v3991 = vsub.f32 %v2839, %v3714
    %v3992 = vsub.f32 %v2840, %v3716
    %v3993 = vsub.f32 %v2841, %v3718
    %v3994 = vsub.f32 %v2842, %v3720
    %v3995 = vsub.f32 %v2843, %v3722
    %v3996 = vsub.f32 %v2844, %v3724
    %v3997 = vsub.f32 %v2845, %v3726
    %v3998 = vsub.f32 %v2846, %v3728
    %v3999 = vsub.f32 %v2847, %v3730
    %v4000 = vsub.f32 %v2848, %v3732
    %v4001 = vsub.f32 %v2849, %v3734
    %v4002 = vsub.f32 %v2850, %v3736
    %v4003 = vsub.f32 %v2851, %v3738
    %v4004 = vsub.f32 %v2852, %v3740
    %v4005 = vsub.f32 %v2853, %v3742
    %v4006 = vsub.f32 %v2854, %v3744
    %v4007 = vsub.f32 %v2855, %v3746
    %v4008 = vsub.f32 %v2856, %v3748
    %v4009 = vsub.f32 %v2857, %v3750
    %v4010 = vsub.f32 %v2858, %v3752
    %v4011 = vsub.f32 %v2859, %v3754
    %v4012 = vsub.f32 %v2860, %v3756
    %v4013 = vmul.f32 %v3885, %v599
    %v4014 = vmul.f32 %v3886, %v600
    %v4015 = vmul.f32 %v3887, %v601
    %v4016 = vmul.f32 %v3888, %v602
    %v4017 = vmul.f32 %v3889, %v603
    %v4018 = vmul.f32 %v3890, %v604
    %v4019 = vmul.f32 %v3891, %v605
    %v4020 = vmul.f32 %v3892, %v606
    %v4021 = vmul.f32 %v3893, %v607
    %v4022 = vmul.f32 %v3894, %v608
    %v4023 = vmul.f32 %v3895, %v609
    %v4024 = vmul.f32 %v3896, %v610
    %v4025 = vmul.f32 %v3897, %v611
    %v4026 = vmul.f32 %v3898, %v612
    %v4027 = vmul.f32 %v3899, %v613
    %v4028 = vmul.f32 %v3900, %v614
    %v4029 = vmul.f32 %v3901, %v599
    %v4030 = vmul.f32 %v3902, %v600
    %v4031 = vmul.f32 %v3903, %v601
    %v4032 = vmul.f32 %v3904, %v602
    %v4033 = vmul.f32 %v3905, %v603
    %v4034 = vmul.f32 %v3906, %v604
    %v4035 = vmul.f32 %v3907, %v605
    %v4036 = vmul.f32 %v3908, %v606
    %v4037 = vmul.f32 %v3909, %v607
    %v4038 = vmul.f32 %v3910, %v608
    %v4039 = vmul.f32 %v3911, %v609
    %v4040 = vmul.f32 %v3912, %v610
    %v4041 = vmul.f32 %v3913, %v611
    %v4042 = vmul.f32 %v3914, %v612
    %v4043 = vmul.f32 %v3915, %v613
    %v4044 = vmul.f32 %v3916, %v614
    %v4045 = vmul.f32 %v3917, %v599
    %v4046 = vmul.f32 %v3918, %v600
    %v4047 = vmul.f32 %v3919, %v601
    %v4048 = vmul.f32 %v3920, %v602
    %v4049 = vmul.f32 %v3921, %v603
    %v4050 = vmul.f32 %v3922, %v604
    %v4051 = vmul.f32 %v3923, %v605
    %v4052 = vmul.f32 %v3924, %v606
    %v4053 = vmul.f32 %v3925, %v607
    %v4054 = vmul.f32 %v3926, %v608
    %v4055 = vmul.f32 %v3927, %v609
    %v4056 = vmul.f32 %v3928, %v610
    %v4057 = vmul.f32 %v3929, %v611
    %v4058 = vmul.f32 %v3930, %v612
    %v4059 = vmul.f32 %v3931, %v613
    %v4060 = vmul.f32 %v3932, %v614
    %v4061 = vmul.f32 %v3933, %v599
    %v4062 = vmul.f32 %v3934, %v600
    %v4063 = vmul.f32 %v3935, %v601
    %v4064 = vmul.f32 %v3936, %v602
    %v4065 = vmul.f32 %v3937, %v603
    %v4066 = vmul.f32 %v3938, %v604
    %v4067 = vmul.f32 %v3939, %v605
    %v4068 = vmul.f32 %v3940, %v606
    %v4069 = vmul.f32 %v3941, %v607
    %v4070 = vmul.f32 %v3942, %v608
    %v4071 = vmul.f32 %v3943, %v609
    %v4072 = vmul.f32 %v3944, %v610
    %v4073 = vmul.f32 %v3945, %v611
    %v4074 = vmul.f32 %v3946, %v612
    %v4075 = vmul.f32 %v3947, %v613
    %v4076 = vmul.f32 %v3948, %v614
    %v4077 = vmul.f32 %v3949, %v599
    %v4078 = vmul.f32 %v3950, %v600
    %v4079 = vmul.f32 %v3951, %v601
    %v4080 = vmul.f32 %v3952, %v602
    %v4081 = vmul.f32 %v3953, %v603
    %v4082 = vmul.f32 %v3954, %v604
    %v4083 = vmul.f32 %v3955, %v605
    %v4084 = vmul.f32 %v3956, %v606
    %v4085 = vmul.f32 %v3957, %v607
    %v4086 = vmul.f32 %v3958, %v608
    %v4087 = vmul.f32 %v3959, %v609
    %v4088 = vmul.f32 %v3960, %v610
    %v4089 = vmul.f32 %v3961, %v611
    %v4090 = vmul.f32 %v3962, %v612
    %v4091 = vmul.f32 %v3963, %v613
    %v4092 = vmul.f32 %v3964, %v614
    %v4093 = vmul.f32 %v3965, %v599
    %v4094 = vmul.f32 %v3966, %v600
    %v4095 = vmul.f32 %v3967, %v601
    %v4096 = vmul.f32 %v3968, %v602
    %v4097 = vmul.f32 %v3969, %v603
    %v4098 = vmul.f32 %v3970, %v604
    %v4099 = vmul.f32 %v3971, %v605
    %v4100 = vmul.f32 %v3972, %v606
    %v4101 = vmul.f32 %v3973, %v607
    %v4102 = vmul.f32 %v3974, %v608
    %v4103 = vmul.f32 %v3975, %v609
    %v4104 = vmul.f32 %v3976, %v610
    %v4105 = vmul.f32 %v3977, %v611
    %v4106 = vmul.f32 %v3978, %v612
    %v4107 = vmul.f32 %v3979, %v613
    %v4108 = vmul.f32 %v3980, %v614
    %v4109 = vmul.f32 %v3981, %v599
    %v4110 = vmul.f32 %v3982, %v600
    %v4111 = vmul.f32 %v3983, %v601
    %v4112 = vmul.f32 %v3984, %v602
    %v4113 = vmul.f32 %v3985, %v603
    %v4114 = vmul.f32 %v3986, %v604
    %v4115 = vmul.f32 %v3987, %v605
    %v4116 = vmul.f32 %v3988, %v606
    %v4117 = vmul.f32 %v3989, %v607
    %v4118 = vmul.f32 %v3990, %v608
    %v4119 = vmul.f32 %v3991, %v609
    %v4120 = vmul.f32 %v3992, %v610
    %v4121 = vmul.f32 %v3993, %v611
    %v4122 = vmul.f32 %v3994, %v612
    %v4123 = vmul.f32 %v3995, %v613
    %v4124 = vmul.f32 %v3996, %v614
    %v4125 = vmul.f32 %v3997, %v599
    %v4126 = vmul.f32 %v3998, %v600
    %v4127 = vmul.f32 %v3999, %v601
    %v4128 = vmul.f32 %v4000, %v602
    %v4129 = vmul.f32 %v4001, %v603
    %v4130 = vmul.f32 %v4002, %v604
    %v4131 = vmul.f32 %v4003, %v605
    %v4132 = vmul.f32 %v4004, %v606
    %v4133 = vmul.f32 %v4005, %v607
    %v4134 = vmul.f32 %v4006, %v608
    %v4135 = vmul.f32 %v4007, %v609
    %v4136 = vmul.f32 %v4008, %v610
    %v4137 = vmul.f32 %v4009, %v611
    %v4138 = vmul.f32 %v4010, %v612
    %v4139 = vmul.f32 %v4011, %v613
    %v4140 = vmul.f32 %v4012, %v614
    %v4141 = vmul.f32 %v3117, %v3757
    %v4142 = vmul.f32 %v3118, %v3758
    %v4143 = vmul.f32 %v3119, %v3759
    %v4144 = vmul.f32 %v3120, %v3760
    %v4145 = vmul.f32 %v3121, %v3761
    %v4146 = vmul.f32 %v3122, %v3762
    %v4147 = vmul.f32 %v3123, %v3763
    %v4148 = vmul.f32 %v3124, %v3764
    %v4149 = vmul.f32 %v3125, %v3765
    %v4150 = vmul.f32 %v3126, %v3766
    %v4151 = vmul.f32 %v3127, %v3767
    %v4152 = vmul.f32 %v3128, %v3768
    %v4153 = vmul.f32 %v3129, %v3769
    %v4154 = vmul.f32 %v3130, %v3770
    %v4155 = vmul.f32 %v3131, %v3771
    %v4156 = vmul.f32 %v3132, %v3772
    %v4157 = vmul.f32 %v3133, %v3773
    %v4158 = vmul.f32 %v3134, %v3774
    %v4159 = vmul.f32 %v3135, %v3775
    %v4160 = vmul.f32 %v3136, %v3776
    %v4161 = vmul.f32 %v3137, %v3777
    %v4162 = vmul.f32 %v3138, %v3778
    %v4163 = vmul.f32 %v3139, %v3779
    %v4164 = vmul.f32 %v3140, %v3780
    %v4165 = vmul.f32 %v3141, %v3781
    %v4166 = vmul.f32 %v3142, %v3782
    %v4167 = vmul.f32 %v3143, %v3783
    %v4168 = vmul.f32 %v3144, %v3784
    %v4169 = vmul.f32 %v3145, %v3785
    %v4170 = vmul.f32 %v3146, %v3786
    %v4171 = vmul.f32 %v3147, %v3787
    %v4172 = vmul.f32 %v3148, %v3788
    %v4173 = vmul.f32 %v3149, %v3789
    %v4174 = vmul.f32 %v3150, %v3790
    %v4175 = vmul.f32 %v3151, %v3791
    %v4176 = vmul.f32 %v3152, %v3792
    %v4177 = vmul.f32 %v3153, %v3793
    %v4178 = vmul.f32 %v3154, %v3794
    %v4179 = vmul.f32 %v3155, %v3795
    %v4180 = vmul.f32 %v3156, %v3796
    %v4181 = vmul.f32 %v3157, %v3797
    %v4182 = vmul.f32 %v3158, %v3798
    %v4183 = vmul.f32 %v3159, %v3799
    %v4184 = vmul.f32 %v3160, %v3800
    %v4185 = vmul.f32 %v3161, %v3801
    %v4186 = vmul.f32 %v3162, %v3802
    %v4187 = vmul.f32 %v3163, %v3803
    %v4188 = vmul.f32 %v3164, %v3804
    %v4189 = vmul.f32 %v3165, %v3805
    %v4190 = vmul.f32 %v3166, %v3806
    %v4191 = vmul.f32 %v3167, %v3807
    %v4192 = vmul.f32 %v3168, %v3808
    %v4193 = vmul.f32 %v3169, %v3809
    %v4194 = vmul.f32 %v3170, %v3810
    %v4195 = vmul.f32 %v3171, %v3811
    %v4196 = vmul.f32 %v3172, %v3812
    %v4197 = vmul.f32 %v3173, %v3813
    %v4198 = vmul.f32 %v3174, %v3814
    %v4199 = vmul.f32 %v3175, %v3815
    %v4200 = vmul.f32 %v3176, %v3816
    %v4201 = vmul.f32 %v3177, %v3817
    %v4202 = vmul.f32 %v3178, %v3818
    %v4203 = vmul.f32 %v3179, %v3819
    %v4204 = vmul.f32 %v3180, %v3820
    %v4205 = vmul.f32 %v3181, %v3821
    %v4206 = vmul.f32 %v3182, %v3822
    %v4207 = vmul.f32 %v3183, %v3823
    %v4208 = vmul.f32 %v3184, %v3824
    %v4209 = vmul.f32 %v3185, %v3825
    %v4210 = vmul.f32 %v3186, %v3826
    %v4211 = vmul.f32 %v3187, %v3827
    %v4212 = vmul.f32 %v3188, %v3828
    %v4213 = vmul.f32 %v3189, %v3829
    %v4214 = vmul.f32 %v3190, %v3830
    %v4215 = vmul.f32 %v3191, %v3831
    %v4216 = vmul.f32 %v3192, %v3832
    %v4217 = vmul.f32 %v3193, %v3833
    %v4218 = vmul.f32 %v3194, %v3834
    %v4219 = vmul.f32 %v3195, %v3835
    %v4220 = vmul.f32 %v3196, %v3836
    %v4221 = vmul.f32 %v3197, %v3837
    %v4222 = vmul.f32 %v3198, %v3838
    %v4223 = vmul.f32 %v3199, %v3839
    %v4224 = vmul.f32 %v3200, %v3840
    %v4225 = vmul.f32 %v3201, %v3841
    %v4226 = vmul.f32 %v3202, %v3842
    %v4227 = vmul.f32 %v3203, %v3843
    %v4228 = vmul.f32 %v3204, %v3844
    %v4229 = vmul.f32 %v3205, %v3845
    %v4230 = vmul.f32 %v3206, %v3846
    %v4231 = vmul.f32 %v3207, %v3847
    %v4232 = vmul.f32 %v3208, %v3848
    %v4233 = vmul.f32 %v3209, %v3849
    %v4234 = vmul.f32 %v3210, %v3850
    %v4235 = vmul.f32 %v3211, %v3851
    %v4236 = vmul.f32 %v3212, %v3852
    %v4237 = vmul.f32 %v3213, %v3853
    %v4238 = vmul.f32 %v3214, %v3854
    %v4239 = vmul.f32 %v3215, %v3855
    %v4240 = vmul.f32 %v3216, %v3856
    %v4241 = vmul.f32 %v3217, %v3857
    %v4242 = vmul.f32 %v3218, %v3858
    %v4243 = vmul.f32 %v3219, %v3859
    %v4244 = vmul.f32 %v3220, %v3860
    %v4245 = vmul.f32 %v3221, %v3861
    %v4246 = vmul.f32 %v3222, %v3862
    %v4247 = vmul.f32 %v3223, %v3863
    %v4248 = vmul.f32 %v3224, %v3864
    %v4249 = vmul.f32 %v3225, %v3865
    %v4250 = vmul.f32 %v3226, %v3866
    %v4251 = vmul.f32 %v3227, %v3867
    %v4252 = vmul.f32 %v3228, %v3868
    %v4253 = vmul.f32 %v3229, %v3869
    %v4254 = vmul.f32 %v3230, %v3870
    %v4255 = vmul.f32 %v3231, %v3871
    %v4256 = vmul.f32 %v3232, %v3872
    %v4257 = vmul.f32 %v3233, %v3873
    %v4258 = vmul.f32 %v3234, %v3874
    %v4259 = vmul.f32 %v3235, %v3875
    %v4260 = vmul.f32 %v3236, %v3876
    %v4261 = vmul.f32 %v3237, %v3877
    %v4262 = vmul.f32 %v3238, %v3878
    %v4263 = vmul.f32 %v3239, %v3879
    %v4264 = vmul.f32 %v3240, %v3880
    %v4265 = vmul.f32 %v3241, %v3881
    %v4266 = vmul.f32 %v3242, %v3882
    %v4267 = vmul.f32 %v3243, %v3883
    %v4268 = vmul.f32 %v3244, %v3884
    %v4269 = vmul.f32 %v4141, %v599
    %v4270 = vmul.f32 %v4142, %v600
    %v4271 = vmul.f32 %v4143, %v601
    %v4272 = vmul.f32 %v4144, %v602
    %v4273 = vmul.f32 %v4145, %v603
    %v4274 = vmul.f32 %v4146, %v604
    %v4275 = vmul.f32 %v4147, %v605
    %v4276 = vmul.f32 %v4148, %v606
    %v4277 = vmul.f32 %v4149, %v607
    %v4278 = vmul.f32 %v4150, %v608
    %v4279 = vmul.f32 %v4151, %v609
    %v4280 = vmul.f32 %v4152, %v610
    %v4281 = vmul.f32 %v4153, %v611
    %v4282 = vmul.f32 %v4154, %v612
    %v4283 = vmul.f32 %v4155, %v613
    %v4284 = vmul.f32 %v4156, %v614
    %v4285 = vmul.f32 %v4157, %v599
    %v4286 = vmul.f32 %v4158, %v600
    %v4287 = vmul.f32 %v4159, %v601
    %v4288 = vmul.f32 %v4160, %v602
    %v4289 = vmul.f32 %v4161, %v603
    %v4290 = vmul.f32 %v4162, %v604
    %v4291 = vmul.f32 %v4163, %v605
    %v4292 = vmul.f32 %v4164, %v606
    %v4293 = vmul.f32 %v4165, %v607
    %v4294 = vmul.f32 %v4166, %v608
    %v4295 = vmul.f32 %v4167, %v609
    %v4296 = vmul.f32 %v4168, %v610
    %v4297 = vmul.f32 %v4169, %v611
    %v4298 = vmul.f32 %v4170, %v612
    %v4299 = vmul.f32 %v4171, %v613
    %v4300 = vmul.f32 %v4172, %v614
    %v4301 = vmul.f32 %v4173, %v599
    %v4302 = vmul.f32 %v4174, %v600
    %v4303 = vmul.f32 %v4175, %v601
    %v4304 = vmul.f32 %v4176, %v602
    %v4305 = vmul.f32 %v4177, %v603
    %v4306 = vmul.f32 %v4178, %v604
    %v4307 = vmul.f32 %v4179, %v605
    %v4308 = vmul.f32 %v4180, %v606
    %v4309 = vmul.f32 %v4181, %v607
    %v4310 = vmul.f32 %v4182, %v608
    %v4311 = vmul.f32 %v4183, %v609
    %v4312 = vmul.f32 %v4184, %v610
    %v4313 = vmul.f32 %v4185, %v611
    %v4314 = vmul.f32 %v4186, %v612
    %v4315 = vmul.f32 %v4187, %v613
    %v4316 = vmul.f32 %v4188, %v614
    %v4317 = vmul.f32 %v4189, %v599
    %v4318 = vmul.f32 %v4190, %v600
    %v4319 = vmul.f32 %v4191, %v601
    %v4320 = vmul.f32 %v4192, %v602
    %v4321 = vmul.f32 %v4193, %v603
    %v4322 = vmul.f32 %v4194, %v604
    %v4323 = vmul.f32 %v4195, %v605
    %v4324 = vmul.f32 %v4196, %v606
    %v4325 = vmul.f32 %v4197, %v607
    %v4326 = vmul.f32 %v4198, %v608
    %v4327 = vmul.f32 %v4199, %v609
    %v4328 = vmul.f32 %v4200, %v610
    %v4329 = vmul.f32 %v4201, %v611
    %v4330 = vmul.f32 %v4202, %v612
    %v4331 = vmul.f32 %v4203, %v613
    %v4332 = vmul.f32 %v4204, %v614
    %v4333 = vmul.f32 %v4205, %v599
    %v4334 = vmul.f32 %v4206, %v600
    %v4335 = vmul.f32 %v4207, %v601
    %v4336 = vmul.f32 %v4208, %v602
    %v4337 = vmul.f32 %v4209, %v603
    %v4338 = vmul.f32 %v4210, %v604
    %v4339 = vmul.f32 %v4211, %v605
    %v4340 = vmul.f32 %v4212, %v606
    %v4341 = vmul.f32 %v4213, %v607
    %v4342 = vmul.f32 %v4214, %v608
    %v4343 = vmul.f32 %v4215, %v609
    %v4344 = vmul.f32 %v4216, %v610
    %v4345 = vmul.f32 %v4217, %v611
    %v4346 = vmul.f32 %v4218, %v612
    %v4347 = vmul.f32 %v4219, %v613
    %v4348 = vmul.f32 %v4220, %v614
    %v4349 = vmul.f32 %v4221, %v599
    %v4350 = vmul.f32 %v4222, %v600
    %v4351 = vmul.f32 %v4223, %v601
    %v4352 = vmul.f32 %v4224, %v602
    %v4353 = vmul.f32 %v4225, %v603
    %v4354 = vmul.f32 %v4226, %v604
    %v4355 = vmul.f32 %v4227, %v605
    %v4356 = vmul.f32 %v4228, %v606
    %v4357 = vmul.f32 %v4229, %v607
    %v4358 = vmul.f32 %v4230, %v608
    %v4359 = vmul.f32 %v4231, %v609
    %v4360 = vmul.f32 %v4232, %v610
    %v4361 = vmul.f32 %v4233, %v611
    %v4362 = vmul.f32 %v4234, %v612
    %v4363 = vmul.f32 %v4235, %v613
    %v4364 = vmul.f32 %v4236, %v614
    %v4365 = vmul.f32 %v4237, %v599
    %v4366 = vmul.f32 %v4238, %v600
    %v4367 = vmul.f32 %v4239, %v601
    %v4368 = vmul.f32 %v4240, %v602
    %v4369 = vmul.f32 %v4241, %v603
    %v4370 = vmul.f32 %v4242, %v604
    %v4371 = vmul.f32 %v4243, %v605
    %v4372 = vmul.f32 %v4244, %v606
    %v4373 = vmul.f32 %v4245, %v607
    %v4374 = vmul.f32 %v4246, %v608
    %v4375 = vmul.f32 %v4247, %v609
    %v4376 = vmul.f32 %v4248, %v610
    %v4377 = vmul.f32 %v4249, %v611
    %v4378 = vmul.f32 %v4250, %v612
    %v4379 = vmul.f32 %v4251, %v613
    %v4380 = vmul.f32 %v4252, %v614
    %v4381 = vmul.f32 %v4253, %v599
    %v4382 = vmul.f32 %v4254, %v600
    %v4383 = vmul.f32 %v4255, %v601
    %v4384 = vmul.f32 %v4256, %v602
    %v4385 = vmul.f32 %v4257, %v603
    %v4386 = vmul.f32 %v4258, %v604
    %v4387 = vmul.f32 %v4259, %v605
    %v4388 = vmul.f32 %v4260, %v606
    %v4389 = vmul.f32 %v4261, %v607
    %v4390 = vmul.f32 %v4262, %v608
    %v4391 = vmul.f32 %v4263, %v609
    %v4392 = vmul.f32 %v4264, %v610
    %v4393 = vmul.f32 %v4265, %v611
    %v4394 = vmul.f32 %v4266, %v612
    %v4395 = vmul.f32 %v4267, %v613
    %v4396 = vmul.f32 %v4268, %v614
    %v4397 = vlaneseq
    %v4398 = vshrl.u32 %v4397, 7
    %v4399 = vsub.s32 0, %v4398
    %v4400 = vrot.slane %v636, %v4399
    %4402 = vbcast.lane.b32.xlu0 %v4400, 256
    %v4403 = vpop.permute.xlu0 %4402
    %s4405 = sor.u32 256, 8
    %4406 = vbcast.lane.b32.xlu0 %v4400, %s4405
    %v4407 = vpop.permute.xlu0 %4406
    %s4409 = sor.u32 256, 16
    %4410 = vbcast.lane.b32.xlu0 %v4400, %s4409
    %v4411 = vpop.permute.xlu0 %4410
    %s4413 = sor.u32 256, 24
    %4414 = vbcast.lane.b32.xlu0 %v4400, %s4413
    %v4415 = vpop.permute.xlu0 %4414
    %s4417 = sor.u32 256, 32
    %4418 = vbcast.lane.b32.xlu0 %v4400, %s4417
    %v4419 = vpop.permute.xlu0 %4418
    %s4421 = sor.u32 256, 40
    %4422 = vbcast.lane.b32.xlu0 %v4400, %s4421
    %v4423 = vpop.permute.xlu0 %4422
    %s4425 = sor.u32 256, 48
    %4426 = vbcast.lane.b32.xlu0 %v4400, %s4425
    %v4427 = vpop.permute.xlu0 %4426
    %s4429 = sor.u32 256, 56
    %4430 = vbcast.lane.b32.xlu0 %v4400, %s4429
    %v4431 = vpop.permute.xlu0 %4430
    %s4433 = sor.u32 256, 64
    %4434 = vbcast.lane.b32.xlu0 %v4400, %s4433
    %v4435 = vpop.permute.xlu0 %4434
    %s4437 = sor.u32 256, 72
    %4438 = vbcast.lane.b32.xlu0 %v4400, %s4437
    %v4439 = vpop.permute.xlu0 %4438
    %s4441 = sor.u32 256, 80
    %4442 = vbcast.lane.b32.xlu0 %v4400, %s4441
    %v4443 = vpop.permute.xlu0 %4442
    %s4445 = sor.u32 256, 88
    %4446 = vbcast.lane.b32.xlu0 %v4400, %s4445
    %v4447 = vpop.permute.xlu0 %4446
    %s4449 = sor.u32 256, 96
    %4450 = vbcast.lane.b32.xlu0 %v4400, %s4449
    %v4451 = vpop.permute.xlu0 %4450
    %s4453 = sor.u32 256, 104
    %4454 = vbcast.lane.b32.xlu0 %v4400, %s4453
    %v4455 = vpop.permute.xlu0 %4454
    %s4457 = sor.u32 256, 112
    %4458 = vbcast.lane.b32.xlu0 %v4400, %s4457
    %v4459 = vpop.permute.xlu0 %4458
    %s4461 = sor.u32 256, 120
    %4462 = vbcast.lane.b32.xlu0 %v4400, %s4461
    %v4463 = vpop.permute.xlu0 %4462
    %v4464 = vlaneseq
    %v4465 = vshrl.u32 %v4464, 7
    %v4466 = vsub.s32 1, %v4465
    %v4467 = vrot.slane %v636, %v4466
    %4469 = vbcast.lane.b32.xlu0 %v4467, 256
    %v4470 = vpop.permute.xlu0 %4469
    %s4472 = sor.u32 256, 8
    %4473 = vbcast.lane.b32.xlu0 %v4467, %s4472
    %v4474 = vpop.permute.xlu0 %4473
    %s4476 = sor.u32 256, 16
    %4477 = vbcast.lane.b32.xlu0 %v4467, %s4476
    %v4478 = vpop.permute.xlu0 %4477
    %s4480 = sor.u32 256, 24
    %4481 = vbcast.lane.b32.xlu0 %v4467, %s4480
    %v4482 = vpop.permute.xlu0 %4481
    %s4484 = sor.u32 256, 32
    %4485 = vbcast.lane.b32.xlu0 %v4467, %s4484
    %v4486 = vpop.permute.xlu0 %4485
    %s4488 = sor.u32 256, 40
    %4489 = vbcast.lane.b32.xlu0 %v4467, %s4488
    %v4490 = vpop.permute.xlu0 %4489
    %s4492 = sor.u32 256, 48
    %4493 = vbcast.lane.b32.xlu0 %v4467, %s4492
    %v4494 = vpop.permute.xlu0 %4493
    %s4496 = sor.u32 256, 56
    %4497 = vbcast.lane.b32.xlu0 %v4467, %s4496
    %v4498 = vpop.permute.xlu0 %4497
    %s4500 = sor.u32 256, 64
    %4501 = vbcast.lane.b32.xlu0 %v4467, %s4500
    %v4502 = vpop.permute.xlu0 %4501
    %s4504 = sor.u32 256, 72
    %4505 = vbcast.lane.b32.xlu0 %v4467, %s4504
    %v4506 = vpop.permute.xlu0 %4505
    %s4508 = sor.u32 256, 80
    %4509 = vbcast.lane.b32.xlu0 %v4467, %s4508
    %v4510 = vpop.permute.xlu0 %4509
    %s4512 = sor.u32 256, 88
    %4513 = vbcast.lane.b32.xlu0 %v4467, %s4512
    %v4514 = vpop.permute.xlu0 %4513
    %s4516 = sor.u32 256, 96
    %4517 = vbcast.lane.b32.xlu0 %v4467, %s4516
    %v4518 = vpop.permute.xlu0 %4517
    %s4520 = sor.u32 256, 104
    %4521 = vbcast.lane.b32.xlu0 %v4467, %s4520
    %v4522 = vpop.permute.xlu0 %4521
    %s4524 = sor.u32 256, 112
    %4525 = vbcast.lane.b32.xlu0 %v4467, %s4524
    %v4526 = vpop.permute.xlu0 %4525
    %s4528 = sor.u32 256, 120
    %4529 = vbcast.lane.b32.xlu0 %v4467, %s4528
    %v4530 = vpop.permute.xlu0 %4529
    %v4531 = vlaneseq
    %v4532 = vshrl.u32 %v4531, 7
    %v4533 = vsub.s32 2, %v4532
    %v4534 = vrot.slane %v636, %v4533
    %4536 = vbcast.lane.b32.xlu0 %v4534, 256
    %v4537 = vpop.permute.xlu0 %4536
    %s4539 = sor.u32 256, 8
    %4540 = vbcast.lane.b32.xlu0 %v4534, %s4539
    %v4541 = vpop.permute.xlu0 %4540
    %s4543 = sor.u32 256, 16
    %4544 = vbcast.lane.b32.xlu0 %v4534, %s4543
    %v4545 = vpop.permute.xlu0 %4544
    %s4547 = sor.u32 256, 24
    %4548 = vbcast.lane.b32.xlu0 %v4534, %s4547
    %v4549 = vpop.permute.xlu0 %4548
    %s4551 = sor.u32 256, 32
    %4552 = vbcast.lane.b32.xlu0 %v4534, %s4551
    %v4553 = vpop.permute.xlu0 %4552
    %s4555 = sor.u32 256, 40
    %4556 = vbcast.lane.b32.xlu0 %v4534, %s4555
    %v4557 = vpop.permute.xlu0 %4556
    %s4559 = sor.u32 256, 48
    %4560 = vbcast.lane.b32.xlu0 %v4534, %s4559
    %v4561 = vpop.permute.xlu0 %4560
    %s4563 = sor.u32 256, 56
    %4564 = vbcast.lane.b32.xlu0 %v4534, %s4563
    %v4565 = vpop.permute.xlu0 %4564
    %s4567 = sor.u32 256, 64
    %4568 = vbcast.lane.b32.xlu0 %v4534, %s4567
    %v4569 = vpop.permute.xlu0 %4568
    %s4571 = sor.u32 256, 72
    %4572 = vbcast.lane.b32.xlu0 %v4534, %s4571
    %v4573 = vpop.permute.xlu0 %4572
    %s4575 = sor.u32 256, 80
    %4576 = vbcast.lane.b32.xlu0 %v4534, %s4575
    %v4577 = vpop.permute.xlu0 %4576
    %s4579 = sor.u32 256, 88
    %4580 = vbcast.lane.b32.xlu0 %v4534, %s4579
    %v4581 = vpop.permute.xlu0 %4580
    %s4583 = sor.u32 256, 96
    %4584 = vbcast.lane.b32.xlu0 %v4534, %s4583
    %v4585 = vpop.permute.xlu0 %4584
    %s4587 = sor.u32 256, 104
    %4588 = vbcast.lane.b32.xlu0 %v4534, %s4587
    %v4589 = vpop.permute.xlu0 %4588
    %s4591 = sor.u32 256, 112
    %4592 = vbcast.lane.b32.xlu0 %v4534, %s4591
    %v4593 = vpop.permute.xlu0 %4592
    %s4595 = sor.u32 256, 120
    %4596 = vbcast.lane.b32.xlu0 %v4534, %s4595
    %v4597 = vpop.permute.xlu0 %4596
    %v4598 = vlaneseq
    %v4599 = vshrl.u32 %v4598, 7
    %v4600 = vsub.s32 3, %v4599
    %v4601 = vrot.slane %v636, %v4600
    %4603 = vbcast.lane.b32.xlu0 %v4601, 256
    %v4604 = vpop.permute.xlu0 %4603
    %s4606 = sor.u32 256, 8
    %4607 = vbcast.lane.b32.xlu0 %v4601, %s4606
    %v4608 = vpop.permute.xlu0 %4607
    %s4610 = sor.u32 256, 16
    %4611 = vbcast.lane.b32.xlu0 %v4601, %s4610
    %v4612 = vpop.permute.xlu0 %4611
    %s4614 = sor.u32 256, 24
    %4615 = vbcast.lane.b32.xlu0 %v4601, %s4614
    %v4616 = vpop.permute.xlu0 %4615
    %s4618 = sor.u32 256, 32
    %4619 = vbcast.lane.b32.xlu0 %v4601, %s4618
    %v4620 = vpop.permute.xlu0 %4619
    %s4622 = sor.u32 256, 40
    %4623 = vbcast.lane.b32.xlu0 %v4601, %s4622
    %v4624 = vpop.permute.xlu0 %4623
    %s4626 = sor.u32 256, 48
    %4627 = vbcast.lane.b32.xlu0 %v4601, %s4626
    %v4628 = vpop.permute.xlu0 %4627
    %s4630 = sor.u32 256, 56
    %4631 = vbcast.lane.b32.xlu0 %v4601, %s4630
    %v4632 = vpop.permute.xlu0 %4631
    %s4634 = sor.u32 256, 64
    %4635 = vbcast.lane.b32.xlu0 %v4601, %s4634
    %v4636 = vpop.permute.xlu0 %4635
    %s4638 = sor.u32 256, 72
    %4639 = vbcast.lane.b32.xlu0 %v4601, %s4638
    %v4640 = vpop.permute.xlu0 %4639
    %s4642 = sor.u32 256, 80
    %4643 = vbcast.lane.b32.xlu0 %v4601, %s4642
    %v4644 = vpop.permute.xlu0 %4643
    %s4646 = sor.u32 256, 88
    %4647 = vbcast.lane.b32.xlu0 %v4601, %s4646
    %v4648 = vpop.permute.xlu0 %4647
    %s4650 = sor.u32 256, 96
    %4651 = vbcast.lane.b32.xlu0 %v4601, %s4650
    %v4652 = vpop.permute.xlu0 %4651
    %s4654 = sor.u32 256, 104
    %4655 = vbcast.lane.b32.xlu0 %v4601, %s4654
    %v4656 = vpop.permute.xlu0 %4655
    %s4658 = sor.u32 256, 112
    %4659 = vbcast.lane.b32.xlu0 %v4601, %s4658
    %v4660 = vpop.permute.xlu0 %4659
    %s4662 = sor.u32 256, 120
    %4663 = vbcast.lane.b32.xlu0 %v4601, %s4662
    %v4664 = vpop.permute.xlu0 %4663
    %v4665 = vlaneseq
    %v4666 = vshrl.u32 %v4665, 7
    %v4667 = vsub.s32 4, %v4666
    %v4668 = vrot.slane %v636, %v4667
    %4670 = vbcast.lane.b32.xlu0 %v4668, 256
    %v4671 = vpop.permute.xlu0 %4670
    %s4673 = sor.u32 256, 8
    %4674 = vbcast.lane.b32.xlu0 %v4668, %s4673
    %v4675 = vpop.permute.xlu0 %4674
    %s4677 = sor.u32 256, 16
    %4678 = vbcast.lane.b32.xlu0 %v4668, %s4677
    %v4679 = vpop.permute.xlu0 %4678
    %s4681 = sor.u32 256, 24
    %4682 = vbcast.lane.b32.xlu0 %v4668, %s4681
    %v4683 = vpop.permute.xlu0 %4682
    %s4685 = sor.u32 256, 32
    %4686 = vbcast.lane.b32.xlu0 %v4668, %s4685
    %v4687 = vpop.permute.xlu0 %4686
    %s4689 = sor.u32 256, 40
    %4690 = vbcast.lane.b32.xlu0 %v4668, %s4689
    %v4691 = vpop.permute.xlu0 %4690
    %s4693 = sor.u32 256, 48
    %4694 = vbcast.lane.b32.xlu0 %v4668, %s4693
    %v4695 = vpop.permute.xlu0 %4694
    %s4697 = sor.u32 256, 56
    %4698 = vbcast.lane.b32.xlu0 %v4668, %s4697
    %v4699 = vpop.permute.xlu0 %4698
    %s4701 = sor.u32 256, 64
    %4702 = vbcast.lane.b32.xlu0 %v4668, %s4701
    %v4703 = vpop.permute.xlu0 %4702
    %s4705 = sor.u32 256, 72
    %4706 = vbcast.lane.b32.xlu0 %v4668, %s4705
    %v4707 = vpop.permute.xlu0 %4706
    %s4709 = sor.u32 256, 80
    %4710 = vbcast.lane.b32.xlu0 %v4668, %s4709
    %v4711 = vpop.permute.xlu0 %4710
    %s4713 = sor.u32 256, 88
    %4714 = vbcast.lane.b32.xlu0 %v4668, %s4713
    %v4715 = vpop.permute.xlu0 %4714
    %s4717 = sor.u32 256, 96
    %4718 = vbcast.lane.b32.xlu0 %v4668, %s4717
    %v4719 = vpop.permute.xlu0 %4718
    %s4721 = sor.u32 256, 104
    %4722 = vbcast.lane.b32.xlu0 %v4668, %s4721
    %v4723 = vpop.permute.xlu0 %4722
    %s4725 = sor.u32 256, 112
    %4726 = vbcast.lane.b32.xlu0 %v4668, %s4725
    %v4727 = vpop.permute.xlu0 %4726
    %s4729 = sor.u32 256, 120
    %4730 = vbcast.lane.b32.xlu0 %v4668, %s4729
    %v4731 = vpop.permute.xlu0 %4730
    %v4732 = vlaneseq
    %v4733 = vshrl.u32 %v4732, 7
    %v4734 = vsub.s32 5, %v4733
    %v4735 = vrot.slane %v636, %v4734
    %4737 = vbcast.lane.b32.xlu0 %v4735, 256
    %v4738 = vpop.permute.xlu0 %4737
    %s4740 = sor.u32 256, 8
    %4741 = vbcast.lane.b32.xlu0 %v4735, %s4740
    %v4742 = vpop.permute.xlu0 %4741
    %s4744 = sor.u32 256, 16
    %4745 = vbcast.lane.b32.xlu0 %v4735, %s4744
    %v4746 = vpop.permute.xlu0 %4745
    %s4748 = sor.u32 256, 24
    %4749 = vbcast.lane.b32.xlu0 %v4735, %s4748
    %v4750 = vpop.permute.xlu0 %4749
    %s4752 = sor.u32 256, 32
    %4753 = vbcast.lane.b32.xlu0 %v4735, %s4752
    %v4754 = vpop.permute.xlu0 %4753
    %s4756 = sor.u32 256, 40
    %4757 = vbcast.lane.b32.xlu0 %v4735, %s4756
    %v4758 = vpop.permute.xlu0 %4757
    %s4760 = sor.u32 256, 48
    %4761 = vbcast.lane.b32.xlu0 %v4735, %s4760
    %v4762 = vpop.permute.xlu0 %4761
    %s4764 = sor.u32 256, 56
    %4765 = vbcast.lane.b32.xlu0 %v4735, %s4764
    %v4766 = vpop.permute.xlu0 %4765
    %s4768 = sor.u32 256, 64
    %4769 = vbcast.lane.b32.xlu0 %v4735, %s4768
    %v4770 = vpop.permute.xlu0 %4769
    %s4772 = sor.u32 256, 72
    %4773 = vbcast.lane.b32.xlu0 %v4735, %s4772
    %v4774 = vpop.permute.xlu0 %4773
    %s4776 = sor.u32 256, 80
    %4777 = vbcast.lane.b32.xlu0 %v4735, %s4776
    %v4778 = vpop.permute.xlu0 %4777
    %s4780 = sor.u32 256, 88
    %4781 = vbcast.lane.b32.xlu0 %v4735, %s4780
    %v4782 = vpop.permute.xlu0 %4781
    %s4784 = sor.u32 256, 96
    %4785 = vbcast.lane.b32.xlu0 %v4735, %s4784
    %v4786 = vpop.permute.xlu0 %4785
    %s4788 = sor.u32 256, 104
    %4789 = vbcast.lane.b32.xlu0 %v4735, %s4788
    %v4790 = vpop.permute.xlu0 %4789
    %s4792 = sor.u32 256, 112
    %4793 = vbcast.lane.b32.xlu0 %v4735, %s4792
    %v4794 = vpop.permute.xlu0 %4793
    %s4796 = sor.u32 256, 120
    %4797 = vbcast.lane.b32.xlu0 %v4735, %s4796
    %v4798 = vpop.permute.xlu0 %4797
    %v4799 = vlaneseq
    %v4800 = vshrl.u32 %v4799, 7
    %v4801 = vsub.s32 6, %v4800
    %v4802 = vrot.slane %v636, %v4801
    %4804 = vbcast.lane.b32.xlu0 %v4802, 256
    %v4805 = vpop.permute.xlu0 %4804
    %s4807 = sor.u32 256, 8
    %4808 = vbcast.lane.b32.xlu0 %v4802, %s4807
    %v4809 = vpop.permute.xlu0 %4808
    %s4811 = sor.u32 256, 16
    %4812 = vbcast.lane.b32.xlu0 %v4802, %s4811
    %v4813 = vpop.permute.xlu0 %4812
    %s4815 = sor.u32 256, 24
    %4816 = vbcast.lane.b32.xlu0 %v4802, %s4815
    %v4817 = vpop.permute.xlu0 %4816
    %s4819 = sor.u32 256, 32
    %4820 = vbcast.lane.b32.xlu0 %v4802, %s4819
    %v4821 = vpop.permute.xlu0 %4820
    %s4823 = sor.u32 256, 40
    %4824 = vbcast.lane.b32.xlu0 %v4802, %s4823
    %v4825 = vpop.permute.xlu0 %4824
    %s4827 = sor.u32 256, 48
    %4828 = vbcast.lane.b32.xlu0 %v4802, %s4827
    %v4829 = vpop.permute.xlu0 %4828
    %s4831 = sor.u32 256, 56
    %4832 = vbcast.lane.b32.xlu0 %v4802, %s4831
    %v4833 = vpop.permute.xlu0 %4832
    %s4835 = sor.u32 256, 64
    %4836 = vbcast.lane.b32.xlu0 %v4802, %s4835
    %v4837 = vpop.permute.xlu0 %4836
    %s4839 = sor.u32 256, 72
    %4840 = vbcast.lane.b32.xlu0 %v4802, %s4839
    %v4841 = vpop.permute.xlu0 %4840
    %s4843 = sor.u32 256, 80
    %4844 = vbcast.lane.b32.xlu0 %v4802, %s4843
    %v4845 = vpop.permute.xlu0 %4844
    %s4847 = sor.u32 256, 88
    %4848 = vbcast.lane.b32.xlu0 %v4802, %s4847
    %v4849 = vpop.permute.xlu0 %4848
    %s4851 = sor.u32 256, 96
    %4852 = vbcast.lane.b32.xlu0 %v4802, %s4851
    %v4853 = vpop.permute.xlu0 %4852
    %s4855 = sor.u32 256, 104
    %4856 = vbcast.lane.b32.xlu0 %v4802, %s4855
    %v4857 = vpop.permute.xlu0 %4856
    %s4859 = sor.u32 256, 112
    %4860 = vbcast.lane.b32.xlu0 %v4802, %s4859
    %v4861 = vpop.permute.xlu0 %4860
    %s4863 = sor.u32 256, 120
    %4864 = vbcast.lane.b32.xlu0 %v4802, %s4863
    %v4865 = vpop.permute.xlu0 %4864
    %v4866 = vlaneseq
    %v4867 = vshrl.u32 %v4866, 7
    %v4868 = vsub.s32 7, %v4867
    %v4869 = vrot.slane %v636, %v4868
    %4871 = vbcast.lane.b32.xlu0 %v4869, 256
    %v4872 = vpop.permute.xlu0 %4871
    %s4874 = sor.u32 256, 8
    %4875 = vbcast.lane.b32.xlu0 %v4869, %s4874
    %v4876 = vpop.permute.xlu0 %4875
    %s4878 = sor.u32 256, 16
    %4879 = vbcast.lane.b32.xlu0 %v4869, %s4878
    %v4880 = vpop.permute.xlu0 %4879
    %s4882 = sor.u32 256, 24
    %4883 = vbcast.lane.b32.xlu0 %v4869, %s4882
    %v4884 = vpop.permute.xlu0 %4883
    %s4886 = sor.u32 256, 32
    %4887 = vbcast.lane.b32.xlu0 %v4869, %s4886
    %v4888 = vpop.permute.xlu0 %4887
    %s4890 = sor.u32 256, 40
    %4891 = vbcast.lane.b32.xlu0 %v4869, %s4890
    %v4892 = vpop.permute.xlu0 %4891
    %s4894 = sor.u32 256, 48
    %4895 = vbcast.lane.b32.xlu0 %v4869, %s4894
    %v4896 = vpop.permute.xlu0 %4895
    %s4898 = sor.u32 256, 56
    %4899 = vbcast.lane.b32.xlu0 %v4869, %s4898
    %v4900 = vpop.permute.xlu0 %4899
    %s4902 = sor.u32 256, 64
    %4903 = vbcast.lane.b32.xlu0 %v4869, %s4902
    %v4904 = vpop.permute.xlu0 %4903
    %s4906 = sor.u32 256, 72
    %4907 = vbcast.lane.b32.xlu0 %v4869, %s4906
    %v4908 = vpop.permute.xlu0 %4907
    %s4910 = sor.u32 256, 80
    %4911 = vbcast.lane.b32.xlu0 %v4869, %s4910
    %v4912 = vpop.permute.xlu0 %4911
    %s4914 = sor.u32 256, 88
    %4915 = vbcast.lane.b32.xlu0 %v4869, %s4914
    %v4916 = vpop.permute.xlu0 %4915
    %s4918 = sor.u32 256, 96
    %4919 = vbcast.lane.b32.xlu0 %v4869, %s4918
    %v4920 = vpop.permute.xlu0 %4919
    %s4922 = sor.u32 256, 104
    %4923 = vbcast.lane.b32.xlu0 %v4869, %s4922
    %v4924 = vpop.permute.xlu0 %4923
    %s4926 = sor.u32 256, 112
    %4927 = vbcast.lane.b32.xlu0 %v4869, %s4926
    %v4928 = vpop.permute.xlu0 %4927
    %s4930 = sor.u32 256, 120
    %4931 = vbcast.lane.b32.xlu0 %v4869, %s4930
    %v4932 = vpop.permute.xlu0 %4931
    %v4933 = vmul.f32 %v4403, %v4269
    %v4934 = vmul.f32 %v4407, %v4270
    %v4935 = vmul.f32 %v4411, %v4271
    %v4936 = vmul.f32 %v4415, %v4272
    %v4937 = vmul.f32 %v4419, %v4273
    %v4938 = vmul.f32 %v4423, %v4274
    %v4939 = vmul.f32 %v4427, %v4275
    %v4940 = vmul.f32 %v4431, %v4276
    %v4941 = vmul.f32 %v4435, %v4277
    %v4942 = vmul.f32 %v4439, %v4278
    %v4943 = vmul.f32 %v4443, %v4279
    %v4944 = vmul.f32 %v4447, %v4280
    %v4945 = vmul.f32 %v4451, %v4281
    %v4946 = vmul.f32 %v4455, %v4282
    %v4947 = vmul.f32 %v4459, %v4283
    %v4948 = vmul.f32 %v4463, %v4284
    %v4949 = vmul.f32 %v4470, %v4285
    %v4950 = vmul.f32 %v4474, %v4286
    %v4951 = vmul.f32 %v4478, %v4287
    %v4952 = vmul.f32 %v4482, %v4288
    %v4953 = vmul.f32 %v4486, %v4289
    %v4954 = vmul.f32 %v4490, %v4290
    %v4955 = vmul.f32 %v4494, %v4291
    %v4956 = vmul.f32 %v4498, %v4292
    %v4957 = vmul.f32 %v4502, %v4293
    %v4958 = vmul.f32 %v4506, %v4294
    %v4959 = vmul.f32 %v4510, %v4295
    %v4960 = vmul.f32 %v4514, %v4296
    %v4961 = vmul.f32 %v4518, %v4297
    %v4962 = vmul.f32 %v4522, %v4298
    %v4963 = vmul.f32 %v4526, %v4299
    %v4964 = vmul.f32 %v4530, %v4300
    %v4965 = vmul.f32 %v4537, %v4301
    %v4966 = vmul.f32 %v4541, %v4302
    %v4967 = vmul.f32 %v4545, %v4303
    %v4968 = vmul.f32 %v4549, %v4304
    %v4969 = vmul.f32 %v4553, %v4305
    %v4970 = vmul.f32 %v4557, %v4306
    %v4971 = vmul.f32 %v4561, %v4307
    %v4972 = vmul.f32 %v4565, %v4308
    %v4973 = vmul.f32 %v4569, %v4309
    %v4974 = vmul.f32 %v4573, %v4310
    %v4975 = vmul.f32 %v4577, %v4311
    %v4976 = vmul.f32 %v4581, %v4312
    %v4977 = vmul.f32 %v4585, %v4313
    %v4978 = vmul.f32 %v4589, %v4314
    %v4979 = vmul.f32 %v4593, %v4315
    %v4980 = vmul.f32 %v4597, %v4316
    %v4981 = vmul.f32 %v4604, %v4317
    %v4982 = vmul.f32 %v4608, %v4318
    %v4983 = vmul.f32 %v4612, %v4319
    %v4984 = vmul.f32 %v4616, %v4320
    %v4985 = vmul.f32 %v4620, %v4321
    %v4986 = vmul.f32 %v4624, %v4322
    %v4987 = vmul.f32 %v4628, %v4323
    %v4988 = vmul.f32 %v4632, %v4324
    %v4989 = vmul.f32 %v4636, %v4325
    %v4990 = vmul.f32 %v4640, %v4326
    %v4991 = vmul.f32 %v4644, %v4327
    %v4992 = vmul.f32 %v4648, %v4328
    %v4993 = vmul.f32 %v4652, %v4329
    %v4994 = vmul.f32 %v4656, %v4330
    %v4995 = vmul.f32 %v4660, %v4331
    %v4996 = vmul.f32 %v4664, %v4332
    %v4997 = vmul.f32 %v4671, %v4333
    %v4998 = vmul.f32 %v4675, %v4334
    %v4999 = vmul.f32 %v4679, %v4335
    %v5000 = vmul.f32 %v4683, %v4336
    %v5001 = vmul.f32 %v4687, %v4337
    %v5002 = vmul.f32 %v4691, %v4338
    %v5003 = vmul.f32 %v4695, %v4339
    %v5004 = vmul.f32 %v4699, %v4340
    %v5005 = vmul.f32 %v4703, %v4341
    %v5006 = vmul.f32 %v4707, %v4342
    %v5007 = vmul.f32 %v4711, %v4343
    %v5008 = vmul.f32 %v4715, %v4344
    %v5009 = vmul.f32 %v4719, %v4345
    %v5010 = vmul.f32 %v4723, %v4346
    %v5011 = vmul.f32 %v4727, %v4347
    %v5012 = vmul.f32 %v4731, %v4348
    %v5013 = vmul.f32 %v4738, %v4349
    %v5014 = vmul.f32 %v4742, %v4350
    %v5015 = vmul.f32 %v4746, %v4351
    %v5016 = vmul.f32 %v4750, %v4352
    %v5017 = vmul.f32 %v4754, %v4353
    %v5018 = vmul.f32 %v4758, %v4354
    %v5019 = vmul.f32 %v4762, %v4355
    %v5020 = vmul.f32 %v4766, %v4356
    %v5021 = vmul.f32 %v4770, %v4357
    %v5022 = vmul.f32 %v4774, %v4358
    %v5023 = vmul.f32 %v4778, %v4359
    %v5024 = vmul.f32 %v4782, %v4360
    %v5025 = vmul.f32 %v4786, %v4361
    %v5026 = vmul.f32 %v4790, %v4362
    %v5027 = vmul.f32 %v4794, %v4363
    %v5028 = vmul.f32 %v4798, %v4364
    %v5029 = vmul.f32 %v4805, %v4365
    %v5030 = vmul.f32 %v4809, %v4366
    %v5031 = vmul.f32 %v4813, %v4367
    %v5032 = vmul.f32 %v4817, %v4368
    %v5033 = vmul.f32 %v4821, %v4369
    %v5034 = vmul.f32 %v4825, %v4370
    %v5035 = vmul.f32 %v4829, %v4371
    %v5036 = vmul.f32 %v4833, %v4372
    %v5037 = vmul.f32 %v4837, %v4373
    %v5038 = vmul.f32 %v4841, %v4374
    %v5039 = vmul.f32 %v4845, %v4375
    %v5040 = vmul.f32 %v4849, %v4376
    %v5041 = vmul.f32 %v4853, %v4377
    %v5042 = vmul.f32 %v4857, %v4378
    %v5043 = vmul.f32 %v4861, %v4379
    %v5044 = vmul.f32 %v4865, %v4380
    %v5045 = vmul.f32 %v4872, %v4381
    %v5046 = vmul.f32 %v4876, %v4382
    %v5047 = vmul.f32 %v4880, %v4383
    %v5048 = vmul.f32 %v4884, %v4384
    %v5049 = vmul.f32 %v4888, %v4385
    %v5050 = vmul.f32 %v4892, %v4386
    %v5051 = vmul.f32 %v4896, %v4387
    %v5052 = vmul.f32 %v4900, %v4388
    %v5053 = vmul.f32 %v4904, %v4389
    %v5054 = vmul.f32 %v4908, %v4390
    %v5055 = vmul.f32 %v4912, %v4391
    %v5056 = vmul.f32 %v4916, %v4392
    %v5057 = vmul.f32 %v4920, %v4393
    %v5058 = vmul.f32 %v4924, %v4394
    %v5059 = vmul.f32 %v4928, %v4395
    %v5060 = vmul.f32 %v4932, %v4396
    %v5061 = vadd.f32 %v4933, %v4949
    %v5062 = vadd.f32 %v5061, %v4965
    %v5063 = vadd.f32 %v5062, %v4981
    %v5064 = vadd.f32 %v5063, %v4997
    %v5065 = vadd.f32 %v5064, %v5013
    %v5066 = vadd.f32 %v5065, %v5029
    %v5067 = vadd.f32 %v5066, %v5045
    %v5068 = vadd.f32 %v4934, %v4950
    %v5069 = vadd.f32 %v5068, %v4966
    %v5070 = vadd.f32 %v5069, %v4982
    %v5071 = vadd.f32 %v5070, %v4998
    %v5072 = vadd.f32 %v5071, %v5014
    %v5073 = vadd.f32 %v5072, %v5030
    %v5074 = vadd.f32 %v5073, %v5046
    %v5075 = vadd.f32 %v4935, %v4951
    %v5076 = vadd.f32 %v5075, %v4967
    %v5077 = vadd.f32 %v5076, %v4983
    %v5078 = vadd.f32 %v5077, %v4999
    %v5079 = vadd.f32 %v5078, %v5015
    %v5080 = vadd.f32 %v5079, %v5031
    %v5081 = vadd.f32 %v5080, %v5047
    %v5082 = vadd.f32 %v4936, %v4952
    %v5083 = vadd.f32 %v5082, %v4968
    %v5084 = vadd.f32 %v5083, %v4984
    %v5085 = vadd.f32 %v5084, %v5000
    %v5086 = vadd.f32 %v5085, %v5016
    %v5087 = vadd.f32 %v5086, %v5032
    %v5088 = vadd.f32 %v5087, %v5048
    %v5089 = vadd.f32 %v4937, %v4953
    %v5090 = vadd.f32 %v5089, %v4969
    %v5091 = vadd.f32 %v5090, %v4985
    %v5092 = vadd.f32 %v5091, %v5001
    %v5093 = vadd.f32 %v5092, %v5017
    %v5094 = vadd.f32 %v5093, %v5033
    %v5095 = vadd.f32 %v5094, %v5049
    %v5096 = vadd.f32 %v4938, %v4954
    %v5097 = vadd.f32 %v5096, %v4970
    %v5098 = vadd.f32 %v5097, %v4986
    %v5099 = vadd.f32 %v5098, %v5002
    %v5100 = vadd.f32 %v5099, %v5018
    %v5101 = vadd.f32 %v5100, %v5034
    %v5102 = vadd.f32 %v5101, %v5050
    %v5103 = vadd.f32 %v4939, %v4955
    %v5104 = vadd.f32 %v5103, %v4971
    %v5105 = vadd.f32 %v5104, %v4987
    %v5106 = vadd.f32 %v5105, %v5003
    %v5107 = vadd.f32 %v5106, %v5019
    %v5108 = vadd.f32 %v5107, %v5035
    %v5109 = vadd.f32 %v5108, %v5051
    %v5110 = vadd.f32 %v4940, %v4956
    %v5111 = vadd.f32 %v5110, %v4972
    %v5112 = vadd.f32 %v5111, %v4988
    %v5113 = vadd.f32 %v5112, %v5004
    %v5114 = vadd.f32 %v5113, %v5020
    %v5115 = vadd.f32 %v5114, %v5036
    %v5116 = vadd.f32 %v5115, %v5052
    %v5117 = vadd.f32 %v4941, %v4957
    %v5118 = vadd.f32 %v5117, %v4973
    %v5119 = vadd.f32 %v5118, %v4989
    %v5120 = vadd.f32 %v5119, %v5005
    %v5121 = vadd.f32 %v5120, %v5021
    %v5122 = vadd.f32 %v5121, %v5037
    %v5123 = vadd.f32 %v5122, %v5053
    %v5124 = vadd.f32 %v4942, %v4958
    %v5125 = vadd.f32 %v5124, %v4974
    %v5126 = vadd.f32 %v5125, %v4990
    %v5127 = vadd.f32 %v5126, %v5006
    %v5128 = vadd.f32 %v5127, %v5022
    %v5129 = vadd.f32 %v5128, %v5038
    %v5130 = vadd.f32 %v5129, %v5054
    %v5131 = vadd.f32 %v4943, %v4959
    %v5132 = vadd.f32 %v5131, %v4975
    %v5133 = vadd.f32 %v5132, %v4991
    %v5134 = vadd.f32 %v5133, %v5007
    %v5135 = vadd.f32 %v5134, %v5023
    %v5136 = vadd.f32 %v5135, %v5039
    %v5137 = vadd.f32 %v5136, %v5055
    %v5138 = vadd.f32 %v4944, %v4960
    %v5139 = vadd.f32 %v5138, %v4976
    %v5140 = vadd.f32 %v5139, %v4992
    %v5141 = vadd.f32 %v5140, %v5008
    %v5142 = vadd.f32 %v5141, %v5024
    %v5143 = vadd.f32 %v5142, %v5040
    %v5144 = vadd.f32 %v5143, %v5056
    %v5145 = vadd.f32 %v4945, %v4961
    %v5146 = vadd.f32 %v5145, %v4977
    %v5147 = vadd.f32 %v5146, %v4993
    %v5148 = vadd.f32 %v5147, %v5009
    %v5149 = vadd.f32 %v5148, %v5025
    %v5150 = vadd.f32 %v5149, %v5041
    %v5151 = vadd.f32 %v5150, %v5057
    %v5152 = vadd.f32 %v4946, %v4962
    %v5153 = vadd.f32 %v5152, %v4978
    %v5154 = vadd.f32 %v5153, %v4994
    %v5155 = vadd.f32 %v5154, %v5010
    %v5156 = vadd.f32 %v5155, %v5026
    %v5157 = vadd.f32 %v5156, %v5042
    %v5158 = vadd.f32 %v5157, %v5058
    %v5159 = vadd.f32 %v4947, %v4963
    %v5160 = vadd.f32 %v5159, %v4979
    %v5161 = vadd.f32 %v5160, %v4995
    %v5162 = vadd.f32 %v5161, %v5011
    %v5163 = vadd.f32 %v5162, %v5027
    %v5164 = vadd.f32 %v5163, %v5043
    %v5165 = vadd.f32 %v5164, %v5059
    %v5166 = vadd.f32 %v4948, %v4964
    %v5167 = vadd.f32 %v5166, %v4980
    %v5168 = vadd.f32 %v5167, %v4996
    %v5169 = vadd.f32 %v5168, %v5012
    %v5170 = vadd.f32 %v5169, %v5028
    %v5171 = vadd.f32 %v5170, %v5044
    %v5172 = vadd.f32 %v5171, %v5060
    %v5173 = vsub.f32 1.0, %v599
    %v5174 = vsub.f32 1.0, %v600
    %v5175 = vsub.f32 1.0, %v601
    %v5176 = vsub.f32 1.0, %v602
    %v5177 = vsub.f32 1.0, %v603
    %v5178 = vsub.f32 1.0, %v604
    %v5179 = vsub.f32 1.0, %v605
    %v5180 = vsub.f32 1.0, %v606
    %v5181 = vsub.f32 1.0, %v607
    %v5182 = vsub.f32 1.0, %v608
    %v5183 = vsub.f32 1.0, %v609
    %v5184 = vsub.f32 1.0, %v610
    %v5185 = vsub.f32 1.0, %v611
    %v5186 = vsub.f32 1.0, %v612
    %v5187 = vsub.f32 1.0, %v613
    %v5188 = vsub.f32 1.0, %v614
    %v5189 = vadd.f32 %v5067, %v5173
    %v5190 = vadd.f32 %v5074, %v5174
    %v5191 = vadd.f32 %v5081, %v5175
    %v5192 = vadd.f32 %v5088, %v5176
    %v5193 = vadd.f32 %v5095, %v5177
    %v5194 = vadd.f32 %v5102, %v5178
    %v5195 = vadd.f32 %v5109, %v5179
    %v5196 = vadd.f32 %v5116, %v5180
    %v5197 = vadd.f32 %v5123, %v5181
    %v5198 = vadd.f32 %v5130, %v5182
    %v5199 = vadd.f32 %v5137, %v5183
    %v5200 = vadd.f32 %v5144, %v5184
    %v5201 = vadd.f32 %v5151, %v5185
    %v5202 = vadd.f32 %v5158, %v5186
    %v5203 = vadd.f32 %v5165, %v5187
    %v5204 = vadd.f32 %v5172, %v5188
    %v5205 = vrcp.pop %v5189
    %v5206 = vmul.f32 1.0, %v5205
    %v5207 = vrcp.pop %v5190
    %v5208 = vmul.f32 1.0, %v5207
    %v5209 = vrcp.pop %v5191
    %v5210 = vmul.f32 1.0, %v5209
    %v5211 = vrcp.pop %v5192
    %v5212 = vmul.f32 1.0, %v5211
    %v5213 = vrcp.pop %v5193
    %v5214 = vmul.f32 1.0, %v5213
    %v5215 = vrcp.pop %v5194
    %v5216 = vmul.f32 1.0, %v5215
    %v5217 = vrcp.pop %v5195
    %v5218 = vmul.f32 1.0, %v5217
    %v5219 = vrcp.pop %v5196
    %v5220 = vmul.f32 1.0, %v5219
    %v5221 = vrcp.pop %v5197
    %v5222 = vmul.f32 1.0, %v5221
    %v5223 = vrcp.pop %v5198
    %v5224 = vmul.f32 1.0, %v5223
    %v5225 = vrcp.pop %v5199
    %v5226 = vmul.f32 1.0, %v5225
    %v5227 = vrcp.pop %v5200
    %v5228 = vmul.f32 1.0, %v5227
    %v5229 = vrcp.pop %v5201
    %v5230 = vmul.f32 1.0, %v5229
    %v5231 = vrcp.pop %v5202
    %v5232 = vmul.f32 1.0, %v5231
    %v5233 = vrcp.pop %v5203
    %v5234 = vmul.f32 1.0, %v5233
    %v5235 = vrcp.pop %v5204
    %v5236 = vmul.f32 1.0, %v5235
    %v5237 = vmul.f32 %v4933, %v5206
    %v5238 = vmul.f32 %v4934, %v5208
    %v5239 = vmul.f32 %v4935, %v5210
    %v5240 = vmul.f32 %v4936, %v5212
    %v5241 = vmul.f32 %v4937, %v5214
    %v5242 = vmul.f32 %v4938, %v5216
    %v5243 = vmul.f32 %v4939, %v5218
    %v5244 = vmul.f32 %v4940, %v5220
    %v5245 = vmul.f32 %v4941, %v5222
    %v5246 = vmul.f32 %v4942, %v5224
    %v5247 = vmul.f32 %v4943, %v5226
    %v5248 = vmul.f32 %v4944, %v5228
    %v5249 = vmul.f32 %v4945, %v5230
    %v5250 = vmul.f32 %v4946, %v5232
    %v5251 = vmul.f32 %v4947, %v5234
    %v5252 = vmul.f32 %v4948, %v5236
    %v5253 = vmul.f32 %v4949, %v5206
    %v5254 = vmul.f32 %v4950, %v5208
    %v5255 = vmul.f32 %v4951, %v5210
    %v5256 = vmul.f32 %v4952, %v5212
    %v5257 = vmul.f32 %v4953, %v5214
    %v5258 = vmul.f32 %v4954, %v5216
    %v5259 = vmul.f32 %v4955, %v5218
    %v5260 = vmul.f32 %v4956, %v5220
    %v5261 = vmul.f32 %v4957, %v5222
    %v5262 = vmul.f32 %v4958, %v5224
    %v5263 = vmul.f32 %v4959, %v5226
    %v5264 = vmul.f32 %v4960, %v5228
    %v5265 = vmul.f32 %v4961, %v5230
    %v5266 = vmul.f32 %v4962, %v5232
    %v5267 = vmul.f32 %v4963, %v5234
    %v5268 = vmul.f32 %v4964, %v5236
    %v5269 = vmul.f32 %v4965, %v5206
    %v5270 = vmul.f32 %v4966, %v5208
    %v5271 = vmul.f32 %v4967, %v5210
    %v5272 = vmul.f32 %v4968, %v5212
    %v5273 = vmul.f32 %v4969, %v5214
    %v5274 = vmul.f32 %v4970, %v5216
    %v5275 = vmul.f32 %v4971, %v5218
    %v5276 = vmul.f32 %v4972, %v5220
    %v5277 = vmul.f32 %v4973, %v5222
    %v5278 = vmul.f32 %v4974, %v5224
    %v5279 = vmul.f32 %v4975, %v5226
    %v5280 = vmul.f32 %v4976, %v5228
    %v5281 = vmul.f32 %v4977, %v5230
    %v5282 = vmul.f32 %v4978, %v5232
    %v5283 = vmul.f32 %v4979, %v5234
    %v5284 = vmul.f32 %v4980, %v5236
    %v5285 = vmul.f32 %v4981, %v5206
    %v5286 = vmul.f32 %v4982, %v5208
    %v5287 = vmul.f32 %v4983, %v5210
    %v5288 = vmul.f32 %v4984, %v5212
    %v5289 = vmul.f32 %v4985, %v5214
    %v5290 = vmul.f32 %v4986, %v5216
    %v5291 = vmul.f32 %v4987, %v5218
    %v5292 = vmul.f32 %v4988, %v5220
    %v5293 = vmul.f32 %v4989, %v5222
    %v5294 = vmul.f32 %v4990, %v5224
    %v5295 = vmul.f32 %v4991, %v5226
    %v5296 = vmul.f32 %v4992, %v5228
    %v5297 = vmul.f32 %v4993, %v5230
    %v5298 = vmul.f32 %v4994, %v5232
    %v5299 = vmul.f32 %v4995, %v5234
    %v5300 = vmul.f32 %v4996, %v5236
    %v5301 = vmul.f32 %v4997, %v5206
    %v5302 = vmul.f32 %v4998, %v5208
    %v5303 = vmul.f32 %v4999, %v5210
    %v5304 = vmul.f32 %v5000, %v5212
    %v5305 = vmul.f32 %v5001, %v5214
    %v5306 = vmul.f32 %v5002, %v5216
    %v5307 = vmul.f32 %v5003, %v5218
    %v5308 = vmul.f32 %v5004, %v5220
    %v5309 = vmul.f32 %v5005, %v5222
    %v5310 = vmul.f32 %v5006, %v5224
    %v5311 = vmul.f32 %v5007, %v5226
    %v5312 = vmul.f32 %v5008, %v5228
    %v5313 = vmul.f32 %v5009, %v5230
    %v5314 = vmul.f32 %v5010, %v5232
    %v5315 = vmul.f32 %v5011, %v5234
    %v5316 = vmul.f32 %v5012, %v5236
    %v5317 = vmul.f32 %v5013, %v5206
    %v5318 = vmul.f32 %v5014, %v5208
    %v5319 = vmul.f32 %v5015, %v5210
    %v5320 = vmul.f32 %v5016, %v5212
    %v5321 = vmul.f32 %v5017, %v5214
    %v5322 = vmul.f32 %v5018, %v5216
    %v5323 = vmul.f32 %v5019, %v5218
    %v5324 = vmul.f32 %v5020, %v5220
    %v5325 = vmul.f32 %v5021, %v5222
    %v5326 = vmul.f32 %v5022, %v5224
    %v5327 = vmul.f32 %v5023, %v5226
    %v5328 = vmul.f32 %v5024, %v5228
    %v5329 = vmul.f32 %v5025, %v5230
    %v5330 = vmul.f32 %v5026, %v5232
    %v5331 = vmul.f32 %v5027, %v5234
    %v5332 = vmul.f32 %v5028, %v5236
    %v5333 = vmul.f32 %v5029, %v5206
    %v5334 = vmul.f32 %v5030, %v5208
    %v5335 = vmul.f32 %v5031, %v5210
    %v5336 = vmul.f32 %v5032, %v5212
    %v5337 = vmul.f32 %v5033, %v5214
    %v5338 = vmul.f32 %v5034, %v5216
    %v5339 = vmul.f32 %v5035, %v5218
    %v5340 = vmul.f32 %v5036, %v5220
    %v5341 = vmul.f32 %v5037, %v5222
    %v5342 = vmul.f32 %v5038, %v5224
    %v5343 = vmul.f32 %v5039, %v5226
    %v5344 = vmul.f32 %v5040, %v5228
    %v5345 = vmul.f32 %v5041, %v5230
    %v5346 = vmul.f32 %v5042, %v5232
    %v5347 = vmul.f32 %v5043, %v5234
    %v5348 = vmul.f32 %v5044, %v5236
    %v5349 = vmul.f32 %v5045, %v5206
    %v5350 = vmul.f32 %v5046, %v5208
    %v5351 = vmul.f32 %v5047, %v5210
    %v5352 = vmul.f32 %v5048, %v5212
    %v5353 = vmul.f32 %v5049, %v5214
    %v5354 = vmul.f32 %v5050, %v5216
    %v5355 = vmul.f32 %v5051, %v5218
    %v5356 = vmul.f32 %v5052, %v5220
    %v5357 = vmul.f32 %v5053, %v5222
    %v5358 = vmul.f32 %v5054, %v5224
    %v5359 = vmul.f32 %v5055, %v5226
    %v5360 = vmul.f32 %v5056, %v5228
    %v5361 = vmul.f32 %v5057, %v5230
    %v5362 = vmul.f32 %v5058, %v5232
    %v5363 = vmul.f32 %v5059, %v5234
    %v5364 = vmul.f32 %v5060, %v5236
    %v5365 = vmul.f32 %v5237, %v599
    %v5366 = vmul.f32 %v5238, %v600
    %v5367 = vmul.f32 %v5239, %v601
    %v5368 = vmul.f32 %v5240, %v602
    %v5369 = vmul.f32 %v5241, %v603
    %v5370 = vmul.f32 %v5242, %v604
    %v5371 = vmul.f32 %v5243, %v605
    %v5372 = vmul.f32 %v5244, %v606
    %v5373 = vmul.f32 %v5245, %v607
    %v5374 = vmul.f32 %v5246, %v608
    %v5375 = vmul.f32 %v5247, %v609
    %v5376 = vmul.f32 %v5248, %v610
    %v5377 = vmul.f32 %v5249, %v611
    %v5378 = vmul.f32 %v5250, %v612
    %v5379 = vmul.f32 %v5251, %v613
    %v5380 = vmul.f32 %v5252, %v614
    %v5381 = vmul.f32 %v5253, %v599
    %v5382 = vmul.f32 %v5254, %v600
    %v5383 = vmul.f32 %v5255, %v601
    %v5384 = vmul.f32 %v5256, %v602
    %v5385 = vmul.f32 %v5257, %v603
    %v5386 = vmul.f32 %v5258, %v604
    %v5387 = vmul.f32 %v5259, %v605
    %v5388 = vmul.f32 %v5260, %v606
    %v5389 = vmul.f32 %v5261, %v607
    %v5390 = vmul.f32 %v5262, %v608
    %v5391 = vmul.f32 %v5263, %v609
    %v5392 = vmul.f32 %v5264, %v610
    %v5393 = vmul.f32 %v5265, %v611
    %v5394 = vmul.f32 %v5266, %v612
    %v5395 = vmul.f32 %v5267, %v613
    %v5396 = vmul.f32 %v5268, %v614
    %v5397 = vmul.f32 %v5269, %v599
    %v5398 = vmul.f32 %v5270, %v600
    %v5399 = vmul.f32 %v5271, %v601
    %v5400 = vmul.f32 %v5272, %v602
    %v5401 = vmul.f32 %v5273, %v603
    %v5402 = vmul.f32 %v5274, %v604
    %v5403 = vmul.f32 %v5275, %v605
    %v5404 = vmul.f32 %v5276, %v606
    %v5405 = vmul.f32 %v5277, %v607
    %v5406 = vmul.f32 %v5278, %v608
    %v5407 = vmul.f32 %v5279, %v609
    %v5408 = vmul.f32 %v5280, %v610
    %v5409 = vmul.f32 %v5281, %v611
    %v5410 = vmul.f32 %v5282, %v612
    %v5411 = vmul.f32 %v5283, %v613
    %v5412 = vmul.f32 %v5284, %v614
    %v5413 = vmul.f32 %v5285, %v599
    %v5414 = vmul.f32 %v5286, %v600
    %v5415 = vmul.f32 %v5287, %v601
    %v5416 = vmul.f32 %v5288, %v602
    %v5417 = vmul.f32 %v5289, %v603
    %v5418 = vmul.f32 %v5290, %v604
    %v5419 = vmul.f32 %v5291, %v605
    %v5420 = vmul.f32 %v5292, %v606
    %v5421 = vmul.f32 %v5293, %v607
    %v5422 = vmul.f32 %v5294, %v608
    %v5423 = vmul.f32 %v5295, %v609
    %v5424 = vmul.f32 %v5296, %v610
    %v5425 = vmul.f32 %v5297, %v611
    %v5426 = vmul.f32 %v5298, %v612
    %v5427 = vmul.f32 %v5299, %v613
    %v5428 = vmul.f32 %v5300, %v614
    %v5429 = vmul.f32 %v5301, %v599
    %v5430 = vmul.f32 %v5302, %v600
    %v5431 = vmul.f32 %v5303, %v601
    %v5432 = vmul.f32 %v5304, %v602
    %v5433 = vmul.f32 %v5305, %v603
    %v5434 = vmul.f32 %v5306, %v604
    %v5435 = vmul.f32 %v5307, %v605
    %v5436 = vmul.f32 %v5308, %v606
    %v5437 = vmul.f32 %v5309, %v607
    %v5438 = vmul.f32 %v5310, %v608
    %v5439 = vmul.f32 %v5311, %v609
    %v5440 = vmul.f32 %v5312, %v610
    %v5441 = vmul.f32 %v5313, %v611
    %v5442 = vmul.f32 %v5314, %v612
    %v5443 = vmul.f32 %v5315, %v613
    %v5444 = vmul.f32 %v5316, %v614
    %v5445 = vmul.f32 %v5317, %v599
    %v5446 = vmul.f32 %v5318, %v600
    %v5447 = vmul.f32 %v5319, %v601
    %v5448 = vmul.f32 %v5320, %v602
    %v5449 = vmul.f32 %v5321, %v603
    %v5450 = vmul.f32 %v5322, %v604
    %v5451 = vmul.f32 %v5323, %v605
    %v5452 = vmul.f32 %v5324, %v606
    %v5453 = vmul.f32 %v5325, %v607
    %v5454 = vmul.f32 %v5326, %v608
    %v5455 = vmul.f32 %v5327, %v609
    %v5456 = vmul.f32 %v5328, %v610
    %v5457 = vmul.f32 %v5329, %v611
    %v5458 = vmul.f32 %v5330, %v612
    %v5459 = vmul.f32 %v5331, %v613
    %v5460 = vmul.f32 %v5332, %v614
    %v5461 = vmul.f32 %v5333, %v599
    %v5462 = vmul.f32 %v5334, %v600
    %v5463 = vmul.f32 %v5335, %v601
    %v5464 = vmul.f32 %v5336, %v602
    %v5465 = vmul.f32 %v5337, %v603
    %v5466 = vmul.f32 %v5338, %v604
    %v5467 = vmul.f32 %v5339, %v605
    %v5468 = vmul.f32 %v5340, %v606
    %v5469 = vmul.f32 %v5341, %v607
    %v5470 = vmul.f32 %v5342, %v608
    %v5471 = vmul.f32 %v5343, %v609
    %v5472 = vmul.f32 %v5344, %v610
    %v5473 = vmul.f32 %v5345, %v611
    %v5474 = vmul.f32 %v5346, %v612
    %v5475 = vmul.f32 %v5347, %v613
    %v5476 = vmul.f32 %v5348, %v614
    %v5477 = vmul.f32 %v5349, %v599
    %v5478 = vmul.f32 %v5350, %v600
    %v5479 = vmul.f32 %v5351, %v601
    %v5480 = vmul.f32 %v5352, %v602
    %v5481 = vmul.f32 %v5353, %v603
    %v5482 = vmul.f32 %v5354, %v604
    %v5483 = vmul.f32 %v5355, %v605
    %v5484 = vmul.f32 %v5356, %v606
    %v5485 = vmul.f32 %v5357, %v607
    %v5486 = vmul.f32 %v5358, %v608
    %v5487 = vmul.f32 %v5359, %v609
    %v5488 = vmul.f32 %v5360, %v610
    %v5489 = vmul.f32 %v5361, %v611
    %v5490 = vmul.f32 %v5362, %v612
    %v5491 = vmul.f32 %v5363, %v613
    %v5492 = vmul.f32 %v5364, %v614
    %v5493 = vlaneseq
    %v5494 = vshrl.u32 %v5493, 7
    %v5495 = vsub.s32 0, %v5494
    %v5496 = vrot.slane %v634, %v5495
    %5498 = vbcast.lane.b32.xlu0 %v5496, 256
    %v5499 = vpop.permute.xlu0 %5498
    %s5501 = sor.u32 256, 8
    %5502 = vbcast.lane.b32.xlu0 %v5496, %s5501
    %v5503 = vpop.permute.xlu0 %5502
    %s5505 = sor.u32 256, 16
    %5506 = vbcast.lane.b32.xlu0 %v5496, %s5505
    %v5507 = vpop.permute.xlu0 %5506
    %s5509 = sor.u32 256, 24
    %5510 = vbcast.lane.b32.xlu0 %v5496, %s5509
    %v5511 = vpop.permute.xlu0 %5510
    %s5513 = sor.u32 256, 32
    %5514 = vbcast.lane.b32.xlu0 %v5496, %s5513
    %v5515 = vpop.permute.xlu0 %5514
    %s5517 = sor.u32 256, 40
    %5518 = vbcast.lane.b32.xlu0 %v5496, %s5517
    %v5519 = vpop.permute.xlu0 %5518
    %s5521 = sor.u32 256, 48
    %5522 = vbcast.lane.b32.xlu0 %v5496, %s5521
    %v5523 = vpop.permute.xlu0 %5522
    %s5525 = sor.u32 256, 56
    %5526 = vbcast.lane.b32.xlu0 %v5496, %s5525
    %v5527 = vpop.permute.xlu0 %5526
    %s5529 = sor.u32 256, 64
    %5530 = vbcast.lane.b32.xlu0 %v5496, %s5529
    %v5531 = vpop.permute.xlu0 %5530
    %s5533 = sor.u32 256, 72
    %5534 = vbcast.lane.b32.xlu0 %v5496, %s5533
    %v5535 = vpop.permute.xlu0 %5534
    %s5537 = sor.u32 256, 80
    %5538 = vbcast.lane.b32.xlu0 %v5496, %s5537
    %v5539 = vpop.permute.xlu0 %5538
    %s5541 = sor.u32 256, 88
    %5542 = vbcast.lane.b32.xlu0 %v5496, %s5541
    %v5543 = vpop.permute.xlu0 %5542
    %s5545 = sor.u32 256, 96
    %5546 = vbcast.lane.b32.xlu0 %v5496, %s5545
    %v5547 = vpop.permute.xlu0 %5546
    %s5549 = sor.u32 256, 104
    %5550 = vbcast.lane.b32.xlu0 %v5496, %s5549
    %v5551 = vpop.permute.xlu0 %5550
    %s5553 = sor.u32 256, 112
    %5554 = vbcast.lane.b32.xlu0 %v5496, %s5553
    %v5555 = vpop.permute.xlu0 %5554
    %s5557 = sor.u32 256, 120
    %5558 = vbcast.lane.b32.xlu0 %v5496, %s5557
    %v5559 = vpop.permute.xlu0 %5558
    %v5560 = vlaneseq
    %v5561 = vshrl.u32 %v5560, 7
    %v5562 = vsub.s32 1, %v5561
    %v5563 = vrot.slane %v634, %v5562
    %5565 = vbcast.lane.b32.xlu0 %v5563, 256
    %v5566 = vpop.permute.xlu0 %5565
    %s5568 = sor.u32 256, 8
    %5569 = vbcast.lane.b32.xlu0 %v5563, %s5568
    %v5570 = vpop.permute.xlu0 %5569
    %s5572 = sor.u32 256, 16
    %5573 = vbcast.lane.b32.xlu0 %v5563, %s5572
    %v5574 = vpop.permute.xlu0 %5573
    %s5576 = sor.u32 256, 24
    %5577 = vbcast.lane.b32.xlu0 %v5563, %s5576
    %v5578 = vpop.permute.xlu0 %5577
    %s5580 = sor.u32 256, 32
    %5581 = vbcast.lane.b32.xlu0 %v5563, %s5580
    %v5582 = vpop.permute.xlu0 %5581
    %s5584 = sor.u32 256, 40
    %5585 = vbcast.lane.b32.xlu0 %v5563, %s5584
    %v5586 = vpop.permute.xlu0 %5585
    %s5588 = sor.u32 256, 48
    %5589 = vbcast.lane.b32.xlu0 %v5563, %s5588
    %v5590 = vpop.permute.xlu0 %5589
    %s5592 = sor.u32 256, 56
    %5593 = vbcast.lane.b32.xlu0 %v5563, %s5592
    %v5594 = vpop.permute.xlu0 %5593
    %s5596 = sor.u32 256, 64
    %5597 = vbcast.lane.b32.xlu0 %v5563, %s5596
    %v5598 = vpop.permute.xlu0 %5597
    %s5600 = sor.u32 256, 72
    %5601 = vbcast.lane.b32.xlu0 %v5563, %s5600
    %v5602 = vpop.permute.xlu0 %5601
    %s5604 = sor.u32 256, 80
    %5605 = vbcast.lane.b32.xlu0 %v5563, %s5604
    %v5606 = vpop.permute.xlu0 %5605
    %s5608 = sor.u32 256, 88
    %5609 = vbcast.lane.b32.xlu0 %v5563, %s5608
    %v5610 = vpop.permute.xlu0 %5609
    %s5612 = sor.u32 256, 96
    %5613 = vbcast.lane.b32.xlu0 %v5563, %s5612
    %v5614 = vpop.permute.xlu0 %5613
    %s5616 = sor.u32 256, 104
    %5617 = vbcast.lane.b32.xlu0 %v5563, %s5616
    %v5618 = vpop.permute.xlu0 %5617
    %s5620 = sor.u32 256, 112
    %5621 = vbcast.lane.b32.xlu0 %v5563, %s5620
    %v5622 = vpop.permute.xlu0 %5621
    %s5624 = sor.u32 256, 120
    %5625 = vbcast.lane.b32.xlu0 %v5563, %s5624
    %v5626 = vpop.permute.xlu0 %5625
    %v5627 = vlaneseq
    %v5628 = vshrl.u32 %v5627, 7
    %v5629 = vsub.s32 2, %v5628
    %v5630 = vrot.slane %v634, %v5629
    %5632 = vbcast.lane.b32.xlu0 %v5630, 256
    %v5633 = vpop.permute.xlu0 %5632
    %s5635 = sor.u32 256, 8
    %5636 = vbcast.lane.b32.xlu0 %v5630, %s5635
    %v5637 = vpop.permute.xlu0 %5636
    %s5639 = sor.u32 256, 16
    %5640 = vbcast.lane.b32.xlu0 %v5630, %s5639
    %v5641 = vpop.permute.xlu0 %5640
    %s5643 = sor.u32 256, 24
    %5644 = vbcast.lane.b32.xlu0 %v5630, %s5643
    %v5645 = vpop.permute.xlu0 %5644
    %s5647 = sor.u32 256, 32
    %5648 = vbcast.lane.b32.xlu0 %v5630, %s5647
    %v5649 = vpop.permute.xlu0 %5648
    %s5651 = sor.u32 256, 40
    %5652 = vbcast.lane.b32.xlu0 %v5630, %s5651
    %v5653 = vpop.permute.xlu0 %5652
    %s5655 = sor.u32 256, 48
    %5656 = vbcast.lane.b32.xlu0 %v5630, %s5655
    %v5657 = vpop.permute.xlu0 %5656
    %s5659 = sor.u32 256, 56
    %5660 = vbcast.lane.b32.xlu0 %v5630, %s5659
    %v5661 = vpop.permute.xlu0 %5660
    %s5663 = sor.u32 256, 64
    %5664 = vbcast.lane.b32.xlu0 %v5630, %s5663
    %v5665 = vpop.permute.xlu0 %5664
    %s5667 = sor.u32 256, 72
    %5668 = vbcast.lane.b32.xlu0 %v5630, %s5667
    %v5669 = vpop.permute.xlu0 %5668
    %s5671 = sor.u32 256, 80
    %5672 = vbcast.lane.b32.xlu0 %v5630, %s5671
    %v5673 = vpop.permute.xlu0 %5672
    %s5675 = sor.u32 256, 88
    %5676 = vbcast.lane.b32.xlu0 %v5630, %s5675
    %v5677 = vpop.permute.xlu0 %5676
    %s5679 = sor.u32 256, 96
    %5680 = vbcast.lane.b32.xlu0 %v5630, %s5679
    %v5681 = vpop.permute.xlu0 %5680
    %s5683 = sor.u32 256, 104
    %5684 = vbcast.lane.b32.xlu0 %v5630, %s5683
    %v5685 = vpop.permute.xlu0 %5684
    %s5687 = sor.u32 256, 112
    %5688 = vbcast.lane.b32.xlu0 %v5630, %s5687
    %v5689 = vpop.permute.xlu0 %5688
    %s5691 = sor.u32 256, 120
    %5692 = vbcast.lane.b32.xlu0 %v5630, %s5691
    %v5693 = vpop.permute.xlu0 %5692
    %v5694 = vlaneseq
    %v5695 = vshrl.u32 %v5694, 7
    %v5696 = vsub.s32 3, %v5695
    %v5697 = vrot.slane %v634, %v5696
    %5699 = vbcast.lane.b32.xlu0 %v5697, 256
    %v5700 = vpop.permute.xlu0 %5699
    %s5702 = sor.u32 256, 8
    %5703 = vbcast.lane.b32.xlu0 %v5697, %s5702
    %v5704 = vpop.permute.xlu0 %5703
    %s5706 = sor.u32 256, 16
    %5707 = vbcast.lane.b32.xlu0 %v5697, %s5706
    %v5708 = vpop.permute.xlu0 %5707
    %s5710 = sor.u32 256, 24
    %5711 = vbcast.lane.b32.xlu0 %v5697, %s5710
    %v5712 = vpop.permute.xlu0 %5711
    %s5714 = sor.u32 256, 32
    %5715 = vbcast.lane.b32.xlu0 %v5697, %s5714
    %v5716 = vpop.permute.xlu0 %5715
    %s5718 = sor.u32 256, 40
    %5719 = vbcast.lane.b32.xlu0 %v5697, %s5718
    %v5720 = vpop.permute.xlu0 %5719
    %s5722 = sor.u32 256, 48
    %5723 = vbcast.lane.b32.xlu0 %v5697, %s5722
    %v5724 = vpop.permute.xlu0 %5723
    %s5726 = sor.u32 256, 56
    %5727 = vbcast.lane.b32.xlu0 %v5697, %s5726
    %v5728 = vpop.permute.xlu0 %5727
    %s5730 = sor.u32 256, 64
    %5731 = vbcast.lane.b32.xlu0 %v5697, %s5730
    %v5732 = vpop.permute.xlu0 %5731
    %s5734 = sor.u32 256, 72
    %5735 = vbcast.lane.b32.xlu0 %v5697, %s5734
    %v5736 = vpop.permute.xlu0 %5735
    %s5738 = sor.u32 256, 80
    %5739 = vbcast.lane.b32.xlu0 %v5697, %s5738
    %v5740 = vpop.permute.xlu0 %5739
    %s5742 = sor.u32 256, 88
    %5743 = vbcast.lane.b32.xlu0 %v5697, %s5742
    %v5744 = vpop.permute.xlu0 %5743
    %s5746 = sor.u32 256, 96
    %5747 = vbcast.lane.b32.xlu0 %v5697, %s5746
    %v5748 = vpop.permute.xlu0 %5747
    %s5750 = sor.u32 256, 104
    %5751 = vbcast.lane.b32.xlu0 %v5697, %s5750
    %v5752 = vpop.permute.xlu0 %5751
    %s5754 = sor.u32 256, 112
    %5755 = vbcast.lane.b32.xlu0 %v5697, %s5754
    %v5756 = vpop.permute.xlu0 %5755
    %s5758 = sor.u32 256, 120
    %5759 = vbcast.lane.b32.xlu0 %v5697, %s5758
    %v5760 = vpop.permute.xlu0 %5759
    %v5761 = vlaneseq
    %v5762 = vshrl.u32 %v5761, 7
    %v5763 = vsub.s32 4, %v5762
    %v5764 = vrot.slane %v634, %v5763
    %5766 = vbcast.lane.b32.xlu0 %v5764, 256
    %v5767 = vpop.permute.xlu0 %5766
    %s5769 = sor.u32 256, 8
    %5770 = vbcast.lane.b32.xlu0 %v5764, %s5769
    %v5771 = vpop.permute.xlu0 %5770
    %s5773 = sor.u32 256, 16
    %5774 = vbcast.lane.b32.xlu0 %v5764, %s5773
    %v5775 = vpop.permute.xlu0 %5774
    %s5777 = sor.u32 256, 24
    %5778 = vbcast.lane.b32.xlu0 %v5764, %s5777
    %v5779 = vpop.permute.xlu0 %5778
    %s5781 = sor.u32 256, 32
    %5782 = vbcast.lane.b32.xlu0 %v5764, %s5781
    %v5783 = vpop.permute.xlu0 %5782
    %s5785 = sor.u32 256, 40
    %5786 = vbcast.lane.b32.xlu0 %v5764, %s5785
    %v5787 = vpop.permute.xlu0 %5786
    %s5789 = sor.u32 256, 48
    %5790 = vbcast.lane.b32.xlu0 %v5764, %s5789
    %v5791 = vpop.permute.xlu0 %5790
    %s5793 = sor.u32 256, 56
    %5794 = vbcast.lane.b32.xlu0 %v5764, %s5793
    %v5795 = vpop.permute.xlu0 %5794
    %s5797 = sor.u32 256, 64
    %5798 = vbcast.lane.b32.xlu0 %v5764, %s5797
    %v5799 = vpop.permute.xlu0 %5798
    %s5801 = sor.u32 256, 72
    %5802 = vbcast.lane.b32.xlu0 %v5764, %s5801
    %v5803 = vpop.permute.xlu0 %5802
    %s5805 = sor.u32 256, 80
    %5806 = vbcast.lane.b32.xlu0 %v5764, %s5805
    %v5807 = vpop.permute.xlu0 %5806
    %s5809 = sor.u32 256, 88
    %5810 = vbcast.lane.b32.xlu0 %v5764, %s5809
    %v5811 = vpop.permute.xlu0 %5810
    %s5813 = sor.u32 256, 96
    %5814 = vbcast.lane.b32.xlu0 %v5764, %s5813
    %v5815 = vpop.permute.xlu0 %5814
    %s5817 = sor.u32 256, 104
    %5818 = vbcast.lane.b32.xlu0 %v5764, %s5817
    %v5819 = vpop.permute.xlu0 %5818
    %s5821 = sor.u32 256, 112
    %5822 = vbcast.lane.b32.xlu0 %v5764, %s5821
    %v5823 = vpop.permute.xlu0 %5822
    %s5825 = sor.u32 256, 120
    %5826 = vbcast.lane.b32.xlu0 %v5764, %s5825
    %v5827 = vpop.permute.xlu0 %5826
    %v5828 = vlaneseq
    %v5829 = vshrl.u32 %v5828, 7
    %v5830 = vsub.s32 5, %v5829
    %v5831 = vrot.slane %v634, %v5830
    %5833 = vbcast.lane.b32.xlu0 %v5831, 256
    %v5834 = vpop.permute.xlu0 %5833
    %s5836 = sor.u32 256, 8
    %5837 = vbcast.lane.b32.xlu0 %v5831, %s5836
    %v5838 = vpop.permute.xlu0 %5837
    %s5840 = sor.u32 256, 16
    %5841 = vbcast.lane.b32.xlu0 %v5831, %s5840
    %v5842 = vpop.permute.xlu0 %5841
    %s5844 = sor.u32 256, 24
    %5845 = vbcast.lane.b32.xlu0 %v5831, %s5844
    %v5846 = vpop.permute.xlu0 %5845
    %s5848 = sor.u32 256, 32
    %5849 = vbcast.lane.b32.xlu0 %v5831, %s5848
    %v5850 = vpop.permute.xlu0 %5849
    %s5852 = sor.u32 256, 40
    %5853 = vbcast.lane.b32.xlu0 %v5831, %s5852
    %v5854 = vpop.permute.xlu0 %5853
    %s5856 = sor.u32 256, 48
    %5857 = vbcast.lane.b32.xlu0 %v5831, %s5856
    %v5858 = vpop.permute.xlu0 %5857
    %s5860 = sor.u32 256, 56
    %5861 = vbcast.lane.b32.xlu0 %v5831, %s5860
    %v5862 = vpop.permute.xlu0 %5861
    %s5864 = sor.u32 256, 64
    %5865 = vbcast.lane.b32.xlu0 %v5831, %s5864
    %v5866 = vpop.permute.xlu0 %5865
    %s5868 = sor.u32 256, 72
    %5869 = vbcast.lane.b32.xlu0 %v5831, %s5868
    %v5870 = vpop.permute.xlu0 %5869
    %s5872 = sor.u32 256, 80
    %5873 = vbcast.lane.b32.xlu0 %v5831, %s5872
    %v5874 = vpop.permute.xlu0 %5873
    %s5876 = sor.u32 256, 88
    %5877 = vbcast.lane.b32.xlu0 %v5831, %s5876
    %v5878 = vpop.permute.xlu0 %5877
    %s5880 = sor.u32 256, 96
    %5881 = vbcast.lane.b32.xlu0 %v5831, %s5880
    %v5882 = vpop.permute.xlu0 %5881
    %s5884 = sor.u32 256, 104
    %5885 = vbcast.lane.b32.xlu0 %v5831, %s5884
    %v5886 = vpop.permute.xlu0 %5885
    %s5888 = sor.u32 256, 112
    %5889 = vbcast.lane.b32.xlu0 %v5831, %s5888
    %v5890 = vpop.permute.xlu0 %5889
    %s5892 = sor.u32 256, 120
    %5893 = vbcast.lane.b32.xlu0 %v5831, %s5892
    %v5894 = vpop.permute.xlu0 %5893
    %v5895 = vlaneseq
    %v5896 = vshrl.u32 %v5895, 7
    %v5897 = vsub.s32 6, %v5896
    %v5898 = vrot.slane %v634, %v5897
    %5900 = vbcast.lane.b32.xlu0 %v5898, 256
    %v5901 = vpop.permute.xlu0 %5900
    %s5903 = sor.u32 256, 8
    %5904 = vbcast.lane.b32.xlu0 %v5898, %s5903
    %v5905 = vpop.permute.xlu0 %5904
    %s5907 = sor.u32 256, 16
    %5908 = vbcast.lane.b32.xlu0 %v5898, %s5907
    %v5909 = vpop.permute.xlu0 %5908
    %s5911 = sor.u32 256, 24
    %5912 = vbcast.lane.b32.xlu0 %v5898, %s5911
    %v5913 = vpop.permute.xlu0 %5912
    %s5915 = sor.u32 256, 32
    %5916 = vbcast.lane.b32.xlu0 %v5898, %s5915
    %v5917 = vpop.permute.xlu0 %5916
    %s5919 = sor.u32 256, 40
    %5920 = vbcast.lane.b32.xlu0 %v5898, %s5919
    %v5921 = vpop.permute.xlu0 %5920
    %s5923 = sor.u32 256, 48
    %5924 = vbcast.lane.b32.xlu0 %v5898, %s5923
    %v5925 = vpop.permute.xlu0 %5924
    %s5927 = sor.u32 256, 56
    %5928 = vbcast.lane.b32.xlu0 %v5898, %s5927
    %v5929 = vpop.permute.xlu0 %5928
    %s5931 = sor.u32 256, 64
    %5932 = vbcast.lane.b32.xlu0 %v5898, %s5931
    %v5933 = vpop.permute.xlu0 %5932
    %s5935 = sor.u32 256, 72
    %5936 = vbcast.lane.b32.xlu0 %v5898, %s5935
    %v5937 = vpop.permute.xlu0 %5936
    %s5939 = sor.u32 256, 80
    %5940 = vbcast.lane.b32.xlu0 %v5898, %s5939
    %v5941 = vpop.permute.xlu0 %5940
    %s5943 = sor.u32 256, 88
    %5944 = vbcast.lane.b32.xlu0 %v5898, %s5943
    %v5945 = vpop.permute.xlu0 %5944
    %s5947 = sor.u32 256, 96
    %5948 = vbcast.lane.b32.xlu0 %v5898, %s5947
    %v5949 = vpop.permute.xlu0 %5948
    %s5951 = sor.u32 256, 104
    %5952 = vbcast.lane.b32.xlu0 %v5898, %s5951
    %v5953 = vpop.permute.xlu0 %5952
    %s5955 = sor.u32 256, 112
    %5956 = vbcast.lane.b32.xlu0 %v5898, %s5955
    %v5957 = vpop.permute.xlu0 %5956
    %s5959 = sor.u32 256, 120
    %5960 = vbcast.lane.b32.xlu0 %v5898, %s5959
    %v5961 = vpop.permute.xlu0 %5960
    %v5962 = vlaneseq
    %v5963 = vshrl.u32 %v5962, 7
    %v5964 = vsub.s32 7, %v5963
    %v5965 = vrot.slane %v634, %v5964
    %5967 = vbcast.lane.b32.xlu0 %v5965, 256
    %v5968 = vpop.permute.xlu0 %5967
    %s5970 = sor.u32 256, 8
    %5971 = vbcast.lane.b32.xlu0 %v5965, %s5970
    %v5972 = vpop.permute.xlu0 %5971
    %s5974 = sor.u32 256, 16
    %5975 = vbcast.lane.b32.xlu0 %v5965, %s5974
    %v5976 = vpop.permute.xlu0 %5975
    %s5978 = sor.u32 256, 24
    %5979 = vbcast.lane.b32.xlu0 %v5965, %s5978
    %v5980 = vpop.permute.xlu0 %5979
    %s5982 = sor.u32 256, 32
    %5983 = vbcast.lane.b32.xlu0 %v5965, %s5982
    %v5984 = vpop.permute.xlu0 %5983
    %s5986 = sor.u32 256, 40
    %5987 = vbcast.lane.b32.xlu0 %v5965, %s5986
    %v5988 = vpop.permute.xlu0 %5987
    %s5990 = sor.u32 256, 48
    %5991 = vbcast.lane.b32.xlu0 %v5965, %s5990
    %v5992 = vpop.permute.xlu0 %5991
    %s5994 = sor.u32 256, 56
    %5995 = vbcast.lane.b32.xlu0 %v5965, %s5994
    %v5996 = vpop.permute.xlu0 %5995
    %s5998 = sor.u32 256, 64
    %5999 = vbcast.lane.b32.xlu0 %v5965, %s5998
    %v6000 = vpop.permute.xlu0 %5999
    %s6002 = sor.u32 256, 72
    %6003 = vbcast.lane.b32.xlu0 %v5965, %s6002
    %v6004 = vpop.permute.xlu0 %6003
    %s6006 = sor.u32 256, 80
    %6007 = vbcast.lane.b32.xlu0 %v5965, %s6006
    %v6008 = vpop.permute.xlu0 %6007
    %s6010 = sor.u32 256, 88
    %6011 = vbcast.lane.b32.xlu0 %v5965, %s6010
    %v6012 = vpop.permute.xlu0 %6011
    %s6014 = sor.u32 256, 96
    %6015 = vbcast.lane.b32.xlu0 %v5965, %s6014
    %v6016 = vpop.permute.xlu0 %6015
    %s6018 = sor.u32 256, 104
    %6019 = vbcast.lane.b32.xlu0 %v5965, %s6018
    %v6020 = vpop.permute.xlu0 %6019
    %s6022 = sor.u32 256, 112
    %6023 = vbcast.lane.b32.xlu0 %v5965, %s6022
    %v6024 = vpop.permute.xlu0 %6023
    %s6026 = sor.u32 256, 120
    %6027 = vbcast.lane.b32.xlu0 %v5965, %s6026
    %v6028 = vpop.permute.xlu0 %6027
    %v6029 = vadd.f32 %v5499, %v4013
    %v6030 = vadd.f32 %v5503, %v4014
    %v6031 = vadd.f32 %v5507, %v4015
    %v6032 = vadd.f32 %v5511, %v4016
    %v6033 = vadd.f32 %v5515, %v4017
    %v6034 = vadd.f32 %v5519, %v4018
    %v6035 = vadd.f32 %v5523, %v4019
    %v6036 = vadd.f32 %v5527, %v4020
    %v6037 = vadd.f32 %v5531, %v4021
    %v6038 = vadd.f32 %v5535, %v4022
    %v6039 = vadd.f32 %v5539, %v4023
    %v6040 = vadd.f32 %v5543, %v4024
    %v6041 = vadd.f32 %v5547, %v4025
    %v6042 = vadd.f32 %v5551, %v4026
    %v6043 = vadd.f32 %v5555, %v4027
    %v6044 = vadd.f32 %v5559, %v4028
    %v6045 = vadd.f32 %v5566, %v4029
    %v6046 = vadd.f32 %v5570, %v4030
    %v6047 = vadd.f32 %v5574, %v4031
    %v6048 = vadd.f32 %v5578, %v4032
    %v6049 = vadd.f32 %v5582, %v4033
    %v6050 = vadd.f32 %v5586, %v4034
    %v6051 = vadd.f32 %v5590, %v4035
    %v6052 = vadd.f32 %v5594, %v4036
    %v6053 = vadd.f32 %v5598, %v4037
    %v6054 = vadd.f32 %v5602, %v4038
    %v6055 = vadd.f32 %v5606, %v4039
    %v6056 = vadd.f32 %v5610, %v4040
    %v6057 = vadd.f32 %v5614, %v4041
    %v6058 = vadd.f32 %v5618, %v4042
    %v6059 = vadd.f32 %v5622, %v4043
    %v6060 = vadd.f32 %v5626, %v4044
    %v6061 = vadd.f32 %v5633, %v4045
    %v6062 = vadd.f32 %v5637, %v4046
    %v6063 = vadd.f32 %v5641, %v4047
    %v6064 = vadd.f32 %v5645, %v4048
    %v6065 = vadd.f32 %v5649, %v4049
    %v6066 = vadd.f32 %v5653, %v4050
    %v6067 = vadd.f32 %v5657, %v4051
    %v6068 = vadd.f32 %v5661, %v4052
    %v6069 = vadd.f32 %v5665, %v4053
    %v6070 = vadd.f32 %v5669, %v4054
    %v6071 = vadd.f32 %v5673, %v4055
    %v6072 = vadd.f32 %v5677, %v4056
    %v6073 = vadd.f32 %v5681, %v4057
    %v6074 = vadd.f32 %v5685, %v4058
    %v6075 = vadd.f32 %v5689, %v4059
    %v6076 = vadd.f32 %v5693, %v4060
    %v6077 = vadd.f32 %v5700, %v4061
    %v6078 = vadd.f32 %v5704, %v4062
    %v6079 = vadd.f32 %v5708, %v4063
    %v6080 = vadd.f32 %v5712, %v4064
    %v6081 = vadd.f32 %v5716, %v4065
    %v6082 = vadd.f32 %v5720, %v4066
    %v6083 = vadd.f32 %v5724, %v4067
    %v6084 = vadd.f32 %v5728, %v4068
    %v6085 = vadd.f32 %v5732, %v4069
    %v6086 = vadd.f32 %v5736, %v4070
    %v6087 = vadd.f32 %v5740, %v4071
    %v6088 = vadd.f32 %v5744, %v4072
    %v6089 = vadd.f32 %v5748, %v4073
    %v6090 = vadd.f32 %v5752, %v4074
    %v6091 = vadd.f32 %v5756, %v4075
    %v6092 = vadd.f32 %v5760, %v4076
    %v6093 = vadd.f32 %v5767, %v4077
    %v6094 = vadd.f32 %v5771, %v4078
    %v6095 = vadd.f32 %v5775, %v4079
    %v6096 = vadd.f32 %v5779, %v4080
    %v6097 = vadd.f32 %v5783, %v4081
    %v6098 = vadd.f32 %v5787, %v4082
    %v6099 = vadd.f32 %v5791, %v4083
    %v6100 = vadd.f32 %v5795, %v4084
    %v6101 = vadd.f32 %v5799, %v4085
    %v6102 = vadd.f32 %v5803, %v4086
    %v6103 = vadd.f32 %v5807, %v4087
    %v6104 = vadd.f32 %v5811, %v4088
    %v6105 = vadd.f32 %v5815, %v4089
    %v6106 = vadd.f32 %v5819, %v4090
    %v6107 = vadd.f32 %v5823, %v4091
    %v6108 = vadd.f32 %v5827, %v4092
    %v6109 = vadd.f32 %v5834, %v4093
    %v6110 = vadd.f32 %v5838, %v4094
    %v6111 = vadd.f32 %v5842, %v4095
    %v6112 = vadd.f32 %v5846, %v4096
    %v6113 = vadd.f32 %v5850, %v4097
    %v6114 = vadd.f32 %v5854, %v4098
    %v6115 = vadd.f32 %v5858, %v4099
    %v6116 = vadd.f32 %v5862, %v4100
    %v6117 = vadd.f32 %v5866, %v4101
    %v6118 = vadd.f32 %v5870, %v4102
    %v6119 = vadd.f32 %v5874, %v4103
    %v6120 = vadd.f32 %v5878, %v4104
    %v6121 = vadd.f32 %v5882, %v4105
    %v6122 = vadd.f32 %v5886, %v4106
    %v6123 = vadd.f32 %v5890, %v4107
    %v6124 = vadd.f32 %v5894, %v4108
    %v6125 = vadd.f32 %v5901, %v4109
    %v6126 = vadd.f32 %v5905, %v4110
    %v6127 = vadd.f32 %v5909, %v4111
    %v6128 = vadd.f32 %v5913, %v4112
    %v6129 = vadd.f32 %v5917, %v4113
    %v6130 = vadd.f32 %v5921, %v4114
    %v6131 = vadd.f32 %v5925, %v4115
    %v6132 = vadd.f32 %v5929, %v4116
    %v6133 = vadd.f32 %v5933, %v4117
    %v6134 = vadd.f32 %v5937, %v4118
    %v6135 = vadd.f32 %v5941, %v4119
    %v6136 = vadd.f32 %v5945, %v4120
    %v6137 = vadd.f32 %v5949, %v4121
    %v6138 = vadd.f32 %v5953, %v4122
    %v6139 = vadd.f32 %v5957, %v4123
    %v6140 = vadd.f32 %v5961, %v4124
    %v6141 = vadd.f32 %v5968, %v4125
    %v6142 = vadd.f32 %v5972, %v4126
    %v6143 = vadd.f32 %v5976, %v4127
    %v6144 = vadd.f32 %v5980, %v4128
    %v6145 = vadd.f32 %v5984, %v4129
    %v6146 = vadd.f32 %v5988, %v4130
    %v6147 = vadd.f32 %v5992, %v4131
    %v6148 = vadd.f32 %v5996, %v4132
    %v6149 = vadd.f32 %v6000, %v4133
    %v6150 = vadd.f32 %v6004, %v4134
    %v6151 = vadd.f32 %v6008, %v4135
    %v6152 = vadd.f32 %v6012, %v4136
    %v6153 = vadd.f32 %v6016, %v4137
    %v6154 = vadd.f32 %v6020, %v4138
    %v6155 = vadd.f32 %v6024, %v4139
    %v6156 = vadd.f32 %v6028, %v4140
    %v6157 = vadd.f32 %v5365, 1e-18
    %v6158 = vadd.f32 %v5366, 1e-18
    %v6159 = vadd.f32 %v5367, 1e-18
    %v6160 = vadd.f32 %v5368, 1e-18
    %v6161 = vadd.f32 %v5369, 1e-18
    %v6162 = vadd.f32 %v5370, 1e-18
    %v6163 = vadd.f32 %v5371, 1e-18
    %v6164 = vadd.f32 %v5372, 1e-18
    %v6165 = vadd.f32 %v5373, 1e-18
    %v6166 = vadd.f32 %v5374, 1e-18
    %v6167 = vadd.f32 %v5375, 1e-18
    %v6168 = vadd.f32 %v5376, 1e-18
    %v6169 = vadd.f32 %v5377, 1e-18
    %v6170 = vadd.f32 %v5378, 1e-18
    %v6171 = vadd.f32 %v5379, 1e-18
    %v6172 = vadd.f32 %v5380, 1e-18
    %v6173 = vadd.f32 %v5381, 1e-18
    %v6174 = vadd.f32 %v5382, 1e-18
    %v6175 = vadd.f32 %v5383, 1e-18
    %v6176 = vadd.f32 %v5384, 1e-18
    %v6177 = vadd.f32 %v5385, 1e-18
    %v6178 = vadd.f32 %v5386, 1e-18
    %v6179 = vadd.f32 %v5387, 1e-18
    %v6180 = vadd.f32 %v5388, 1e-18
    %v6181 = vadd.f32 %v5389, 1e-18
    %v6182 = vadd.f32 %v5390, 1e-18
    %v6183 = vadd.f32 %v5391, 1e-18
    %v6184 = vadd.f32 %v5392, 1e-18
    %v6185 = vadd.f32 %v5393, 1e-18
    %v6186 = vadd.f32 %v5394, 1e-18
    %v6187 = vadd.f32 %v5395, 1e-18
    %v6188 = vadd.f32 %v5396, 1e-18
    %v6189 = vadd.f32 %v5397, 1e-18
    %v6190 = vadd.f32 %v5398, 1e-18
    %v6191 = vadd.f32 %v5399, 1e-18
    %v6192 = vadd.f32 %v5400, 1e-18
    %v6193 = vadd.f32 %v5401, 1e-18
    %v6194 = vadd.f32 %v5402, 1e-18
    %v6195 = vadd.f32 %v5403, 1e-18
    %v6196 = vadd.f32 %v5404, 1e-18
    %v6197 = vadd.f32 %v5405, 1e-18
    %v6198 = vadd.f32 %v5406, 1e-18
    %v6199 = vadd.f32 %v5407, 1e-18
    %v6200 = vadd.f32 %v5408, 1e-18
    %v6201 = vadd.f32 %v5409, 1e-18
    %v6202 = vadd.f32 %v5410, 1e-18
    %v6203 = vadd.f32 %v5411, 1e-18
    %v6204 = vadd.f32 %v5412, 1e-18
    %v6205 = vadd.f32 %v5413, 1e-18
    %v6206 = vadd.f32 %v5414, 1e-18
    %v6207 = vadd.f32 %v5415, 1e-18
    %v6208 = vadd.f32 %v5416, 1e-18
    %v6209 = vadd.f32 %v5417, 1e-18
    %v6210 = vadd.f32 %v5418, 1e-18
    %v6211 = vadd.f32 %v5419, 1e-18
    %v6212 = vadd.f32 %v5420, 1e-18
    %v6213 = vadd.f32 %v5421, 1e-18
    %v6214 = vadd.f32 %v5422, 1e-18
    %v6215 = vadd.f32 %v5423, 1e-18
    %v6216 = vadd.f32 %v5424, 1e-18
    %v6217 = vadd.f32 %v5425, 1e-18
    %v6218 = vadd.f32 %v5426, 1e-18
    %v6219 = vadd.f32 %v5427, 1e-18
    %v6220 = vadd.f32 %v5428, 1e-18
    %v6221 = vadd.f32 %v5429, 1e-18
    %v6222 = vadd.f32 %v5430, 1e-18
    %v6223 = vadd.f32 %v5431, 1e-18
    %v6224 = vadd.f32 %v5432, 1e-18
    %v6225 = vadd.f32 %v5433, 1e-18
    %v6226 = vadd.f32 %v5434, 1e-18
    %v6227 = vadd.f32 %v5435, 1e-18
    %v6228 = vadd.f32 %v5436, 1e-18
    %v6229 = vadd.f32 %v5437, 1e-18
    %v6230 = vadd.f32 %v5438, 1e-18
    %v6231 = vadd.f32 %v5439, 1e-18
    %v6232 = vadd.f32 %v5440, 1e-18
    %v6233 = vadd.f32 %v5441, 1e-18
    %v6234 = vadd.f32 %v5442, 1e-18
    %v6235 = vadd.f32 %v5443, 1e-18
    %v6236 = vadd.f32 %v5444, 1e-18
    %v6237 = vadd.f32 %v5445, 1e-18
    %v6238 = vadd.f32 %v5446, 1e-18
    %v6239 = vadd.f32 %v5447, 1e-18
    %v6240 = vadd.f32 %v5448, 1e-18
    %v6241 = vadd.f32 %v5449, 1e-18
    %v6242 = vadd.f32 %v5450, 1e-18
    %v6243 = vadd.f32 %v5451, 1e-18
    %v6244 = vadd.f32 %v5452, 1e-18
    %v6245 = vadd.f32 %v5453, 1e-18
    %v6246 = vadd.f32 %v5454, 1e-18
    %v6247 = vadd.f32 %v5455, 1e-18
    %v6248 = vadd.f32 %v5456, 1e-18
    %v6249 = vadd.f32 %v5457, 1e-18
    %v6250 = vadd.f32 %v5458, 1e-18
    %v6251 = vadd.f32 %v5459, 1e-18
    %v6252 = vadd.f32 %v5460, 1e-18
    %v6253 = vadd.f32 %v5461, 1e-18
    %v6254 = vadd.f32 %v5462, 1e-18
    %v6255 = vadd.f32 %v5463, 1e-18
    %v6256 = vadd.f32 %v5464, 1e-18
    %v6257 = vadd.f32 %v5465, 1e-18
    %v6258 = vadd.f32 %v5466, 1e-18
    %v6259 = vadd.f32 %v5467, 1e-18
    %v6260 = vadd.f32 %v5468, 1e-18
    %v6261 = vadd.f32 %v5469, 1e-18
    %v6262 = vadd.f32 %v5470, 1e-18
    %v6263 = vadd.f32 %v5471, 1e-18
    %v6264 = vadd.f32 %v5472, 1e-18
    %v6265 = vadd.f32 %v5473, 1e-18
    %v6266 = vadd.f32 %v5474, 1e-18
    %v6267 = vadd.f32 %v5475, 1e-18
    %v6268 = vadd.f32 %v5476, 1e-18
    %v6269 = vadd.f32 %v5477, 1e-18
    %v6270 = vadd.f32 %v5478, 1e-18
    %v6271 = vadd.f32 %v5479, 1e-18
    %v6272 = vadd.f32 %v5480, 1e-18
    %v6273 = vadd.f32 %v5481, 1e-18
    %v6274 = vadd.f32 %v5482, 1e-18
    %v6275 = vadd.f32 %v5483, 1e-18
    %v6276 = vadd.f32 %v5484, 1e-18
    %v6277 = vadd.f32 %v5485, 1e-18
    %v6278 = vadd.f32 %v5486, 1e-18
    %v6279 = vadd.f32 %v5487, 1e-18
    %v6280 = vadd.f32 %v5488, 1e-18
    %v6281 = vadd.f32 %v5489, 1e-18
    %v6282 = vadd.f32 %v5490, 1e-18
    %v6283 = vadd.f32 %v5491, 1e-18
    %v6284 = vadd.f32 %v5492, 1e-18
    %v6285 = vlog2.pop %v6157
    %v6286 = vmul.f32 %v6285, 0.6931472
    %v6287 = vlog2.pop %v6158
    %v6288 = vmul.f32 %v6287, 0.6931472
    %v6289 = vlog2.pop %v6159
    %v6290 = vmul.f32 %v6289, 0.6931472
    %v6291 = vlog2.pop %v6160
    %v6292 = vmul.f32 %v6291, 0.6931472
    %v6293 = vlog2.pop %v6161
    %v6294 = vmul.f32 %v6293, 0.6931472
    %v6295 = vlog2.pop %v6162
    %v6296 = vmul.f32 %v6295, 0.6931472
    %v6297 = vlog2.pop %v6163
    %v6298 = vmul.f32 %v6297, 0.6931472
    %v6299 = vlog2.pop %v6164
    %v6300 = vmul.f32 %v6299, 0.6931472
    %v6301 = vlog2.pop %v6165
    %v6302 = vmul.f32 %v6301, 0.6931472
    %v6303 = vlog2.pop %v6166
    %v6304 = vmul.f32 %v6303, 0.6931472
    %v6305 = vlog2.pop %v6167
    %v6306 = vmul.f32 %v6305, 0.6931472
    %v6307 = vlog2.pop %v6168
    %v6308 = vmul.f32 %v6307, 0.6931472
    %v6309 = vlog2.pop %v6169
    %v6310 = vmul.f32 %v6309, 0.6931472
    %v6311 = vlog2.pop %v6170
    %v6312 = vmul.f32 %v6311, 0.6931472
    %v6313 = vlog2.pop %v6171
    %v6314 = vmul.f32 %v6313, 0.6931472
    %v6315 = vlog2.pop %v6172
    %v6316 = vmul.f32 %v6315, 0.6931472
    %v6317 = vlog2.pop %v6173
    %v6318 = vmul.f32 %v6317, 0.6931472
    %v6319 = vlog2.pop %v6174
    %v6320 = vmul.f32 %v6319, 0.6931472
    %v6321 = vlog2.pop %v6175
    %v6322 = vmul.f32 %v6321, 0.6931472
    %v6323 = vlog2.pop %v6176
    %v6324 = vmul.f32 %v6323, 0.6931472
    %v6325 = vlog2.pop %v6177
    %v6326 = vmul.f32 %v6325, 0.6931472
    %v6327 = vlog2.pop %v6178
    %v6328 = vmul.f32 %v6327, 0.6931472
    %v6329 = vlog2.pop %v6179
    %v6330 = vmul.f32 %v6329, 0.6931472
    %v6331 = vlog2.pop %v6180
    %v6332 = vmul.f32 %v6331, 0.6931472
    %v6333 = vlog2.pop %v6181
    %v6334 = vmul.f32 %v6333, 0.6931472
    %v6335 = vlog2.pop %v6182
    %v6336 = vmul.f32 %v6335, 0.6931472
    %v6337 = vlog2.pop %v6183
    %v6338 = vmul.f32 %v6337, 0.6931472
    %v6339 = vlog2.pop %v6184
    %v6340 = vmul.f32 %v6339, 0.6931472
    %v6341 = vlog2.pop %v6185
    %v6342 = vmul.f32 %v6341, 0.6931472
    %v6343 = vlog2.pop %v6186
    %v6344 = vmul.f32 %v6343, 0.6931472
    %v6345 = vlog2.pop %v6187
    %v6346 = vmul.f32 %v6345, 0.6931472
    %v6347 = vlog2.pop %v6188
    %v6348 = vmul.f32 %v6347, 0.6931472
    %v6349 = vlog2.pop %v6189
    %v6350 = vmul.f32 %v6349, 0.6931472
    %v6351 = vlog2.pop %v6190
    %v6352 = vmul.f32 %v6351, 0.6931472
    %v6353 = vlog2.pop %v6191
    %v6354 = vmul.f32 %v6353, 0.6931472
    %v6355 = vlog2.pop %v6192
    %v6356 = vmul.f32 %v6355, 0.6931472
    %v6357 = vlog2.pop %v6193
    %v6358 = vmul.f32 %v6357, 0.6931472
    %v6359 = vlog2.pop %v6194
    %v6360 = vmul.f32 %v6359, 0.6931472
    %v6361 = vlog2.pop %v6195
    %v6362 = vmul.f32 %v6361, 0.6931472
    %v6363 = vlog2.pop %v6196
    %v6364 = vmul.f32 %v6363, 0.6931472
    %v6365 = vlog2.pop %v6197
    %v6366 = vmul.f32 %v6365, 0.6931472
    %v6367 = vlog2.pop %v6198
    %v6368 = vmul.f32 %v6367, 0.6931472
    %v6369 = vlog2.pop %v6199
    %v6370 = vmul.f32 %v6369, 0.6931472
    %v6371 = vlog2.pop %v6200
    %v6372 = vmul.f32 %v6371, 0.6931472
    %v6373 = vlog2.pop %v6201
    %v6374 = vmul.f32 %v6373, 0.6931472
    %v6375 = vlog2.pop %v6202
    %v6376 = vmul.f32 %v6375, 0.6931472
    %v6377 = vlog2.pop %v6203
    %v6378 = vmul.f32 %v6377, 0.6931472
    %v6379 = vlog2.pop %v6204
    %v6380 = vmul.f32 %v6379, 0.6931472
    %v6381 = vlog2.pop %v6205
    %v6382 = vmul.f32 %v6381, 0.6931472
    %v6383 = vlog2.pop %v6206
    %v6384 = vmul.f32 %v6383, 0.6931472
    %v6385 = vlog2.pop %v6207
    %v6386 = vmul.f32 %v6385, 0.6931472
    %v6387 = vlog2.pop %v6208
    %v6388 = vmul.f32 %v6387, 0.6931472
    %v6389 = vlog2.pop %v6209
    %v6390 = vmul.f32 %v6389, 0.6931472
    %v6391 = vlog2.pop %v6210
    %v6392 = vmul.f32 %v6391, 0.6931472
    %v6393 = vlog2.pop %v6211
    %v6394 = vmul.f32 %v6393, 0.6931472
    %v6395 = vlog2.pop %v6212
    %v6396 = vmul.f32 %v6395, 0.6931472
    %v6397 = vlog2.pop %v6213
    %v6398 = vmul.f32 %v6397, 0.6931472
    %v6399 = vlog2.pop %v6214
    %v6400 = vmul.f32 %v6399, 0.6931472
    %v6401 = vlog2.pop %v6215
    %v6402 = vmul.f32 %v6401, 0.6931472
    %v6403 = vlog2.pop %v6216
    %v6404 = vmul.f32 %v6403, 0.6931472
    %v6405 = vlog2.pop %v6217
    %v6406 = vmul.f32 %v6405, 0.6931472
    %v6407 = vlog2.pop %v6218
    %v6408 = vmul.f32 %v6407, 0.6931472
    %v6409 = vlog2.pop %v6219
    %v6410 = vmul.f32 %v6409, 0.6931472
    %v6411 = vlog2.pop %v6220
    %v6412 = vmul.f32 %v6411, 0.6931472
    %v6413 = vlog2.pop %v6221
    %v6414 = vmul.f32 %v6413, 0.6931472
    %v6415 = vlog2.pop %v6222
    %v6416 = vmul.f32 %v6415, 0.6931472
    %v6417 = vlog2.pop %v6223
    %v6418 = vmul.f32 %v6417, 0.6931472
    %v6419 = vlog2.pop %v6224
    %v6420 = vmul.f32 %v6419, 0.6931472
    %v6421 = vlog2.pop %v6225
    %v6422 = vmul.f32 %v6421, 0.6931472
    %v6423 = vlog2.pop %v6226
    %v6424 = vmul.f32 %v6423, 0.6931472
    %v6425 = vlog2.pop %v6227
    %v6426 = vmul.f32 %v6425, 0.6931472
    %v6427 = vlog2.pop %v6228
    %v6428 = vmul.f32 %v6427, 0.6931472
    %v6429 = vlog2.pop %v6229
    %v6430 = vmul.f32 %v6429, 0.6931472
    %v6431 = vlog2.pop %v6230
    %v6432 = vmul.f32 %v6431, 0.6931472
    %v6433 = vlog2.pop %v6231
    %v6434 = vmul.f32 %v6433, 0.6931472
    %v6435 = vlog2.pop %v6232
    %v6436 = vmul.f32 %v6435, 0.6931472
    %v6437 = vlog2.pop %v6233
    %v6438 = vmul.f32 %v6437, 0.6931472
    %v6439 = vlog2.pop %v6234
    %v6440 = vmul.f32 %v6439, 0.6931472
    %v6441 = vlog2.pop %v6235
    %v6442 = vmul.f32 %v6441, 0.6931472
    %v6443 = vlog2.pop %v6236
    %v6444 = vmul.f32 %v6443, 0.6931472
    %v6445 = vlog2.pop %v6237
    %v6446 = vmul.f32 %v6445, 0.6931472
    %v6447 = vlog2.pop %v6238
    %v6448 = vmul.f32 %v6447, 0.6931472
    %v6449 = vlog2.pop %v6239
    %v6450 = vmul.f32 %v6449, 0.6931472
    %v6451 = vlog2.pop %v6240
    %v6452 = vmul.f32 %v6451, 0.6931472
    %v6453 = vlog2.pop %v6241
    %v6454 = vmul.f32 %v6453, 0.6931472
    %v6455 = vlog2.pop %v6242
    %v6456 = vmul.f32 %v6455, 0.6931472
    %v6457 = vlog2.pop %v6243
    %v6458 = vmul.f32 %v6457, 0.6931472
    %v6459 = vlog2.pop %v6244
    %v6460 = vmul.f32 %v6459, 0.6931472
    %v6461 = vlog2.pop %v6245
    %v6462 = vmul.f32 %v6461, 0.6931472
    %v6463 = vlog2.pop %v6246
    %v6464 = vmul.f32 %v6463, 0.6931472
    %v6465 = vlog2.pop %v6247
    %v6466 = vmul.f32 %v6465, 0.6931472
    %v6467 = vlog2.pop %v6248
    %v6468 = vmul.f32 %v6467, 0.6931472
    %v6469 = vlog2.pop %v6249
    %v6470 = vmul.f32 %v6469, 0.6931472
    %v6471 = vlog2.pop %v6250
    %v6472 = vmul.f32 %v6471, 0.6931472
    %v6473 = vlog2.pop %v6251
    %v6474 = vmul.f32 %v6473, 0.6931472
    %v6475 = vlog2.pop %v6252
    %v6476 = vmul.f32 %v6475, 0.6931472
    %v6477 = vlog2.pop %v6253
    %v6478 = vmul.f32 %v6477, 0.6931472
    %v6479 = vlog2.pop %v6254
    %v6480 = vmul.f32 %v6479, 0.6931472
    %v6481 = vlog2.pop %v6255
    %v6482 = vmul.f32 %v6481, 0.6931472
    %v6483 = vlog2.pop %v6256
    %v6484 = vmul.f32 %v6483, 0.6931472
    %v6485 = vlog2.pop %v6257
    %v6486 = vmul.f32 %v6485, 0.6931472
    %v6487 = vlog2.pop %v6258
    %v6488 = vmul.f32 %v6487, 0.6931472
    %v6489 = vlog2.pop %v6259
    %v6490 = vmul.f32 %v6489, 0.6931472
    %v6491 = vlog2.pop %v6260
    %v6492 = vmul.f32 %v6491, 0.6931472
    %v6493 = vlog2.pop %v6261
    %v6494 = vmul.f32 %v6493, 0.6931472
    %v6495 = vlog2.pop %v6262
    %v6496 = vmul.f32 %v6495, 0.6931472
    %v6497 = vlog2.pop %v6263
    %v6498 = vmul.f32 %v6497, 0.6931472
    %v6499 = vlog2.pop %v6264
    %v6500 = vmul.f32 %v6499, 0.6931472
    %v6501 = vlog2.pop %v6265
    %v6502 = vmul.f32 %v6501, 0.6931472
    %v6503 = vlog2.pop %v6266
    %v6504 = vmul.f32 %v6503, 0.6931472
    %v6505 = vlog2.pop %v6267
    %v6506 = vmul.f32 %v6505, 0.6931472
    %v6507 = vlog2.pop %v6268
    %v6508 = vmul.f32 %v6507, 0.6931472
    %v6509 = vlog2.pop %v6269
    %v6510 = vmul.f32 %v6509, 0.6931472
    %v6511 = vlog2.pop %v6270
    %v6512 = vmul.f32 %v6511, 0.6931472
    %v6513 = vlog2.pop %v6271
    %v6514 = vmul.f32 %v6513, 0.6931472
    %v6515 = vlog2.pop %v6272
    %v6516 = vmul.f32 %v6515, 0.6931472
    %v6517 = vlog2.pop %v6273
    %v6518 = vmul.f32 %v6517, 0.6931472
    %v6519 = vlog2.pop %v6274
    %v6520 = vmul.f32 %v6519, 0.6931472
    %v6521 = vlog2.pop %v6275
    %v6522 = vmul.f32 %v6521, 0.6931472
    %v6523 = vlog2.pop %v6276
    %v6524 = vmul.f32 %v6523, 0.6931472
    %v6525 = vlog2.pop %v6277
    %v6526 = vmul.f32 %v6525, 0.6931472
    %v6527 = vlog2.pop %v6278
    %v6528 = vmul.f32 %v6527, 0.6931472
    %v6529 = vlog2.pop %v6279
    %v6530 = vmul.f32 %v6529, 0.6931472
    %v6531 = vlog2.pop %v6280
    %v6532 = vmul.f32 %v6531, 0.6931472
    %v6533 = vlog2.pop %v6281
    %v6534 = vmul.f32 %v6533, 0.6931472
    %v6535 = vlog2.pop %v6282
    %v6536 = vmul.f32 %v6535, 0.6931472
    %v6537 = vlog2.pop %v6283
    %v6538 = vmul.f32 %v6537, 0.6931472
    %v6539 = vlog2.pop %v6284
    %v6540 = vmul.f32 %v6539, 0.6931472
    %v6541 = vsub.f32 %v6029, %v6286
    %v6542 = vsub.f32 %v6030, %v6288
    %v6543 = vsub.f32 %v6031, %v6290
    %v6544 = vsub.f32 %v6032, %v6292
    %v6545 = vsub.f32 %v6033, %v6294
    %v6546 = vsub.f32 %v6034, %v6296
    %v6547 = vsub.f32 %v6035, %v6298
    %v6548 = vsub.f32 %v6036, %v6300
    %v6549 = vsub.f32 %v6037, %v6302
    %v6550 = vsub.f32 %v6038, %v6304
    %v6551 = vsub.f32 %v6039, %v6306
    %v6552 = vsub.f32 %v6040, %v6308
    %v6553 = vsub.f32 %v6041, %v6310
    %v6554 = vsub.f32 %v6042, %v6312
    %v6555 = vsub.f32 %v6043, %v6314
    %v6556 = vsub.f32 %v6044, %v6316
    %v6557 = vsub.f32 %v6045, %v6318
    %v6558 = vsub.f32 %v6046, %v6320
    %v6559 = vsub.f32 %v6047, %v6322
    %v6560 = vsub.f32 %v6048, %v6324
    %v6561 = vsub.f32 %v6049, %v6326
    %v6562 = vsub.f32 %v6050, %v6328
    %v6563 = vsub.f32 %v6051, %v6330
    %v6564 = vsub.f32 %v6052, %v6332
    %v6565 = vsub.f32 %v6053, %v6334
    %v6566 = vsub.f32 %v6054, %v6336
    %v6567 = vsub.f32 %v6055, %v6338
    %v6568 = vsub.f32 %v6056, %v6340
    %v6569 = vsub.f32 %v6057, %v6342
    %v6570 = vsub.f32 %v6058, %v6344
    %v6571 = vsub.f32 %v6059, %v6346
    %v6572 = vsub.f32 %v6060, %v6348
    %v6573 = vsub.f32 %v6061, %v6350
    %v6574 = vsub.f32 %v6062, %v6352
    %v6575 = vsub.f32 %v6063, %v6354
    %v6576 = vsub.f32 %v6064, %v6356
    %v6577 = vsub.f32 %v6065, %v6358
    %v6578 = vsub.f32 %v6066, %v6360
    %v6579 = vsub.f32 %v6067, %v6362
    %v6580 = vsub.f32 %v6068, %v6364
    %v6581 = vsub.f32 %v6069, %v6366
    %v6582 = vsub.f32 %v6070, %v6368
    %v6583 = vsub.f32 %v6071, %v6370
    %v6584 = vsub.f32 %v6072, %v6372
    %v6585 = vsub.f32 %v6073, %v6374
    %v6586 = vsub.f32 %v6074, %v6376
    %v6587 = vsub.f32 %v6075, %v6378
    %v6588 = vsub.f32 %v6076, %v6380
    %v6589 = vsub.f32 %v6077, %v6382
    %v6590 = vsub.f32 %v6078, %v6384
    %v6591 = vsub.f32 %v6079, %v6386
    %v6592 = vsub.f32 %v6080, %v6388
    %v6593 = vsub.f32 %v6081, %v6390
    %v6594 = vsub.f32 %v6082, %v6392
    %v6595 = vsub.f32 %v6083, %v6394
    %v6596 = vsub.f32 %v6084, %v6396
    %v6597 = vsub.f32 %v6085, %v6398
    %v6598 = vsub.f32 %v6086, %v6400
    %v6599 = vsub.f32 %v6087, %v6402
    %v6600 = vsub.f32 %v6088, %v6404
    %v6601 = vsub.f32 %v6089, %v6406
    %v6602 = vsub.f32 %v6090, %v6408
    %v6603 = vsub.f32 %v6091, %v6410
    %v6604 = vsub.f32 %v6092, %v6412
    %v6605 = vsub.f32 %v6093, %v6414
    %v6606 = vsub.f32 %v6094, %v6416
    %v6607 = vsub.f32 %v6095, %v6418
    %v6608 = vsub.f32 %v6096, %v6420
    %v6609 = vsub.f32 %v6097, %v6422
    %v6610 = vsub.f32 %v6098, %v6424
    %v6611 = vsub.f32 %v6099, %v6426
    %v6612 = vsub.f32 %v6100, %v6428
    %v6613 = vsub.f32 %v6101, %v6430
    %v6614 = vsub.f32 %v6102, %v6432
    %v6615 = vsub.f32 %v6103, %v6434
    %v6616 = vsub.f32 %v6104, %v6436
    %v6617 = vsub.f32 %v6105, %v6438
    %v6618 = vsub.f32 %v6106, %v6440
    %v6619 = vsub.f32 %v6107, %v6442
    %v6620 = vsub.f32 %v6108, %v6444
    %v6621 = vsub.f32 %v6109, %v6446
    %v6622 = vsub.f32 %v6110, %v6448
    %v6623 = vsub.f32 %v6111, %v6450
    %v6624 = vsub.f32 %v6112, %v6452
    %v6625 = vsub.f32 %v6113, %v6454
    %v6626 = vsub.f32 %v6114, %v6456
    %v6627 = vsub.f32 %v6115, %v6458
    %v6628 = vsub.f32 %v6116, %v6460
    %v6629 = vsub.f32 %v6117, %v6462
    %v6630 = vsub.f32 %v6118, %v6464
    %v6631 = vsub.f32 %v6119, %v6466
    %v6632 = vsub.f32 %v6120, %v6468
    %v6633 = vsub.f32 %v6121, %v6470
    %v6634 = vsub.f32 %v6122, %v6472
    %v6635 = vsub.f32 %v6123, %v6474
    %v6636 = vsub.f32 %v6124, %v6476
    %v6637 = vsub.f32 %v6125, %v6478
    %v6638 = vsub.f32 %v6126, %v6480
    %v6639 = vsub.f32 %v6127, %v6482
    %v6640 = vsub.f32 %v6128, %v6484
    %v6641 = vsub.f32 %v6129, %v6486
    %v6642 = vsub.f32 %v6130, %v6488
    %v6643 = vsub.f32 %v6131, %v6490
    %v6644 = vsub.f32 %v6132, %v6492
    %v6645 = vsub.f32 %v6133, %v6494
    %v6646 = vsub.f32 %v6134, %v6496
    %v6647 = vsub.f32 %v6135, %v6498
    %v6648 = vsub.f32 %v6136, %v6500
    %v6649 = vsub.f32 %v6137, %v6502
    %v6650 = vsub.f32 %v6138, %v6504
    %v6651 = vsub.f32 %v6139, %v6506
    %v6652 = vsub.f32 %v6140, %v6508
    %v6653 = vsub.f32 %v6141, %v6510
    %v6654 = vsub.f32 %v6142, %v6512
    %v6655 = vsub.f32 %v6143, %v6514
    %v6656 = vsub.f32 %v6144, %v6516
    %v6657 = vsub.f32 %v6145, %v6518
    %v6658 = vsub.f32 %v6146, %v6520
    %v6659 = vsub.f32 %v6147, %v6522
    %v6660 = vsub.f32 %v6148, %v6524
    %v6661 = vsub.f32 %v6149, %v6526
    %v6662 = vsub.f32 %v6150, %v6528
    %v6663 = vsub.f32 %v6151, %v6530
    %v6664 = vsub.f32 %v6152, %v6532
    %v6665 = vsub.f32 %v6153, %v6534
    %v6666 = vsub.f32 %v6154, %v6536
    %v6667 = vsub.f32 %v6155, %v6538
    %v6668 = vsub.f32 %v6156, %v6540
    %v6669 = vmul.f32 %v5365, %v6541
    %v6670 = vmul.f32 %v5366, %v6542
    %v6671 = vmul.f32 %v5367, %v6543
    %v6672 = vmul.f32 %v5368, %v6544
    %v6673 = vmul.f32 %v5369, %v6545
    %v6674 = vmul.f32 %v5370, %v6546
    %v6675 = vmul.f32 %v5371, %v6547
    %v6676 = vmul.f32 %v5372, %v6548
    %v6677 = vmul.f32 %v5373, %v6549
    %v6678 = vmul.f32 %v5374, %v6550
    %v6679 = vmul.f32 %v5375, %v6551
    %v6680 = vmul.f32 %v5376, %v6552
    %v6681 = vmul.f32 %v5377, %v6553
    %v6682 = vmul.f32 %v5378, %v6554
    %v6683 = vmul.f32 %v5379, %v6555
    %v6684 = vmul.f32 %v5380, %v6556
    %v6685 = vmul.f32 %v5381, %v6557
    %v6686 = vmul.f32 %v5382, %v6558
    %v6687 = vmul.f32 %v5383, %v6559
    %v6688 = vmul.f32 %v5384, %v6560
    %v6689 = vmul.f32 %v5385, %v6561
    %v6690 = vmul.f32 %v5386, %v6562
    %v6691 = vmul.f32 %v5387, %v6563
    %v6692 = vmul.f32 %v5388, %v6564
    %v6693 = vmul.f32 %v5389, %v6565
    %v6694 = vmul.f32 %v5390, %v6566
    %v6695 = vmul.f32 %v5391, %v6567
    %v6696 = vmul.f32 %v5392, %v6568
    %v6697 = vmul.f32 %v5393, %v6569
    %v6698 = vmul.f32 %v5394, %v6570
    %v6699 = vmul.f32 %v5395, %v6571
    %v6700 = vmul.f32 %v5396, %v6572
    %v6701 = vmul.f32 %v5397, %v6573
    %v6702 = vmul.f32 %v5398, %v6574
    %v6703 = vmul.f32 %v5399, %v6575
    %v6704 = vmul.f32 %v5400, %v6576
    %v6705 = vmul.f32 %v5401, %v6577
    %v6706 = vmul.f32 %v5402, %v6578
    %v6707 = vmul.f32 %v5403, %v6579
    %v6708 = vmul.f32 %v5404, %v6580
    %v6709 = vmul.f32 %v5405, %v6581
    %v6710 = vmul.f32 %v5406, %v6582
    %v6711 = vmul.f32 %v5407, %v6583
    %v6712 = vmul.f32 %v5408, %v6584
    %v6713 = vmul.f32 %v5409, %v6585
    %v6714 = vmul.f32 %v5410, %v6586
    %v6715 = vmul.f32 %v5411, %v6587
    %v6716 = vmul.f32 %v5412, %v6588
    %v6717 = vmul.f32 %v5413, %v6589
    %v6718 = vmul.f32 %v5414, %v6590
    %v6719 = vmul.f32 %v5415, %v6591
    %v6720 = vmul.f32 %v5416, %v6592
    %v6721 = vmul.f32 %v5417, %v6593
    %v6722 = vmul.f32 %v5418, %v6594
    %v6723 = vmul.f32 %v5419, %v6595
    %v6724 = vmul.f32 %v5420, %v6596
    %v6725 = vmul.f32 %v5421, %v6597
    %v6726 = vmul.f32 %v5422, %v6598
    %v6727 = vmul.f32 %v5423, %v6599
    %v6728 = vmul.f32 %v5424, %v6600
    %v6729 = vmul.f32 %v5425, %v6601
    %v6730 = vmul.f32 %v5426, %v6602
    %v6731 = vmul.f32 %v5427, %v6603
    %v6732 = vmul.f32 %v5428, %v6604
    %v6733 = vmul.f32 %v5429, %v6605
    %v6734 = vmul.f32 %v5430, %v6606
    %v6735 = vmul.f32 %v5431, %v6607
    %v6736 = vmul.f32 %v5432, %v6608
    %v6737 = vmul.f32 %v5433, %v6609
    %v6738 = vmul.f32 %v5434, %v6610
    %v6739 = vmul.f32 %v5435, %v6611
    %v6740 = vmul.f32 %v5436, %v6612
    %v6741 = vmul.f32 %v5437, %v6613
    %v6742 = vmul.f32 %v5438, %v6614
    %v6743 = vmul.f32 %v5439, %v6615
    %v6744 = vmul.f32 %v5440, %v6616
    %v6745 = vmul.f32 %v5441, %v6617
    %v6746 = vmul.f32 %v5442, %v6618
    %v6747 = vmul.f32 %v5443, %v6619
    %v6748 = vmul.f32 %v5444, %v6620
    %v6749 = vmul.f32 %v5445, %v6621
    %v6750 = vmul.f32 %v5446, %v6622
    %v6751 = vmul.f32 %v5447, %v6623
    %v6752 = vmul.f32 %v5448, %v6624
    %v6753 = vmul.f32 %v5449, %v6625
    %v6754 = vmul.f32 %v5450, %v6626
    %v6755 = vmul.f32 %v5451, %v6627
    %v6756 = vmul.f32 %v5452, %v6628
    %v6757 = vmul.f32 %v5453, %v6629
    %v6758 = vmul.f32 %v5454, %v6630
    %v6759 = vmul.f32 %v5455, %v6631
    %v6760 = vmul.f32 %v5456, %v6632
    %v6761 = vmul.f32 %v5457, %v6633
    %v6762 = vmul.f32 %v5458, %v6634
    %v6763 = vmul.f32 %v5459, %v6635
    %v6764 = vmul.f32 %v5460, %v6636
    %v6765 = vmul.f32 %v5461, %v6637
    %v6766 = vmul.f32 %v5462, %v6638
    %v6767 = vmul.f32 %v5463, %v6639
    %v6768 = vmul.f32 %v5464, %v6640
    %v6769 = vmul.f32 %v5465, %v6641
    %v6770 = vmul.f32 %v5466, %v6642
    %v6771 = vmul.f32 %v5467, %v6643
    %v6772 = vmul.f32 %v5468, %v6644
    %v6773 = vmul.f32 %v5469, %v6645
    %v6774 = vmul.f32 %v5470, %v6646
    %v6775 = vmul.f32 %v5471, %v6647
    %v6776 = vmul.f32 %v5472, %v6648
    %v6777 = vmul.f32 %v5473, %v6649
    %v6778 = vmul.f32 %v5474, %v6650
    %v6779 = vmul.f32 %v5475, %v6651
    %v6780 = vmul.f32 %v5476, %v6652
    %v6781 = vmul.f32 %v5477, %v6653
    %v6782 = vmul.f32 %v5478, %v6654
    %v6783 = vmul.f32 %v5479, %v6655
    %v6784 = vmul.f32 %v5480, %v6656
    %v6785 = vmul.f32 %v5481, %v6657
    %v6786 = vmul.f32 %v5482, %v6658
    %v6787 = vmul.f32 %v5483, %v6659
    %v6788 = vmul.f32 %v5484, %v6660
    %v6789 = vmul.f32 %v5485, %v6661
    %v6790 = vmul.f32 %v5486, %v6662
    %v6791 = vmul.f32 %v5487, %v6663
    %v6792 = vmul.f32 %v5488, %v6664
    %v6793 = vmul.f32 %v5489, %v6665
    %v6794 = vmul.f32 %v5490, %v6666
    %v6795 = vmul.f32 %v5491, %v6667
    %v6796 = vmul.f32 %v5492, %v6668
    %v6797 = vadd.f32 %v6669, %v6685
    %v6798 = vadd.f32 %v6797, %v6701
    %v6799 = vadd.f32 %v6798, %v6717
    %v6800 = vadd.f32 %v6799, %v6733
    %v6801 = vadd.f32 %v6800, %v6749
    %v6802 = vadd.f32 %v6801, %v6765
    %v6803 = vadd.f32 %v6802, %v6781
    %v6804 = vadd.f32 %v6670, %v6686
    %v6805 = vadd.f32 %v6804, %v6702
    %v6806 = vadd.f32 %v6805, %v6718
    %v6807 = vadd.f32 %v6806, %v6734
    %v6808 = vadd.f32 %v6807, %v6750
    %v6809 = vadd.f32 %v6808, %v6766
    %v6810 = vadd.f32 %v6809, %v6782
    %v6811 = vadd.f32 %v6671, %v6687
    %v6812 = vadd.f32 %v6811, %v6703
    %v6813 = vadd.f32 %v6812, %v6719
    %v6814 = vadd.f32 %v6813, %v6735
    %v6815 = vadd.f32 %v6814, %v6751
    %v6816 = vadd.f32 %v6815, %v6767
    %v6817 = vadd.f32 %v6816, %v6783
    %v6818 = vadd.f32 %v6672, %v6688
    %v6819 = vadd.f32 %v6818, %v6704
    %v6820 = vadd.f32 %v6819, %v6720
    %v6821 = vadd.f32 %v6820, %v6736
    %v6822 = vadd.f32 %v6821, %v6752
    %v6823 = vadd.f32 %v6822, %v6768
    %v6824 = vadd.f32 %v6823, %v6784
    %v6825 = vadd.f32 %v6673, %v6689
    %v6826 = vadd.f32 %v6825, %v6705
    %v6827 = vadd.f32 %v6826, %v6721
    %v6828 = vadd.f32 %v6827, %v6737
    %v6829 = vadd.f32 %v6828, %v6753
    %v6830 = vadd.f32 %v6829, %v6769
    %v6831 = vadd.f32 %v6830, %v6785
    %v6832 = vadd.f32 %v6674, %v6690
    %v6833 = vadd.f32 %v6832, %v6706
    %v6834 = vadd.f32 %v6833, %v6722
    %v6835 = vadd.f32 %v6834, %v6738
    %v6836 = vadd.f32 %v6835, %v6754
    %v6837 = vadd.f32 %v6836, %v6770
    %v6838 = vadd.f32 %v6837, %v6786
    %v6839 = vadd.f32 %v6675, %v6691
    %v6840 = vadd.f32 %v6839, %v6707
    %v6841 = vadd.f32 %v6840, %v6723
    %v6842 = vadd.f32 %v6841, %v6739
    %v6843 = vadd.f32 %v6842, %v6755
    %v6844 = vadd.f32 %v6843, %v6771
    %v6845 = vadd.f32 %v6844, %v6787
    %v6846 = vadd.f32 %v6676, %v6692
    %v6847 = vadd.f32 %v6846, %v6708
    %v6848 = vadd.f32 %v6847, %v6724
    %v6849 = vadd.f32 %v6848, %v6740
    %v6850 = vadd.f32 %v6849, %v6756
    %v6851 = vadd.f32 %v6850, %v6772
    %v6852 = vadd.f32 %v6851, %v6788
    %v6853 = vadd.f32 %v6677, %v6693
    %v6854 = vadd.f32 %v6853, %v6709
    %v6855 = vadd.f32 %v6854, %v6725
    %v6856 = vadd.f32 %v6855, %v6741
    %v6857 = vadd.f32 %v6856, %v6757
    %v6858 = vadd.f32 %v6857, %v6773
    %v6859 = vadd.f32 %v6858, %v6789
    %v6860 = vadd.f32 %v6678, %v6694
    %v6861 = vadd.f32 %v6860, %v6710
    %v6862 = vadd.f32 %v6861, %v6726
    %v6863 = vadd.f32 %v6862, %v6742
    %v6864 = vadd.f32 %v6863, %v6758
    %v6865 = vadd.f32 %v6864, %v6774
    %v6866 = vadd.f32 %v6865, %v6790
    %v6867 = vadd.f32 %v6679, %v6695
    %v6868 = vadd.f32 %v6867, %v6711
    %v6869 = vadd.f32 %v6868, %v6727
    %v6870 = vadd.f32 %v6869, %v6743
    %v6871 = vadd.f32 %v6870, %v6759
    %v6872 = vadd.f32 %v6871, %v6775
    %v6873 = vadd.f32 %v6872, %v6791
    %v6874 = vadd.f32 %v6680, %v6696
    %v6875 = vadd.f32 %v6874, %v6712
    %v6876 = vadd.f32 %v6875, %v6728
    %v6877 = vadd.f32 %v6876, %v6744
    %v6878 = vadd.f32 %v6877, %v6760
    %v6879 = vadd.f32 %v6878, %v6776
    %v6880 = vadd.f32 %v6879, %v6792
    %v6881 = vadd.f32 %v6681, %v6697
    %v6882 = vadd.f32 %v6881, %v6713
    %v6883 = vadd.f32 %v6882, %v6729
    %v6884 = vadd.f32 %v6883, %v6745
    %v6885 = vadd.f32 %v6884, %v6761
    %v6886 = vadd.f32 %v6885, %v6777
    %v6887 = vadd.f32 %v6886, %v6793
    %v6888 = vadd.f32 %v6682, %v6698
    %v6889 = vadd.f32 %v6888, %v6714
    %v6890 = vadd.f32 %v6889, %v6730
    %v6891 = vadd.f32 %v6890, %v6746
    %v6892 = vadd.f32 %v6891, %v6762
    %v6893 = vadd.f32 %v6892, %v6778
    %v6894 = vadd.f32 %v6893, %v6794
    %v6895 = vadd.f32 %v6683, %v6699
    %v6896 = vadd.f32 %v6895, %v6715
    %v6897 = vadd.f32 %v6896, %v6731
    %v6898 = vadd.f32 %v6897, %v6747
    %v6899 = vadd.f32 %v6898, %v6763
    %v6900 = vadd.f32 %v6899, %v6779
    %v6901 = vadd.f32 %v6900, %v6795
    %v6902 = vadd.f32 %v6684, %v6700
    %v6903 = vadd.f32 %v6902, %v6716
    %v6904 = vadd.f32 %v6903, %v6732
    %v6905 = vadd.f32 %v6904, %v6748
    %v6906 = vadd.f32 %v6905, %v6764
    %v6907 = vadd.f32 %v6906, %v6780
    %v6908 = vadd.f32 %v6907, %v6796
    %6909 = vadd.xlane.f32.xlu0 %v6803
    %v6910 = vpop.xlane.xlu0 %6909
    %6911 = vadd.xlane.f32.xlu0 %v6810
    %v6912 = vpop.xlane.xlu0 %6911
    %6913 = vadd.xlane.f32.xlu0 %v6817
    %v6914 = vpop.xlane.xlu0 %6913
    %6915 = vadd.xlane.f32.xlu0 %v6824
    %v6916 = vpop.xlane.xlu0 %6915
    %6917 = vadd.xlane.f32.xlu0 %v6831
    %v6918 = vpop.xlane.xlu0 %6917
    %6919 = vadd.xlane.f32.xlu0 %v6838
    %v6920 = vpop.xlane.xlu0 %6919
    %6921 = vadd.xlane.f32.xlu0 %v6845
    %v6922 = vpop.xlane.xlu0 %6921
    %6923 = vadd.xlane.f32.xlu0 %v6852
    %v6924 = vpop.xlane.xlu0 %6923
    %6925 = vadd.xlane.f32.xlu0 %v6859
    %v6926 = vpop.xlane.xlu0 %6925
    %6927 = vadd.xlane.f32.xlu0 %v6866
    %v6928 = vpop.xlane.xlu0 %6927
    %6929 = vadd.xlane.f32.xlu0 %v6873
    %v6930 = vpop.xlane.xlu0 %6929
    %6931 = vadd.xlane.f32.xlu0 %v6880
    %v6932 = vpop.xlane.xlu0 %6931
    %6933 = vadd.xlane.f32.xlu0 %v6887
    %v6934 = vpop.xlane.xlu0 %6933
    %6935 = vadd.xlane.f32.xlu0 %v6894
    %v6936 = vpop.xlane.xlu0 %6935
    %6937 = vadd.xlane.f32.xlu0 %v6901
    %v6938 = vpop.xlane.xlu0 %6937
    %6939 = vadd.xlane.f32.xlu0 %v6908
    %v6940 = vpop.xlane.xlu0 %6939
    %6941 = vadd.xlane.f32.xlu0 %v599
    %v6942 = vpop.xlane.xlu0 %6941
    %6943 = vadd.xlane.f32.xlu0 %v600
    %v6944 = vpop.xlane.xlu0 %6943
    %6945 = vadd.xlane.f32.xlu0 %v601
    %v6946 = vpop.xlane.xlu0 %6945
    %6947 = vadd.xlane.f32.xlu0 %v602
    %v6948 = vpop.xlane.xlu0 %6947
    %6949 = vadd.xlane.f32.xlu0 %v603
    %v6950 = vpop.xlane.xlu0 %6949
    %6951 = vadd.xlane.f32.xlu0 %v604
    %v6952 = vpop.xlane.xlu0 %6951
    %6953 = vadd.xlane.f32.xlu0 %v605
    %v6954 = vpop.xlane.xlu0 %6953
    %6955 = vadd.xlane.f32.xlu0 %v606
    %v6956 = vpop.xlane.xlu0 %6955
    %6957 = vadd.xlane.f32.xlu0 %v607
    %v6958 = vpop.xlane.xlu0 %6957
    %6959 = vadd.xlane.f32.xlu0 %v608
    %v6960 = vpop.xlane.xlu0 %6959
    %6961 = vadd.xlane.f32.xlu0 %v609
    %v6962 = vpop.xlane.xlu0 %6961
    %6963 = vadd.xlane.f32.xlu0 %v610
    %v6964 = vpop.xlane.xlu0 %6963
    %6965 = vadd.xlane.f32.xlu0 %v611
    %v6966 = vpop.xlane.xlu0 %6965
    %6967 = vadd.xlane.f32.xlu0 %v612
    %v6968 = vpop.xlane.xlu0 %6967
    %6969 = vadd.xlane.f32.xlu0 %v613
    %v6970 = vpop.xlane.xlu0 %6969
    %6971 = vadd.xlane.f32.xlu0 %v614
    %v6972 = vpop.xlane.xlu0 %6971
    %vm6973 = vcmp.gt.f32.partialorder %v6942, 0.0
    %vm6974 = vcmp.gt.f32.partialorder %v6944, 0.0
    %vm6975 = vcmp.gt.f32.partialorder %v6946, 0.0
    %vm6976 = vcmp.gt.f32.partialorder %v6948, 0.0
    %vm6977 = vcmp.gt.f32.partialorder %v6950, 0.0
    %vm6978 = vcmp.gt.f32.partialorder %v6952, 0.0
    %vm6979 = vcmp.gt.f32.partialorder %v6954, 0.0
    %vm6980 = vcmp.gt.f32.partialorder %v6956, 0.0
    %vm6981 = vcmp.gt.f32.partialorder %v6958, 0.0
    %vm6982 = vcmp.gt.f32.partialorder %v6960, 0.0
    %vm6983 = vcmp.gt.f32.partialorder %v6962, 0.0
    %vm6984 = vcmp.gt.f32.partialorder %v6964, 0.0
    %vm6985 = vcmp.gt.f32.partialorder %v6966, 0.0
    %vm6986 = vcmp.gt.f32.partialorder %v6968, 0.0
    %vm6987 = vcmp.gt.f32.partialorder %v6970, 0.0
    %vm6988 = vcmp.gt.f32.partialorder %v6972, 0.0
    %v6989 = vmax.f32 %v6942, 1.0
    %v6990 = vmax.f32 %v6944, 1.0
    %v6991 = vmax.f32 %v6946, 1.0
    %v6992 = vmax.f32 %v6948, 1.0
    %v6993 = vmax.f32 %v6950, 1.0
    %v6994 = vmax.f32 %v6952, 1.0
    %v6995 = vmax.f32 %v6954, 1.0
    %v6996 = vmax.f32 %v6956, 1.0
    %v6997 = vmax.f32 %v6958, 1.0
    %v6998 = vmax.f32 %v6960, 1.0
    %v6999 = vmax.f32 %v6962, 1.0
    %v7000 = vmax.f32 %v6964, 1.0
    %v7001 = vmax.f32 %v6966, 1.0
    %v7002 = vmax.f32 %v6968, 1.0
    %v7003 = vmax.f32 %v6970, 1.0
    %v7004 = vmax.f32 %v6972, 1.0
    %v7005 = vrcp.pop %v6989
    %v7006 = vmul.f32 %v6910, %v7005
    %v7007 = vrcp.pop %v6990
    %v7008 = vmul.f32 %v6912, %v7007
    %v7009 = vrcp.pop %v6991
    %v7010 = vmul.f32 %v6914, %v7009
    %v7011 = vrcp.pop %v6992
    %v7012 = vmul.f32 %v6916, %v7011
    %v7013 = vrcp.pop %v6993
    %v7014 = vmul.f32 %v6918, %v7013
    %v7015 = vrcp.pop %v6994
    %v7016 = vmul.f32 %v6920, %v7015
    %v7017 = vrcp.pop %v6995
    %v7018 = vmul.f32 %v6922, %v7017
    %v7019 = vrcp.pop %v6996
    %v7020 = vmul.f32 %v6924, %v7019
    %v7021 = vrcp.pop %v6997
    %v7022 = vmul.f32 %v6926, %v7021
    %v7023 = vrcp.pop %v6998
    %v7024 = vmul.f32 %v6928, %v7023
    %v7025 = vrcp.pop %v6999
    %v7026 = vmul.f32 %v6930, %v7025
    %v7027 = vrcp.pop %v7000
    %v7028 = vmul.f32 %v6932, %v7027
    %v7029 = vrcp.pop %v7001
    %v7030 = vmul.f32 %v6934, %v7029
    %v7031 = vrcp.pop %v7002
    %v7032 = vmul.f32 %v6936, %v7031
    %v7033 = vrcp.pop %v7003
    %v7034 = vmul.f32 %v6938, %v7033
    %v7035 = vrcp.pop %v7004
    %v7036 = vmul.f32 %v6940, %v7035
    %v7037 = vsel %vm6973, %v7006, 0.0
    %v7038 = vsel %vm6974, %v7008, 0.0
    %v7039 = vsel %vm6975, %v7010, 0.0
    %v7040 = vsel %vm6976, %v7012, 0.0
    %v7041 = vsel %vm6977, %v7014, 0.0
    %v7042 = vsel %vm6978, %v7016, 0.0
    %v7043 = vsel %vm6979, %v7018, 0.0
    %v7044 = vsel %vm6980, %v7020, 0.0
    %v7045 = vsel %vm6981, %v7022, 0.0
    %v7046 = vsel %vm6982, %v7024, 0.0
    %v7047 = vsel %vm6983, %v7026, 0.0
    %v7048 = vsel %vm6984, %v7028, 0.0
    %v7049 = vsel %vm6985, %v7030, 0.0
    %v7050 = vsel %vm6986, %v7032, 0.0
    %v7051 = vsel %vm6987, %v7034, 0.0
    %v7052 = vsel %vm6988, %v7036, 0.0
    %vm7053 = vcmask 7168
    %v7054 = vsel %vm7053, %v7037, 0.0
    %v7055 = vsel %vm7053, %v7038, 0.0
    %v7056 = vadd.f32 %v7054, %v7055
    %v7057 = vsel %vm7053, %v7039, 0.0
    %v7058 = vadd.f32 %v7056, %v7057
    %v7059 = vsel %vm7053, %v7040, 0.0
    %v7060 = vadd.f32 %v7058, %v7059
    %v7061 = vsel %vm7053, %v7041, 0.0
    %v7062 = vadd.f32 %v7060, %v7061
    %v7063 = vsel %vm7053, %v7042, 0.0
    %v7064 = vadd.f32 %v7062, %v7063
    %v7065 = vsel %vm7053, %v7043, 0.0
    %v7066 = vadd.f32 %v7064, %v7065
    %v7067 = vsel %vm7053, %v7044, 0.0
    %v7068 = vadd.f32 %v7066, %v7067
    %v7069 = vsel %vm7053, %v7045, 0.0
    %v7070 = vadd.f32 %v7068, %v7069
    %v7071 = vsel %vm7053, %v7046, 0.0
    %v7072 = vadd.f32 %v7070, %v7071
    %v7073 = vsel %vm7053, %v7047, 0.0
    %v7074 = vadd.f32 %v7072, %v7073
    %v7075 = vsel %vm7053, %v7048, 0.0
    %v7076 = vadd.f32 %v7074, %v7075
    %v7077 = vsel %vm7053, %v7049, 0.0
    %v7078 = vadd.f32 %v7076, %v7077
    %v7079 = vsel %vm7053, %v7050, 0.0
    %v7080 = vadd.f32 %v7078, %v7079
    %v7081 = vsel %vm7053, %v7051, 0.0
    %v7082 = vadd.f32 %v7080, %v7081
    %v7083 = vsel %vm7053, %v7052, 0.0
    %v7084 = vadd.f32 %v7082, %v7083
    %7085 = vadd.xlane.f32.xlu0 %v7084
    %v7086 = vpop.xlane.xlu0 %7085
    %v7087 = vrot.slane %v7086, 4
    %v7088 = vadd.f32 %v7086, %v7087
    %v7089 = vrot.slane %v7088, 2
    %v7090 = vadd.f32 %v7088, %v7089
    %v7091 = vrot.slane %v7090, 1
    %v7092 = vadd.f32 %v7090, %v7091
    %s7093 = vtos %v7092
    %s7094 = sld [smem:[#allocation2]]
    %s7095 = sadd.f32 %s7094, %s7093
    %s7096 = scalar_lea.smem [#allocation2], 0
    %7097 = sst [smem:[%s7096]] %s7095
    %s7098 = sld [smem:[#allocation2 + $0x1]]
    %s7099 = sadd.f32 %s7098, %s659
    %s7100 = scalar_lea.smem [#allocation2], 1
    %7101 = sst [smem:[%s7100]] %s7099
    %s7102 = sld [smem:[#allocation2]]
    %s7103 = ssub.f32 0.0, %s7102
    %s7104 = sld [smem:[#allocation2 + $0x1]]
    %s7105 = sadd.f32 %s7103, %s7104
    %s7106 = smul.f32 %s7105, 0.0625
    %s7107 = scalar_lea.smem [#allocation3], 0
    %7108 = sst [smem:[%s7107]] %s7106
    // Predicated region
    $region26: #{tpu_custom_call.1} parent=1 // pred_check
      _
    $region27: #{tpu_custom_call.1} parent=1 // pred_check_branch
      %7110 = sbr.rel (0) target = $region29
    $region28: #{tpu_custom_call.1} parent=1 // pred_region
      %s7112 = ssub.s32 16, 16
      %7113 = vsyncadd [#allocation4], %s7112
      %7116 = dma.smem_to_hbm [#allocation3], 16, %s5, [#allocation4]
    $region29: #{tpu_custom_call.1} parent=1 // pred_fallthru
      _
    // Predicated region
    $region30: #{tpu_custom_call.1} parent=1 // pred_check
      _
    $region31: #{tpu_custom_call.1} parent=1 // pred_check_branch
      %7118 = sbr.rel (0) target = $region33
    $region32: #{tpu_custom_call.1} parent=1 // pred_region
      %7119 = dma.done [#allocation4], 16
    $region33: #{tpu_custom_call.1} parent=1 // pred_fallthru
      _
    %7120 = sfence
    %7121 = vsyncpa [#allocation4], 1

</llo_original>
